<compile_context>
chip_gen: v7x
topology: tpu7x:2x2x1
jax: 0.10.0
libtpu: 0.0.40
codegen_flags: <defaults>
</compile_context>

<pallas_src>
import numpy as np

import jax
import jax.numpy as jnp
from jax.experimental import pallas as pl
from jax.experimental.pallas import tpu as pltpu


# ----------------------------------------------------------------------------
# numpy helpers for the fixed spatial operators (built once, at trace time)
# ----------------------------------------------------------------------------
def _np_subsample2(h, w):
    """0/1 matrix selecting the stride-2 (top-left) positions of a row-major
    flattened (h, w) map:  (h/2*w/2, h*w)."""
    ho, wo = h // 2, w // 2
    s = np.zeros((ho * wo, h * w), np.float32)
    for i in range(ho):
        for j in range(wo):
            s[i * wo + j, (2 * i) * w + (2 * j)] = 1.0
    return s


def _np_upsample_1d(n_in, factor):
    """Bilinear upsample matrix (align_corners=False), matching F.interpolate."""
    n_out = n_in * factor
    u = np.zeros((n_out, n_in), np.float32)
    for o in range(n_out):
        src = (o + 0.5) / factor - 0.5
        src = min(max(src, 0.0), n_in - 1.0)
        i0 = int(np.floor(src))
        i1 = min(i0 + 1, n_in - 1)
        w1 = src - i0
        u[o, i0] += 1.0 - w1
        u[o, i1] += w1
    return u


def _np_downsample_1d(n_in, k):
    """Bilinear sampling matrix for scale_factor = 1/k (align_corners=False)."""
    n_out = n_in // k
    d = np.zeros((n_out, n_in), np.float32)
    for o in range(n_out):
        src = (o + 0.5) * k - 0.5
        src = min(max(src, 0.0), n_in - 1.0)
        i0 = int(np.floor(src))
        i1 = min(i0 + 1, n_in - 1)
        w1 = src - i0
        d[o, i0] += 1.0 - w1
        d[o, i1] += w1
    return d


def _np_deconv_up(hq, wq, factor):
    """Spatial operator fusing ConvTranspose2d(k=4, s=2, p=1) scatter with the
    final bilinear x`factor` upsample.  For each of the 16 kernel taps (ky,kx)
    it holds  U @ Shift_{ky,kx}  of shape (Hout*Wout, hq*wq); the 16 blocks are
    concatenated along axis 1 in tap order t = ky*4 + kx."""
    hm, wm = 2 * hq, 2 * wq
    u2 = np.kron(_np_upsample_1d(hm, factor), _np_upsample_1d(wm, factor))
    mats = []
    for ky in range(4):
        for kx in range(4):
            sh = np.zeros((hm * wm, hq * wq), np.float32)
            for i in range(hq):
                oy = 2 * i + ky - 1
                if oy < 0 or oy >= hm:
                    continue
                for j in range(wq):
                    ox = 2 * j + kx - 1
                    if ox < 0 or ox >= wm:
                        continue
                    sh[oy * wm + ox, i * wq + j] = 1.0
            mats.append(u2 @ sh)
    return np.concatenate(mats, axis=1).astype(np.float32)


# ----------------------------------------------------------------------------
# Fused IFBlock kernel (one grid step = one batch element, all in VMEM)
# ----------------------------------------------------------------------------
def _ifblock_kernel(x_ref, w0_ref, b0_ref, s0_ref, w1_ref, b1_ref, s1_ref,
                    wb_ref, bb_ref, wl_ref, bl_ref, m_ref, o_ref):
    H, W, _ = x_ref.shape

    def lrelu(v):
        return jnp.where(v >= 0.0, v, 0.1 * v)

    def conv3x3_s1(t, wmat, bias):
        # t: (h, w, cin) NHWC tile; wmat: (9*cin, cout); bias: (1, cout)
        h, w, cin = t.shape
        zc = jnp.zeros((h, 1, cin), jnp.float32)
        tp = jnp.concatenate([zc, t, zc], axis=1)              # pad W
        zr = jnp.zeros((1, w + 2, cin), jnp.float32)
        tp = jnp.concatenate([zr, tp, zr], axis=0)             # pad H
        patches = [tp[dy:dy + h, dx:dx + w, :]
                   for dy in range(3) for dx in range(3)]
        col = jnp.concatenate(patches, axis=-1).reshape(h * w, 9 * cin)
        y = jnp.dot(col, wmat, preferred_element_type=jnp.float32) + bias
        return lrelu(y)                                        # (h*w, cout)

    x = x_ref[...]

    # conv0[0]: 3x3 stride-2 == stride-1 conv + 2x2 subsample (S0 selection).
    y = conv3x3_s1(x, w0_ref[...], b0_ref[...])                # (H*W, c)
    y = jnp.dot(s0_ref[...], y, preferred_element_type=jnp.float32)
    c0 = y.shape[-1]
    y = y.reshape(H // 2, W // 2, c0)

    # conv0[1]: 3x3 stride-2
    y = conv3x3_s1(y, w1_ref[...], b1_ref[...])                # (H/2*W/2, 2c)
    y = jnp.dot(s1_ref[...], y, preferred_element_type=jnp.float32)
    c1 = y.shape[-1]
    hq, wq = H // 4, W // 4
    y = y.reshape(hq, wq, c1)

    # convblock: 4 x (conv3x3 s1 + LReLU), then residual add.
    z = y
    for i in range(4):
        z = conv3x3_s1(z, wb_ref[i], bb_ref[i]).reshape(hq, wq, c1)
    z = z + y

    # lastconv (ConvTranspose2d 4x4 s2 p1, no activation) fused with the final
    # bilinear (scale*2) upsample:  out = sum_t M_t @ (z_flat @ W_t) + bias.
    zf = z.reshape(hq * wq, c1)
    parts = [jnp.dot(zf, wl_ref[t], preferred_element_type=jnp.float32)
             for t in range(16)]
    stacked = jnp.concatenate(parts, axis=0)                   # (16*hq*wq, 5)
    up = jnp.dot(m_ref[...], stacked,
                 preferred_element_type=jnp.float32) + bl_ref[...]

    ho, wo, cf = o_ref.shape
    o_ref[...] = up.reshape(ho, wo, cf)


def _ifblock_pallas(x_nhwc, ops, out_h, out_w):
    N, H, W, cin = x_nhwc.shape
    w0, b0, s0, w1, b1, s1, wb, bb, wl, bl, m = ops

    def rep(shape):
        return pl.BlockSpec(shape, lambda n: (0,) * len(shape))

    in_specs = [
        pl.BlockSpec((None, H, W, cin), lambda n: (n, 0, 0, 0)),
        rep(w0.shape), rep(b0.shape), rep(s0.shape),
        rep(w1.shape), rep(b1.shape), rep(s1.shape),
        rep(wb.shape), rep(bb.shape), rep(wl.shape), rep(bl.shape),
        rep(m.shape),
    ]
    out_specs = pl.BlockSpec((None, out_h, out_w, 5), lambda n: (n, 0, 0, 0))

    return pl.pallas_call(
        _ifblock_kernel,
        out_shape=jax.ShapeDtypeStruct((N, out_h, out_w, 5), jnp.float32),
        grid=(N,),
        in_specs=in_specs,
        out_specs=out_specs,
        compiler_params=pltpu.CompilerParams(
            dimension_semantics=("parallel",)),
    )(x_nhwc, w0, b0, s0, w1, b1, s1, wb, bb, wl, bl, m)


# ----------------------------------------------------------------------------
# Parameter handling / wrapper (cheap plumbing in plain JAX, compute in Pallas)
# ----------------------------------------------------------------------------
def _conv_w_to_mat(w):
    # torch Conv2d weight (cout, cin, 3, 3) -> im2col weight (9*cin, cout)
    cout, cin = w.shape[0], w.shape[1]
    return jnp.transpose(w, (2, 3, 1, 0)).reshape(9 * cin, cout)


def _prepare_operands(params, H, W, scale):
    c0 = params["w00"].shape[0]
    c1 = params["w01"].shape[0]
    w0 = _conv_w_to_mat(params["w00"])
    b0 = params["b00"].reshape(1, c0)
    w1 = _conv_w_to_mat(params["w01"])
    b1 = params["b01"].reshape(1, c1)
    wb = jnp.stack([_conv_w_to_mat(w) for w in params["wblock"]])   # (4, 9*2c, 2c)
    bb = jnp.stack([b.reshape(1, c1) for b in params["bblock"]])    # (4, 1, 2c)
    wt = params["wlast"]                                            # (2c, 5, 4, 4)
    wl = jnp.stack([wt[:, :, ky, kx]
                    for ky in range(4) for kx in range(4)])         # (16, 2c, 5)
    bl = params["blast"].reshape(1, 5)
    s0 = jnp.asarray(_np_subsample2(H, W))
    s1 = jnp.asarray(_np_subsample2(H // 2, W // 2))
    m = jnp.asarray(_np_deconv_up(H // 4, W // 4, 2 * scale))
    return (w0, b0, s0, w1, b1, s1, wb, bb, wl, bl, m)


def _bilinear_downsample_nchw(x, k):
    n, c, h, w = x.shape
    dh = jnp.asarray(_np_downsample_1d(h, k))
    dw = jnp.asarray(_np_downsample_1d(w, k))
    x = jnp.einsum("oi,nciw->ncow", dh, x)
    x = jnp.einsum("pj,ncoj->ncop", dw, x)
    return x


def ifblock_forward(params, x, flow=None, scale=1):
    """x: (N, Cx, H, W), flow: (N, 4, H, W) or None. Returns (flow, mask) NCHW."""
    if scale != 1:
        # TODO(synk): only integer `scale` with divisible spatial dims here.
        assert int(scale) == scale and scale > 1
        x = _bilinear_downsample_nchw(x, int(scale))
        if flow is not None:
            flow = _bilinear_downsample_nchw(flow, int(scale)) * (1.0 / scale)
    if flow is not None:
        x = jnp.concatenate([x, flow], axis=1)

    N, cin, H, W = x.shape
    assert H % 4 == 0 and W % 4 == 0, "working resolution must be /4"

    ops = _prepare_operands(params, H, W, int(scale))
    x_nhwc = jnp.transpose(x, (0, 2, 3, 1)).astype(jnp.float32)
    out_h, out_w = H * int(scale), W * int(scale)

    out = _ifblock_pallas(x_nhwc, ops, out_h, out_w)        # (N, out_h, out_w, 5)
    out = jnp.transpose(out, (0, 3, 1, 2))                  # (N, 5, out_h, out_w)
    flow_out = out[:, :4] * (scale * 2.0)
    mask = out[:, 4:5]
    return flow_out, mask


def init_params(key, in_planes, c=48):
    """Deterministic synthetic weights in the PyTorch layouts of IFBlock."""
    def conv_w(k, cout, cin):
        return (jax.random.normal(k, (cout, cin, 3, 3), jnp.float32)
                / np.sqrt(9.0 * cin))

    keys = jax.random.split(key, 16)
    p = {}
    p["w00"] = conv_w(keys[0], c, in_planes)
    p["b00"] = 0.01 * jax.random.normal(keys[1], (c,), jnp.float32)
    p["w01"] = conv_w(keys[2], 2 * c, c)
    p["b01"] = 0.01 * jax.random.normal(keys[3], (2 * c,), jnp.float32)
    p["wblock"] = [conv_w(keys[4 + i], 2 * c, 2 * c) for i in range(4)]
    p["bblock"] = [0.01 * jax.random.normal(keys[8 + i], (2 * c,), jnp.float32)
                   for i in range(4)]
    # ConvTranspose2d weight layout: (in_channels, out_channels, kh, kw)
    p["wlast"] = (jax.random.normal(keys[12], (2 * c, 5, 4, 4), jnp.float32)
                  / np.sqrt(16.0 * 2 * c))
    p["blast"] = 0.01 * jax.random.normal(keys[13], (5,), jnp.float32)
    return p


if __name__ == "__main__":
    key = jax.random.PRNGKey(0)
    kx, kf, kp = jax.random.split(key, 3)

    N, H, W = 2, 16, 16
    cx, cflow, c = 6, 4, 48           # IFBlock(in_planes=10, c=48)
    in_planes = cx + cflow

    x = jax.random.normal(kx, (N, cx, H, W), jnp.float32)
    flow = jax.random.normal(kf, (N, cflow, H, W), jnp.float32)
    params = init_params(kp, in_planes, c)

    fwd = jax.jit(lambda p, a, b: ifblock_forward(p, a, b, scale=1))
    flow_out, mask = fwd(params, x, flow)
    jax.block_until_ready((flow_out, mask))

    assert flow_out.shape == (N, 4, H, W), flow_out.shape
    assert mask.shape == (N, 1, H, W), mask.shape
    assert bool(jnp.isfinite(flow_out).all() & jnp.isfinite(mask).all())
    print("KERNEL_OK")
</pallas_src>

<mosaic_0001>
module attributes {stable_mosaic.version = 11 : i64} {
  func.func @_ifblock_kernel(%arg0: i32, %arg1: memref<1x16x16x10xf32, #tpu.memory_space<vmem>>, %arg2: memref<90x48xf32, #tpu.memory_space<vmem>>, %arg3: memref<1x48xf32, #tpu.memory_space<vmem>>, %arg4: memref<64x256xf32, #tpu.memory_space<vmem>>, %arg5: memref<432x96xf32, #tpu.memory_space<vmem>>, %arg6: memref<1x96xf32, #tpu.memory_space<vmem>>, %arg7: memref<16x64xf32, #tpu.memory_space<vmem>>, %arg8: memref<4x864x96xf32, #tpu.memory_space<vmem>>, %arg9: memref<4x1x96xf32, #tpu.memory_space<vmem>>, %arg10: memref<16x96x5xf32, #tpu.memory_space<vmem>>, %arg11: memref<1x5xf32, #tpu.memory_space<vmem>>, %arg12: memref<256x256xf32, #tpu.memory_space<vmem>>, %arg13: memref<1x16x16x5xf32, #tpu.memory_space<vmem>>) attributes {dimension_semantics = [#tpu.dimension_semantics<parallel>], iteration_bounds = array<i64: 2>, scalar_prefetch = 0 : i64, scratch_operands = 0 : i64, tpu.core_type = #tpu.core_type<tc>, window_params = [{transform_indices = @transform_0, window_bounds = array<i64: 1, 16, 16, 10>}, {pipeline_mode = #tpu.pipeline_mode<synchronous>, transform_indices = @transform_1, window_bounds = array<i64: 90, 48>}, {pipeline_mode = #tpu.pipeline_mode<synchronous>, transform_indices = @transform_2, window_bounds = array<i64: 1, 48>}, {pipeline_mode = #tpu.pipeline_mode<synchronous>, transform_indices = @transform_3, window_bounds = array<i64: 64, 256>}, {pipeline_mode = #tpu.pipeline_mode<synchronous>, transform_indices = @transform_4, window_bounds = array<i64: 432, 96>}, {pipeline_mode = #tpu.pipeline_mode<synchronous>, transform_indices = @transform_5, window_bounds = array<i64: 1, 96>}, {pipeline_mode = #tpu.pipeline_mode<synchronous>, transform_indices = @transform_6, window_bounds = array<i64: 16, 64>}, {pipeline_mode = #tpu.pipeline_mode<synchronous>, transform_indices = @transform_7, window_bounds = array<i64: 4, 864, 96>}, {pipeline_mode = #tpu.pipeline_mode<synchronous>, transform_indices = @transform_8, window_bounds = array<i64: 4, 1, 96>}, {pipeline_mode = #tpu.pipeline_mode<synchronous>, transform_indices = @transform_9, window_bounds = array<i64: 16, 96, 5>}, {pipeline_mode = #tpu.pipeline_mode<synchronous>, transform_indices = @transform_10, window_bounds = array<i64: 1, 5>}, {pipeline_mode = #tpu.pipeline_mode<synchronous>, transform_indices = @transform_11, window_bounds = array<i64: 256, 256>}, {transform_indices = @transform_12, window_bounds = array<i64: 1, 16, 16, 5>}]} {
    %c0 = arith.constant 0 : index
    %c0_0 = arith.constant 0 : index
    %c0_1 = arith.constant 0 : index
    %c0_2 = arith.constant 0 : index
    %0 = vector.load %arg1[%c0, %c0_0, %c0_1, %c0_2] : memref<1x16x16x10xf32, #tpu.memory_space<vmem>>, vector<1x16x16x10xf32>
    %1 = vector.shape_cast %0 : vector<1x16x16x10xf32> to vector<16x16x10xf32>
    %c0_3 = arith.constant 0 : index
    %c0_4 = arith.constant 0 : index
    %2 = vector.load %arg2[%c0_3, %c0_4] : memref<90x48xf32, #tpu.memory_space<vmem>>, vector<90x48xf32>
    %c0_5 = arith.constant 0 : index
    %c0_6 = arith.constant 0 : index
    %3 = vector.load %arg3[%c0_5, %c0_6] : memref<1x48xf32, #tpu.memory_space<vmem>>, vector<1x48xf32>
    %cst = arith.constant 0.000000e+00 : f32
    %4 = vector.broadcast %cst : f32 to vector<16x1x10xf32>
    %5 = tpu.concatenate %4, %1, %4 in 1 : vector<16x1x10xf32>, vector<16x16x10xf32>, vector<16x1x10xf32> -> vector<16x18x10xf32>
    %cst_7 = arith.constant 0.000000e+00 : f32
    %6 = vector.broadcast %cst_7 : f32 to vector<1x18x10xf32>
    %7 = tpu.concatenate %6, %5, %6 in 0 : vector<1x18x10xf32>, vector<16x18x10xf32>, vector<1x18x10xf32> -> vector<18x18x10xf32>
    %8 = vector.extract_strided_slice %7 {offsets = [0, 0, 0], sizes = [16, 16, 10], strides = [1, 1, 1]} : vector<18x18x10xf32> to vector<16x16x10xf32>
    %9 = vector.extract_strided_slice %7 {offsets = [0, 1, 0], sizes = [16, 16, 10], strides = [1, 1, 1]} : vector<18x18x10xf32> to vector<16x16x10xf32>
    %10 = vector.extract_strided_slice %7 {offsets = [0, 2, 0], sizes = [16, 16, 10], strides = [1, 1, 1]} : vector<18x18x10xf32> to vector<16x16x10xf32>
    %11 = vector.extract_strided_slice %7 {offsets = [1, 0, 0], sizes = [16, 16, 10], strides = [1, 1, 1]} : vector<18x18x10xf32> to vector<16x16x10xf32>
    %12 = vector.extract_strided_slice %7 {offsets = [1, 1, 0], sizes = [16, 16, 10], strides = [1, 1, 1]} : vector<18x18x10xf32> to vector<16x16x10xf32>
    %13 = vector.extract_strided_slice %7 {offsets = [1, 2, 0], sizes = [16, 16, 10], strides = [1, 1, 1]} : vector<18x18x10xf32> to vector<16x16x10xf32>
    %14 = vector.extract_strided_slice %7 {offsets = [2, 0, 0], sizes = [16, 16, 10], strides = [1, 1, 1]} : vector<18x18x10xf32> to vector<16x16x10xf32>
    %15 = vector.extract_strided_slice %7 {offsets = [2, 1, 0], sizes = [16, 16, 10], strides = [1, 1, 1]} : vector<18x18x10xf32> to vector<16x16x10xf32>
    %16 = vector.extract_strided_slice %7 {offsets = [2, 2, 0], sizes = [16, 16, 10], strides = [1, 1, 1]} : vector<18x18x10xf32> to vector<16x16x10xf32>
    %17 = tpu.concatenate %8, %9, %10, %11, %12, %13, %14, %15, %16 in 2 : vector<16x16x10xf32>, vector<16x16x10xf32>, vector<16x16x10xf32>, vector<16x16x10xf32>, vector<16x16x10xf32>, vector<16x16x10xf32>, vector<16x16x10xf32>, vector<16x16x10xf32>, vector<16x16x10xf32> -> vector<16x16x90xf32>
    %18 = vector.shape_cast %17 : vector<16x16x90xf32> to vector<256x90xf32>
    %cst_8 = arith.constant dense<0.000000e+00> : vector<256x48xf32>
    %19 = tpu.matmul %18, %2, %cst_8 {dimension_numbers = #tpu.dot_dimension_numbers<[1], [0], [0], [1], [0, 0, 1, 1], [], []>} : vector<256x90xf32>, vector<90x48xf32>, vector<256x48xf32> -> vector<256x48xf32>
    %20 = vector.broadcast %3 : vector<1x48xf32> to vector<256x48xf32>
    %21 = arith.addf %19, %20 : vector<256x48xf32>
    %cst_9 = arith.constant 0.000000e+00 : f32
    %22 = vector.broadcast %cst_9 : f32 to vector<256x48xf32>
    %23 = arith.cmpf oge, %21, %22 : vector<256x48xf32>
    %cst_10 = arith.constant 1.000000e-01 : f32
    %24 = vector.broadcast %cst_10 : f32 to vector<256x48xf32>
    %25 = arith.mulf %24, %21 : vector<256x48xf32>
    %26 = arith.select %23, %21, %25 : vector<256x48xi1>, vector<256x48xf32>
    %c0_11 = arith.constant 0 : index
    %c0_12 = arith.constant 0 : index
    %27 = vector.load %arg4[%c0_11, %c0_12] : memref<64x256xf32, #tpu.memory_space<vmem>>, vector<64x256xf32>
    %cst_13 = arith.constant dense<0.000000e+00> : vector<64x48xf32>
    %28 = tpu.matmul %27, %26, %cst_13 {dimension_numbers = #tpu.dot_dimension_numbers<[1], [0], [0], [1], [0, 0, 1, 1], [], []>} : vector<64x256xf32>, vector<256x48xf32>, vector<64x48xf32> -> vector<64x48xf32>
    %29 = vector.shape_cast %28 : vector<64x48xf32> to vector<8x8x48xf32>
    %c0_14 = arith.constant 0 : index
    %c0_15 = arith.constant 0 : index
    %30 = vector.load %arg5[%c0_14, %c0_15] : memref<432x96xf32, #tpu.memory_space<vmem>>, vector<432x96xf32>
    %c0_16 = arith.constant 0 : index
    %c0_17 = arith.constant 0 : index
    %31 = vector.load %arg6[%c0_16, %c0_17] : memref<1x96xf32, #tpu.memory_space<vmem>>, vector<1x96xf32>
    %cst_18 = arith.constant 0.000000e+00 : f32
    %32 = vector.broadcast %cst_18 : f32 to vector<8x1x48xf32>
    %33 = tpu.concatenate %32, %29, %32 in 1 : vector<8x1x48xf32>, vector<8x8x48xf32>, vector<8x1x48xf32> -> vector<8x10x48xf32>
    %cst_19 = arith.constant 0.000000e+00 : f32
    %34 = vector.broadcast %cst_19 : f32 to vector<1x10x48xf32>
    %35 = tpu.concatenate %34, %33, %34 in 0 : vector<1x10x48xf32>, vector<8x10x48xf32>, vector<1x10x48xf32> -> vector<10x10x48xf32>
    %36 = vector.extract_strided_slice %35 {offsets = [0, 0, 0], sizes = [8, 8, 48], strides = [1, 1, 1]} : vector<10x10x48xf32> to vector<8x8x48xf32>
    %37 = vector.extract_strided_slice %35 {offsets = [0, 1, 0], sizes = [8, 8, 48], strides = [1, 1, 1]} : vector<10x10x48xf32> to vector<8x8x48xf32>
    %38 = vector.extract_strided_slice %35 {offsets = [0, 2, 0], sizes = [8, 8, 48], strides = [1, 1, 1]} : vector<10x10x48xf32> to vector<8x8x48xf32>
    %39 = vector.extract_strided_slice %35 {offsets = [1, 0, 0], sizes = [8, 8, 48], strides = [1, 1, 1]} : vector<10x10x48xf32> to vector<8x8x48xf32>
    %40 = vector.extract_strided_slice %35 {offsets = [1, 1, 0], sizes = [8, 8, 48], strides = [1, 1, 1]} : vector<10x10x48xf32> to vector<8x8x48xf32>
    %41 = vector.extract_strided_slice %35 {offsets = [1, 2, 0], sizes = [8, 8, 48], strides = [1, 1, 1]} : vector<10x10x48xf32> to vector<8x8x48xf32>
    %42 = vector.extract_strided_slice %35 {offsets = [2, 0, 0], sizes = [8, 8, 48], strides = [1, 1, 1]} : vector<10x10x48xf32> to vector<8x8x48xf32>
    %43 = vector.extract_strided_slice %35 {offsets = [2, 1, 0], sizes = [8, 8, 48], strides = [1, 1, 1]} : vector<10x10x48xf32> to vector<8x8x48xf32>
    %44 = vector.extract_strided_slice %35 {offsets = [2, 2, 0], sizes = [8, 8, 48], strides = [1, 1, 1]} : vector<10x10x48xf32> to vector<8x8x48xf32>
    %45 = tpu.concatenate %36, %37, %38, %39, %40, %41, %42, %43, %44 in 2 : vector<8x8x48xf32>, vector<8x8x48xf32>, vector<8x8x48xf32>, vector<8x8x48xf32>, vector<8x8x48xf32>, vector<8x8x48xf32>, vector<8x8x48xf32>, vector<8x8x48xf32>, vector<8x8x48xf32> -> vector<8x8x432xf32>
    %46 = vector.shape_cast %45 : vector<8x8x432xf32> to vector<64x432xf32>
    %cst_20 = arith.constant dense<0.000000e+00> : vector<64x96xf32>
    %47 = tpu.matmul %46, %30, %cst_20 {dimension_numbers = #tpu.dot_dimension_numbers<[1], [0], [0], [1], [0, 0, 1, 1], [], []>} : vector<64x432xf32>, vector<432x96xf32>, vector<64x96xf32> -> vector<64x96xf32>
    %48 = vector.broadcast %31 : vector<1x96xf32> to vector<64x96xf32>
    %49 = arith.addf %47, %48 : vector<64x96xf32>
    %cst_21 = arith.constant 0.000000e+00 : f32
    %50 = vector.broadcast %cst_21 : f32 to vector<64x96xf32>
    %51 = arith.cmpf oge, %49, %50 : vector<64x96xf32>
    %cst_22 = arith.constant 1.000000e-01 : f32
    %52 = vector.broadcast %cst_22 : f32 to vector<64x96xf32>
    %53 = arith.mulf %52, %49 : vector<64x96xf32>
    %54 = arith.select %51, %49, %53 : vector<64x96xi1>, vector<64x96xf32>
    %c0_23 = arith.constant 0 : index
    %c0_24 = arith.constant 0 : index
    %55 = vector.load %arg7[%c0_23, %c0_24] : memref<16x64xf32, #tpu.memory_space<vmem>>, vector<16x64xf32>
    %cst_25 = arith.constant dense<0.000000e+00> : vector<16x96xf32>
    %56 = tpu.matmul %55, %54, %cst_25 {dimension_numbers = #tpu.dot_dimension_numbers<[1], [0], [0], [1], [0, 0, 1, 1], [], []>} : vector<16x64xf32>, vector<64x96xf32>, vector<16x96xf32> -> vector<16x96xf32>
    %57 = vector.shape_cast %56 : vector<16x96xf32> to vector<4x4x96xf32>
    %c0_26 = arith.constant 0 : index
    %c0_27 = arith.constant 0 : index
    %c0_28 = arith.constant 0 : index
    %58 = vector.load %arg8[%c0_26, %c0_27, %c0_28] : memref<4x864x96xf32, #tpu.memory_space<vmem>>, vector<1x864x96xf32>
    %59 = vector.shape_cast %58 : vector<1x864x96xf32> to vector<864x96xf32>
    %c0_29 = arith.constant 0 : index
    %c0_30 = arith.constant 0 : index
    %c0_31 = arith.constant 0 : index
    %60 = vector.load %arg9[%c0_29, %c0_30, %c0_31] : memref<4x1x96xf32, #tpu.memory_space<vmem>>, vector<1x1x96xf32>
    %61 = vector.shape_cast %60 : vector<1x1x96xf32> to vector<1x96xf32>
    %cst_32 = arith.constant 0.000000e+00 : f32
    %62 = vector.broadcast %cst_32 : f32 to vector<4x1x96xf32>
    %63 = tpu.concatenate %62, %57, %62 in 1 : vector<4x1x96xf32>, vector<4x4x96xf32>, vector<4x1x96xf32> -> vector<4x6x96xf32>
    %cst_33 = arith.constant 0.000000e+00 : f32
    %64 = vector.broadcast %cst_33 : f32 to vector<1x6x96xf32>
    %65 = tpu.concatenate %64, %63, %64 in 0 : vector<1x6x96xf32>, vector<4x6x96xf32>, vector<1x6x96xf32> -> vector<6x6x96xf32>
    %66 = vector.extract_strided_slice %65 {offsets = [0, 0, 0], sizes = [4, 4, 96], strides = [1, 1, 1]} : vector<6x6x96xf32> to vector<4x4x96xf32>
    %67 = vector.extract_strided_slice %65 {offsets = [0, 1, 0], sizes = [4, 4, 96], strides = [1, 1, 1]} : vector<6x6x96xf32> to vector<4x4x96xf32>
    %68 = vector.extract_strided_slice %65 {offsets = [0, 2, 0], sizes = [4, 4, 96], strides = [1, 1, 1]} : vector<6x6x96xf32> to vector<4x4x96xf32>
    %69 = vector.extract_strided_slice %65 {offsets = [1, 0, 0], sizes = [4, 4, 96], strides = [1, 1, 1]} : vector<6x6x96xf32> to vector<4x4x96xf32>
    %70 = vector.extract_strided_slice %65 {offsets = [1, 1, 0], sizes = [4, 4, 96], strides = [1, 1, 1]} : vector<6x6x96xf32> to vector<4x4x96xf32>
    %71 = vector.extract_strided_slice %65 {offsets = [1, 2, 0], sizes = [4, 4, 96], strides = [1, 1, 1]} : vector<6x6x96xf32> to vector<4x4x96xf32>
    %72 = vector.extract_strided_slice %65 {offsets = [2, 0, 0], sizes = [4, 4, 96], strides = [1, 1, 1]} : vector<6x6x96xf32> to vector<4x4x96xf32>
    %73 = vector.extract_strided_slice %65 {offsets = [2, 1, 0], sizes = [4, 4, 96], strides = [1, 1, 1]} : vector<6x6x96xf32> to vector<4x4x96xf32>
    %74 = vector.extract_strided_slice %65 {offsets = [2, 2, 0], sizes = [4, 4, 96], strides = [1, 1, 1]} : vector<6x6x96xf32> to vector<4x4x96xf32>
    %75 = tpu.concatenate %66, %67, %68, %69, %70, %71, %72, %73, %74 in 2 : vector<4x4x96xf32>, vector<4x4x96xf32>, vector<4x4x96xf32>, vector<4x4x96xf32>, vector<4x4x96xf32>, vector<4x4x96xf32>, vector<4x4x96xf32>, vector<4x4x96xf32>, vector<4x4x96xf32> -> vector<4x4x864xf32>
    %76 = vector.shape_cast %75 : vector<4x4x864xf32> to vector<16x864xf32>
    %cst_34 = arith.constant dense<0.000000e+00> : vector<16x96xf32>
    %77 = tpu.matmul %76, %59, %cst_34 {dimension_numbers = #tpu.dot_dimension_numbers<[1], [0], [0], [1], [0, 0, 1, 1], [], []>} : vector<16x864xf32>, vector<864x96xf32>, vector<16x96xf32> -> vector<16x96xf32>
    %78 = vector.broadcast %61 : vector<1x96xf32> to vector<16x96xf32>
    %79 = arith.addf %77, %78 : vector<16x96xf32>
    %cst_35 = arith.constant 0.000000e+00 : f32
    %80 = vector.broadcast %cst_35 : f32 to vector<16x96xf32>
    %81 = arith.cmpf oge, %79, %80 : vector<16x96xf32>
    %cst_36 = arith.constant 1.000000e-01 : f32
    %82 = vector.broadcast %cst_36 : f32 to vector<16x96xf32>
    %83 = arith.mulf %82, %79 : vector<16x96xf32>
    %84 = arith.select %81, %79, %83 : vector<16x96xi1>, vector<16x96xf32>
    %85 = vector.shape_cast %84 : vector<16x96xf32> to vector<4x4x96xf32>
    %c1 = arith.constant 1 : index
    %c0_37 = arith.constant 0 : index
    %c0_38 = arith.constant 0 : index
    %86 = vector.load %arg8[%c1, %c0_37, %c0_38] : memref<4x864x96xf32, #tpu.memory_space<vmem>>, vector<1x864x96xf32>
    %87 = vector.shape_cast %86 : vector<1x864x96xf32> to vector<864x96xf32>
    %c1_39 = arith.constant 1 : index
    %c0_40 = arith.constant 0 : index
    %c0_41 = arith.constant 0 : index
    %88 = vector.load %arg9[%c1_39, %c0_40, %c0_41] : memref<4x1x96xf32, #tpu.memory_space<vmem>>, vector<1x1x96xf32>
    %89 = vector.shape_cast %88 : vector<1x1x96xf32> to vector<1x96xf32>
    %cst_42 = arith.constant 0.000000e+00 : f32
    %90 = vector.broadcast %cst_42 : f32 to vector<4x1x96xf32>
    %91 = tpu.concatenate %90, %85, %90 in 1 : vector<4x1x96xf32>, vector<4x4x96xf32>, vector<4x1x96xf32> -> vector<4x6x96xf32>
    %cst_43 = arith.constant 0.000000e+00 : f32
    %92 = vector.broadcast %cst_43 : f32 to vector<1x6x96xf32>
    %93 = tpu.concatenate %92, %91, %92 in 0 : vector<1x6x96xf32>, vector<4x6x96xf32>, vector<1x6x96xf32> -> vector<6x6x96xf32>
    %94 = vector.extract_strided_slice %93 {offsets = [0, 0, 0], sizes = [4, 4, 96], strides = [1, 1, 1]} : vector<6x6x96xf32> to vector<4x4x96xf32>
    %95 = vector.extract_strided_slice %93 {offsets = [0, 1, 0], sizes = [4, 4, 96], strides = [1, 1, 1]} : vector<6x6x96xf32> to vector<4x4x96xf32>
    %96 = vector.extract_strided_slice %93 {offsets = [0, 2, 0], sizes = [4, 4, 96], strides = [1, 1, 1]} : vector<6x6x96xf32> to vector<4x4x96xf32>
    %97 = vector.extract_strided_slice %93 {offsets = [1, 0, 0], sizes = [4, 4, 96], strides = [1, 1, 1]} : vector<6x6x96xf32> to vector<4x4x96xf32>
    %98 = vector.extract_strided_slice %93 {offsets = [1, 1, 0], sizes = [4, 4, 96], strides = [1, 1, 1]} : vector<6x6x96xf32> to vector<4x4x96xf32>
    %99 = vector.extract_strided_slice %93 {offsets = [1, 2, 0], sizes = [4, 4, 96], strides = [1, 1, 1]} : vector<6x6x96xf32> to vector<4x4x96xf32>
    %100 = vector.extract_strided_slice %93 {offsets = [2, 0, 0], sizes = [4, 4, 96], strides = [1, 1, 1]} : vector<6x6x96xf32> to vector<4x4x96xf32>
    %101 = vector.extract_strided_slice %93 {offsets = [2, 1, 0], sizes = [4, 4, 96], strides = [1, 1, 1]} : vector<6x6x96xf32> to vector<4x4x96xf32>
    %102 = vector.extract_strided_slice %93 {offsets = [2, 2, 0], sizes = [4, 4, 96], strides = [1, 1, 1]} : vector<6x6x96xf32> to vector<4x4x96xf32>
    %103 = tpu.concatenate %94, %95, %96, %97, %98, %99, %100, %101, %102 in 2 : vector<4x4x96xf32>, vector<4x4x96xf32>, vector<4x4x96xf32>, vector<4x4x96xf32>, vector<4x4x96xf32>, vector<4x4x96xf32>, vector<4x4x96xf32>, vector<4x4x96xf32>, vector<4x4x96xf32> -> vector<4x4x864xf32>
    %104 = vector.shape_cast %103 : vector<4x4x864xf32> to vector<16x864xf32>
    %cst_44 = arith.constant dense<0.000000e+00> : vector<16x96xf32>
    %105 = tpu.matmul %104, %87, %cst_44 {dimension_numbers = #tpu.dot_dimension_numbers<[1], [0], [0], [1], [0, 0, 1, 1], [], []>} : vector<16x864xf32>, vector<864x96xf32>, vector<16x96xf32> -> vector<16x96xf32>
    %106 = vector.broadcast %89 : vector<1x96xf32> to vector<16x96xf32>
    %107 = arith.addf %105, %106 : vector<16x96xf32>
    %cst_45 = arith.constant 0.000000e+00 : f32
    %108 = vector.broadcast %cst_45 : f32 to vector<16x96xf32>
    %109 = arith.cmpf oge, %107, %108 : vector<16x96xf32>
    %cst_46 = arith.constant 1.000000e-01 : f32
    %110 = vector.broadcast %cst_46 : f32 to vector<16x96xf32>
    %111 = arith.mulf %110, %107 : vector<16x96xf32>
    %112 = arith.select %109, %107, %111 : vector<16x96xi1>, vector<16x96xf32>
    %113 = vector.shape_cast %112 : vector<16x96xf32> to vector<4x4x96xf32>
    %c2 = arith.constant 2 : index
    %c0_47 = arith.constant 0 : index
    %c0_48 = arith.constant 0 : index
    %114 = vector.load %arg8[%c2, %c0_47, %c0_48] : memref<4x864x96xf32, #tpu.memory_space<vmem>>, vector<1x864x96xf32>
    %115 = vector.shape_cast %114 : vector<1x864x96xf32> to vector<864x96xf32>
    %c2_49 = arith.constant 2 : index
    %c0_50 = arith.constant 0 : index
    %c0_51 = arith.constant 0 : index
    %116 = vector.load %arg9[%c2_49, %c0_50, %c0_51] : memref<4x1x96xf32, #tpu.memory_space<vmem>>, vector<1x1x96xf32>
    %117 = vector.shape_cast %116 : vector<1x1x96xf32> to vector<1x96xf32>
    %cst_52 = arith.constant 0.000000e+00 : f32
    %118 = vector.broadcast %cst_52 : f32 to vector<4x1x96xf32>
    %119 = tpu.concatenate %118, %113, %118 in 1 : vector<4x1x96xf32>, vector<4x4x96xf32>, vector<4x1x96xf32> -> vector<4x6x96xf32>
    %cst_53 = arith.constant 0.000000e+00 : f32
    %120 = vector.broadcast %cst_53 : f32 to vector<1x6x96xf32>
    %121 = tpu.concatenate %120, %119, %120 in 0 : vector<1x6x96xf32>, vector<4x6x96xf32>, vector<1x6x96xf32> -> vector<6x6x96xf32>
    %122 = vector.extract_strided_slice %121 {offsets = [0, 0, 0], sizes = [4, 4, 96], strides = [1, 1, 1]} : vector<6x6x96xf32> to vector<4x4x96xf32>
    %123 = vector.extract_strided_slice %121 {offsets = [0, 1, 0], sizes = [4, 4, 96], strides = [1, 1, 1]} : vector<6x6x96xf32> to vector<4x4x96xf32>
    %124 = vector.extract_strided_slice %121 {offsets = [0, 2, 0], sizes = [4, 4, 96], strides = [1, 1, 1]} : vector<6x6x96xf32> to vector<4x4x96xf32>
    %125 = vector.extract_strided_slice %121 {offsets = [1, 0, 0], sizes = [4, 4, 96], strides = [1, 1, 1]} : vector<6x6x96xf32> to vector<4x4x96xf32>
    %126 = vector.extract_strided_slice %121 {offsets = [1, 1, 0], sizes = [4, 4, 96], strides = [1, 1, 1]} : vector<6x6x96xf32> to vector<4x4x96xf32>
    %127 = vector.extract_strided_slice %121 {offsets = [1, 2, 0], sizes = [4, 4, 96], strides = [1, 1, 1]} : vector<6x6x96xf32> to vector<4x4x96xf32>
    %128 = vector.extract_strided_slice %121 {offsets = [2, 0, 0], sizes = [4, 4, 96], strides = [1, 1, 1]} : vector<6x6x96xf32> to vector<4x4x96xf32>
    %129 = vector.extract_strided_slice %121 {offsets = [2, 1, 0], sizes = [4, 4, 96], strides = [1, 1, 1]} : vector<6x6x96xf32> to vector<4x4x96xf32>
    %130 = vector.extract_strided_slice %121 {offsets = [2, 2, 0], sizes = [4, 4, 96], strides = [1, 1, 1]} : vector<6x6x96xf32> to vector<4x4x96xf32>
    %131 = tpu.concatenate %122, %123, %124, %125, %126, %127, %128, %129, %130 in 2 : vector<4x4x96xf32>, vector<4x4x96xf32>, vector<4x4x96xf32>, vector<4x4x96xf32>, vector<4x4x96xf32>, vector<4x4x96xf32>, vector<4x4x96xf32>, vector<4x4x96xf32>, vector<4x4x96xf32> -> vector<4x4x864xf32>
    %132 = vector.shape_cast %131 : vector<4x4x864xf32> to vector<16x864xf32>
    %cst_54 = arith.constant dense<0.000000e+00> : vector<16x96xf32>
    %133 = tpu.matmul %132, %115, %cst_54 {dimension_numbers = #tpu.dot_dimension_numbers<[1], [0], [0], [1], [0, 0, 1, 1], [], []>} : vector<16x864xf32>, vector<864x96xf32>, vector<16x96xf32> -> vector<16x96xf32>
    %134 = vector.broadcast %117 : vector<1x96xf32> to vector<16x96xf32>
    %135 = arith.addf %133, %134 : vector<16x96xf32>
    %cst_55 = arith.constant 0.000000e+00 : f32
    %136 = vector.broadcast %cst_55 : f32 to vector<16x96xf32>
    %137 = arith.cmpf oge, %135, %136 : vector<16x96xf32>
    %cst_56 = arith.constant 1.000000e-01 : f32
    %138 = vector.broadcast %cst_56 : f32 to vector<16x96xf32>
    %139 = arith.mulf %138, %135 : vector<16x96xf32>
    %140 = arith.select %137, %135, %139 : vector<16x96xi1>, vector<16x96xf32>
    %141 = vector.shape_cast %140 : vector<16x96xf32> to vector<4x4x96xf32>
    %c3 = arith.constant 3 : index
    %c0_57 = arith.constant 0 : index
    %c0_58 = arith.constant 0 : index
    %142 = vector.load %arg8[%c3, %c0_57, %c0_58] : memref<4x864x96xf32, #tpu.memory_space<vmem>>, vector<1x864x96xf32>
    %143 = vector.shape_cast %142 : vector<1x864x96xf32> to vector<864x96xf32>
    %c3_59 = arith.constant 3 : index
    %c0_60 = arith.constant 0 : index
    %c0_61 = arith.constant 0 : index
    %144 = vector.load %arg9[%c3_59, %c0_60, %c0_61] : memref<4x1x96xf32, #tpu.memory_space<vmem>>, vector<1x1x96xf32>
    %145 = vector.shape_cast %144 : vector<1x1x96xf32> to vector<1x96xf32>
    %cst_62 = arith.constant 0.000000e+00 : f32
    %146 = vector.broadcast %cst_62 : f32 to vector<4x1x96xf32>
    %147 = tpu.concatenate %146, %141, %146 in 1 : vector<4x1x96xf32>, vector<4x4x96xf32>, vector<4x1x96xf32> -> vector<4x6x96xf32>
    %cst_63 = arith.constant 0.000000e+00 : f32
    %148 = vector.broadcast %cst_63 : f32 to vector<1x6x96xf32>
    %149 = tpu.concatenate %148, %147, %148 in 0 : vector<1x6x96xf32>, vector<4x6x96xf32>, vector<1x6x96xf32> -> vector<6x6x96xf32>
    %150 = vector.extract_strided_slice %149 {offsets = [0, 0, 0], sizes = [4, 4, 96], strides = [1, 1, 1]} : vector<6x6x96xf32> to vector<4x4x96xf32>
    %151 = vector.extract_strided_slice %149 {offsets = [0, 1, 0], sizes = [4, 4, 96], strides = [1, 1, 1]} : vector<6x6x96xf32> to vector<4x4x96xf32>
    %152 = vector.extract_strided_slice %149 {offsets = [0, 2, 0], sizes = [4, 4, 96], strides = [1, 1, 1]} : vector<6x6x96xf32> to vector<4x4x96xf32>
    %153 = vector.extract_strided_slice %149 {offsets = [1, 0, 0], sizes = [4, 4, 96], strides = [1, 1, 1]} : vector<6x6x96xf32> to vector<4x4x96xf32>
    %154 = vector.extract_strided_slice %149 {offsets = [1, 1, 0], sizes = [4, 4, 96], strides = [1, 1, 1]} : vector<6x6x96xf32> to vector<4x4x96xf32>
    %155 = vector.extract_strided_slice %149 {offsets = [1, 2, 0], sizes = [4, 4, 96], strides = [1, 1, 1]} : vector<6x6x96xf32> to vector<4x4x96xf32>
    %156 = vector.extract_strided_slice %149 {offsets = [2, 0, 0], sizes = [4, 4, 96], strides = [1, 1, 1]} : vector<6x6x96xf32> to vector<4x4x96xf32>
    %157 = vector.extract_strided_slice %149 {offsets = [2, 1, 0], sizes = [4, 4, 96], strides = [1, 1, 1]} : vector<6x6x96xf32> to vector<4x4x96xf32>
    %158 = vector.extract_strided_slice %149 {offsets = [2, 2, 0], sizes = [4, 4, 96], strides = [1, 1, 1]} : vector<6x6x96xf32> to vector<4x4x96xf32>
    %159 = tpu.concatenate %150, %151, %152, %153, %154, %155, %156, %157, %158 in 2 : vector<4x4x96xf32>, vector<4x4x96xf32>, vector<4x4x96xf32>, vector<4x4x96xf32>, vector<4x4x96xf32>, vector<4x4x96xf32>, vector<4x4x96xf32>, vector<4x4x96xf32>, vector<4x4x96xf32> -> vector<4x4x864xf32>
    %160 = vector.shape_cast %159 : vector<4x4x864xf32> to vector<16x864xf32>
    %cst_64 = arith.constant dense<0.000000e+00> : vector<16x96xf32>
    %161 = tpu.matmul %160, %143, %cst_64 {dimension_numbers = #tpu.dot_dimension_numbers<[1], [0], [0], [1], [0, 0, 1, 1], [], []>} : vector<16x864xf32>, vector<864x96xf32>, vector<16x96xf32> -> vector<16x96xf32>
    %162 = vector.broadcast %145 : vector<1x96xf32> to vector<16x96xf32>
    %163 = arith.addf %161, %162 : vector<16x96xf32>
    %cst_65 = arith.constant 0.000000e+00 : f32
    %164 = vector.broadcast %cst_65 : f32 to vector<16x96xf32>
    %165 = arith.cmpf oge, %163, %164 : vector<16x96xf32>
    %cst_66 = arith.constant 1.000000e-01 : f32
    %166 = vector.broadcast %cst_66 : f32 to vector<16x96xf32>
    %167 = arith.mulf %166, %163 : vector<16x96xf32>
    %168 = arith.select %165, %163, %167 : vector<16x96xi1>, vector<16x96xf32>
    %169 = vector.shape_cast %168 : vector<16x96xf32> to vector<4x4x96xf32>
    %170 = arith.addf %169, %57 : vector<4x4x96xf32>
    %171 = vector.shape_cast %170 : vector<4x4x96xf32> to vector<16x96xf32>
    %c0_67 = arith.constant 0 : index
    %c0_68 = arith.constant 0 : index
    %c0_69 = arith.constant 0 : index
    %172 = vector.load %arg10[%c0_67, %c0_68, %c0_69] : memref<16x96x5xf32, #tpu.memory_space<vmem>>, vector<1x96x5xf32>
    %173 = vector.shape_cast %172 : vector<1x96x5xf32> to vector<96x5xf32>
    %cst_70 = arith.constant dense<0.000000e+00> : vector<16x5xf32>
    %174 = tpu.matmul %171, %173, %cst_70 {dimension_numbers = #tpu.dot_dimension_numbers<[1], [0], [0], [1], [0, 0, 1, 1], [], []>} : vector<16x96xf32>, vector<96x5xf32>, vector<16x5xf32> -> vector<16x5xf32>
    %c1_71 = arith.constant 1 : index
    %c0_72 = arith.constant 0 : index
    %c0_73 = arith.constant 0 : index
    %175 = vector.load %arg10[%c1_71, %c0_72, %c0_73] : memref<16x96x5xf32, #tpu.memory_space<vmem>>, vector<1x96x5xf32>
    %176 = vector.shape_cast %175 : vector<1x96x5xf32> to vector<96x5xf32>
    %cst_74 = arith.constant dense<0.000000e+00> : vector<16x5xf32>
    %177 = tpu.matmul %171, %176, %cst_74 {dimension_numbers = #tpu.dot_dimension_numbers<[1], [0], [0], [1], [0, 0, 1, 1], [], []>} : vector<16x96xf32>, vector<96x5xf32>, vector<16x5xf32> -> vector<16x5xf32>
    %c2_75 = arith.constant 2 : index
    %c0_76 = arith.constant 0 : index
    %c0_77 = arith.constant 0 : index
    %178 = vector.load %arg10[%c2_75, %c0_76, %c0_77] : memref<16x96x5xf32, #tpu.memory_space<vmem>>, vector<1x96x5xf32>
    %179 = vector.shape_cast %178 : vector<1x96x5xf32> to vector<96x5xf32>
    %cst_78 = arith.constant dense<0.000000e+00> : vector<16x5xf32>
    %180 = tpu.matmul %171, %179, %cst_78 {dimension_numbers = #tpu.dot_dimension_numbers<[1], [0], [0], [1], [0, 0, 1, 1], [], []>} : vector<16x96xf32>, vector<96x5xf32>, vector<16x5xf32> -> vector<16x5xf32>
    %c3_79 = arith.constant 3 : index
    %c0_80 = arith.constant 0 : index
    %c0_81 = arith.constant 0 : index
    %181 = vector.load %arg10[%c3_79, %c0_80, %c0_81] : memref<16x96x5xf32, #tpu.memory_space<vmem>>, vector<1x96x5xf32>
    %182 = vector.shape_cast %181 : vector<1x96x5xf32> to vector<96x5xf32>
    %cst_82 = arith.constant dense<0.000000e+00> : vector<16x5xf32>
    %183 = tpu.matmul %171, %182, %cst_82 {dimension_numbers = #tpu.dot_dimension_numbers<[1], [0], [0], [1], [0, 0, 1, 1], [], []>} : vector<16x96xf32>, vector<96x5xf32>, vector<16x5xf32> -> vector<16x5xf32>
    %c4 = arith.constant 4 : index
    %c0_83 = arith.constant 0 : index
    %c0_84 = arith.constant 0 : index
    %184 = vector.load %arg10[%c4, %c0_83, %c0_84] : memref<16x96x5xf32, #tpu.memory_space<vmem>>, vector<1x96x5xf32>
    %185 = vector.shape_cast %184 : vector<1x96x5xf32> to vector<96x5xf32>
    %cst_85 = arith.constant dense<0.000000e+00> : vector<16x5xf32>
    %186 = tpu.matmul %171, %185, %cst_85 {dimension_numbers = #tpu.dot_dimension_numbers<[1], [0], [0], [1], [0, 0, 1, 1], [], []>} : vector<16x96xf32>, vector<96x5xf32>, vector<16x5xf32> -> vector<16x5xf32>
    %c5 = arith.constant 5 : index
    %c0_86 = arith.constant 0 : index
    %c0_87 = arith.constant 0 : index
    %187 = vector.load %arg10[%c5, %c0_86, %c0_87] : memref<16x96x5xf32, #tpu.memory_space<vmem>>, vector<1x96x5xf32>
    %188 = vector.shape_cast %187 : vector<1x96x5xf32> to vector<96x5xf32>
    %cst_88 = arith.constant dense<0.000000e+00> : vector<16x5xf32>
    %189 = tpu.matmul %171, %188, %cst_88 {dimension_numbers = #tpu.dot_dimension_numbers<[1], [0], [0], [1], [0, 0, 1, 1], [], []>} : vector<16x96xf32>, vector<96x5xf32>, vector<16x5xf32> -> vector<16x5xf32>
    %c6 = arith.constant 6 : index
    %c0_89 = arith.constant 0 : index
    %c0_90 = arith.constant 0 : index
    %190 = vector.load %arg10[%c6, %c0_89, %c0_90] : memref<16x96x5xf32, #tpu.memory_space<vmem>>, vector<1x96x5xf32>
    %191 = vector.shape_cast %190 : vector<1x96x5xf32> to vector<96x5xf32>
    %cst_91 = arith.constant dense<0.000000e+00> : vector<16x5xf32>
    %192 = tpu.matmul %171, %191, %cst_91 {dimension_numbers = #tpu.dot_dimension_numbers<[1], [0], [0], [1], [0, 0, 1, 1], [], []>} : vector<16x96xf32>, vector<96x5xf32>, vector<16x5xf32> -> vector<16x5xf32>
    %c7 = arith.constant 7 : index
    %c0_92 = arith.constant 0 : index
    %c0_93 = arith.constant 0 : index
    %193 = vector.load %arg10[%c7, %c0_92, %c0_93] : memref<16x96x5xf32, #tpu.memory_space<vmem>>, vector<1x96x5xf32>
    %194 = vector.shape_cast %193 : vector<1x96x5xf32> to vector<96x5xf32>
    %cst_94 = arith.constant dense<0.000000e+00> : vector<16x5xf32>
    %195 = tpu.matmul %171, %194, %cst_94 {dimension_numbers = #tpu.dot_dimension_numbers<[1], [0], [0], [1], [0, 0, 1, 1], [], []>} : vector<16x96xf32>, vector<96x5xf32>, vector<16x5xf32> -> vector<16x5xf32>
    %c8 = arith.constant 8 : index
    %c0_95 = arith.constant 0 : index
    %c0_96 = arith.constant 0 : index
    %196 = vector.load %arg10[%c8, %c0_95, %c0_96] : memref<16x96x5xf32, #tpu.memory_space<vmem>>, vector<1x96x5xf32>
    %197 = vector.shape_cast %196 : vector<1x96x5xf32> to vector<96x5xf32>
    %cst_97 = arith.constant dense<0.000000e+00> : vector<16x5xf32>
    %198 = tpu.matmul %171, %197, %cst_97 {dimension_numbers = #tpu.dot_dimension_numbers<[1], [0], [0], [1], [0, 0, 1, 1], [], []>} : vector<16x96xf32>, vector<96x5xf32>, vector<16x5xf32> -> vector<16x5xf32>
    %c9 = arith.constant 9 : index
    %c0_98 = arith.constant 0 : index
    %c0_99 = arith.constant 0 : index
    %199 = vector.load %arg10[%c9, %c0_98, %c0_99] : memref<16x96x5xf32, #tpu.memory_space<vmem>>, vector<1x96x5xf32>
    %200 = vector.shape_cast %199 : vector<1x96x5xf32> to vector<96x5xf32>
    %cst_100 = arith.constant dense<0.000000e+00> : vector<16x5xf32>
    %201 = tpu.matmul %171, %200, %cst_100 {dimension_numbers = #tpu.dot_dimension_numbers<[1], [0], [0], [1], [0, 0, 1, 1], [], []>} : vector<16x96xf32>, vector<96x5xf32>, vector<16x5xf32> -> vector<16x5xf32>
    %c10 = arith.constant 10 : index
    %c0_101 = arith.constant 0 : index
    %c0_102 = arith.constant 0 : index
    %202 = vector.load %arg10[%c10, %c0_101, %c0_102] : memref<16x96x5xf32, #tpu.memory_space<vmem>>, vector<1x96x5xf32>
    %203 = vector.shape_cast %202 : vector<1x96x5xf32> to vector<96x5xf32>
    %cst_103 = arith.constant dense<0.000000e+00> : vector<16x5xf32>
    %204 = tpu.matmul %171, %203, %cst_103 {dimension_numbers = #tpu.dot_dimension_numbers<[1], [0], [0], [1], [0, 0, 1, 1], [], []>} : vector<16x96xf32>, vector<96x5xf32>, vector<16x5xf32> -> vector<16x5xf32>
    %c11 = arith.constant 11 : index
    %c0_104 = arith.constant 0 : index
    %c0_105 = arith.constant 0 : index
    %205 = vector.load %arg10[%c11, %c0_104, %c0_105] : memref<16x96x5xf32, #tpu.memory_space<vmem>>, vector<1x96x5xf32>
    %206 = vector.shape_cast %205 : vector<1x96x5xf32> to vector<96x5xf32>
    %cst_106 = arith.constant dense<0.000000e+00> : vector<16x5xf32>
    %207 = tpu.matmul %171, %206, %cst_106 {dimension_numbers = #tpu.dot_dimension_numbers<[1], [0], [0], [1], [0, 0, 1, 1], [], []>} : vector<16x96xf32>, vector<96x5xf32>, vector<16x5xf32> -> vector<16x5xf32>
    %c12 = arith.constant 12 : index
    %c0_107 = arith.constant 0 : index
    %c0_108 = arith.constant 0 : index
    %208 = vector.load %arg10[%c12, %c0_107, %c0_108] : memref<16x96x5xf32, #tpu.memory_space<vmem>>, vector<1x96x5xf32>
    %209 = vector.shape_cast %208 : vector<1x96x5xf32> to vector<96x5xf32>
    %cst_109 = arith.constant dense<0.000000e+00> : vector<16x5xf32>
    %210 = tpu.matmul %171, %209, %cst_109 {dimension_numbers = #tpu.dot_dimension_numbers<[1], [0], [0], [1], [0, 0, 1, 1], [], []>} : vector<16x96xf32>, vector<96x5xf32>, vector<16x5xf32> -> vector<16x5xf32>
    %c13 = arith.constant 13 : index
    %c0_110 = arith.constant 0 : index
    %c0_111 = arith.constant 0 : index
    %211 = vector.load %arg10[%c13, %c0_110, %c0_111] : memref<16x96x5xf32, #tpu.memory_space<vmem>>, vector<1x96x5xf32>
    %212 = vector.shape_cast %211 : vector<1x96x5xf32> to vector<96x5xf32>
    %cst_112 = arith.constant dense<0.000000e+00> : vector<16x5xf32>
    %213 = tpu.matmul %171, %212, %cst_112 {dimension_numbers = #tpu.dot_dimension_numbers<[1], [0], [0], [1], [0, 0, 1, 1], [], []>} : vector<16x96xf32>, vector<96x5xf32>, vector<16x5xf32> -> vector<16x5xf32>
    %c14 = arith.constant 14 : index
    %c0_113 = arith.constant 0 : index
    %c0_114 = arith.constant 0 : index
    %214 = vector.load %arg10[%c14, %c0_113, %c0_114] : memref<16x96x5xf32, #tpu.memory_space<vmem>>, vector<1x96x5xf32>
    %215 = vector.shape_cast %214 : vector<1x96x5xf32> to vector<96x5xf32>
    %cst_115 = arith.constant dense<0.000000e+00> : vector<16x5xf32>
    %216 = tpu.matmul %171, %215, %cst_115 {dimension_numbers = #tpu.dot_dimension_numbers<[1], [0], [0], [1], [0, 0, 1, 1], [], []>} : vector<16x96xf32>, vector<96x5xf32>, vector<16x5xf32> -> vector<16x5xf32>
    %c15 = arith.constant 15 : index
    %c0_116 = arith.constant 0 : index
    %c0_117 = arith.constant 0 : index
    %217 = vector.load %arg10[%c15, %c0_116, %c0_117] : memref<16x96x5xf32, #tpu.memory_space<vmem>>, vector<1x96x5xf32>
    %218 = vector.shape_cast %217 : vector<1x96x5xf32> to vector<96x5xf32>
    %cst_118 = arith.constant dense<0.000000e+00> : vector<16x5xf32>
    %219 = tpu.matmul %171, %218, %cst_118 {dimension_numbers = #tpu.dot_dimension_numbers<[1], [0], [0], [1], [0, 0, 1, 1], [], []>} : vector<16x96xf32>, vector<96x5xf32>, vector<16x5xf32> -> vector<16x5xf32>
    %220 = tpu.concatenate %174, %177, %180, %183, %186, %189, %192, %195, %198, %201, %204, %207, %210, %213, %216, %219 in 0 : vector<16x5xf32>, vector<16x5xf32>, vector<16x5xf32>, vector<16x5xf32>, vector<16x5xf32>, vector<16x5xf32>, vector<16x5xf32>, vector<16x5xf32>, vector<16x5xf32>, vector<16x5xf32>, vector<16x5xf32>, vector<16x5xf32>, vector<16x5xf32>, vector<16x5xf32>, vector<16x5xf32>, vector<16x5xf32> -> vector<256x5xf32>
    %c0_119 = arith.constant 0 : index
    %c0_120 = arith.constant 0 : index
    %221 = vector.load %arg12[%c0_119, %c0_120] : memref<256x256xf32, #tpu.memory_space<vmem>>, vector<256x256xf32>
    %cst_121 = arith.constant dense<0.000000e+00> : vector<256x5xf32>
    %222 = tpu.matmul %221, %220, %cst_121 {dimension_numbers = #tpu.dot_dimension_numbers<[1], [0], [0], [1], [0, 0, 1, 1], [], []>} : vector<256x256xf32>, vector<256x5xf32>, vector<256x5xf32> -> vector<256x5xf32>
    %c0_122 = arith.constant 0 : index
    %c0_123 = arith.constant 0 : index
    %223 = vector.load %arg11[%c0_122, %c0_123] : memref<1x5xf32, #tpu.memory_space<vmem>>, vector<1x5xf32>
    %224 = vector.broadcast %223 : vector<1x5xf32> to vector<256x5xf32>
    %225 = arith.addf %222, %224 : vector<256x5xf32>
    %226 = vector.shape_cast %225 : vector<256x5xf32> to vector<16x16x5xf32>
    %c0_124 = arith.constant 0 : index
    %c0_125 = arith.constant 0 : index
    %c0_126 = arith.constant 0 : index
    %c0_127 = arith.constant 0 : index
    %227 = vector.load %arg13[%c0_124, %c0_125, %c0_126, %c0_127] : memref<1x16x16x5xf32, #tpu.memory_space<vmem>>, vector<1x16x16x5xf32>
    %228 = vector.shape_cast %227 : vector<1x16x16x5xf32> to vector<16x16x5xf32>
    %229 = vector.shape_cast %226 : vector<16x16x5xf32> to vector<1x16x16x5xf32>
    tpu.vector_store %arg13[%c0_124, %c0_125, %c0_126, %c0_127], %229 {strides = array<i32>} : memref<1x16x16x5xf32, #tpu.memory_space<vmem>>, vector<1x16x16x5xf32>,
    return
  }
  func.func @transform_0(%arg0: i32) -> (i32, i32, i32, i32) {
    %c0_i32 = arith.constant 0 : i32
    %c0_i32_0 = arith.constant 0 : i32
    %c0_i32_1 = arith.constant 0 : i32
    %c0_i32_2 = arith.constant 0 : i32
    return %arg0, %c0_i32, %c0_i32_0, %c0_i32_1 : i32, i32, i32, i32
  }
  func.func @transform_1(%arg0: i32) -> (i32, i32) {
    %c0_i32 = arith.constant 0 : i32
    %c0_i32_0 = arith.constant 0 : i32
    %c0_i32_1 = arith.constant 0 : i32
    return %c0_i32, %c0_i32_0 : i32, i32
  }
  func.func @transform_2(%arg0: i32) -> (i32, i32) {
    %c0_i32 = arith.constant 0 : i32
    %c0_i32_0 = arith.constant 0 : i32
    %c0_i32_1 = arith.constant 0 : i32
    return %c0_i32, %c0_i32_0 : i32, i32
  }
  func.func @transform_3(%arg0: i32) -> (i32, i32) {
    %c0_i32 = arith.constant 0 : i32
    %c0_i32_0 = arith.constant 0 : i32
    %c0_i32_1 = arith.constant 0 : i32
    return %c0_i32, %c0_i32_0 : i32, i32
  }
  func.func @transform_4(%arg0: i32) -> (i32, i32) {
    %c0_i32 = arith.constant 0 : i32
    %c0_i32_0 = arith.constant 0 : i32
    %c0_i32_1 = arith.constant 0 : i32
    return %c0_i32, %c0_i32_0 : i32, i32
  }
  func.func @transform_5(%arg0: i32) -> (i32, i32) {
    %c0_i32 = arith.constant 0 : i32
    %c0_i32_0 = arith.constant 0 : i32
    %c0_i32_1 = arith.constant 0 : i32
    return %c0_i32, %c0_i32_0 : i32, i32
  }
  func.func @transform_6(%arg0: i32) -> (i32, i32) {
    %c0_i32 = arith.constant 0 : i32
    %c0_i32_0 = arith.constant 0 : i32
    %c0_i32_1 = arith.constant 0 : i32
    return %c0_i32, %c0_i32_0 : i32, i32
  }
  func.func @transform_7(%arg0: i32) -> (i32, i32, i32) {
    %c0_i32 = arith.constant 0 : i32
    %c0_i32_0 = arith.constant 0 : i32
    %c0_i32_1 = arith.constant 0 : i32
    %c0_i32_2 = arith.constant 0 : i32
    return %c0_i32, %c0_i32_0, %c0_i32_1 : i32, i32, i32
  }
  func.func @transform_8(%arg0: i32) -> (i32, i32, i32) {
    %c0_i32 = arith.constant 0 : i32
    %c0_i32_0 = arith.constant 0 : i32
    %c0_i32_1 = arith.constant 0 : i32
    %c0_i32_2 = arith.constant 0 : i32
    return %c0_i32, %c0_i32_0, %c0_i32_1 : i32, i32, i32
  }
  func.func @transform_9(%arg0: i32) -> (i32, i32, i32) {
    %c0_i32 = arith.constant 0 : i32
    %c0_i32_0 = arith.constant 0 : i32
    %c0_i32_1 = arith.constant 0 : i32
    %c0_i32_2 = arith.constant 0 : i32
    return %c0_i32, %c0_i32_0, %c0_i32_1 : i32, i32, i32
  }
  func.func @transform_10(%arg0: i32) -> (i32, i32) {
    %c0_i32 = arith.constant 0 : i32
    %c0_i32_0 = arith.constant 0 : i32
    %c0_i32_1 = arith.constant 0 : i32
    return %c0_i32, %c0_i32_0 : i32, i32
  }
  func.func @transform_11(%arg0: i32) -> (i32, i32) {
    %c0_i32 = arith.constant 0 : i32
    %c0_i32_0 = arith.constant 0 : i32
    %c0_i32_1 = arith.constant 0 : i32
    return %c0_i32, %c0_i32_0 : i32, i32
  }
  func.func @transform_12(%arg0: i32) -> (i32, i32, i32, i32) {
    %c0_i32 = arith.constant 0 : i32
    %c0_i32_0 = arith.constant 0 : i32
    %c0_i32_1 = arith.constant 0 : i32
    %c0_i32_2 = arith.constant 0 : i32
    return %arg0, %c0_i32, %c0_i32_0, %c0_i32_1 : i32, i32, i32, i32
  }
}

</mosaic_0001>

<llo_original>
// kernel: _lambda_.1
$region0: #{_lambda_.1}
  #allocation0 [shape = 'u32[]', space=smem, size = 0x4, offset = 0x4, fixed_abs, tag = 'smem constant byte address 0x4 - core index']
  #allocation1 [shape = 'u32[144,128]{1,0:T(1,128)}', space=vmem, size = 0x12000, scoped, tag = 'internal scratch']
  %s0 = inlined_call_operand.vmem [shape: f32[2,16,16,10], index: 0, kind: input, shape index: {}]
  %s1 = inlined_call_operand.vmem [shape: f32[90,48], index: 1, kind: input, shape index: {}]
  %s2 = inlined_call_operand.vmem [shape: f32[1,48], index: 2, kind: input, shape index: {}]
  %s3 = inlined_call_operand.vmem [shape: f32[64,256], index: 3, kind: input, shape index: {}]
  %s4 = inlined_call_operand.vmem [shape: f32[432,96], index: 4, kind: input, shape index: {}]
  %s5 = inlined_call_operand.vmem [shape: f32[1,96], index: 5, kind: input, shape index: {}]
  %s6 = inlined_call_operand.vmem [shape: f32[16,64], index: 6, kind: input, shape index: {}]
  %s7 = inlined_call_operand.vmem [shape: f32[4,864,96], index: 7, kind: input, shape index: {}]
  %s8 = inlined_call_operand.vmem [shape: f32[4,1,96], index: 8, kind: input, shape index: {}]
  %s9 = inlined_call_operand.vmem [shape: f32[16,96,5], index: 9, kind: input, shape index: {}]
  %s10 = inlined_call_operand.vmem [shape: f32[1,5], index: 10, kind: input, shape index: {}]
  %s11 = inlined_call_operand.vmem [shape: f32[256,256], index: 11, kind: input, shape index: {}]
  %s12 = inlined_call_operand.vmem [shape: f32[2,16,16,5], index: 12, kind: output, shape index: {}]
  %s13 = sld [smem:[#allocation0]]
  $region81: #{_lambda_.1} parent=0
    _
  %s15 = ssub.s32 1, %s13
  %s16 = scalar_select 0, %s15, %s13
  loop: start=0, step=1, limit=4
  $region2: #{_lambda_.1} parent=0 // loop_pre_header
    _
  $region3: #{_lambda_.1} parent=0 // loop_header
    %s18 = sphi 0, %s22
    %p19 = scmp.ge.s32.totalorder %s18, 4
    %s28 = sphi 0, %s30
    %s31 = sphi 0, %s28
    %s32 = sphi 0, %s31
    %s48 = sphi 0, %s32
    %s52 = sphi 0, %s52
    %s54 = sphi 0, %s52
    %s55 = sphi 0, %s54
    %s69 = sphi 0, %s55
    %s73 = sphi 0, %s73
    %s75 = sphi 0, %s73
    %s76 = sphi 0, %s75
    %s90 = sphi 0, %s76
    %s94 = sphi 0, %s94
    %s96 = sphi 0, %s94
    %s97 = sphi 0, %s96
    %s111 = sphi 0, %s97
    %s115 = sphi 0, %s115
    %s117 = sphi 0, %s115
    %s118 = sphi 0, %s117
    %s132 = sphi 0, %s118
    %s136 = sphi 0, %s136
    %s138 = sphi 0, %s136
    %s139 = sphi 0, %s138
    %s153 = sphi 0, %s139
    %s157 = sphi 0, %s157
    %s159 = sphi 0, %s157
    %s160 = sphi 0, %s159
    %s174 = sphi 0, %s160
    %s178 = sphi 0, %s178
    %s180 = sphi 0, %s178
    %s181 = sphi 0, %s180
    %s195 = sphi 0, %s181
    %s199 = sphi 0, %s199
    %s201 = sphi 0, %s199
    %s202 = sphi 0, %s201
    %s216 = sphi 0, %s202
    %s220 = sphi 0, %s220
    %s222 = sphi 0, %s220
    %s223 = sphi 0, %s222
    %s237 = sphi 0, %s223
    %s241 = sphi 0, %s241
    %s243 = sphi 0, %s241
    %s244 = sphi 0, %s243
    %s258 = sphi 0, %s244
    %s262 = sphi 0, %s262
    %s264 = sphi 0, %s262
    %s265 = sphi 0, %s264
    %s279 = sphi 0, %s265
    %s285 = sphi 0, %s287
    %s288 = sphi 0, %s285
    %s289 = sphi 0, %s288
    %s305 = sphi 0, %s289
  $region4: #{_lambda_.1} parent=0 // loop_header_branch
    %21 = sbr.rel (%p19) target = $region8
  $region5: #{_lambda_.1} parent=0 // loop_body
    %s23 = ssub.s32 %s18, 1
    %s24 = ssub.s32 %s18, 2
    %s25 = sadd.s32 %s18, 1
    %s26 = ssub.s32 %s18, %s25
    %p27 = scmp.eq.s32.totalorder %s26, 0
    %s29 = sadd.s32 %s28, 1
    %s30 = scalar_select %p27, %s28, %s29
    %p33 = pneg %p27
    %p34 = scmp.eq.s32.totalorder %s18, 1
    %p35 = por %p33, %p34
    %p36 = scmp.ne.s32.totalorder %s28, %s31
    %p37 = scmp.eq.s32.totalorder %s18, 0
    %p38 = por %p36, %p37
    %p39 = scmp.ne.s32.totalorder %s28, %s31
    %p40 = scmp.eq.s32.totalorder %s23, 1
    %p41 = por %p39, %p40
    %p42 = scmp.ne.s32.totalorder %s31, %s32
    %p43 = scmp.eq.s32.totalorder %s23, 0
    %p44 = por %p42, %p43
    %p45 = scmp.ne.s32.totalorder %s31, %s32
    %p46 = scmp.eq.s32.totalorder %s24, 1
    %p47 = por %p45, %p46
    %p49 = scmp.ne.s32.totalorder %s32, %s48
    %p50 = scmp.eq.s32.totalorder %s24, 0
    %p51 = por %p49, %p50
    %s53 = sadd.s32 %s52, 1
    %p56 = scmp.eq.s32.totalorder %s18, 1
    %p57 = scmp.ne.s32.totalorder %s52, %s54
    %p58 = scmp.eq.s32.totalorder %s18, 0
    %p59 = por %p57, %p58
    %p60 = scmp.ne.s32.totalorder %s52, %s54
    %p61 = scmp.eq.s32.totalorder %s23, 1
    %p62 = por %p60, %p61
    %p63 = scmp.ne.s32.totalorder %s54, %s55
    %p64 = scmp.eq.s32.totalorder %s23, 0
    %p65 = por %p63, %p64
    %p66 = scmp.ne.s32.totalorder %s54, %s55
    %p67 = scmp.eq.s32.totalorder %s24, 1
    %p68 = por %p66, %p67
    %p70 = scmp.ne.s32.totalorder %s55, %s69
    %p71 = scmp.eq.s32.totalorder %s24, 0
    %p72 = por %p70, %p71
    %s74 = sadd.s32 %s73, 1
    %p77 = scmp.eq.s32.totalorder %s18, 1
    %p78 = scmp.ne.s32.totalorder %s73, %s75
    %p79 = scmp.eq.s32.totalorder %s18, 0
    %p80 = por %p78, %p79
    %p81 = scmp.ne.s32.totalorder %s73, %s75
    %p82 = scmp.eq.s32.totalorder %s23, 1
    %p83 = por %p81, %p82
    %p84 = scmp.ne.s32.totalorder %s75, %s76
    %p85 = scmp.eq.s32.totalorder %s23, 0
    %p86 = por %p84, %p85
    %p87 = scmp.ne.s32.totalorder %s75, %s76
    %p88 = scmp.eq.s32.totalorder %s24, 1
    %p89 = por %p87, %p88
    %p91 = scmp.ne.s32.totalorder %s76, %s90
    %p92 = scmp.eq.s32.totalorder %s24, 0
    %p93 = por %p91, %p92
    %s95 = sadd.s32 %s94, 1
    %p98 = scmp.eq.s32.totalorder %s18, 1
    %p99 = scmp.ne.s32.totalorder %s94, %s96
    %p100 = scmp.eq.s32.totalorder %s18, 0
    %p101 = por %p99, %p100
    %p102 = scmp.ne.s32.totalorder %s94, %s96
    %p103 = scmp.eq.s32.totalorder %s23, 1
    %p104 = por %p102, %p103
    %p105 = scmp.ne.s32.totalorder %s96, %s97
    %p106 = scmp.eq.s32.totalorder %s23, 0
    %p107 = por %p105, %p106
    %p108 = scmp.ne.s32.totalorder %s96, %s97
    %p109 = scmp.eq.s32.totalorder %s24, 1
    %p110 = por %p108, %p109
    %p112 = scmp.ne.s32.totalorder %s97, %s111
    %p113 = scmp.eq.s32.totalorder %s24, 0
    %p114 = por %p112, %p113
    %s116 = sadd.s32 %s115, 1
    %p119 = scmp.eq.s32.totalorder %s18, 1
    %p120 = scmp.ne.s32.totalorder %s115, %s117
    %p121 = scmp.eq.s32.totalorder %s18, 0
    %p122 = por %p120, %p121
    %p123 = scmp.ne.s32.totalorder %s115, %s117
    %p124 = scmp.eq.s32.totalorder %s23, 1
    %p125 = por %p123, %p124
    %p126 = scmp.ne.s32.totalorder %s117, %s118
    %p127 = scmp.eq.s32.totalorder %s23, 0
    %p128 = por %p126, %p127
    %p129 = scmp.ne.s32.totalorder %s117, %s118
    %p130 = scmp.eq.s32.totalorder %s24, 1
    %p131 = por %p129, %p130
    %p133 = scmp.ne.s32.totalorder %s118, %s132
    %p134 = scmp.eq.s32.totalorder %s24, 0
    %p135 = por %p133, %p134
    %s137 = sadd.s32 %s136, 1
    %p140 = scmp.eq.s32.totalorder %s18, 1
    %p141 = scmp.ne.s32.totalorder %s136, %s138
    %p142 = scmp.eq.s32.totalorder %s18, 0
    %p143 = por %p141, %p142
    %p144 = scmp.ne.s32.totalorder %s136, %s138
    %p145 = scmp.eq.s32.totalorder %s23, 1
    %p146 = por %p144, %p145
    %p147 = scmp.ne.s32.totalorder %s138, %s139
    %p148 = scmp.eq.s32.totalorder %s23, 0
    %p149 = por %p147, %p148
    %p150 = scmp.ne.s32.totalorder %s138, %s139
    %p151 = scmp.eq.s32.totalorder %s24, 1
    %p152 = por %p150, %p151
    %p154 = scmp.ne.s32.totalorder %s139, %s153
    %p155 = scmp.eq.s32.totalorder %s24, 0
    %p156 = por %p154, %p155
    %s158 = sadd.s32 %s157, 1
    %p161 = scmp.eq.s32.totalorder %s18, 1
    %p162 = scmp.ne.s32.totalorder %s157, %s159
    %p163 = scmp.eq.s32.totalorder %s18, 0
    %p164 = por %p162, %p163
    %p165 = scmp.ne.s32.totalorder %s157, %s159
    %p166 = scmp.eq.s32.totalorder %s23, 1
    %p167 = por %p165, %p166
    %p168 = scmp.ne.s32.totalorder %s159, %s160
    %p169 = scmp.eq.s32.totalorder %s23, 0
    %p170 = por %p168, %p169
    %p171 = scmp.ne.s32.totalorder %s159, %s160
    %p172 = scmp.eq.s32.totalorder %s24, 1
    %p173 = por %p171, %p172
    %p175 = scmp.ne.s32.totalorder %s160, %s174
    %p176 = scmp.eq.s32.totalorder %s24, 0
    %p177 = por %p175, %p176
    %s179 = sadd.s32 %s178, 1
    %p182 = scmp.eq.s32.totalorder %s18, 1
    %p183 = scmp.ne.s32.totalorder %s178, %s180
    %p184 = scmp.eq.s32.totalorder %s18, 0
    %p185 = por %p183, %p184
    %p186 = scmp.ne.s32.totalorder %s178, %s180
    %p187 = scmp.eq.s32.totalorder %s23, 1
    %p188 = por %p186, %p187
    %p189 = scmp.ne.s32.totalorder %s180, %s181
    %p190 = scmp.eq.s32.totalorder %s23, 0
    %p191 = por %p189, %p190
    %p192 = scmp.ne.s32.totalorder %s180, %s181
    %p193 = scmp.eq.s32.totalorder %s24, 1
    %p194 = por %p192, %p193
    %p196 = scmp.ne.s32.totalorder %s181, %s195
    %p197 = scmp.eq.s32.totalorder %s24, 0
    %p198 = por %p196, %p197
    %s200 = sadd.s32 %s199, 1
    %p203 = scmp.eq.s32.totalorder %s18, 1
    %p204 = scmp.ne.s32.totalorder %s199, %s201
    %p205 = scmp.eq.s32.totalorder %s18, 0
    %p206 = por %p204, %p205
    %p207 = scmp.ne.s32.totalorder %s199, %s201
    %p208 = scmp.eq.s32.totalorder %s23, 1
    %p209 = por %p207, %p208
    %p210 = scmp.ne.s32.totalorder %s201, %s202
    %p211 = scmp.eq.s32.totalorder %s23, 0
    %p212 = por %p210, %p211
    %p213 = scmp.ne.s32.totalorder %s201, %s202
    %p214 = scmp.eq.s32.totalorder %s24, 1
    %p215 = por %p213, %p214
    %p217 = scmp.ne.s32.totalorder %s202, %s216
    %p218 = scmp.eq.s32.totalorder %s24, 0
    %p219 = por %p217, %p218
    %s221 = sadd.s32 %s220, 1
    %p224 = scmp.eq.s32.totalorder %s18, 1
    %p225 = scmp.ne.s32.totalorder %s220, %s222
    %p226 = scmp.eq.s32.totalorder %s18, 0
    %p227 = por %p225, %p226
    %p228 = scmp.ne.s32.totalorder %s220, %s222
    %p229 = scmp.eq.s32.totalorder %s23, 1
    %p230 = por %p228, %p229
    %p231 = scmp.ne.s32.totalorder %s222, %s223
    %p232 = scmp.eq.s32.totalorder %s23, 0
    %p233 = por %p231, %p232
    %p234 = scmp.ne.s32.totalorder %s222, %s223
    %p235 = scmp.eq.s32.totalorder %s24, 1
    %p236 = por %p234, %p235
    %p238 = scmp.ne.s32.totalorder %s223, %s237
    %p239 = scmp.eq.s32.totalorder %s24, 0
    %p240 = por %p238, %p239
    %s242 = sadd.s32 %s241, 1
    %p245 = scmp.eq.s32.totalorder %s18, 1
    %p246 = scmp.ne.s32.totalorder %s241, %s243
    %p247 = scmp.eq.s32.totalorder %s18, 0
    %p248 = por %p246, %p247
    %p249 = scmp.ne.s32.totalorder %s241, %s243
    %p250 = scmp.eq.s32.totalorder %s23, 1
    %p251 = por %p249, %p250
    %p252 = scmp.ne.s32.totalorder %s243, %s244
    %p253 = scmp.eq.s32.totalorder %s23, 0
    %p254 = por %p252, %p253
    %p255 = scmp.ne.s32.totalorder %s243, %s244
    %p256 = scmp.eq.s32.totalorder %s24, 1
    %p257 = por %p255, %p256
    %p259 = scmp.ne.s32.totalorder %s244, %s258
    %p260 = scmp.eq.s32.totalorder %s24, 0
    %p261 = por %p259, %p260
    %s263 = sadd.s32 %s262, 1
    %p266 = scmp.eq.s32.totalorder %s18, 1
    %p267 = scmp.ne.s32.totalorder %s262, %s264
    %p268 = scmp.eq.s32.totalorder %s18, 0
    %p269 = por %p267, %p268
    %p270 = scmp.ne.s32.totalorder %s262, %s264
    %p271 = scmp.eq.s32.totalorder %s23, 1
    %p272 = por %p270, %p271
    %p273 = scmp.ne.s32.totalorder %s264, %s265
    %p274 = scmp.eq.s32.totalorder %s23, 0
    %p275 = por %p273, %p274
    %p276 = scmp.ne.s32.totalorder %s264, %s265
    %p277 = scmp.eq.s32.totalorder %s24, 1
    %p278 = por %p276, %p277
    %p280 = scmp.ne.s32.totalorder %s265, %s279
    %p281 = scmp.eq.s32.totalorder %s24, 0
    %p282 = por %p280, %p281
    %s283 = ssub.s32 %s18, %s25
    %p284 = scmp.eq.s32.totalorder %s283, 0
    %s286 = sadd.s32 %s285, 1
    %s287 = scalar_select %p284, %s285, %s286
    %p290 = pneg %p284
    %p291 = scmp.eq.s32.totalorder %s18, 1
    %p292 = por %p290, %p291
    %p293 = scmp.ne.s32.totalorder %s285, %s288
    %p294 = scmp.eq.s32.totalorder %s18, 0
    %p295 = por %p293, %p294
    %p296 = scmp.ne.s32.totalorder %s285, %s288
    %p297 = scmp.eq.s32.totalorder %s23, 1
    %p298 = por %p296, %p297
    %p299 = scmp.ne.s32.totalorder %s288, %s289
    %p300 = scmp.eq.s32.totalorder %s23, 0
    %p301 = por %p299, %p300
    %p302 = scmp.ne.s32.totalorder %s288, %s289
    %p303 = scmp.eq.s32.totalorder %s24, 1
    %p304 = por %p302, %p303
    %p306 = scmp.ne.s32.totalorder %s289, %s305
    %p307 = scmp.eq.s32.totalorder %s24, 0
    %p308 = por %p306, %p307
    %p309 = scmp.le.s32.totalorder 1, %s18
    %p310 = scmp.lt.s32.totalorder %s18, 3
    %p311 = pnand %p309, %p310
    %p312 = pneg %p311
    // Predicated region
    $region9: #{_lambda_.1} parent=5 // pred_check
      _
    $region10: #{_lambda_.1} parent=5 // pred_check_branch
      %314 = sbr.rel (%p311) target = $region12
    $region11: #{_lambda_.1} parent=5 // pred_region
      %s315 = ssub.s32 %s18, 1
      // Predicated region
      $region13: #{_lambda_.1} parent=11 // pred_check
        %p316 = pneg %p65
      $region14: #{_lambda_.1} parent=11 // pred_check_branch
        %318 = sbr.rel (%p316) target = $region16
      $region15: #{_lambda_.1} parent=11 // pred_region
        _
      $region16: #{_lambda_.1} parent=11 // pred_fallthru
        _
      // Predicated region
      $region17: #{_lambda_.1} parent=11 // pred_check
        %p319 = pneg %p86
      $region18: #{_lambda_.1} parent=11 // pred_check_branch
        %321 = sbr.rel (%p319) target = $region20
      $region19: #{_lambda_.1} parent=11 // pred_region
        _
      $region20: #{_lambda_.1} parent=11 // pred_fallthru
        _
      // Predicated region
      $region21: #{_lambda_.1} parent=11 // pred_check
        %p322 = pneg %p107
      $region22: #{_lambda_.1} parent=11 // pred_check_branch
        %324 = sbr.rel (%p322) target = $region24
      $region23: #{_lambda_.1} parent=11 // pred_region
        _
      $region24: #{_lambda_.1} parent=11 // pred_fallthru
        _
      // Predicated region
      $region25: #{_lambda_.1} parent=11 // pred_check
        %p325 = pneg %p128
      $region26: #{_lambda_.1} parent=11 // pred_check_branch
        %327 = sbr.rel (%p325) target = $region28
      $region27: #{_lambda_.1} parent=11 // pred_region
        _
      $region28: #{_lambda_.1} parent=11 // pred_fallthru
        _
      // Predicated region
      $region29: #{_lambda_.1} parent=11 // pred_check
        %p328 = pneg %p149
      $region30: #{_lambda_.1} parent=11 // pred_check_branch
        %330 = sbr.rel (%p328) target = $region32
      $region31: #{_lambda_.1} parent=11 // pred_region
        _
      $region32: #{_lambda_.1} parent=11 // pred_fallthru
        _
      // Predicated region
      $region33: #{_lambda_.1} parent=11 // pred_check
        %p331 = pneg %p170
      $region34: #{_lambda_.1} parent=11 // pred_check_branch
        %333 = sbr.rel (%p331) target = $region36
      $region35: #{_lambda_.1} parent=11 // pred_region
        _
      $region36: #{_lambda_.1} parent=11 // pred_fallthru
        _
      // Predicated region
      $region37: #{_lambda_.1} parent=11 // pred_check
        %p334 = pneg %p191
      $region38: #{_lambda_.1} parent=11 // pred_check_branch
        %336 = sbr.rel (%p334) target = $region40
      $region39: #{_lambda_.1} parent=11 // pred_region
        _
      $region40: #{_lambda_.1} parent=11 // pred_fallthru
        _
      // Predicated region
      $region41: #{_lambda_.1} parent=11 // pred_check
        %p337 = pneg %p212
      $region42: #{_lambda_.1} parent=11 // pred_check_branch
        %339 = sbr.rel (%p337) target = $region44
      $region43: #{_lambda_.1} parent=11 // pred_region
        _
      $region44: #{_lambda_.1} parent=11 // pred_fallthru
        _
      // Predicated region
      $region45: #{_lambda_.1} parent=11 // pred_check
        %p340 = pneg %p233
      $region46: #{_lambda_.1} parent=11 // pred_check_branch
        %342 = sbr.rel (%p340) target = $region48
      $region47: #{_lambda_.1} parent=11 // pred_region
        _
      $region48: #{_lambda_.1} parent=11 // pred_fallthru
        _
      // Predicated region
      $region49: #{_lambda_.1} parent=11 // pred_check
        %p343 = pneg %p254
      $region50: #{_lambda_.1} parent=11 // pred_check_branch
        %345 = sbr.rel (%p343) target = $region52
      $region51: #{_lambda_.1} parent=11 // pred_region
        _
      $region52: #{_lambda_.1} parent=11 // pred_fallthru
        _
      // Predicated region
      $region53: #{_lambda_.1} parent=11 // pred_check
        %p346 = pneg %p275
      $region54: #{_lambda_.1} parent=11 // pred_check_branch
        %348 = sbr.rel (%p346) target = $region56
      $region55: #{_lambda_.1} parent=11 // pred_region
        _
      $region56: #{_lambda_.1} parent=11 // pred_fallthru
        _
    $region12: #{_lambda_.1} parent=5 // pred_fallthru
      _
    %p349 = scmp.lt.s32.totalorder %s18, 2
    // Predicated region
    $region57: #{_lambda_.1} parent=5 // pred_check
      %p350 = pneg %p349
    $region58: #{_lambda_.1} parent=5 // pred_check_branch
      %352 = sbr.rel (%p350) target = $region60
    $region59: #{_lambda_.1} parent=5 // pred_region
      // Predicated region
      $region61: #{_lambda_.1} parent=59 // pred_check
        %p353 = pneg %p38
      $region62: #{_lambda_.1} parent=59 // pred_check_branch
        %355 = sbr.rel (%p353) target = $region64
      $region63: #{_lambda_.1} parent=59 // pred_region
        %p356 = scmp.lt.s32.totalorder %s18, 1
        %s357 = scalar_select %p356, %s18, 1
        %s358 = smul.addr %s357, 32
        %s359 = smul.addr %s358, 8
        %s360 = scalar_lea.vmem %s0, %s359
      $region64: #{_lambda_.1} parent=59 // pred_fallthru
        _
    $region60: #{_lambda_.1} parent=5 // pred_fallthru
      _
    %p361 = scmp.le.s32.totalorder 1, %s18
    %p362 = scmp.lt.s32.totalorder %s18, 3
    %p363 = pnand %p361, %p362
    %p364 = pneg %p363
    // Predicated region
    $region65: #{_lambda_.1} parent=5 // pred_check
      _
    $region66: #{_lambda_.1} parent=5 // pred_check_branch
      %366 = sbr.rel (%p363) target = $region68
    $region67: #{_lambda_.1} parent=5 // pred_region
      %s367 = ssub.s32 %s18, 1
      %p368 = scmp.lt.s32.totalorder %s23, 1
      %s369 = scalar_select %p368, %s23, 1
      %s370 = smul.addr %s369, 32
      %s371 = smul.addr %s370, 8
      %s372 = scalar_lea.vmem %s0, %s371
      %p373 = pneg %p44
      %p374 = pneg %p41
      %p375 = pneg %p65
      %p376 = pneg %p62
      %p377 = pneg %p86
      %p378 = pneg %p83
      %p379 = pneg %p107
      %p380 = pneg %p104
      %p381 = pneg %p128
      %p382 = pneg %p125
      %p383 = pneg %p149
      %p384 = pneg %p146
      %p385 = pneg %p170
      %p386 = pneg %p167
      %p387 = pneg %p191
      %p388 = pneg %p188
      %p389 = pneg %p212
      %p390 = pneg %p209
      %p391 = pneg %p233
      %p392 = pneg %p230
      %p393 = pneg %p254
      %p394 = pneg %p251
      %p395 = pneg %p275
      %p396 = pneg %p272
      %p397 = pneg %p301
      %p398 = pneg %p298
      %p399 = scmp.lt.s32.totalorder %s23, 1
      %s400 = scalar_select %p399, %s23, 1
      %s401 = smul.addr %s400, 32
      %s402 = smul.addr %s401, 8
      %s403 = scalar_lea.vmem %s12, %s402
      %p404 = scmp.lt.s32.totalorder %s23, 1
      %s405 = scalar_select %p404, %s23, 1
      %s406 = smul.addr %s405, 32
      %s407 = smul.addr %s406, 8
      %s408 = scalar_lea.vmem %s0, %s407
      %p409 = scmp.lt.s32.totalorder %s23, 1
      %s410 = scalar_select %p409, %s23, 1
      %s411 = smul.addr %s410, 32
      %s412 = smul.addr %s411, 8
      %s413 = scalar_lea.vmem %s12, %s412
      %v414 = vld [vmem:[%s408] sm:$0xff]
      %v415 = vld [vmem:[%s408 + $0x8] sm:$0xff]
      %v416 = vld [vmem:[%s408 + $0x10] sm:$0xff]
      %v417 = vld [vmem:[%s408 + $0x18] sm:$0xff]
      %v418 = vld [vmem:[%s408 + $0x20] sm:$0xff]
      %v419 = vld [vmem:[%s408 + $0x28] sm:$0xff]
      %v420 = vld [vmem:[%s408 + $0x30] sm:$0xff]
      %v421 = vld [vmem:[%s408 + $0x38] sm:$0xff]
      %v422 = vld [vmem:[%s408 + $0x40] sm:$0xff]
      %v423 = vld [vmem:[%s408 + $0x48] sm:$0xff]
      %v424 = vld [vmem:[%s408 + $0x50] sm:$0xff]
      %v425 = vld [vmem:[%s408 + $0x58] sm:$0xff]
      %v426 = vld [vmem:[%s408 + $0x60] sm:$0xff]
      %v427 = vld [vmem:[%s408 + $0x68] sm:$0xff]
      %v428 = vld [vmem:[%s408 + $0x70] sm:$0xff]
      %v429 = vld [vmem:[%s408 + $0x78] sm:$0xff]
      %v430 = vld [vmem:[%s408 + $0x80] sm:$0xff]
      %v431 = vld [vmem:[%s408 + $0x88] sm:$0xff]
      %v432 = vld [vmem:[%s408 + $0x90] sm:$0xff]
      %v433 = vld [vmem:[%s408 + $0x98] sm:$0xff]
      %v434 = vld [vmem:[%s408 + $0xa0] sm:$0xff]
      %v435 = vld [vmem:[%s408 + $0xa8] sm:$0xff]
      %v436 = vld [vmem:[%s408 + $0xb0] sm:$0xff]
      %v437 = vld [vmem:[%s408 + $0xb8] sm:$0xff]
      %v438 = vld [vmem:[%s408 + $0xc0] sm:$0xff]
      %v439 = vld [vmem:[%s408 + $0xc8] sm:$0xff]
      %v440 = vld [vmem:[%s408 + $0xd0] sm:$0xff]
      %v441 = vld [vmem:[%s408 + $0xd8] sm:$0xff]
      %v442 = vld [vmem:[%s408 + $0xe0] sm:$0xff]
      %v443 = vld [vmem:[%s408 + $0xe8] sm:$0xff]
      %v444 = vld [vmem:[%s408 + $0xf0] sm:$0xff]
      %v445 = vld [vmem:[%s408 + $0xf8] sm:$0xff]
      %v446 = vld [vmem:[%s1] sm:$0xff]
      %v447 = vld [vmem:[%s1 + $0x8] sm:$0xff]
      %v448 = vld [vmem:[%s1 + $0x10] sm:$0xff]
      %v449 = vld [vmem:[%s1 + $0x18] sm:$0xff]
      %v450 = vld [vmem:[%s1 + $0x20] sm:$0xff]
      %v451 = vld [vmem:[%s1 + $0x28] sm:$0xff]
      %v452 = vld [vmem:[%s1 + $0x30] sm:$0xff]
      %v453 = vld [vmem:[%s1 + $0x38] sm:$0xff]
      %v454 = vld [vmem:[%s1 + $0x40] sm:$0xff]
      %v455 = vld [vmem:[%s1 + $0x48] sm:$0xff]
      %v456 = vld [vmem:[%s1 + $0x50] sm:$0xff]
      %v457 = vld [vmem:[%s1 + $0x58] sm:$0x3]
      %v458 = vld [vmem:[%s2] sm:$0x1]
      %vm491 = vcmask 1040384
      %v492 = vrot.slane %v414, 7
      %v493 = vrot.slane %v415, 7
      %v494 = vsel %vm491, %v492, %v493
      %v495 = vrot.slane %v416, 7
      %v496 = vrot.slane %v417, 7
      %v497 = vsel %vm491, %v495, %v496
      %v498 = vrot.slane %v418, 7
      %v499 = vrot.slane %v419, 7
      %v500 = vsel %vm491, %v498, %v499
      %v501 = vrot.slane %v420, 7
      %v502 = vrot.slane %v421, 7
      %v503 = vsel %vm491, %v501, %v502
      %v504 = vrot.slane %v422, 7
      %v505 = vrot.slane %v423, 7
      %v506 = vsel %vm491, %v504, %v505
      %v507 = vrot.slane %v424, 7
      %v508 = vrot.slane %v425, 7
      %v509 = vsel %vm491, %v507, %v508
      %v510 = vrot.slane %v426, 7
      %v511 = vrot.slane %v427, 7
      %v512 = vsel %vm491, %v510, %v511
      %v513 = vrot.slane %v428, 7
      %v514 = vrot.slane %v429, 7
      %v515 = vsel %vm491, %v513, %v514
      %v516 = vrot.slane %v430, 7
      %v517 = vrot.slane %v431, 7
      %v518 = vsel %vm491, %v516, %v517
      %v519 = vrot.slane %v432, 7
      %v520 = vrot.slane %v433, 7
      %v521 = vsel %vm491, %v519, %v520
      %v522 = vrot.slane %v434, 7
      %v523 = vrot.slane %v435, 7
      %v524 = vsel %vm491, %v522, %v523
      %v525 = vrot.slane %v436, 7
      %v526 = vrot.slane %v437, 7
      %v527 = vsel %vm491, %v525, %v526
      %v528 = vrot.slane %v438, 7
      %v529 = vrot.slane %v439, 7
      %v530 = vsel %vm491, %v528, %v529
      %v531 = vrot.slane %v440, 7
      %v532 = vrot.slane %v441, 7
      %v533 = vsel %vm491, %v531, %v532
      %v534 = vrot.slane %v442, 7
      %v535 = vrot.slane %v443, 7
      %v536 = vsel %vm491, %v534, %v535
      %v537 = vrot.slane %v444, 7
      %v538 = vrot.slane %v445, 7
      %v539 = vsel %vm491, %v537, %v538
      %v587 = vsel %vm491, 0.0, %v492
      %v588 = vsel %vm491, 0.0, %v495
      %v589 = vsel %vm491, 0.0, %v498
      %v590 = vsel %vm491, 0.0, %v501
      %v591 = vsel %vm491, 0.0, %v504
      %v592 = vsel %vm491, 0.0, %v507
      %v593 = vsel %vm491, 0.0, %v510
      %v594 = vsel %vm491, 0.0, %v513
      %v595 = vsel %vm491, 0.0, %v516
      %v596 = vsel %vm491, 0.0, %v519
      %v597 = vsel %vm491, 0.0, %v522
      %v598 = vsel %vm491, 0.0, %v525
      %v599 = vsel %vm491, 0.0, %v528
      %v600 = vsel %vm491, 0.0, %v531
      %v601 = vsel %vm491, 0.0, %v534
      %v602 = vsel %vm491, 0.0, %v537
      %v603 = vsel %vm491, %v493, 0.0
      %v604 = vsel %vm491, %v496, 0.0
      %v605 = vsel %vm491, %v499, 0.0
      %v606 = vsel %vm491, %v502, 0.0
      %v607 = vsel %vm491, %v505, 0.0
      %v608 = vsel %vm491, %v508, 0.0
      %v609 = vsel %vm491, %v511, 0.0
      %v610 = vsel %vm491, %v514, 0.0
      %v611 = vsel %vm491, %v517, 0.0
      %v612 = vsel %vm491, %v520, 0.0
      %v613 = vsel %vm491, %v523, 0.0
      %v614 = vsel %vm491, %v526, 0.0
      %v615 = vsel %vm491, %v529, 0.0
      %v616 = vsel %vm491, %v532, 0.0
      %v617 = vsel %vm491, %v535, 0.0
      %v618 = vsel %vm491, %v538, 0.0
      %vm650 = vcmask 1046528
      %v651 = vrot.slane 0.0, 1
      %v652 = vsel %vm650, %v651, %v651
      %v653 = vrot.slane %v587, 1
      %v654 = vrot.slane %v494, 1
      %v655 = vsel %vm650, %v653, %v654
      %v656 = vrot.slane %v603, 1
      %v657 = vsel %vm650, %v654, %v656
      %v658 = vrot.slane %v588, 1
      %v659 = vrot.slane %v497, 1
      %v660 = vsel %vm650, %v658, %v659
      %v661 = vrot.slane %v604, 1
      %v662 = vsel %vm650, %v659, %v661
      %v663 = vrot.slane %v589, 1
      %v664 = vrot.slane %v500, 1
      %v665 = vsel %vm650, %v663, %v664
      %v666 = vrot.slane %v605, 1
      %v667 = vsel %vm650, %v664, %v666
      %v668 = vrot.slane %v590, 1
      %v669 = vrot.slane %v503, 1
      %v670 = vsel %vm650, %v668, %v669
      %v671 = vrot.slane %v606, 1
      %v672 = vsel %vm650, %v669, %v671
      %v673 = vrot.slane %v591, 1
      %v674 = vrot.slane %v506, 1
      %v675 = vsel %vm650, %v673, %v674
      %v676 = vrot.slane %v607, 1
      %v677 = vsel %vm650, %v674, %v676
      %v678 = vrot.slane %v592, 1
      %v679 = vrot.slane %v509, 1
      %v680 = vsel %vm650, %v678, %v679
      %v681 = vrot.slane %v608, 1
      %v682 = vsel %vm650, %v679, %v681
      %v683 = vrot.slane %v593, 1
      %v684 = vrot.slane %v512, 1
      %v685 = vsel %vm650, %v683, %v684
      %v686 = vrot.slane %v609, 1
      %v687 = vsel %vm650, %v684, %v686
      %v688 = vrot.slane %v594, 1
      %v689 = vrot.slane %v515, 1
      %v690 = vsel %vm650, %v688, %v689
      %v691 = vrot.slane %v610, 1
      %v692 = vsel %vm650, %v689, %v691
      %v693 = vrot.slane %v595, 1
      %v694 = vrot.slane %v518, 1
      %v695 = vsel %vm650, %v693, %v694
      %v696 = vrot.slane %v611, 1
      %v697 = vsel %vm650, %v694, %v696
      %v698 = vrot.slane %v596, 1
      %v699 = vrot.slane %v521, 1
      %v700 = vsel %vm650, %v698, %v699
      %v701 = vrot.slane %v612, 1
      %v702 = vsel %vm650, %v699, %v701
      %v703 = vrot.slane %v597, 1
      %v704 = vrot.slane %v524, 1
      %v705 = vsel %vm650, %v703, %v704
      %v706 = vrot.slane %v613, 1
      %v707 = vsel %vm650, %v704, %v706
      %v708 = vrot.slane %v598, 1
      %v709 = vrot.slane %v527, 1
      %v710 = vsel %vm650, %v708, %v709
      %v711 = vrot.slane %v614, 1
      %v712 = vsel %vm650, %v709, %v711
      %v713 = vrot.slane %v599, 1
      %v714 = vrot.slane %v530, 1
      %v715 = vsel %vm650, %v713, %v714
      %v716 = vrot.slane %v615, 1
      %v717 = vsel %vm650, %v714, %v716
      %v718 = vrot.slane %v600, 1
      %v719 = vrot.slane %v533, 1
      %v720 = vsel %vm650, %v718, %v719
      %v721 = vrot.slane %v616, 1
      %v722 = vsel %vm650, %v719, %v721
      %v723 = vrot.slane %v601, 1
      %v724 = vrot.slane %v536, 1
      %v725 = vsel %vm650, %v723, %v724
      %v726 = vrot.slane %v617, 1
      %v727 = vsel %vm650, %v724, %v726
      %728 = vrot.lane.b32.xlu0 %v652, 10
      %v729 = vpop.permute.xlu0 %728
      %730 = vrot.lane.b32.xlu0 %v655, 10
      %v731 = vpop.permute.xlu0 %730
      %732 = vrot.lane.b32.xlu0 %v657, 10
      %v733 = vpop.permute.xlu0 %732
      %734 = vrot.lane.b32.xlu0 %v660, 10
      %v735 = vpop.permute.xlu0 %734
      %736 = vrot.lane.b32.xlu0 %v662, 10
      %v737 = vpop.permute.xlu0 %736
      %738 = vrot.lane.b32.xlu0 %v665, 10
      %v739 = vpop.permute.xlu0 %738
      %740 = vrot.lane.b32.xlu0 %v667, 10
      %v741 = vpop.permute.xlu0 %740
      %742 = vrot.lane.b32.xlu0 %v670, 10
      %v743 = vpop.permute.xlu0 %742
      %744 = vrot.lane.b32.xlu0 %v672, 10
      %v745 = vpop.permute.xlu0 %744
      %746 = vrot.lane.b32.xlu0 %v675, 10
      %v747 = vpop.permute.xlu0 %746
      %748 = vrot.lane.b32.xlu0 %v677, 10
      %v749 = vpop.permute.xlu0 %748
      %750 = vrot.lane.b32.xlu0 %v680, 10
      %v751 = vpop.permute.xlu0 %750
      %752 = vrot.lane.b32.xlu0 %v682, 10
      %v753 = vpop.permute.xlu0 %752
      %754 = vrot.lane.b32.xlu0 %v685, 10
      %v755 = vpop.permute.xlu0 %754
      %756 = vrot.lane.b32.xlu0 %v687, 10
      %v757 = vpop.permute.xlu0 %756
      %758 = vrot.lane.b32.xlu0 %v690, 10
      %v759 = vpop.permute.xlu0 %758
      %760 = vrot.lane.b32.xlu0 %v692, 10
      %v761 = vpop.permute.xlu0 %760
      %762 = vrot.lane.b32.xlu0 %v695, 10
      %v763 = vpop.permute.xlu0 %762
      %764 = vrot.lane.b32.xlu0 %v697, 10
      %v765 = vpop.permute.xlu0 %764
      %766 = vrot.lane.b32.xlu0 %v700, 10
      %v767 = vpop.permute.xlu0 %766
      %768 = vrot.lane.b32.xlu0 %v702, 10
      %v769 = vpop.permute.xlu0 %768
      %770 = vrot.lane.b32.xlu0 %v705, 10
      %v771 = vpop.permute.xlu0 %770
      %772 = vrot.lane.b32.xlu0 %v707, 10
      %v773 = vpop.permute.xlu0 %772
      %774 = vrot.lane.b32.xlu0 %v710, 10
      %v775 = vpop.permute.xlu0 %774
      %776 = vrot.lane.b32.xlu0 %v712, 10
      %v777 = vpop.permute.xlu0 %776
      %778 = vrot.lane.b32.xlu0 %v715, 10
      %v779 = vpop.permute.xlu0 %778
      %780 = vrot.lane.b32.xlu0 %v717, 10
      %v781 = vpop.permute.xlu0 %780
      %782 = vrot.lane.b32.xlu0 %v720, 10
      %v783 = vpop.permute.xlu0 %782
      %784 = vrot.lane.b32.xlu0 %v722, 10
      %v785 = vpop.permute.xlu0 %784
      %786 = vrot.lane.b32.xlu0 %v725, 10
      %v787 = vpop.permute.xlu0 %786
      %788 = vrot.lane.b32.xlu0 %v727, 10
      %v789 = vpop.permute.xlu0 %788
      %vm821 = vcmask 1045504
      %v822 = vrot.slane 0.0, 2
      %v823 = vsel %vm821, %v822, %v822
      %v824 = vrot.slane %v587, 2
      %v825 = vrot.slane %v494, 2
      %v826 = vsel %vm821, %v824, %v825
      %v827 = vrot.slane %v603, 2
      %v828 = vsel %vm821, %v825, %v827
      %v829 = vrot.slane %v588, 2
      %v830 = vrot.slane %v497, 2
      %v831 = vsel %vm821, %v829, %v830
      %v832 = vrot.slane %v604, 2
      %v833 = vsel %vm821, %v830, %v832
      %v834 = vrot.slane %v589, 2
      %v835 = vrot.slane %v500, 2
      %v836 = vsel %vm821, %v834, %v835
      %v837 = vrot.slane %v605, 2
      %v838 = vsel %vm821, %v835, %v837
      %v839 = vrot.slane %v590, 2
      %v840 = vrot.slane %v503, 2
      %v841 = vsel %vm821, %v839, %v840
      %v842 = vrot.slane %v606, 2
      %v843 = vsel %vm821, %v840, %v842
      %v844 = vrot.slane %v591, 2
      %v845 = vrot.slane %v506, 2
      %v846 = vsel %vm821, %v844, %v845
      %v847 = vrot.slane %v607, 2
      %v848 = vsel %vm821, %v845, %v847
      %v849 = vrot.slane %v592, 2
      %v850 = vrot.slane %v509, 2
      %v851 = vsel %vm821, %v849, %v850
      %v852 = vrot.slane %v608, 2
      %v853 = vsel %vm821, %v850, %v852
      %v854 = vrot.slane %v593, 2
      %v855 = vrot.slane %v512, 2
      %v856 = vsel %vm821, %v854, %v855
      %v857 = vrot.slane %v609, 2
      %v858 = vsel %vm821, %v855, %v857
      %v859 = vrot.slane %v594, 2
      %v860 = vrot.slane %v515, 2
      %v861 = vsel %vm821, %v859, %v860
      %v862 = vrot.slane %v610, 2
      %v863 = vsel %vm821, %v860, %v862
      %v864 = vrot.slane %v595, 2
      %v865 = vrot.slane %v518, 2
      %v866 = vsel %vm821, %v864, %v865
      %v867 = vrot.slane %v611, 2
      %v868 = vsel %vm821, %v865, %v867
      %v869 = vrot.slane %v596, 2
      %v870 = vrot.slane %v521, 2
      %v871 = vsel %vm821, %v869, %v870
      %v872 = vrot.slane %v612, 2
      %v873 = vsel %vm821, %v870, %v872
      %v874 = vrot.slane %v597, 2
      %v875 = vrot.slane %v524, 2
      %v876 = vsel %vm821, %v874, %v875
      %v877 = vrot.slane %v613, 2
      %v878 = vsel %vm821, %v875, %v877
      %v879 = vrot.slane %v598, 2
      %v880 = vrot.slane %v527, 2
      %v881 = vsel %vm821, %v879, %v880
      %v882 = vrot.slane %v614, 2
      %v883 = vsel %vm821, %v880, %v882
      %v884 = vrot.slane %v599, 2
      %v885 = vrot.slane %v530, 2
      %v886 = vsel %vm821, %v884, %v885
      %v887 = vrot.slane %v615, 2
      %v888 = vsel %vm821, %v885, %v887
      %v889 = vrot.slane %v600, 2
      %v890 = vrot.slane %v533, 2
      %v891 = vsel %vm821, %v889, %v890
      %v892 = vrot.slane %v616, 2
      %v893 = vsel %vm821, %v890, %v892
      %v894 = vrot.slane %v601, 2
      %v895 = vrot.slane %v536, 2
      %v896 = vsel %vm821, %v894, %v895
      %v897 = vrot.slane %v617, 2
      %v898 = vsel %vm821, %v895, %v897
      %899 = vrot.lane.b32.xlu0 %v823, 20
      %v900 = vpop.permute.xlu0 %899
      %901 = vrot.lane.b32.xlu0 %v826, 20
      %v902 = vpop.permute.xlu0 %901
      %903 = vrot.lane.b32.xlu0 %v828, 20
      %v904 = vpop.permute.xlu0 %903
      %905 = vrot.lane.b32.xlu0 %v831, 20
      %v906 = vpop.permute.xlu0 %905
      %907 = vrot.lane.b32.xlu0 %v833, 20
      %v908 = vpop.permute.xlu0 %907
      %909 = vrot.lane.b32.xlu0 %v836, 20
      %v910 = vpop.permute.xlu0 %909
      %911 = vrot.lane.b32.xlu0 %v838, 20
      %v912 = vpop.permute.xlu0 %911
      %913 = vrot.lane.b32.xlu0 %v841, 20
      %v914 = vpop.permute.xlu0 %913
      %915 = vrot.lane.b32.xlu0 %v843, 20
      %v916 = vpop.permute.xlu0 %915
      %917 = vrot.lane.b32.xlu0 %v846, 20
      %v918 = vpop.permute.xlu0 %917
      %919 = vrot.lane.b32.xlu0 %v848, 20
      %v920 = vpop.permute.xlu0 %919
      %921 = vrot.lane.b32.xlu0 %v851, 20
      %v922 = vpop.permute.xlu0 %921
      %923 = vrot.lane.b32.xlu0 %v853, 20
      %v924 = vpop.permute.xlu0 %923
      %925 = vrot.lane.b32.xlu0 %v856, 20
      %v926 = vpop.permute.xlu0 %925
      %927 = vrot.lane.b32.xlu0 %v858, 20
      %v928 = vpop.permute.xlu0 %927
      %929 = vrot.lane.b32.xlu0 %v861, 20
      %v930 = vpop.permute.xlu0 %929
      %931 = vrot.lane.b32.xlu0 %v863, 20
      %v932 = vpop.permute.xlu0 %931
      %933 = vrot.lane.b32.xlu0 %v866, 20
      %v934 = vpop.permute.xlu0 %933
      %935 = vrot.lane.b32.xlu0 %v868, 20
      %v936 = vpop.permute.xlu0 %935
      %937 = vrot.lane.b32.xlu0 %v871, 20
      %v938 = vpop.permute.xlu0 %937
      %939 = vrot.lane.b32.xlu0 %v873, 20
      %v940 = vpop.permute.xlu0 %939
      %941 = vrot.lane.b32.xlu0 %v876, 20
      %v942 = vpop.permute.xlu0 %941
      %943 = vrot.lane.b32.xlu0 %v878, 20
      %v944 = vpop.permute.xlu0 %943
      %945 = vrot.lane.b32.xlu0 %v881, 20
      %v946 = vpop.permute.xlu0 %945
      %947 = vrot.lane.b32.xlu0 %v883, 20
      %v948 = vpop.permute.xlu0 %947
      %949 = vrot.lane.b32.xlu0 %v886, 20
      %v950 = vpop.permute.xlu0 %949
      %951 = vrot.lane.b32.xlu0 %v888, 20
      %v952 = vpop.permute.xlu0 %951
      %953 = vrot.lane.b32.xlu0 %v891, 20
      %v954 = vpop.permute.xlu0 %953
      %955 = vrot.lane.b32.xlu0 %v893, 20
      %v956 = vpop.permute.xlu0 %955
      %957 = vrot.lane.b32.xlu0 %v896, 20
      %v958 = vpop.permute.xlu0 %957
      %959 = vrot.lane.b32.xlu0 %v898, 20
      %v960 = vpop.permute.xlu0 %959
      %993 = vrot.lane.b32.xlu0 %v587, 30
      %v994 = vpop.permute.xlu0 %993
      %995 = vrot.lane.b32.xlu0 %v494, 30
      %v996 = vpop.permute.xlu0 %995
      %997 = vrot.lane.b32.xlu0 %v588, 30
      %v998 = vpop.permute.xlu0 %997
      %999 = vrot.lane.b32.xlu0 %v497, 30
      %v1000 = vpop.permute.xlu0 %999
      %1001 = vrot.lane.b32.xlu0 %v589, 30
      %v1002 = vpop.permute.xlu0 %1001
      %1003 = vrot.lane.b32.xlu0 %v500, 30
      %v1004 = vpop.permute.xlu0 %1003
      %1005 = vrot.lane.b32.xlu0 %v590, 30
      %v1006 = vpop.permute.xlu0 %1005
      %1007 = vrot.lane.b32.xlu0 %v503, 30
      %v1008 = vpop.permute.xlu0 %1007
      %1009 = vrot.lane.b32.xlu0 %v591, 30
      %v1010 = vpop.permute.xlu0 %1009
      %1011 = vrot.lane.b32.xlu0 %v506, 30
      %v1012 = vpop.permute.xlu0 %1011
      %1013 = vrot.lane.b32.xlu0 %v592, 30
      %v1014 = vpop.permute.xlu0 %1013
      %1015 = vrot.lane.b32.xlu0 %v509, 30
      %v1016 = vpop.permute.xlu0 %1015
      %1017 = vrot.lane.b32.xlu0 %v593, 30
      %v1018 = vpop.permute.xlu0 %1017
      %1019 = vrot.lane.b32.xlu0 %v512, 30
      %v1020 = vpop.permute.xlu0 %1019
      %1021 = vrot.lane.b32.xlu0 %v594, 30
      %v1022 = vpop.permute.xlu0 %1021
      %1023 = vrot.lane.b32.xlu0 %v515, 30
      %v1024 = vpop.permute.xlu0 %1023
      %1025 = vrot.lane.b32.xlu0 %v595, 30
      %v1026 = vpop.permute.xlu0 %1025
      %1027 = vrot.lane.b32.xlu0 %v518, 30
      %v1028 = vpop.permute.xlu0 %1027
      %1029 = vrot.lane.b32.xlu0 %v596, 30
      %v1030 = vpop.permute.xlu0 %1029
      %1031 = vrot.lane.b32.xlu0 %v521, 30
      %v1032 = vpop.permute.xlu0 %1031
      %1033 = vrot.lane.b32.xlu0 %v597, 30
      %v1034 = vpop.permute.xlu0 %1033
      %1035 = vrot.lane.b32.xlu0 %v524, 30
      %v1036 = vpop.permute.xlu0 %1035
      %1037 = vrot.lane.b32.xlu0 %v598, 30
      %v1038 = vpop.permute.xlu0 %1037
      %1039 = vrot.lane.b32.xlu0 %v527, 30
      %v1040 = vpop.permute.xlu0 %1039
      %1041 = vrot.lane.b32.xlu0 %v599, 30
      %v1042 = vpop.permute.xlu0 %1041
      %1043 = vrot.lane.b32.xlu0 %v530, 30
      %v1044 = vpop.permute.xlu0 %1043
      %1045 = vrot.lane.b32.xlu0 %v600, 30
      %v1046 = vpop.permute.xlu0 %1045
      %1047 = vrot.lane.b32.xlu0 %v533, 30
      %v1048 = vpop.permute.xlu0 %1047
      %1049 = vrot.lane.b32.xlu0 %v601, 30
      %v1050 = vpop.permute.xlu0 %1049
      %1051 = vrot.lane.b32.xlu0 %v536, 30
      %v1052 = vpop.permute.xlu0 %1051
      %1053 = vrot.lane.b32.xlu0 %v602, 30
      %v1054 = vpop.permute.xlu0 %1053
      %1055 = vrot.lane.b32.xlu0 %v539, 30
      %v1056 = vpop.permute.xlu0 %1055
      %v1090 = vrot.slane %v602, 1
      %v1091 = vrot.slane %v539, 1
      %v1092 = vsel %vm650, %v1090, %v1091
      %v1093 = vrot.slane %v618, 1
      %v1094 = vsel %vm650, %v1091, %v1093
      %1095 = vrot.lane.b32.xlu0 %v655, 40
      %v1096 = vpop.permute.xlu0 %1095
      %1097 = vrot.lane.b32.xlu0 %v657, 40
      %v1098 = vpop.permute.xlu0 %1097
      %1099 = vrot.lane.b32.xlu0 %v660, 40
      %v1100 = vpop.permute.xlu0 %1099
      %1101 = vrot.lane.b32.xlu0 %v662, 40
      %v1102 = vpop.permute.xlu0 %1101
      %1103 = vrot.lane.b32.xlu0 %v665, 40
      %v1104 = vpop.permute.xlu0 %1103
      %1105 = vrot.lane.b32.xlu0 %v667, 40
      %v1106 = vpop.permute.xlu0 %1105
      %1107 = vrot.lane.b32.xlu0 %v670, 40
      %v1108 = vpop.permute.xlu0 %1107
      %1109 = vrot.lane.b32.xlu0 %v672, 40
      %v1110 = vpop.permute.xlu0 %1109
      %1111 = vrot.lane.b32.xlu0 %v675, 40
      %v1112 = vpop.permute.xlu0 %1111
      %1113 = vrot.lane.b32.xlu0 %v677, 40
      %v1114 = vpop.permute.xlu0 %1113
      %1115 = vrot.lane.b32.xlu0 %v680, 40
      %v1116 = vpop.permute.xlu0 %1115
      %1117 = vrot.lane.b32.xlu0 %v682, 40
      %v1118 = vpop.permute.xlu0 %1117
      %1119 = vrot.lane.b32.xlu0 %v685, 40
      %v1120 = vpop.permute.xlu0 %1119
      %1121 = vrot.lane.b32.xlu0 %v687, 40
      %v1122 = vpop.permute.xlu0 %1121
      %1123 = vrot.lane.b32.xlu0 %v690, 40
      %v1124 = vpop.permute.xlu0 %1123
      %1125 = vrot.lane.b32.xlu0 %v692, 40
      %v1126 = vpop.permute.xlu0 %1125
      %1127 = vrot.lane.b32.xlu0 %v695, 40
      %v1128 = vpop.permute.xlu0 %1127
      %1129 = vrot.lane.b32.xlu0 %v697, 40
      %v1130 = vpop.permute.xlu0 %1129
      %1131 = vrot.lane.b32.xlu0 %v700, 40
      %v1132 = vpop.permute.xlu0 %1131
      %1133 = vrot.lane.b32.xlu0 %v702, 40
      %v1134 = vpop.permute.xlu0 %1133
      %1135 = vrot.lane.b32.xlu0 %v705, 40
      %v1136 = vpop.permute.xlu0 %1135
      %1137 = vrot.lane.b32.xlu0 %v707, 40
      %v1138 = vpop.permute.xlu0 %1137
      %1139 = vrot.lane.b32.xlu0 %v710, 40
      %v1140 = vpop.permute.xlu0 %1139
      %1141 = vrot.lane.b32.xlu0 %v712, 40
      %v1142 = vpop.permute.xlu0 %1141
      %1143 = vrot.lane.b32.xlu0 %v715, 40
      %v1144 = vpop.permute.xlu0 %1143
      %1145 = vrot.lane.b32.xlu0 %v717, 40
      %v1146 = vpop.permute.xlu0 %1145
      %1147 = vrot.lane.b32.xlu0 %v720, 40
      %v1148 = vpop.permute.xlu0 %1147
      %1149 = vrot.lane.b32.xlu0 %v722, 40
      %v1150 = vpop.permute.xlu0 %1149
      %1151 = vrot.lane.b32.xlu0 %v725, 40
      %v1152 = vpop.permute.xlu0 %1151
      %1153 = vrot.lane.b32.xlu0 %v727, 40
      %v1154 = vpop.permute.xlu0 %1153
      %1155 = vrot.lane.b32.xlu0 %v1092, 40
      %v1156 = vpop.permute.xlu0 %1155
      %1157 = vrot.lane.b32.xlu0 %v1094, 40
      %v1158 = vpop.permute.xlu0 %1157
      %v1191 = vrot.slane %v602, 2
      %v1192 = vrot.slane %v539, 2
      %v1193 = vsel %vm821, %v1191, %v1192
      %v1194 = vrot.slane %v618, 2
      %v1195 = vsel %vm821, %v1192, %v1194
      %1196 = vrot.lane.b32.xlu0 %v826, 50
      %v1197 = vpop.permute.xlu0 %1196
      %1198 = vrot.lane.b32.xlu0 %v828, 50
      %v1199 = vpop.permute.xlu0 %1198
      %1200 = vrot.lane.b32.xlu0 %v831, 50
      %v1201 = vpop.permute.xlu0 %1200
      %1202 = vrot.lane.b32.xlu0 %v833, 50
      %v1203 = vpop.permute.xlu0 %1202
      %1204 = vrot.lane.b32.xlu0 %v836, 50
      %v1205 = vpop.permute.xlu0 %1204
      %1206 = vrot.lane.b32.xlu0 %v838, 50
      %v1207 = vpop.permute.xlu0 %1206
      %1208 = vrot.lane.b32.xlu0 %v841, 50
      %v1209 = vpop.permute.xlu0 %1208
      %1210 = vrot.lane.b32.xlu0 %v843, 50
      %v1211 = vpop.permute.xlu0 %1210
      %1212 = vrot.lane.b32.xlu0 %v846, 50
      %v1213 = vpop.permute.xlu0 %1212
      %1214 = vrot.lane.b32.xlu0 %v848, 50
      %v1215 = vpop.permute.xlu0 %1214
      %1216 = vrot.lane.b32.xlu0 %v851, 50
      %v1217 = vpop.permute.xlu0 %1216
      %1218 = vrot.lane.b32.xlu0 %v853, 50
      %v1219 = vpop.permute.xlu0 %1218
      %1220 = vrot.lane.b32.xlu0 %v856, 50
      %v1221 = vpop.permute.xlu0 %1220
      %1222 = vrot.lane.b32.xlu0 %v858, 50
      %v1223 = vpop.permute.xlu0 %1222
      %1224 = vrot.lane.b32.xlu0 %v861, 50
      %v1225 = vpop.permute.xlu0 %1224
      %1226 = vrot.lane.b32.xlu0 %v863, 50
      %v1227 = vpop.permute.xlu0 %1226
      %1228 = vrot.lane.b32.xlu0 %v866, 50
      %v1229 = vpop.permute.xlu0 %1228
      %1230 = vrot.lane.b32.xlu0 %v868, 50
      %v1231 = vpop.permute.xlu0 %1230
      %1232 = vrot.lane.b32.xlu0 %v871, 50
      %v1233 = vpop.permute.xlu0 %1232
      %1234 = vrot.lane.b32.xlu0 %v873, 50
      %v1235 = vpop.permute.xlu0 %1234
      %1236 = vrot.lane.b32.xlu0 %v876, 50
      %v1237 = vpop.permute.xlu0 %1236
      %1238 = vrot.lane.b32.xlu0 %v878, 50
      %v1239 = vpop.permute.xlu0 %1238
      %1240 = vrot.lane.b32.xlu0 %v881, 50
      %v1241 = vpop.permute.xlu0 %1240
      %1242 = vrot.lane.b32.xlu0 %v883, 50
      %v1243 = vpop.permute.xlu0 %1242
      %1244 = vrot.lane.b32.xlu0 %v886, 50
      %v1245 = vpop.permute.xlu0 %1244
      %1246 = vrot.lane.b32.xlu0 %v888, 50
      %v1247 = vpop.permute.xlu0 %1246
      %1248 = vrot.lane.b32.xlu0 %v891, 50
      %v1249 = vpop.permute.xlu0 %1248
      %1250 = vrot.lane.b32.xlu0 %v893, 50
      %v1251 = vpop.permute.xlu0 %1250
      %1252 = vrot.lane.b32.xlu0 %v896, 50
      %v1253 = vpop.permute.xlu0 %1252
      %1254 = vrot.lane.b32.xlu0 %v898, 50
      %v1255 = vpop.permute.xlu0 %1254
      %1256 = vrot.lane.b32.xlu0 %v1193, 50
      %v1257 = vpop.permute.xlu0 %1256
      %1258 = vrot.lane.b32.xlu0 %v1195, 50
      %v1259 = vpop.permute.xlu0 %1258
      %1292 = vrot.lane.b32.xlu0 %v588, 60
      %v1293 = vpop.permute.xlu0 %1292
      %1294 = vrot.lane.b32.xlu0 %v497, 60
      %v1295 = vpop.permute.xlu0 %1294
      %1296 = vrot.lane.b32.xlu0 %v589, 60
      %v1297 = vpop.permute.xlu0 %1296
      %1298 = vrot.lane.b32.xlu0 %v500, 60
      %v1299 = vpop.permute.xlu0 %1298
      %1300 = vrot.lane.b32.xlu0 %v590, 60
      %v1301 = vpop.permute.xlu0 %1300
      %1302 = vrot.lane.b32.xlu0 %v503, 60
      %v1303 = vpop.permute.xlu0 %1302
      %1304 = vrot.lane.b32.xlu0 %v591, 60
      %v1305 = vpop.permute.xlu0 %1304
      %1306 = vrot.lane.b32.xlu0 %v506, 60
      %v1307 = vpop.permute.xlu0 %1306
      %1308 = vrot.lane.b32.xlu0 %v592, 60
      %v1309 = vpop.permute.xlu0 %1308
      %1310 = vrot.lane.b32.xlu0 %v509, 60
      %v1311 = vpop.permute.xlu0 %1310
      %1312 = vrot.lane.b32.xlu0 %v593, 60
      %v1313 = vpop.permute.xlu0 %1312
      %1314 = vrot.lane.b32.xlu0 %v512, 60
      %v1315 = vpop.permute.xlu0 %1314
      %1316 = vrot.lane.b32.xlu0 %v594, 60
      %v1317 = vpop.permute.xlu0 %1316
      %1318 = vrot.lane.b32.xlu0 %v515, 60
      %v1319 = vpop.permute.xlu0 %1318
      %1320 = vrot.lane.b32.xlu0 %v595, 60
      %v1321 = vpop.permute.xlu0 %1320
      %1322 = vrot.lane.b32.xlu0 %v518, 60
      %v1323 = vpop.permute.xlu0 %1322
      %1324 = vrot.lane.b32.xlu0 %v596, 60
      %v1325 = vpop.permute.xlu0 %1324
      %1326 = vrot.lane.b32.xlu0 %v521, 60
      %v1327 = vpop.permute.xlu0 %1326
      %1328 = vrot.lane.b32.xlu0 %v597, 60
      %v1329 = vpop.permute.xlu0 %1328
      %1330 = vrot.lane.b32.xlu0 %v524, 60
      %v1331 = vpop.permute.xlu0 %1330
      %1332 = vrot.lane.b32.xlu0 %v598, 60
      %v1333 = vpop.permute.xlu0 %1332
      %1334 = vrot.lane.b32.xlu0 %v527, 60
      %v1335 = vpop.permute.xlu0 %1334
      %1336 = vrot.lane.b32.xlu0 %v599, 60
      %v1337 = vpop.permute.xlu0 %1336
      %1338 = vrot.lane.b32.xlu0 %v530, 60
      %v1339 = vpop.permute.xlu0 %1338
      %1340 = vrot.lane.b32.xlu0 %v600, 60
      %v1341 = vpop.permute.xlu0 %1340
      %1342 = vrot.lane.b32.xlu0 %v533, 60
      %v1343 = vpop.permute.xlu0 %1342
      %1344 = vrot.lane.b32.xlu0 %v601, 60
      %v1345 = vpop.permute.xlu0 %1344
      %1346 = vrot.lane.b32.xlu0 %v536, 60
      %v1347 = vpop.permute.xlu0 %1346
      %1348 = vrot.lane.b32.xlu0 %v602, 60
      %v1349 = vpop.permute.xlu0 %1348
      %1350 = vrot.lane.b32.xlu0 %v539, 60
      %v1351 = vpop.permute.xlu0 %1350
      %1352 = vrot.lane.b32.xlu0 0.0, 60
      %v1353 = vpop.permute.xlu0 %1352
      %1385 = vrot.lane.b32.xlu0 %v660, 70
      %v1386 = vpop.permute.xlu0 %1385
      %1387 = vrot.lane.b32.xlu0 %v662, 70
      %v1388 = vpop.permute.xlu0 %1387
      %1389 = vrot.lane.b32.xlu0 %v665, 70
      %v1390 = vpop.permute.xlu0 %1389
      %1391 = vrot.lane.b32.xlu0 %v667, 70
      %v1392 = vpop.permute.xlu0 %1391
      %1393 = vrot.lane.b32.xlu0 %v670, 70
      %v1394 = vpop.permute.xlu0 %1393
      %1395 = vrot.lane.b32.xlu0 %v672, 70
      %v1396 = vpop.permute.xlu0 %1395
      %1397 = vrot.lane.b32.xlu0 %v675, 70
      %v1398 = vpop.permute.xlu0 %1397
      %1399 = vrot.lane.b32.xlu0 %v677, 70
      %v1400 = vpop.permute.xlu0 %1399
      %1401 = vrot.lane.b32.xlu0 %v680, 70
      %v1402 = vpop.permute.xlu0 %1401
      %1403 = vrot.lane.b32.xlu0 %v682, 70
      %v1404 = vpop.permute.xlu0 %1403
      %1405 = vrot.lane.b32.xlu0 %v685, 70
      %v1406 = vpop.permute.xlu0 %1405
      %1407 = vrot.lane.b32.xlu0 %v687, 70
      %v1408 = vpop.permute.xlu0 %1407
      %1409 = vrot.lane.b32.xlu0 %v690, 70
      %v1410 = vpop.permute.xlu0 %1409
      %1411 = vrot.lane.b32.xlu0 %v692, 70
      %v1412 = vpop.permute.xlu0 %1411
      %1413 = vrot.lane.b32.xlu0 %v695, 70
      %v1414 = vpop.permute.xlu0 %1413
      %1415 = vrot.lane.b32.xlu0 %v697, 70
      %v1416 = vpop.permute.xlu0 %1415
      %1417 = vrot.lane.b32.xlu0 %v700, 70
      %v1418 = vpop.permute.xlu0 %1417
      %1419 = vrot.lane.b32.xlu0 %v702, 70
      %v1420 = vpop.permute.xlu0 %1419
      %1421 = vrot.lane.b32.xlu0 %v705, 70
      %v1422 = vpop.permute.xlu0 %1421
      %1423 = vrot.lane.b32.xlu0 %v707, 70
      %v1424 = vpop.permute.xlu0 %1423
      %1425 = vrot.lane.b32.xlu0 %v710, 70
      %v1426 = vpop.permute.xlu0 %1425
      %1427 = vrot.lane.b32.xlu0 %v712, 70
      %v1428 = vpop.permute.xlu0 %1427
      %1429 = vrot.lane.b32.xlu0 %v715, 70
      %v1430 = vpop.permute.xlu0 %1429
      %1431 = vrot.lane.b32.xlu0 %v717, 70
      %v1432 = vpop.permute.xlu0 %1431
      %1433 = vrot.lane.b32.xlu0 %v720, 70
      %v1434 = vpop.permute.xlu0 %1433
      %1435 = vrot.lane.b32.xlu0 %v722, 70
      %v1436 = vpop.permute.xlu0 %1435
      %1437 = vrot.lane.b32.xlu0 %v725, 70
      %v1438 = vpop.permute.xlu0 %1437
      %1439 = vrot.lane.b32.xlu0 %v727, 70
      %v1440 = vpop.permute.xlu0 %1439
      %1441 = vrot.lane.b32.xlu0 %v1092, 70
      %v1442 = vpop.permute.xlu0 %1441
      %1443 = vrot.lane.b32.xlu0 %v1094, 70
      %v1444 = vpop.permute.xlu0 %1443
      %1445 = vrot.lane.b32.xlu0 %v652, 70
      %v1446 = vpop.permute.xlu0 %1445
      %1478 = vrot.lane.b32.xlu0 %v831, 80
      %v1479 = vpop.permute.xlu0 %1478
      %1480 = vrot.lane.b32.xlu0 %v833, 80
      %v1481 = vpop.permute.xlu0 %1480
      %1482 = vrot.lane.b32.xlu0 %v836, 80
      %v1483 = vpop.permute.xlu0 %1482
      %1484 = vrot.lane.b32.xlu0 %v838, 80
      %v1485 = vpop.permute.xlu0 %1484
      %1486 = vrot.lane.b32.xlu0 %v841, 80
      %v1487 = vpop.permute.xlu0 %1486
      %1488 = vrot.lane.b32.xlu0 %v843, 80
      %v1489 = vpop.permute.xlu0 %1488
      %1490 = vrot.lane.b32.xlu0 %v846, 80
      %v1491 = vpop.permute.xlu0 %1490
      %1492 = vrot.lane.b32.xlu0 %v848, 80
      %v1493 = vpop.permute.xlu0 %1492
      %1494 = vrot.lane.b32.xlu0 %v851, 80
      %v1495 = vpop.permute.xlu0 %1494
      %1496 = vrot.lane.b32.xlu0 %v853, 80
      %v1497 = vpop.permute.xlu0 %1496
      %1498 = vrot.lane.b32.xlu0 %v856, 80
      %v1499 = vpop.permute.xlu0 %1498
      %1500 = vrot.lane.b32.xlu0 %v858, 80
      %v1501 = vpop.permute.xlu0 %1500
      %1502 = vrot.lane.b32.xlu0 %v861, 80
      %v1503 = vpop.permute.xlu0 %1502
      %1504 = vrot.lane.b32.xlu0 %v863, 80
      %v1505 = vpop.permute.xlu0 %1504
      %1506 = vrot.lane.b32.xlu0 %v866, 80
      %v1507 = vpop.permute.xlu0 %1506
      %1508 = vrot.lane.b32.xlu0 %v868, 80
      %v1509 = vpop.permute.xlu0 %1508
      %1510 = vrot.lane.b32.xlu0 %v871, 80
      %v1511 = vpop.permute.xlu0 %1510
      %1512 = vrot.lane.b32.xlu0 %v873, 80
      %v1513 = vpop.permute.xlu0 %1512
      %1514 = vrot.lane.b32.xlu0 %v876, 80
      %v1515 = vpop.permute.xlu0 %1514
      %1516 = vrot.lane.b32.xlu0 %v878, 80
      %v1517 = vpop.permute.xlu0 %1516
      %1518 = vrot.lane.b32.xlu0 %v881, 80
      %v1519 = vpop.permute.xlu0 %1518
      %1520 = vrot.lane.b32.xlu0 %v883, 80
      %v1521 = vpop.permute.xlu0 %1520
      %1522 = vrot.lane.b32.xlu0 %v886, 80
      %v1523 = vpop.permute.xlu0 %1522
      %1524 = vrot.lane.b32.xlu0 %v888, 80
      %v1525 = vpop.permute.xlu0 %1524
      %1526 = vrot.lane.b32.xlu0 %v891, 80
      %v1527 = vpop.permute.xlu0 %1526
      %1528 = vrot.lane.b32.xlu0 %v893, 80
      %v1529 = vpop.permute.xlu0 %1528
      %1530 = vrot.lane.b32.xlu0 %v896, 80
      %v1531 = vpop.permute.xlu0 %1530
      %1532 = vrot.lane.b32.xlu0 %v898, 80
      %v1533 = vpop.permute.xlu0 %1532
      %1534 = vrot.lane.b32.xlu0 %v1193, 80
      %v1535 = vpop.permute.xlu0 %1534
      %1536 = vrot.lane.b32.xlu0 %v1195, 80
      %v1537 = vpop.permute.xlu0 %1536
      %1538 = vrot.lane.b32.xlu0 %v823, 80
      %v1539 = vpop.permute.xlu0 %1538
      %vm1571 = vcmask 80896
      %v1572 = vsel %vm1571, 0.0, %v729
      %v1573 = vsel %vm1571, %v587, %v731
      %v1574 = vsel %vm1571, %v494, %v733
      %v1575 = vsel %vm1571, %v588, %v735
      %v1576 = vsel %vm1571, %v497, %v737
      %v1577 = vsel %vm1571, %v589, %v739
      %v1578 = vsel %vm1571, %v500, %v741
      %v1579 = vsel %vm1571, %v590, %v743
      %v1580 = vsel %vm1571, %v503, %v745
      %v1581 = vsel %vm1571, %v591, %v747
      %v1582 = vsel %vm1571, %v506, %v749
      %v1583 = vsel %vm1571, %v592, %v751
      %v1584 = vsel %vm1571, %v509, %v753
      %v1585 = vsel %vm1571, %v593, %v755
      %v1586 = vsel %vm1571, %v512, %v757
      %v1587 = vsel %vm1571, %v594, %v759
      %v1588 = vsel %vm1571, %v515, %v761
      %v1589 = vsel %vm1571, %v595, %v763
      %v1590 = vsel %vm1571, %v518, %v765
      %v1591 = vsel %vm1571, %v596, %v767
      %v1592 = vsel %vm1571, %v521, %v769
      %v1593 = vsel %vm1571, %v597, %v771
      %v1594 = vsel %vm1571, %v524, %v773
      %v1595 = vsel %vm1571, %v598, %v775
      %v1596 = vsel %vm1571, %v527, %v777
      %v1597 = vsel %vm1571, %v599, %v779
      %v1598 = vsel %vm1571, %v530, %v781
      %v1599 = vsel %vm1571, %v600, %v783
      %v1600 = vsel %vm1571, %v533, %v785
      %v1601 = vsel %vm1571, %v601, %v787
      %v1602 = vsel %vm1571, %v536, %v789
      %vm1603 = vcmask 162816
      %v1604 = vsel %vm1603, %v1572, %v900
      %v1605 = vsel %vm1603, %v1573, %v902
      %v1606 = vsel %vm1603, %v1574, %v904
      %v1607 = vsel %vm1603, %v1575, %v906
      %v1608 = vsel %vm1603, %v1576, %v908
      %v1609 = vsel %vm1603, %v1577, %v910
      %v1610 = vsel %vm1603, %v1578, %v912
      %v1611 = vsel %vm1603, %v1579, %v914
      %v1612 = vsel %vm1603, %v1580, %v916
      %v1613 = vsel %vm1603, %v1581, %v918
      %v1614 = vsel %vm1603, %v1582, %v920
      %v1615 = vsel %vm1603, %v1583, %v922
      %v1616 = vsel %vm1603, %v1584, %v924
      %v1617 = vsel %vm1603, %v1585, %v926
      %v1618 = vsel %vm1603, %v1586, %v928
      %v1619 = vsel %vm1603, %v1587, %v930
      %v1620 = vsel %vm1603, %v1588, %v932
      %v1621 = vsel %vm1603, %v1589, %v934
      %v1622 = vsel %vm1603, %v1590, %v936
      %v1623 = vsel %vm1603, %v1591, %v938
      %v1624 = vsel %vm1603, %v1592, %v940
      %v1625 = vsel %vm1603, %v1593, %v942
      %v1626 = vsel %vm1603, %v1594, %v944
      %v1627 = vsel %vm1603, %v1595, %v946
      %v1628 = vsel %vm1603, %v1596, %v948
      %v1629 = vsel %vm1603, %v1597, %v950
      %v1630 = vsel %vm1603, %v1598, %v952
      %v1631 = vsel %vm1603, %v1599, %v954
      %v1632 = vsel %vm1603, %v1600, %v956
      %v1633 = vsel %vm1603, %v1601, %v958
      %v1634 = vsel %vm1603, %v1602, %v960
      %vm1635 = vcmask 244736
      %v1636 = vsel %vm1635, %v1604, %v994
      %v1637 = vsel %vm1635, %v1604, %v996
      %v1638 = vsel %vm1635, %v1605, %v998
      %v1639 = vsel %vm1635, %v1606, %v1000
      %v1640 = vsel %vm1635, %v1607, %v1002
      %v1641 = vsel %vm1635, %v1608, %v1004
      %v1642 = vsel %vm1635, %v1609, %v1006
      %v1643 = vsel %vm1635, %v1610, %v1008
      %v1644 = vsel %vm1635, %v1611, %v1010
      %v1645 = vsel %vm1635, %v1612, %v1012
      %v1646 = vsel %vm1635, %v1613, %v1014
      %v1647 = vsel %vm1635, %v1614, %v1016
      %v1648 = vsel %vm1635, %v1615, %v1018
      %v1649 = vsel %vm1635, %v1616, %v1020
      %v1650 = vsel %vm1635, %v1617, %v1022
      %v1651 = vsel %vm1635, %v1618, %v1024
      %v1652 = vsel %vm1635, %v1619, %v1026
      %v1653 = vsel %vm1635, %v1620, %v1028
      %v1654 = vsel %vm1635, %v1621, %v1030
      %v1655 = vsel %vm1635, %v1622, %v1032
      %v1656 = vsel %vm1635, %v1623, %v1034
      %v1657 = vsel %vm1635, %v1624, %v1036
      %v1658 = vsel %vm1635, %v1625, %v1038
      %v1659 = vsel %vm1635, %v1626, %v1040
      %v1660 = vsel %vm1635, %v1627, %v1042
      %v1661 = vsel %vm1635, %v1628, %v1044
      %v1662 = vsel %vm1635, %v1629, %v1046
      %v1663 = vsel %vm1635, %v1630, %v1048
      %v1664 = vsel %vm1635, %v1631, %v1050
      %v1665 = vsel %vm1635, %v1632, %v1052
      %v1666 = vsel %vm1635, %v1633, %v1054
      %v1667 = vsel %vm1635, %v1634, %v1056
      %vm1668 = vcmask 326656
      %v1669 = vsel %vm1668, %v1636, %v1096
      %v1670 = vsel %vm1668, %v1637, %v1098
      %v1671 = vsel %vm1668, %v1638, %v1100
      %v1672 = vsel %vm1668, %v1639, %v1102
      %v1673 = vsel %vm1668, %v1640, %v1104
      %v1674 = vsel %vm1668, %v1641, %v1106
      %v1675 = vsel %vm1668, %v1642, %v1108
      %v1676 = vsel %vm1668, %v1643, %v1110
      %v1677 = vsel %vm1668, %v1644, %v1112
      %v1678 = vsel %vm1668, %v1645, %v1114
      %v1679 = vsel %vm1668, %v1646, %v1116
      %v1680 = vsel %vm1668, %v1647, %v1118
      %v1681 = vsel %vm1668, %v1648, %v1120
      %v1682 = vsel %vm1668, %v1649, %v1122
      %v1683 = vsel %vm1668, %v1650, %v1124
      %v1684 = vsel %vm1668, %v1651, %v1126
      %v1685 = vsel %vm1668, %v1652, %v1128
      %v1686 = vsel %vm1668, %v1653, %v1130
      %v1687 = vsel %vm1668, %v1654, %v1132
      %v1688 = vsel %vm1668, %v1655, %v1134
      %v1689 = vsel %vm1668, %v1656, %v1136
      %v1690 = vsel %vm1668, %v1657, %v1138
      %v1691 = vsel %vm1668, %v1658, %v1140
      %v1692 = vsel %vm1668, %v1659, %v1142
      %v1693 = vsel %vm1668, %v1660, %v1144
      %v1694 = vsel %vm1668, %v1661, %v1146
      %v1695 = vsel %vm1668, %v1662, %v1148
      %v1696 = vsel %vm1668, %v1663, %v1150
      %v1697 = vsel %vm1668, %v1664, %v1152
      %v1698 = vsel %vm1668, %v1665, %v1154
      %v1699 = vsel %vm1668, %v1666, %v1156
      %v1700 = vsel %vm1668, %v1667, %v1158
      %vm1701 = vcmask 408576
      %v1702 = vsel %vm1701, %v1669, %v1197
      %v1703 = vsel %vm1701, %v1670, %v1199
      %v1704 = vsel %vm1701, %v1671, %v1201
      %v1705 = vsel %vm1701, %v1672, %v1203
      %v1706 = vsel %vm1701, %v1673, %v1205
      %v1707 = vsel %vm1701, %v1674, %v1207
      %v1708 = vsel %vm1701, %v1675, %v1209
      %v1709 = vsel %vm1701, %v1676, %v1211
      %v1710 = vsel %vm1701, %v1677, %v1213
      %v1711 = vsel %vm1701, %v1678, %v1215
      %v1712 = vsel %vm1701, %v1679, %v1217
      %v1713 = vsel %vm1701, %v1680, %v1219
      %v1714 = vsel %vm1701, %v1681, %v1221
      %v1715 = vsel %vm1701, %v1682, %v1223
      %v1716 = vsel %vm1701, %v1683, %v1225
      %v1717 = vsel %vm1701, %v1684, %v1227
      %v1718 = vsel %vm1701, %v1685, %v1229
      %v1719 = vsel %vm1701, %v1686, %v1231
      %v1720 = vsel %vm1701, %v1687, %v1233
      %v1721 = vsel %vm1701, %v1688, %v1235
      %v1722 = vsel %vm1701, %v1689, %v1237
      %v1723 = vsel %vm1701, %v1690, %v1239
      %v1724 = vsel %vm1701, %v1691, %v1241
      %v1725 = vsel %vm1701, %v1692, %v1243
      %v1726 = vsel %vm1701, %v1693, %v1245
      %v1727 = vsel %vm1701, %v1694, %v1247
      %v1728 = vsel %vm1701, %v1695, %v1249
      %v1729 = vsel %vm1701, %v1696, %v1251
      %v1730 = vsel %vm1701, %v1697, %v1253
      %v1731 = vsel %vm1701, %v1698, %v1255
      %v1732 = vsel %vm1701, %v1699, %v1257
      %v1733 = vsel %vm1701, %v1700, %v1259
      %vm1734 = vcmask 490496
      %v1735 = vsel %vm1734, %v1702, %v1293
      %v1736 = vsel %vm1734, %v1703, %v1295
      %v1737 = vsel %vm1734, %v1704, %v1297
      %v1738 = vsel %vm1734, %v1705, %v1299
      %v1739 = vsel %vm1734, %v1706, %v1301
      %v1740 = vsel %vm1734, %v1707, %v1303
      %v1741 = vsel %vm1734, %v1708, %v1305
      %v1742 = vsel %vm1734, %v1709, %v1307
      %v1743 = vsel %vm1734, %v1710, %v1309
      %v1744 = vsel %vm1734, %v1711, %v1311
      %v1745 = vsel %vm1734, %v1712, %v1313
      %v1746 = vsel %vm1734, %v1713, %v1315
      %v1747 = vsel %vm1734, %v1714, %v1317
      %v1748 = vsel %vm1734, %v1715, %v1319
      %v1749 = vsel %vm1734, %v1716, %v1321
      %v1750 = vsel %vm1734, %v1717, %v1323
      %v1751 = vsel %vm1734, %v1718, %v1325
      %v1752 = vsel %vm1734, %v1719, %v1327
      %v1753 = vsel %vm1734, %v1720, %v1329
      %v1754 = vsel %vm1734, %v1721, %v1331
      %v1755 = vsel %vm1734, %v1722, %v1333
      %v1756 = vsel %vm1734, %v1723, %v1335
      %v1757 = vsel %vm1734, %v1724, %v1337
      %v1758 = vsel %vm1734, %v1725, %v1339
      %v1759 = vsel %vm1734, %v1726, %v1341
      %v1760 = vsel %vm1734, %v1727, %v1343
      %v1761 = vsel %vm1734, %v1728, %v1345
      %v1762 = vsel %vm1734, %v1729, %v1347
      %v1763 = vsel %vm1734, %v1730, %v1349
      %v1764 = vsel %vm1734, %v1731, %v1351
      %v1765 = vsel %vm1734, %v1732, %v1353
      %v1766 = vsel %vm1734, %v1733, %v1353
      %vm1767 = vcmask 572416
      %v1768 = vsel %vm1767, %v1735, %v1386
      %v1769 = vsel %vm1767, %v1736, %v1388
      %v1770 = vsel %vm1767, %v1737, %v1390
      %v1771 = vsel %vm1767, %v1738, %v1392
      %v1772 = vsel %vm1767, %v1739, %v1394
      %v1773 = vsel %vm1767, %v1740, %v1396
      %v1774 = vsel %vm1767, %v1741, %v1398
      %v1775 = vsel %vm1767, %v1742, %v1400
      %v1776 = vsel %vm1767, %v1743, %v1402
      %v1777 = vsel %vm1767, %v1744, %v1404
      %v1778 = vsel %vm1767, %v1745, %v1406
      %v1779 = vsel %vm1767, %v1746, %v1408
      %v1780 = vsel %vm1767, %v1747, %v1410
      %v1781 = vsel %vm1767, %v1748, %v1412
      %v1782 = vsel %vm1767, %v1749, %v1414
      %v1783 = vsel %vm1767, %v1750, %v1416
      %v1784 = vsel %vm1767, %v1751, %v1418
      %v1785 = vsel %vm1767, %v1752, %v1420
      %v1786 = vsel %vm1767, %v1753, %v1422
      %v1787 = vsel %vm1767, %v1754, %v1424
      %v1788 = vsel %vm1767, %v1755, %v1426
      %v1789 = vsel %vm1767, %v1756, %v1428
      %v1790 = vsel %vm1767, %v1757, %v1430
      %v1791 = vsel %vm1767, %v1758, %v1432
      %v1792 = vsel %vm1767, %v1759, %v1434
      %v1793 = vsel %vm1767, %v1760, %v1436
      %v1794 = vsel %vm1767, %v1761, %v1438
      %v1795 = vsel %vm1767, %v1762, %v1440
      %v1796 = vsel %vm1767, %v1763, %v1442
      %v1797 = vsel %vm1767, %v1764, %v1444
      %v1798 = vsel %vm1767, %v1765, %v1446
      %v1799 = vsel %vm1767, %v1766, %v1446
      %vm1800 = vcmask 654336
      %v1801 = vsel %vm1800, %v1768, %v1479
      %v1802 = vsel %vm1800, %v1769, %v1481
      %v1803 = vsel %vm1800, %v1770, %v1483
      %v1804 = vsel %vm1800, %v1771, %v1485
      %v1805 = vsel %vm1800, %v1772, %v1487
      %v1806 = vsel %vm1800, %v1773, %v1489
      %v1807 = vsel %vm1800, %v1774, %v1491
      %v1808 = vsel %vm1800, %v1775, %v1493
      %v1809 = vsel %vm1800, %v1776, %v1495
      %v1810 = vsel %vm1800, %v1777, %v1497
      %v1811 = vsel %vm1800, %v1778, %v1499
      %v1812 = vsel %vm1800, %v1779, %v1501
      %v1813 = vsel %vm1800, %v1780, %v1503
      %v1814 = vsel %vm1800, %v1781, %v1505
      %v1815 = vsel %vm1800, %v1782, %v1507
      %v1816 = vsel %vm1800, %v1783, %v1509
      %v1817 = vsel %vm1800, %v1784, %v1511
      %v1818 = vsel %vm1800, %v1785, %v1513
      %v1819 = vsel %vm1800, %v1786, %v1515
      %v1820 = vsel %vm1800, %v1787, %v1517
      %v1821 = vsel %vm1800, %v1788, %v1519
      %v1822 = vsel %vm1800, %v1789, %v1521
      %v1823 = vsel %vm1800, %v1790, %v1523
      %v1824 = vsel %vm1800, %v1791, %v1525
      %v1825 = vsel %vm1800, %v1792, %v1527
      %v1826 = vsel %vm1800, %v1793, %v1529
      %v1827 = vsel %vm1800, %v1794, %v1531
      %v1828 = vsel %vm1800, %v1795, %v1533
      %v1829 = vsel %vm1800, %v1796, %v1535
      %v1830 = vsel %vm1800, %v1797, %v1537
      %v1831 = vsel %vm1800, %v1798, %v1539
      %v1832 = vsel %vm1800, %v1799, %v1539
      %v1834 = vlaneseq
      %v1835 = vshrl.u32 %v1834, 7
      %v1836 = vsub.s32 0, %v1835
      %v1837 = vrot.slane %v458, %v1836
      %vm1839 = vcmask 736256
      %v1841 = vsel %vm1839, %v1801, 0
      %v1844 = vsel %vm1839, %v1802, 0
      %v1847 = vsel %vm1839, %v1803, 0
      %v1850 = vsel %vm1839, %v1804, 0
      %v1853 = vsel %vm1839, %v1805, 0
      %v1856 = vsel %vm1839, %v1806, 0
      %v1859 = vsel %vm1839, %v1807, 0
      %v1862 = vsel %vm1839, %v1808, 0
      %v1865 = vsel %vm1839, %v1809, 0
      %v1868 = vsel %vm1839, %v1810, 0
      %v1871 = vsel %vm1839, %v1811, 0
      %v1874 = vsel %vm1839, %v1812, 0
      %v1877 = vsel %vm1839, %v1813, 0
      %v1880 = vsel %vm1839, %v1814, 0
      %v1883 = vsel %vm1839, %v1815, 0
      %v1886 = vsel %vm1839, %v1816, 0
      %v1889 = vsel %vm1839, %v1817, 0
      %v1892 = vsel %vm1839, %v1818, 0
      %v1895 = vsel %vm1839, %v1819, 0
      %v1898 = vsel %vm1839, %v1820, 0
      %v1901 = vsel %vm1839, %v1821, 0
      %v1904 = vsel %vm1839, %v1822, 0
      %v1907 = vsel %vm1839, %v1823, 0
      %v1910 = vsel %vm1839, %v1824, 0
      %v1913 = vsel %vm1839, %v1825, 0
      %v1916 = vsel %vm1839, %v1826, 0
      %v1919 = vsel %vm1839, %v1827, 0
      %v1922 = vsel %vm1839, %v1828, 0
      %v1925 = vsel %vm1839, %v1829, 0
      %v1928 = vsel %vm1839, %v1830, 0
      %v1931 = vsel %vm1839, %v1831, 0
      %v1934 = vsel %vm1839, %v1832, 0
      %vm1936 = vcmask 1041408
      %v1938 = vsel %vm1936, %v457, 0
      %1940 = vmatprep.subr.mxu0 0.0
      %1941 = vmatpush1.msra.mxu0 %v446
      %1942 = vmatprep.subr.mxu0 0.0
      %1943 = vmatpush1.msra.mxu0 %v447
      %1944 = vmatprep.subr.mxu0 0.0
      %1945 = vmatpush1.msra.mxu0 %v448
      %1946 = vmatprep.subr.mxu0 0.0
      %1947 = vmatpush1.msra.mxu0 %v449
      %1948 = vmatprep.subr.mxu0 0.0
      %1949 = vmatpush1.msra.mxu0 %v450
      %1950 = vmatprep.subr.mxu0 0.0
      %1951 = vmatpush1.msra.mxu0 %v451
      %1952 = vmatprep.subr.mxu0 0.0
      %1953 = vmatpush1.msra.mxu0 %v452
      %1954 = vmatprep.subr.mxu0 0.0
      %1955 = vmatpush1.msra.mxu0 %v453
      %1956 = vmatprep.subr.mxu0 0.0
      %1957 = vmatpush1.msra.mxu0 %v454
      %1958 = vmatprep.subr.mxu0 0.0
      %1959 = vmatpush1.msra.mxu0 %v455
      %1960 = vmatprep.subr.mxu0 0.0
      %1961 = vmatpush1.msra.mxu0 %v456
      %1962 = vmatprep.subr.mxu0 0.0
      %1963 = vmatpush1.msra.mxu0 %v1938
      %1964 = vmatprep.subr.mxu0 0.0
      %1965 = vmatpush1.msra.mxu0 0.0
      %1966 = vmatprep.subr.mxu0 0.0
      %1967 = vmatpush1.msra.mxu0 0.0
      %1968 = vmatprep.subr.mxu0 0.0
      %1969 = vmatpush1.msra.mxu0 0.0
      %1970 = vmatprep.subr.mxu0 0.0
      %1971 = vmatpush1.msra.mxu0 0.0
      %1972 = vmatprep.subr.mxu0 0.0
      %1973 = vmatpush1.msra.mxu0 0.0
      %1974 = vmatprep.subr.mxu0 0.0
      %1975 = vmatpush1.msra.mxu0 0.0
      %1976 = vmatprep.subr.mxu0 0.0
      %1977 = vmatpush1.msra.mxu0 0.0
      %1978 = vmatprep.subr.mxu0 0.0
      %1979 = vmatpush1.msra.mxu0 0.0
      %1980 = vmatprep.subr.mxu0 0.0
      %1981 = vmatpush1.msra.mxu0 0.0
      %1982 = vmatprep.subr.mxu0 0.0
      %1983 = vmatpush1.msra.mxu0 0.0
      %1984 = vmatprep.subr.mxu0 0.0
      %1985 = vmatpush1.msra.mxu0 0.0
      %1986 = vmatprep.subr.mxu0 0.0
      %1987 = vmatpush1.msra.mxu0 0.0
      %1988 = vmatprep.subr.mxu0 0.0
      %1989 = vmatpush1.msra.mxu0 0.0
      %1990 = vmatprep.subr.mxu0 0.0
      %1991 = vmatpush1.msra.mxu0 0.0
      %1992 = vmatprep.subr.mxu0 0.0
      %1993 = vmatpush1.msra.mxu0 0.0
      %1994 = vmatprep.subr.mxu0 0.0
      %1995 = vmatpush1.msra.mxu0 0.0
      %1996 = vmatprep.subr.mxu0 0.0
      %1997 = vmatpush1.msra.mxu0 0.0
      %1998 = vmatprep.subr.mxu0 0.0
      %1999 = vmatpush1.msra.mxu0 0.0
      %2000 = vmatprep.subr.mxu0 0.0
      %2001 = vmatpush1.msra.mxu0 0.0
      %2002 = vmatprep.subr.mxu0 0.0
      %2003 = vmatpush1.msra.mxu0 0.0
      %2004 = vmatprep.mubr.f32.mxu0 0.0
      %2005 = vmatmul.mubr.f32.gmra.mrb[0].mxu0 %v1841
      %v2006 = vpop.f32.mrb[0].mxu0
      %v2007 = vadd.f32 %v1837, %v2006
      %v2008 = vpop.f32.mrb[0].mxu0
      %2009 = vmatprep.mubr.f32.mxu0 0.0
      %2010 = vmatmul.mubr.f32.gmra.mrb[0].mxu0 %v1844
      %v2011 = vpop.f32.mrb[0].mxu0
      %v2012 = vadd.f32 %v1837, %v2011
      %v2013 = vpop.f32.mrb[0].mxu0
      %2014 = vmatprep.mubr.f32.mxu0 0.0
      %2015 = vmatmul.mubr.f32.gmra.mrb[0].mxu0 %v1847
      %v2016 = vpop.f32.mrb[0].mxu0
      %v2017 = vadd.f32 %v1837, %v2016
      %v2018 = vpop.f32.mrb[0].mxu0
      %2019 = vmatprep.mubr.f32.mxu0 0.0
      %2020 = vmatmul.mubr.f32.gmra.mrb[0].mxu0 %v1850
      %v2021 = vpop.f32.mrb[0].mxu0
      %v2022 = vadd.f32 %v1837, %v2021
      %v2023 = vpop.f32.mrb[0].mxu0
      %2024 = vmatprep.mubr.f32.mxu0 0.0
      %2025 = vmatmul.mubr.f32.gmra.mrb[0].mxu0 %v1853
      %v2026 = vpop.f32.mrb[0].mxu0
      %v2027 = vadd.f32 %v1837, %v2026
      %v2028 = vpop.f32.mrb[0].mxu0
      %2029 = vmatprep.mubr.f32.mxu0 0.0
      %2030 = vmatmul.mubr.f32.gmra.mrb[0].mxu0 %v1856
      %v2031 = vpop.f32.mrb[0].mxu0
      %v2032 = vadd.f32 %v1837, %v2031
      %v2033 = vpop.f32.mrb[0].mxu0
      %2034 = vmatprep.mubr.f32.mxu0 0.0
      %2035 = vmatmul.mubr.f32.gmra.mrb[0].mxu0 %v1859
      %v2036 = vpop.f32.mrb[0].mxu0
      %v2037 = vadd.f32 %v1837, %v2036
      %v2038 = vpop.f32.mrb[0].mxu0
      %2039 = vmatprep.mubr.f32.mxu0 0.0
      %2040 = vmatmul.mubr.f32.gmra.mrb[0].mxu0 %v1862
      %v2041 = vpop.f32.mrb[0].mxu0
      %v2042 = vadd.f32 %v1837, %v2041
      %v2043 = vpop.f32.mrb[0].mxu0
      %2044 = vmatprep.mubr.f32.mxu0 0.0
      %2045 = vmatmul.mubr.f32.gmra.mrb[0].mxu0 %v1865
      %v2046 = vpop.f32.mrb[0].mxu0
      %v2047 = vadd.f32 %v1837, %v2046
      %v2048 = vpop.f32.mrb[0].mxu0
      %2049 = vmatprep.mubr.f32.mxu0 0.0
      %2050 = vmatmul.mubr.f32.gmra.mrb[0].mxu0 %v1868
      %v2051 = vpop.f32.mrb[0].mxu0
      %v2052 = vadd.f32 %v1837, %v2051
      %v2053 = vpop.f32.mrb[0].mxu0
      %2054 = vmatprep.mubr.f32.mxu0 0.0
      %2055 = vmatmul.mubr.f32.gmra.mrb[0].mxu0 %v1871
      %v2056 = vpop.f32.mrb[0].mxu0
      %v2057 = vadd.f32 %v1837, %v2056
      %v2058 = vpop.f32.mrb[0].mxu0
      %2059 = vmatprep.mubr.f32.mxu0 0.0
      %2060 = vmatmul.mubr.f32.gmra.mrb[0].mxu0 %v1874
      %v2061 = vpop.f32.mrb[0].mxu0
      %v2062 = vadd.f32 %v1837, %v2061
      %v2063 = vpop.f32.mrb[0].mxu0
      %2064 = vmatprep.mubr.f32.mxu0 0.0
      %2065 = vmatmul.mubr.f32.gmra.mrb[0].mxu0 %v1877
      %v2066 = vpop.f32.mrb[0].mxu0
      %v2067 = vadd.f32 %v1837, %v2066
      %v2068 = vpop.f32.mrb[0].mxu0
      %2069 = vmatprep.mubr.f32.mxu0 0.0
      %2070 = vmatmul.mubr.f32.gmra.mrb[0].mxu0 %v1880
      %v2071 = vpop.f32.mrb[0].mxu0
      %v2072 = vadd.f32 %v1837, %v2071
      %v2073 = vpop.f32.mrb[0].mxu0
      %2074 = vmatprep.mubr.f32.mxu0 0.0
      %2075 = vmatmul.mubr.f32.gmra.mrb[0].mxu0 %v1883
      %v2076 = vpop.f32.mrb[0].mxu0
      %v2077 = vadd.f32 %v1837, %v2076
      %v2078 = vpop.f32.mrb[0].mxu0
      %2079 = vmatprep.mubr.f32.mxu0 0.0
      %2080 = vmatmul.mubr.f32.gmra.mrb[0].mxu0 %v1886
      %v2081 = vpop.f32.mrb[0].mxu0
      %v2082 = vadd.f32 %v1837, %v2081
      %v2083 = vpop.f32.mrb[0].mxu0
      %2084 = vmatprep.mubr.f32.mxu0 0.0
      %2085 = vmatmul.mubr.f32.gmra.mrb[0].mxu0 %v1889
      %v2086 = vpop.f32.mrb[0].mxu0
      %v2087 = vadd.f32 %v1837, %v2086
      %v2088 = vpop.f32.mrb[0].mxu0
      %2089 = vmatprep.mubr.f32.mxu0 0.0
      %2090 = vmatmul.mubr.f32.gmra.mrb[0].mxu0 %v1892
      %v2091 = vpop.f32.mrb[0].mxu0
      %v2092 = vadd.f32 %v1837, %v2091
      %v2093 = vpop.f32.mrb[0].mxu0
      %2094 = vmatprep.mubr.f32.mxu0 0.0
      %2095 = vmatmul.mubr.f32.gmra.mrb[0].mxu0 %v1895
      %v2096 = vpop.f32.mrb[0].mxu0
      %v2097 = vadd.f32 %v1837, %v2096
      %v2098 = vpop.f32.mrb[0].mxu0
      %2099 = vmatprep.mubr.f32.mxu0 0.0
      %2100 = vmatmul.mubr.f32.gmra.mrb[0].mxu0 %v1898
      %v2101 = vpop.f32.mrb[0].mxu0
      %v2102 = vadd.f32 %v1837, %v2101
      %v2103 = vpop.f32.mrb[0].mxu0
      %2104 = vmatprep.mubr.f32.mxu0 0.0
      %2105 = vmatmul.mubr.f32.gmra.mrb[0].mxu0 %v1901
      %v2106 = vpop.f32.mrb[0].mxu0
      %v2107 = vadd.f32 %v1837, %v2106
      %v2108 = vpop.f32.mrb[0].mxu0
      %2109 = vmatprep.mubr.f32.mxu0 0.0
      %2110 = vmatmul.mubr.f32.gmra.mrb[0].mxu0 %v1904
      %v2111 = vpop.f32.mrb[0].mxu0
      %v2112 = vadd.f32 %v1837, %v2111
      %v2113 = vpop.f32.mrb[0].mxu0
      %2114 = vmatprep.mubr.f32.mxu0 0.0
      %2115 = vmatmul.mubr.f32.gmra.mrb[0].mxu0 %v1907
      %v2116 = vpop.f32.mrb[0].mxu0
      %v2117 = vadd.f32 %v1837, %v2116
      %v2118 = vpop.f32.mrb[0].mxu0
      %2119 = vmatprep.mubr.f32.mxu0 0.0
      %2120 = vmatmul.mubr.f32.gmra.mrb[0].mxu0 %v1910
      %v2121 = vpop.f32.mrb[0].mxu0
      %v2122 = vadd.f32 %v1837, %v2121
      %v2123 = vpop.f32.mrb[0].mxu0
      %2124 = vmatprep.mubr.f32.mxu0 0.0
      %2125 = vmatmul.mubr.f32.gmra.mrb[0].mxu0 %v1913
      %v2126 = vpop.f32.mrb[0].mxu0
      %v2127 = vadd.f32 %v1837, %v2126
      %v2128 = vpop.f32.mrb[0].mxu0
      %2129 = vmatprep.mubr.f32.mxu0 0.0
      %2130 = vmatmul.mubr.f32.gmra.mrb[0].mxu0 %v1916
      %v2131 = vpop.f32.mrb[0].mxu0
      %v2132 = vadd.f32 %v1837, %v2131
      %v2133 = vpop.f32.mrb[0].mxu0
      %2134 = vmatprep.mubr.f32.mxu0 0.0
      %2135 = vmatmul.mubr.f32.gmra.mrb[0].mxu0 %v1919
      %v2136 = vpop.f32.mrb[0].mxu0
      %v2137 = vadd.f32 %v1837, %v2136
      %v2138 = vpop.f32.mrb[0].mxu0
      %2139 = vmatprep.mubr.f32.mxu0 0.0
      %2140 = vmatmul.mubr.f32.gmra.mrb[0].mxu0 %v1922
      %v2141 = vpop.f32.mrb[0].mxu0
      %v2142 = vadd.f32 %v1837, %v2141
      %v2143 = vpop.f32.mrb[0].mxu0
      %2144 = vmatprep.mubr.f32.mxu0 0.0
      %2145 = vmatmul.mubr.f32.gmra.mrb[0].mxu0 %v1925
      %v2146 = vpop.f32.mrb[0].mxu0
      %v2147 = vadd.f32 %v1837, %v2146
      %v2148 = vpop.f32.mrb[0].mxu0
      %2149 = vmatprep.mubr.f32.mxu0 0.0
      %2150 = vmatmul.mubr.f32.gmra.mrb[0].mxu0 %v1928
      %v2151 = vpop.f32.mrb[0].mxu0
      %v2152 = vadd.f32 %v1837, %v2151
      %v2153 = vpop.f32.mrb[0].mxu0
      %2154 = vmatprep.mubr.f32.mxu0 0.0
      %2155 = vmatmul.mubr.f32.gmra.mrb[0].mxu0 %v1931
      %v2156 = vpop.f32.mrb[0].mxu0
      %v2157 = vadd.f32 %v1837, %v2156
      %v2158 = vpop.f32.mrb[0].mxu0
      %2159 = vmatprep.mubr.f32.mxu0 0.0
      %2160 = vmatmul.mubr.f32.gmra.mrb[0].mxu0 %v1934
      %v2161 = vpop.f32.mrb[0].mxu0
      %v2162 = vadd.f32 %v1837, %v2161
      %v2163 = vpop.f32.mrb[0].mxu0
      %2164 = vdwg.mxu0
      %vm2165 = vcmp.ge.f32.partialorder %v2007, 0.0
      %vm2166 = vcmp.ge.f32.partialorder %v2012, 0.0
      %vm2167 = vcmp.ge.f32.partialorder %v2017, 0.0
      %vm2168 = vcmp.ge.f32.partialorder %v2022, 0.0
      %vm2169 = vcmp.ge.f32.partialorder %v2027, 0.0
      %vm2170 = vcmp.ge.f32.partialorder %v2032, 0.0
      %vm2171 = vcmp.ge.f32.partialorder %v2037, 0.0
      %vm2172 = vcmp.ge.f32.partialorder %v2042, 0.0
      %vm2173 = vcmp.ge.f32.partialorder %v2047, 0.0
      %vm2174 = vcmp.ge.f32.partialorder %v2052, 0.0
      %vm2175 = vcmp.ge.f32.partialorder %v2057, 0.0
      %vm2176 = vcmp.ge.f32.partialorder %v2062, 0.0
      %vm2177 = vcmp.ge.f32.partialorder %v2067, 0.0
      %vm2178 = vcmp.ge.f32.partialorder %v2072, 0.0
      %vm2179 = vcmp.ge.f32.partialorder %v2077, 0.0
      %vm2180 = vcmp.ge.f32.partialorder %v2082, 0.0
      %vm2181 = vcmp.ge.f32.partialorder %v2087, 0.0
      %vm2182 = vcmp.ge.f32.partialorder %v2092, 0.0
      %vm2183 = vcmp.ge.f32.partialorder %v2097, 0.0
      %vm2184 = vcmp.ge.f32.partialorder %v2102, 0.0
      %vm2185 = vcmp.ge.f32.partialorder %v2107, 0.0
      %vm2186 = vcmp.ge.f32.partialorder %v2112, 0.0
      %vm2187 = vcmp.ge.f32.partialorder %v2117, 0.0
      %vm2188 = vcmp.ge.f32.partialorder %v2122, 0.0
      %vm2189 = vcmp.ge.f32.partialorder %v2127, 0.0
      %vm2190 = vcmp.ge.f32.partialorder %v2132, 0.0
      %vm2191 = vcmp.ge.f32.partialorder %v2137, 0.0
      %vm2192 = vcmp.ge.f32.partialorder %v2142, 0.0
      %vm2193 = vcmp.ge.f32.partialorder %v2147, 0.0
      %vm2194 = vcmp.ge.f32.partialorder %v2152, 0.0
      %vm2195 = vcmp.ge.f32.partialorder %v2157, 0.0
      %vm2196 = vcmp.ge.f32.partialorder %v2162, 0.0
      %v2197 = vmul.f32 %v2007, 0.1
      %v2198 = vmul.f32 %v2012, 0.1
      %v2199 = vmul.f32 %v2017, 0.1
      %v2200 = vmul.f32 %v2022, 0.1
      %v2201 = vmul.f32 %v2027, 0.1
      %v2202 = vmul.f32 %v2032, 0.1
      %v2203 = vmul.f32 %v2037, 0.1
      %v2204 = vmul.f32 %v2042, 0.1
      %v2205 = vmul.f32 %v2047, 0.1
      %v2206 = vmul.f32 %v2052, 0.1
      %v2207 = vmul.f32 %v2057, 0.1
      %v2208 = vmul.f32 %v2062, 0.1
      %v2209 = vmul.f32 %v2067, 0.1
      %v2210 = vmul.f32 %v2072, 0.1
      %v2211 = vmul.f32 %v2077, 0.1
      %v2212 = vmul.f32 %v2082, 0.1
      %v2213 = vmul.f32 %v2087, 0.1
      %v2214 = vmul.f32 %v2092, 0.1
      %v2215 = vmul.f32 %v2097, 0.1
      %v2216 = vmul.f32 %v2102, 0.1
      %v2217 = vmul.f32 %v2107, 0.1
      %v2218 = vmul.f32 %v2112, 0.1
      %v2219 = vmul.f32 %v2117, 0.1
      %v2220 = vmul.f32 %v2122, 0.1
      %v2221 = vmul.f32 %v2127, 0.1
      %v2222 = vmul.f32 %v2132, 0.1
      %v2223 = vmul.f32 %v2137, 0.1
      %v2224 = vmul.f32 %v2142, 0.1
      %v2225 = vmul.f32 %v2147, 0.1
      %v2226 = vmul.f32 %v2152, 0.1
      %v2227 = vmul.f32 %v2157, 0.1
      %v2228 = vmul.f32 %v2162, 0.1
      %v2229 = vsel %vm2165, %v2007, %v2197
      %v2230 = vsel %vm2166, %v2012, %v2198
      %v2231 = vsel %vm2167, %v2017, %v2199
      %v2232 = vsel %vm2168, %v2022, %v2200
      %v2233 = vsel %vm2169, %v2027, %v2201
      %v2234 = vsel %vm2170, %v2032, %v2202
      %v2235 = vsel %vm2171, %v2037, %v2203
      %v2236 = vsel %vm2172, %v2042, %v2204
      %v2237 = vsel %vm2173, %v2047, %v2205
      %v2238 = vsel %vm2174, %v2052, %v2206
      %v2239 = vsel %vm2175, %v2057, %v2207
      %v2240 = vsel %vm2176, %v2062, %v2208
      %v2241 = vsel %vm2177, %v2067, %v2209
      %v2242 = vsel %vm2178, %v2072, %v2210
      %v2243 = vsel %vm2179, %v2077, %v2211
      %v2244 = vsel %vm2180, %v2082, %v2212
      %v2245 = vsel %vm2181, %v2087, %v2213
      %v2246 = vsel %vm2182, %v2092, %v2214
      %v2247 = vsel %vm2183, %v2097, %v2215
      %v2248 = vsel %vm2184, %v2102, %v2216
      %v2249 = vsel %vm2185, %v2107, %v2217
      %v2250 = vsel %vm2186, %v2112, %v2218
      %v2251 = vsel %vm2187, %v2117, %v2219
      %v2252 = vsel %vm2188, %v2122, %v2220
      %v2253 = vsel %vm2189, %v2127, %v2221
      %v2254 = vsel %vm2190, %v2132, %v2222
      %v2255 = vsel %vm2191, %v2137, %v2223
      %v2256 = vsel %vm2192, %v2142, %v2224
      %v2257 = vsel %vm2193, %v2147, %v2225
      %v2258 = vsel %vm2194, %v2152, %v2226
      %v2259 = vsel %vm2195, %v2157, %v2227
      %v2260 = vsel %vm2196, %v2162, %v2228
      %v2261 = vld [vmem:[%s3] sm:$0xff]
      %v2262 = vld [vmem:[%s3 + $0x8] sm:$0xff]
      %v2263 = vld [vmem:[%s3 + $0x10] sm:$0xff]
      %v2264 = vld [vmem:[%s3 + $0x18] sm:$0xff]
      %v2265 = vld [vmem:[%s3 + $0x20] sm:$0xff]
      %v2266 = vld [vmem:[%s3 + $0x28] sm:$0xff]
      %v2267 = vld [vmem:[%s3 + $0x30] sm:$0xff]
      %v2268 = vld [vmem:[%s3 + $0x38] sm:$0xff]
      %v2269 = vld [vmem:[%s3 + $0x40] sm:$0xff]
      %v2270 = vld [vmem:[%s3 + $0x48] sm:$0xff]
      %v2271 = vld [vmem:[%s3 + $0x50] sm:$0xff]
      %v2272 = vld [vmem:[%s3 + $0x58] sm:$0xff]
      %v2273 = vld [vmem:[%s3 + $0x60] sm:$0xff]
      %v2274 = vld [vmem:[%s3 + $0x68] sm:$0xff]
      %v2275 = vld [vmem:[%s3 + $0x70] sm:$0xff]
      %v2276 = vld [vmem:[%s3 + $0x78] sm:$0xff]
      %2277 = vmatprep.subr.mxu0 0.0
      %2278 = vmatpush1.msra.mxu0 %v2229
      %2279 = vmatprep.subr.mxu0 0.0
      %2280 = vmatpush1.msra.mxu0 %v2230
      %2281 = vmatprep.subr.mxu0 0.0
      %2282 = vmatpush1.msra.mxu0 %v2231
      %2283 = vmatprep.subr.mxu0 0.0
      %2284 = vmatpush1.msra.mxu0 %v2232
      %2285 = vmatprep.subr.mxu0 0.0
      %2286 = vmatpush1.msra.mxu0 %v2233
      %2287 = vmatprep.subr.mxu0 0.0
      %2288 = vmatpush1.msra.mxu0 %v2234
      %2289 = vmatprep.subr.mxu0 0.0
      %2290 = vmatpush1.msra.mxu0 %v2235
      %2291 = vmatprep.subr.mxu0 0.0
      %2292 = vmatpush1.msra.mxu0 %v2236
      %2293 = vmatprep.subr.mxu0 0.0
      %2294 = vmatpush1.msra.mxu0 %v2237
      %2295 = vmatprep.subr.mxu0 0.0
      %2296 = vmatpush1.msra.mxu0 %v2238
      %2297 = vmatprep.subr.mxu0 0.0
      %2298 = vmatpush1.msra.mxu0 %v2239
      %2299 = vmatprep.subr.mxu0 0.0
      %2300 = vmatpush1.msra.mxu0 %v2240
      %2301 = vmatprep.subr.mxu0 0.0
      %2302 = vmatpush1.msra.mxu0 %v2241
      %2303 = vmatprep.subr.mxu0 0.0
      %2304 = vmatpush1.msra.mxu0 %v2242
      %2305 = vmatprep.subr.mxu0 0.0
      %2306 = vmatpush1.msra.mxu0 %v2243
      %2307 = vmatprep.subr.mxu0 0.0
      %2308 = vmatpush1.msra.mxu0 %v2244
      %2309 = vmatprep.subr.mxu0 0.0
      %2310 = vmatpush1.msra.mxu0 %v2245
      %2311 = vmatprep.subr.mxu0 0.0
      %2312 = vmatpush1.msra.mxu0 %v2246
      %2313 = vmatprep.subr.mxu0 0.0
      %2314 = vmatpush1.msra.mxu0 %v2247
      %2315 = vmatprep.subr.mxu0 0.0
      %2316 = vmatpush1.msra.mxu0 %v2248
      %2317 = vmatprep.subr.mxu0 0.0
      %2318 = vmatpush1.msra.mxu0 %v2249
      %2319 = vmatprep.subr.mxu0 0.0
      %2320 = vmatpush1.msra.mxu0 %v2250
      %2321 = vmatprep.subr.mxu0 0.0
      %2322 = vmatpush1.msra.mxu0 %v2251
      %2323 = vmatprep.subr.mxu0 0.0
      %2324 = vmatpush1.msra.mxu0 %v2252
      %2325 = vmatprep.subr.mxu0 0.0
      %2326 = vmatpush1.msra.mxu0 %v2253
      %2327 = vmatprep.subr.mxu0 0.0
      %2328 = vmatpush1.msra.mxu0 %v2254
      %2329 = vmatprep.subr.mxu0 0.0
      %2330 = vmatpush1.msra.mxu0 %v2255
      %2331 = vmatprep.subr.mxu0 0.0
      %2332 = vmatpush1.msra.mxu0 %v2256
      %2333 = vmatprep.subr.mxu0 0.0
      %2334 = vmatpush1.msra.mxu0 %v2257
      %2335 = vmatprep.subr.mxu0 0.0
      %2336 = vmatpush1.msra.mxu0 %v2258
      %2337 = vmatprep.subr.mxu0 0.0
      %2338 = vmatpush1.msra.mxu0 %v2259
      %2339 = vmatprep.subr.mxu0 0.0
      %2340 = vmatpush1.msra.mxu0 %v2260
      %2341 = vmatprep.mubr.f32.mxu0 %v2262
      %2342 = vmatmul.mubr.f32.gmra.mrb[0].mxu0 %v2261
      %v2343 = vpop.f32.mrb[0].mxu0
      %v2344 = vadd.f32 0.0, %v2343
      %v2345 = vpop.f32.mrb[0].mxu0
      %2346 = vmatprep.mubr.f32.mxu0 %v2264
      %2347 = vmatmul.mubr.f32.gmra.mrb[0].mxu0 %v2263
      %v2348 = vpop.f32.mrb[0].mxu0
      %v2349 = vadd.f32 0.0, %v2348
      %v2350 = vpop.f32.mrb[0].mxu0
      %2351 = vmatprep.mubr.f32.mxu0 %v2266
      %2352 = vmatmul.mubr.f32.gmra.mrb[0].mxu0 %v2265
      %v2353 = vpop.f32.mrb[0].mxu0
      %v2354 = vadd.f32 0.0, %v2353
      %v2355 = vpop.f32.mrb[0].mxu0
      %2356 = vmatprep.mubr.f32.mxu0 %v2268
      %2357 = vmatmul.mubr.f32.gmra.mrb[0].mxu0 %v2267
      %v2358 = vpop.f32.mrb[0].mxu0
      %v2359 = vadd.f32 0.0, %v2358
      %v2360 = vpop.f32.mrb[0].mxu0
      %2361 = vmatprep.mubr.f32.mxu0 %v2270
      %2362 = vmatmul.mubr.f32.gmra.mrb[0].mxu0 %v2269
      %v2363 = vpop.f32.mrb[0].mxu0
      %v2364 = vadd.f32 0.0, %v2363
      %v2365 = vpop.f32.mrb[0].mxu0
      %2366 = vmatprep.mubr.f32.mxu0 %v2272
      %2367 = vmatmul.mubr.f32.gmra.mrb[0].mxu0 %v2271
      %v2368 = vpop.f32.mrb[0].mxu0
      %v2369 = vadd.f32 0.0, %v2368
      %v2370 = vpop.f32.mrb[0].mxu0
      %2371 = vmatprep.mubr.f32.mxu0 %v2274
      %2372 = vmatmul.mubr.f32.gmra.mrb[0].mxu0 %v2273
      %v2373 = vpop.f32.mrb[0].mxu0
      %v2374 = vadd.f32 0.0, %v2373
      %v2375 = vpop.f32.mrb[0].mxu0
      %2376 = vmatprep.mubr.f32.mxu0 %v2276
      %2377 = vmatmul.mubr.f32.gmra.mrb[0].mxu0 %v2275
      %v2378 = vpop.f32.mrb[0].mxu0
      %v2379 = vadd.f32 0.0, %v2378
      %v2380 = vpop.f32.mrb[0].mxu0
      %2381 = vdwg.mxu0
      %v2382 = vld [vmem:[%s4] sm:$0xff]
      %v2383 = vld [vmem:[%s4 + $0x8] sm:$0xff]
      %v2384 = vld [vmem:[%s4 + $0x10] sm:$0xff]
      %v2385 = vld [vmem:[%s4 + $0x18] sm:$0xff]
      %v2386 = vld [vmem:[%s4 + $0x20] sm:$0xff]
      %v2387 = vld [vmem:[%s4 + $0x28] sm:$0xff]
      %v2388 = vld [vmem:[%s4 + $0x30] sm:$0xff]
      %v2389 = vld [vmem:[%s4 + $0x38] sm:$0xff]
      %v2390 = vld [vmem:[%s4 + $0x40] sm:$0xff]
      %v2391 = vld [vmem:[%s4 + $0x48] sm:$0xff]
      %v2392 = vld [vmem:[%s4 + $0x50] sm:$0xff]
      %v2393 = vld [vmem:[%s4 + $0x58] sm:$0xff]
      %v2394 = vld [vmem:[%s4 + $0x60] sm:$0xff]
      %v2395 = vld [vmem:[%s4 + $0x68] sm:$0xff]
      %v2396 = vld [vmem:[%s4 + $0x70] sm:$0xff]
      %v2397 = vld [vmem:[%s4 + $0x78] sm:$0xff]
      %v2398 = vld [vmem:[%s4 + $0x80] sm:$0xff]
      %v2399 = vld [vmem:[%s4 + $0x88] sm:$0xff]
      %v2400 = vld [vmem:[%s4 + $0x90] sm:$0xff]
      %v2401 = vld [vmem:[%s4 + $0x98] sm:$0xff]
      %v2402 = vld [vmem:[%s4 + $0xa0] sm:$0xff]
      %v2403 = vld [vmem:[%s4 + $0xa8] sm:$0xff]
      %v2404 = vld [vmem:[%s4 + $0xb0] sm:$0xff]
      %v2405 = vld [vmem:[%s4 + $0xb8] sm:$0xff]
      %v2406 = vld [vmem:[%s4 + $0xc0] sm:$0xff]
      %v2407 = vld [vmem:[%s4 + $0xc8] sm:$0xff]
      %v2408 = vld [vmem:[%s4 + $0xd0] sm:$0xff]
      %v2409 = vld [vmem:[%s4 + $0xd8] sm:$0xff]
      %v2410 = vld [vmem:[%s4 + $0xe0] sm:$0xff]
      %v2411 = vld [vmem:[%s4 + $0xe8] sm:$0xff]
      %v2412 = vld [vmem:[%s4 + $0xf0] sm:$0xff]
      %v2413 = vld [vmem:[%s4 + $0xf8] sm:$0xff]
      %v2414 = vld [vmem:[%s4 + $0x100] sm:$0xff]
      %v2415 = vld [vmem:[%s4 + $0x108] sm:$0xff]
      %v2416 = vld [vmem:[%s4 + $0x110] sm:$0xff]
      %v2417 = vld [vmem:[%s4 + $0x118] sm:$0xff]
      %v2418 = vld [vmem:[%s4 + $0x120] sm:$0xff]
      %v2419 = vld [vmem:[%s4 + $0x128] sm:$0xff]
      %v2420 = vld [vmem:[%s4 + $0x130] sm:$0xff]
      %v2421 = vld [vmem:[%s4 + $0x138] sm:$0xff]
      %v2422 = vld [vmem:[%s4 + $0x140] sm:$0xff]
      %v2423 = vld [vmem:[%s4 + $0x148] sm:$0xff]
      %v2424 = vld [vmem:[%s4 + $0x150] sm:$0xff]
      %v2425 = vld [vmem:[%s4 + $0x158] sm:$0xff]
      %v2426 = vld [vmem:[%s4 + $0x160] sm:$0xff]
      %v2427 = vld [vmem:[%s4 + $0x168] sm:$0xff]
      %v2428 = vld [vmem:[%s4 + $0x170] sm:$0xff]
      %v2429 = vld [vmem:[%s4 + $0x178] sm:$0xff]
      %v2430 = vld [vmem:[%s4 + $0x180] sm:$0xff]
      %v2431 = vld [vmem:[%s4 + $0x188] sm:$0xff]
      %v2432 = vld [vmem:[%s4 + $0x190] sm:$0xff]
      %v2433 = vld [vmem:[%s4 + $0x198] sm:$0xff]
      %v2434 = vld [vmem:[%s4 + $0x1a0] sm:$0xff]
      %v2435 = vld [vmem:[%s4 + $0x1a8] sm:$0xff]
      %v2436 = vld [vmem:[%s5] sm:$0x1]
      %v2445 = vrot.slane %v2344, 7
      %v2446 = vrot.slane %v2349, 7
      %v2447 = vrot.slane %v2354, 7
      %v2448 = vrot.slane %v2359, 7
      %v2449 = vrot.slane %v2364, 7
      %v2450 = vrot.slane %v2369, 7
      %v2451 = vrot.slane %v2374, 7
      %v2452 = vrot.slane %v2379, 7
      %v2461 = vsel %vm491, 0.0, %v2445
      %v2462 = vsel %vm491, 0.0, %v2446
      %v2463 = vsel %vm491, 0.0, %v2447
      %v2464 = vsel %vm491, 0.0, %v2448
      %v2465 = vsel %vm491, 0.0, %v2449
      %v2466 = vsel %vm491, 0.0, %v2450
      %v2467 = vsel %vm491, 0.0, %v2451
      %v2468 = vsel %vm491, 0.0, %v2452
      %v2469 = vsel %vm491, %v2445, 0.0
      %v2470 = vsel %vm491, %v2446, 0.0
      %v2471 = vsel %vm491, %v2447, 0.0
      %v2472 = vsel %vm491, %v2448, 0.0
      %v2473 = vsel %vm491, %v2449, 0.0
      %v2474 = vsel %vm491, %v2450, 0.0
      %v2475 = vsel %vm491, %v2451, 0.0
      %v2476 = vsel %vm491, %v2452, 0.0
      %v2491 = vrot.slane %v2461, 1
      %v2492 = vrot.slane %v2469, 1
      %v2493 = vsel %vm650, %v2491, %v2492
      %v2494 = vrot.slane %v2462, 1
      %v2495 = vrot.slane %v2470, 1
      %v2496 = vsel %vm650, %v2494, %v2495
      %v2497 = vrot.slane %v2463, 1
      %v2498 = vrot.slane %v2471, 1
      %v2499 = vsel %vm650, %v2497, %v2498
      %v2500 = vrot.slane %v2464, 1
      %v2501 = vrot.slane %v2472, 1
      %v2502 = vsel %vm650, %v2500, %v2501
      %v2503 = vrot.slane %v2465, 1
      %v2504 = vrot.slane %v2473, 1
      %v2505 = vsel %vm650, %v2503, %v2504
      %v2506 = vrot.slane %v2466, 1
      %v2507 = vrot.slane %v2474, 1
      %v2508 = vsel %vm650, %v2506, %v2507
      %v2509 = vrot.slane %v2467, 1
      %v2510 = vrot.slane %v2475, 1
      %v2511 = vsel %vm650, %v2509, %v2510
      %2512 = vrot.lane.b32.xlu0 %v652, 48
      %v2513 = vpop.permute.xlu0 %2512
      %2514 = vrot.lane.b32.xlu0 %v2493, 48
      %v2515 = vpop.permute.xlu0 %2514
      %2516 = vrot.lane.b32.xlu0 %v2496, 48
      %v2517 = vpop.permute.xlu0 %2516
      %2518 = vrot.lane.b32.xlu0 %v2499, 48
      %v2519 = vpop.permute.xlu0 %2518
      %2520 = vrot.lane.b32.xlu0 %v2502, 48
      %v2521 = vpop.permute.xlu0 %2520
      %2522 = vrot.lane.b32.xlu0 %v2505, 48
      %v2523 = vpop.permute.xlu0 %2522
      %2524 = vrot.lane.b32.xlu0 %v2508, 48
      %v2525 = vpop.permute.xlu0 %2524
      %2526 = vrot.lane.b32.xlu0 %v2511, 48
      %v2527 = vpop.permute.xlu0 %2526
      %v2536 = vrot.slane %v2461, 2
      %v2537 = vrot.slane %v2469, 2
      %v2538 = vsel %vm821, %v2536, %v2537
      %v2539 = vrot.slane %v2462, 2
      %v2540 = vrot.slane %v2470, 2
      %v2541 = vsel %vm821, %v2539, %v2540
      %v2542 = vrot.slane %v2463, 2
      %v2543 = vrot.slane %v2471, 2
      %v2544 = vsel %vm821, %v2542, %v2543
      %v2545 = vrot.slane %v2464, 2
      %v2546 = vrot.slane %v2472, 2
      %v2547 = vsel %vm821, %v2545, %v2546
      %v2548 = vrot.slane %v2465, 2
      %v2549 = vrot.slane %v2473, 2
      %v2550 = vsel %vm821, %v2548, %v2549
      %v2551 = vrot.slane %v2466, 2
      %v2552 = vrot.slane %v2474, 2
      %v2553 = vsel %vm821, %v2551, %v2552
      %v2554 = vrot.slane %v2467, 2
      %v2555 = vrot.slane %v2475, 2
      %v2556 = vsel %vm821, %v2554, %v2555
      %2557 = vrot.lane.b32.xlu0 %v823, 96
      %v2558 = vpop.permute.xlu0 %2557
      %2559 = vrot.lane.b32.xlu0 %v2538, 96
      %v2560 = vpop.permute.xlu0 %2559
      %2561 = vrot.lane.b32.xlu0 %v2541, 96
      %v2562 = vpop.permute.xlu0 %2561
      %2563 = vrot.lane.b32.xlu0 %v2544, 96
      %v2564 = vpop.permute.xlu0 %2563
      %2565 = vrot.lane.b32.xlu0 %v2547, 96
      %v2566 = vpop.permute.xlu0 %2565
      %2567 = vrot.lane.b32.xlu0 %v2550, 96
      %v2568 = vpop.permute.xlu0 %2567
      %2569 = vrot.lane.b32.xlu0 %v2553, 96
      %v2570 = vpop.permute.xlu0 %2569
      %2571 = vrot.lane.b32.xlu0 %v2556, 96
      %v2572 = vpop.permute.xlu0 %2571
      %2582 = vrot.lane.b32.xlu0 %v2461, 16
      %v2583 = vpop.permute.xlu0 %2582
      %2584 = vrot.lane.b32.xlu0 %v2462, 16
      %v2585 = vpop.permute.xlu0 %2584
      %2586 = vrot.lane.b32.xlu0 %v2463, 16
      %v2587 = vpop.permute.xlu0 %2586
      %2588 = vrot.lane.b32.xlu0 %v2464, 16
      %v2589 = vpop.permute.xlu0 %2588
      %2590 = vrot.lane.b32.xlu0 %v2465, 16
      %v2591 = vpop.permute.xlu0 %2590
      %2592 = vrot.lane.b32.xlu0 %v2466, 16
      %v2593 = vpop.permute.xlu0 %2592
      %2594 = vrot.lane.b32.xlu0 %v2467, 16
      %v2595 = vpop.permute.xlu0 %2594
      %2596 = vrot.lane.b32.xlu0 %v2468, 16
      %v2597 = vpop.permute.xlu0 %2596
      %v2607 = vrot.slane %v2468, 1
      %v2608 = vrot.slane %v2476, 1
      %v2609 = vsel %vm650, %v2607, %v2608
      %2610 = vrot.lane.b32.xlu0 %v2493, 64
      %v2611 = vpop.permute.xlu0 %2610
      %2612 = vrot.lane.b32.xlu0 %v2496, 64
      %v2613 = vpop.permute.xlu0 %2612
      %2614 = vrot.lane.b32.xlu0 %v2499, 64
      %v2615 = vpop.permute.xlu0 %2614
      %2616 = vrot.lane.b32.xlu0 %v2502, 64
      %v2617 = vpop.permute.xlu0 %2616
      %2618 = vrot.lane.b32.xlu0 %v2505, 64
      %v2619 = vpop.permute.xlu0 %2618
      %2620 = vrot.lane.b32.xlu0 %v2508, 64
      %v2621 = vpop.permute.xlu0 %2620
      %2622 = vrot.lane.b32.xlu0 %v2511, 64
      %v2623 = vpop.permute.xlu0 %2622
      %2624 = vrot.lane.b32.xlu0 %v2609, 64
      %v2625 = vpop.permute.xlu0 %2624
      %v2634 = vrot.slane %v2468, 2
      %v2635 = vrot.slane %v2476, 2
      %v2636 = vsel %vm821, %v2634, %v2635
      %2637 = vrot.lane.b32.xlu0 %v2538, 112
      %v2638 = vpop.permute.xlu0 %2637
      %2639 = vrot.lane.b32.xlu0 %v2541, 112
      %v2640 = vpop.permute.xlu0 %2639
      %2641 = vrot.lane.b32.xlu0 %v2544, 112
      %v2642 = vpop.permute.xlu0 %2641
      %2643 = vrot.lane.b32.xlu0 %v2547, 112
      %v2644 = vpop.permute.xlu0 %2643
      %2645 = vrot.lane.b32.xlu0 %v2550, 112
      %v2646 = vpop.permute.xlu0 %2645
      %2647 = vrot.lane.b32.xlu0 %v2553, 112
      %v2648 = vpop.permute.xlu0 %2647
      %2649 = vrot.lane.b32.xlu0 %v2556, 112
      %v2650 = vpop.permute.xlu0 %2649
      %2651 = vrot.lane.b32.xlu0 %v2636, 112
      %v2652 = vpop.permute.xlu0 %2651
      %2661 = vrot.lane.b32.xlu0 %v2462, 32
      %v2662 = vpop.permute.xlu0 %2661
      %2663 = vrot.lane.b32.xlu0 %v2463, 32
      %v2664 = vpop.permute.xlu0 %2663
      %2665 = vrot.lane.b32.xlu0 %v2464, 32
      %v2666 = vpop.permute.xlu0 %2665
      %2667 = vrot.lane.b32.xlu0 %v2465, 32
      %v2668 = vpop.permute.xlu0 %2667
      %2669 = vrot.lane.b32.xlu0 %v2466, 32
      %v2670 = vpop.permute.xlu0 %2669
      %2671 = vrot.lane.b32.xlu0 %v2467, 32
      %v2672 = vpop.permute.xlu0 %2671
      %2673 = vrot.lane.b32.xlu0 %v2468, 32
      %v2674 = vpop.permute.xlu0 %2673
      %2675 = vrot.lane.b32.xlu0 0.0, 32
      %v2676 = vpop.permute.xlu0 %2675
      %2685 = vrot.lane.b32.xlu0 %v2496, 80
      %v2686 = vpop.permute.xlu0 %2685
      %2687 = vrot.lane.b32.xlu0 %v2499, 80
      %v2688 = vpop.permute.xlu0 %2687
      %2689 = vrot.lane.b32.xlu0 %v2502, 80
      %v2690 = vpop.permute.xlu0 %2689
      %2691 = vrot.lane.b32.xlu0 %v2505, 80
      %v2692 = vpop.permute.xlu0 %2691
      %2693 = vrot.lane.b32.xlu0 %v2508, 80
      %v2694 = vpop.permute.xlu0 %2693
      %2695 = vrot.lane.b32.xlu0 %v2511, 80
      %v2696 = vpop.permute.xlu0 %2695
      %2697 = vrot.lane.b32.xlu0 %v2609, 80
      %v2698 = vpop.permute.xlu0 %2697
      %2699 = vrot.lane.b32.xlu0 %v652, 80
      %v2700 = vpop.permute.xlu0 %2699
      %vm2709 = vcmask 392192
      %v2710 = vsel %vm2709, 0.0, %v2513
      %v2711 = vsel %vm2709, %v2461, %v2515
      %v2712 = vsel %vm2709, %v2462, %v2517
      %v2713 = vsel %vm2709, %v2463, %v2519
      %v2714 = vsel %vm2709, %v2464, %v2521
      %v2715 = vsel %vm2709, %v2465, %v2523
      %v2716 = vsel %vm2709, %v2466, %v2525
      %v2717 = vsel %vm2709, %v2467, %v2527
      %vm2718 = vcmask 785408
      %v2719 = vsel %vm2718, %v2710, %v2558
      %v2720 = vsel %vm2718, %v2711, %v2560
      %v2721 = vsel %vm2718, %v2712, %v2562
      %v2722 = vsel %vm2718, %v2713, %v2564
      %v2723 = vsel %vm2718, %v2714, %v2566
      %v2724 = vsel %vm2718, %v2715, %v2568
      %v2725 = vsel %vm2718, %v2716, %v2570
      %v2726 = vsel %vm2718, %v2717, %v2572
      %vm2727 = vcmask 130048
      %v2728 = vsel %vm2727, %v2558, %v2583
      %v2729 = vsel %vm2727, %v2560, %v2585
      %v2730 = vsel %vm2727, %v2562, %v2587
      %v2731 = vsel %vm2727, %v2564, %v2589
      %v2732 = vsel %vm2727, %v2566, %v2591
      %v2733 = vsel %vm2727, %v2568, %v2593
      %v2734 = vsel %vm2727, %v2570, %v2595
      %v2735 = vsel %vm2727, %v2572, %v2597
      %vm2736 = vcmask 523264
      %v2737 = vsel %vm2736, %v2728, %v2611
      %v2738 = vsel %vm2736, %v2729, %v2613
      %v2739 = vsel %vm2736, %v2730, %v2615
      %v2740 = vsel %vm2736, %v2731, %v2617
      %v2741 = vsel %vm2736, %v2732, %v2619
      %v2742 = vsel %vm2736, %v2733, %v2621
      %v2743 = vsel %vm2736, %v2734, %v2623
      %v2744 = vsel %vm2736, %v2735, %v2625
      %vm2745 = vcmask 916480
      %v2746 = vsel %vm2745, %v2737, %v2638
      %v2747 = vsel %vm2745, %v2738, %v2640
      %v2748 = vsel %vm2745, %v2739, %v2642
      %v2749 = vsel %vm2745, %v2740, %v2644
      %v2750 = vsel %vm2745, %v2741, %v2646
      %v2751 = vsel %vm2745, %v2742, %v2648
      %v2752 = vsel %vm2745, %v2743, %v2650
      %v2753 = vsel %vm2745, %v2744, %v2652
      %vm2754 = vcmask 261120
      %v2755 = vsel %vm2754, %v2638, %v2662
      %v2756 = vsel %vm2754, %v2640, %v2664
      %v2757 = vsel %vm2754, %v2642, %v2666
      %v2758 = vsel %vm2754, %v2644, %v2668
      %v2759 = vsel %vm2754, %v2646, %v2670
      %v2760 = vsel %vm2754, %v2648, %v2672
      %v2761 = vsel %vm2754, %v2650, %v2674
      %v2762 = vsel %vm2754, %v2652, %v2676
      %v2763 = vsel %vm1800, %v2755, %v2686
      %v2764 = vsel %vm1800, %v2756, %v2688
      %v2765 = vsel %vm1800, %v2757, %v2690
      %v2766 = vsel %vm1800, %v2758, %v2692
      %v2767 = vsel %vm1800, %v2759, %v2694
      %v2768 = vsel %vm1800, %v2760, %v2696
      %v2769 = vsel %vm1800, %v2761, %v2698
      %v2770 = vsel %vm1800, %v2762, %v2700
      %v2772 = vlaneseq
      %v2773 = vshrl.u32 %v2772, 7
      %v2774 = vsub.s32 0, %v2773
      %v2775 = vrot.slane %v2436, %v2774
      %v2777 = vsel %vm2709, %v2541, 0
      %v2779 = vsel %vm2709, %v2544, 0
      %v2781 = vsel %vm2709, %v2547, 0
      %v2783 = vsel %vm2709, %v2550, 0
      %v2785 = vsel %vm2709, %v2553, 0
      %v2787 = vsel %vm2709, %v2556, 0
      %v2789 = vsel %vm2709, %v2636, 0
      %v2791 = vsel %vm2709, %v823, 0
      %2793 = vmatprep.subr.mxu0 0.0
      %2794 = vmatpush1.msra.mxu0 %v2382
      %2795 = vmatprep.subr.mxu0 0.0
      %2796 = vmatpush1.msra.mxu0 %v2383
      %2797 = vmatprep.subr.mxu0 0.0
      %2798 = vmatpush1.msra.mxu0 %v2384
      %2799 = vmatprep.subr.mxu0 0.0
      %2800 = vmatpush1.msra.mxu0 %v2385
      %2801 = vmatprep.subr.mxu0 0.0
      %2802 = vmatpush1.msra.mxu0 %v2386
      %2803 = vmatprep.subr.mxu0 0.0
      %2804 = vmatpush1.msra.mxu0 %v2387
      %2805 = vmatprep.subr.mxu0 0.0
      %2806 = vmatpush1.msra.mxu0 %v2388
      %2807 = vmatprep.subr.mxu0 0.0
      %2808 = vmatpush1.msra.mxu0 %v2389
      %2809 = vmatprep.subr.mxu0 0.0
      %2810 = vmatpush1.msra.mxu0 %v2390
      %2811 = vmatprep.subr.mxu0 0.0
      %2812 = vmatpush1.msra.mxu0 %v2391
      %2813 = vmatprep.subr.mxu0 0.0
      %2814 = vmatpush1.msra.mxu0 %v2392
      %2815 = vmatprep.subr.mxu0 0.0
      %2816 = vmatpush1.msra.mxu0 %v2393
      %2817 = vmatprep.subr.mxu0 0.0
      %2818 = vmatpush1.msra.mxu0 %v2394
      %2819 = vmatprep.subr.mxu0 0.0
      %2820 = vmatpush1.msra.mxu0 %v2395
      %2821 = vmatprep.subr.mxu0 0.0
      %2822 = vmatpush1.msra.mxu0 %v2396
      %2823 = vmatprep.subr.mxu0 0.0
      %2824 = vmatpush1.msra.mxu0 %v2397
      %2825 = vmatprep.subr.mxu0 0.0
      %2826 = vmatpush1.msra.mxu0 %v2398
      %2827 = vmatprep.subr.mxu0 0.0
      %2828 = vmatpush1.msra.mxu0 %v2399
      %2829 = vmatprep.subr.mxu0 0.0
      %2830 = vmatpush1.msra.mxu0 %v2400
      %2831 = vmatprep.subr.mxu0 0.0
      %2832 = vmatpush1.msra.mxu0 %v2401
      %2833 = vmatprep.subr.mxu0 0.0
      %2834 = vmatpush1.msra.mxu0 %v2402
      %2835 = vmatprep.subr.mxu0 0.0
      %2836 = vmatpush1.msra.mxu0 %v2403
      %2837 = vmatprep.subr.mxu0 0.0
      %2838 = vmatpush1.msra.mxu0 %v2404
      %2839 = vmatprep.subr.mxu0 0.0
      %2840 = vmatpush1.msra.mxu0 %v2405
      %2841 = vmatprep.subr.mxu0 0.0
      %2842 = vmatpush1.msra.mxu0 %v2406
      %2843 = vmatprep.subr.mxu0 0.0
      %2844 = vmatpush1.msra.mxu0 %v2407
      %2845 = vmatprep.subr.mxu0 0.0
      %2846 = vmatpush1.msra.mxu0 %v2408
      %2847 = vmatprep.subr.mxu0 0.0
      %2848 = vmatpush1.msra.mxu0 %v2409
      %2849 = vmatprep.subr.mxu0 0.0
      %2850 = vmatpush1.msra.mxu0 %v2410
      %2851 = vmatprep.subr.mxu0 0.0
      %2852 = vmatpush1.msra.mxu0 %v2411
      %2853 = vmatprep.subr.mxu0 0.0
      %2854 = vmatpush1.msra.mxu0 %v2412
      %2855 = vmatprep.subr.mxu0 0.0
      %2856 = vmatpush1.msra.mxu0 %v2413
      %2857 = vmatprep.mubr.f32.mxu0 %v2746
      %2858 = vmatmul.mubr.f32.gmra.mrb[0].mxu0 %v2719
      %v2859 = vpop.f32.mrb[0].mxu0
      %v2860 = vadd.f32 %v2775, %v2859
      %v2861 = vpop.f32.mrb[0].mxu0
      %2862 = vmatprep.mubr.f32.mxu0 %v2747
      %2863 = vmatmul.mubr.f32.gmra.mrb[0].mxu0 %v2720
      %v2864 = vpop.f32.mrb[0].mxu0
      %v2865 = vadd.f32 %v2775, %v2864
      %v2866 = vpop.f32.mrb[0].mxu0
      %2867 = vmatprep.mubr.f32.mxu0 %v2748
      %2868 = vmatmul.mubr.f32.gmra.mrb[0].mxu0 %v2721
      %v2869 = vpop.f32.mrb[0].mxu0
      %v2870 = vadd.f32 %v2775, %v2869
      %v2871 = vpop.f32.mrb[0].mxu0
      %2872 = vmatprep.mubr.f32.mxu0 %v2749
      %2873 = vmatmul.mubr.f32.gmra.mrb[0].mxu0 %v2722
      %v2874 = vpop.f32.mrb[0].mxu0
      %v2875 = vadd.f32 %v2775, %v2874
      %v2876 = vpop.f32.mrb[0].mxu0
      %2877 = vmatprep.mubr.f32.mxu0 %v2750
      %2878 = vmatmul.mubr.f32.gmra.mrb[0].mxu0 %v2723
      %v2879 = vpop.f32.mrb[0].mxu0
      %v2880 = vadd.f32 %v2775, %v2879
      %v2881 = vpop.f32.mrb[0].mxu0
      %2882 = vmatprep.mubr.f32.mxu0 %v2751
      %2883 = vmatmul.mubr.f32.gmra.mrb[0].mxu0 %v2724
      %v2884 = vpop.f32.mrb[0].mxu0
      %v2885 = vadd.f32 %v2775, %v2884
      %v2886 = vpop.f32.mrb[0].mxu0
      %2887 = vmatprep.mubr.f32.mxu0 %v2752
      %2888 = vmatmul.mubr.f32.gmra.mrb[0].mxu0 %v2725
      %v2889 = vpop.f32.mrb[0].mxu0
      %v2890 = vadd.f32 %v2775, %v2889
      %v2891 = vpop.f32.mrb[0].mxu0
      %2892 = vmatprep.mubr.f32.mxu0 %v2753
      %2893 = vmatmul.mubr.f32.gmra.mrb[0].mxu0 %v2726
      %v2894 = vpop.f32.mrb[0].mxu0
      %v2895 = vadd.f32 %v2775, %v2894
      %v2896 = vpop.f32.mrb[0].mxu0
      %2897 = vdwg.mxu0
      %2898 = vmatprep.subr.mxu0 0.0
      %2899 = vmatpush1.msra.mxu0 %v2414
      %2900 = vmatprep.subr.mxu0 0.0
      %2901 = vmatpush1.msra.mxu0 %v2415
      %2902 = vmatprep.subr.mxu0 0.0
      %2903 = vmatpush1.msra.mxu0 %v2416
      %2904 = vmatprep.subr.mxu0 0.0
      %2905 = vmatpush1.msra.mxu0 %v2417
      %2906 = vmatprep.subr.mxu0 0.0
      %2907 = vmatpush1.msra.mxu0 %v2418
      %2908 = vmatprep.subr.mxu0 0.0
      %2909 = vmatpush1.msra.mxu0 %v2419
      %2910 = vmatprep.subr.mxu0 0.0
      %2911 = vmatpush1.msra.mxu0 %v2420
      %2912 = vmatprep.subr.mxu0 0.0
      %2913 = vmatpush1.msra.mxu0 %v2421
      %2914 = vmatprep.subr.mxu0 0.0
      %2915 = vmatpush1.msra.mxu0 %v2422
      %2916 = vmatprep.subr.mxu0 0.0
      %2917 = vmatpush1.msra.mxu0 %v2423
      %2918 = vmatprep.subr.mxu0 0.0
      %2919 = vmatpush1.msra.mxu0 %v2424
      %2920 = vmatprep.subr.mxu0 0.0
      %2921 = vmatpush1.msra.mxu0 %v2425
      %2922 = vmatprep.subr.mxu0 0.0
      %2923 = vmatpush1.msra.mxu0 %v2426
      %2924 = vmatprep.subr.mxu0 0.0
      %2925 = vmatpush1.msra.mxu0 %v2427
      %2926 = vmatprep.subr.mxu0 0.0
      %2927 = vmatpush1.msra.mxu0 %v2428
      %2928 = vmatprep.subr.mxu0 0.0
      %2929 = vmatpush1.msra.mxu0 %v2429
      %2930 = vmatprep.subr.mxu0 0.0
      %2931 = vmatpush1.msra.mxu0 %v2430
      %2932 = vmatprep.subr.mxu0 0.0
      %2933 = vmatpush1.msra.mxu0 %v2431
      %2934 = vmatprep.subr.mxu0 0.0
      %2935 = vmatpush1.msra.mxu0 %v2432
      %2936 = vmatprep.subr.mxu0 0.0
      %2937 = vmatpush1.msra.mxu0 %v2433
      %2938 = vmatprep.subr.mxu0 0.0
      %2939 = vmatpush1.msra.mxu0 %v2434
      %2940 = vmatprep.subr.mxu0 0.0
      %2941 = vmatpush1.msra.mxu0 %v2435
      %2942 = vmatprep.subr.mxu0 0.0
      %2943 = vmatpush1.msra.mxu0 0.0
      %2944 = vmatprep.subr.mxu0 0.0
      %2945 = vmatpush1.msra.mxu0 0.0
      %2946 = vmatprep.subr.mxu0 0.0
      %2947 = vmatpush1.msra.mxu0 0.0
      %2948 = vmatprep.subr.mxu0 0.0
      %2949 = vmatpush1.msra.mxu0 0.0
      %2950 = vmatprep.subr.mxu0 0.0
      %2951 = vmatpush1.msra.mxu0 0.0
      %2952 = vmatprep.subr.mxu0 0.0
      %2953 = vmatpush1.msra.mxu0 0.0
      %2954 = vmatprep.subr.mxu0 0.0
      %2955 = vmatpush1.msra.mxu0 0.0
      %2956 = vmatprep.subr.mxu0 0.0
      %2957 = vmatpush1.msra.mxu0 0.0
      %2958 = vmatprep.subr.mxu0 0.0
      %2959 = vmatpush1.msra.mxu0 0.0
      %2960 = vmatprep.subr.mxu0 0.0
      %2961 = vmatpush1.msra.mxu0 0.0
      %2962 = vmatprep.mubr.f32.mxu0 %v2777
      %2963 = vmatmul.mubr.f32.gmra.mrb[0].mxu0 %v2763
      %v2964 = vpop.f32.mrb[0].mxu0
      %v2965 = vadd.f32 %v2860, %v2964
      %v2966 = vpop.f32.mrb[0].mxu0
      %2967 = vmatprep.mubr.f32.mxu0 %v2779
      %2968 = vmatmul.mubr.f32.gmra.mrb[0].mxu0 %v2764
      %v2969 = vpop.f32.mrb[0].mxu0
      %v2970 = vadd.f32 %v2865, %v2969
      %v2971 = vpop.f32.mrb[0].mxu0
      %2972 = vmatprep.mubr.f32.mxu0 %v2781
      %2973 = vmatmul.mubr.f32.gmra.mrb[0].mxu0 %v2765
      %v2974 = vpop.f32.mrb[0].mxu0
      %v2975 = vadd.f32 %v2870, %v2974
      %v2976 = vpop.f32.mrb[0].mxu0
      %2977 = vmatprep.mubr.f32.mxu0 %v2783
      %2978 = vmatmul.mubr.f32.gmra.mrb[0].mxu0 %v2766
      %v2979 = vpop.f32.mrb[0].mxu0
      %v2980 = vadd.f32 %v2875, %v2979
      %v2981 = vpop.f32.mrb[0].mxu0
      %2982 = vmatprep.mubr.f32.mxu0 %v2785
      %2983 = vmatmul.mubr.f32.gmra.mrb[0].mxu0 %v2767
      %v2984 = vpop.f32.mrb[0].mxu0
      %v2985 = vadd.f32 %v2880, %v2984
      %v2986 = vpop.f32.mrb[0].mxu0
      %2987 = vmatprep.mubr.f32.mxu0 %v2787
      %2988 = vmatmul.mubr.f32.gmra.mrb[0].mxu0 %v2768
      %v2989 = vpop.f32.mrb[0].mxu0
      %v2990 = vadd.f32 %v2885, %v2989
      %v2991 = vpop.f32.mrb[0].mxu0
      %2992 = vmatprep.mubr.f32.mxu0 %v2789
      %2993 = vmatmul.mubr.f32.gmra.mrb[0].mxu0 %v2769
      %v2994 = vpop.f32.mrb[0].mxu0
      %v2995 = vadd.f32 %v2890, %v2994
      %v2996 = vpop.f32.mrb[0].mxu0
      %2997 = vmatprep.mubr.f32.mxu0 %v2791
      %2998 = vmatmul.mubr.f32.gmra.mrb[0].mxu0 %v2770
      %v2999 = vpop.f32.mrb[0].mxu0
      %v3000 = vadd.f32 %v2895, %v2999
      %v3001 = vpop.f32.mrb[0].mxu0
      %3002 = vdwg.mxu0
      %vm3003 = vcmp.ge.f32.partialorder %v2965, 0.0
      %vm3004 = vcmp.ge.f32.partialorder %v2970, 0.0
      %vm3005 = vcmp.ge.f32.partialorder %v2975, 0.0
      %vm3006 = vcmp.ge.f32.partialorder %v2980, 0.0
      %vm3007 = vcmp.ge.f32.partialorder %v2985, 0.0
      %vm3008 = vcmp.ge.f32.partialorder %v2990, 0.0
      %vm3009 = vcmp.ge.f32.partialorder %v2995, 0.0
      %vm3010 = vcmp.ge.f32.partialorder %v3000, 0.0
      %v3011 = vmul.f32 %v2965, 0.1
      %v3012 = vmul.f32 %v2970, 0.1
      %v3013 = vmul.f32 %v2975, 0.1
      %v3014 = vmul.f32 %v2980, 0.1
      %v3015 = vmul.f32 %v2985, 0.1
      %v3016 = vmul.f32 %v2990, 0.1
      %v3017 = vmul.f32 %v2995, 0.1
      %v3018 = vmul.f32 %v3000, 0.1
      %v3019 = vsel %vm3003, %v2965, %v3011
      %v3020 = vsel %vm3004, %v2970, %v3012
      %v3021 = vsel %vm3005, %v2975, %v3013
      %v3022 = vsel %vm3006, %v2980, %v3014
      %v3023 = vsel %vm3007, %v2985, %v3015
      %v3024 = vsel %vm3008, %v2990, %v3016
      %v3025 = vsel %vm3009, %v2995, %v3017
      %v3026 = vsel %vm3010, %v3000, %v3018
      %v3027 = vld [vmem:[%s6] sm:$0xff]
      %v3028 = vld [vmem:[%s6 + $0x8] sm:$0xff]
      %v3030 = vsel %vm2736, %v3027, 0
      %v3033 = vsel %vm2736, %v3028, 0
      %3035 = vmatprep.subr.mxu0 0.0
      %3036 = vmatpush1.msra.mxu0 %v3019
      %3037 = vmatprep.subr.mxu0 0.0
      %3038 = vmatpush1.msra.mxu0 %v3020
      %3039 = vmatprep.subr.mxu0 0.0
      %3040 = vmatpush1.msra.mxu0 %v3021
      %3041 = vmatprep.subr.mxu0 0.0
      %3042 = vmatpush1.msra.mxu0 %v3022
      %3043 = vmatprep.subr.mxu0 0.0
      %3044 = vmatpush1.msra.mxu0 %v3023
      %3045 = vmatprep.subr.mxu0 0.0
      %3046 = vmatpush1.msra.mxu0 %v3024
      %3047 = vmatprep.subr.mxu0 0.0
      %3048 = vmatpush1.msra.mxu0 %v3025
      %3049 = vmatprep.subr.mxu0 0.0
      %3050 = vmatpush1.msra.mxu0 %v3026
      %3051 = vmatprep.subr.mxu0 0.0
      %3052 = vmatpush1.msra.mxu0 0.0
      %3053 = vmatprep.subr.mxu0 0.0
      %3054 = vmatpush1.msra.mxu0 0.0
      %3055 = vmatprep.subr.mxu0 0.0
      %3056 = vmatpush1.msra.mxu0 0.0
      %3057 = vmatprep.subr.mxu0 0.0
      %3058 = vmatpush1.msra.mxu0 0.0
      %3059 = vmatprep.subr.mxu0 0.0
      %3060 = vmatpush1.msra.mxu0 0.0
      %3061 = vmatprep.subr.mxu0 0.0
      %3062 = vmatpush1.msra.mxu0 0.0
      %3063 = vmatprep.subr.mxu0 0.0
      %3064 = vmatpush1.msra.mxu0 0.0
      %3065 = vmatprep.subr.mxu0 0.0
      %3066 = vmatpush1.msra.mxu0 0.0
      %3067 = vmatprep.subr.mxu0 0.0
      %3068 = vmatpush1.msra.mxu0 0.0
      %3069 = vmatprep.subr.mxu0 0.0
      %3070 = vmatpush1.msra.mxu0 0.0
      %3071 = vmatprep.subr.mxu0 0.0
      %3072 = vmatpush1.msra.mxu0 0.0
      %3073 = vmatprep.subr.mxu0 0.0
      %3074 = vmatpush1.msra.mxu0 0.0
      %3075 = vmatprep.subr.mxu0 0.0
      %3076 = vmatpush1.msra.mxu0 0.0
      %3077 = vmatprep.subr.mxu0 0.0
      %3078 = vmatpush1.msra.mxu0 0.0
      %3079 = vmatprep.subr.mxu0 0.0
      %3080 = vmatpush1.msra.mxu0 0.0
      %3081 = vmatprep.subr.mxu0 0.0
      %3082 = vmatpush1.msra.mxu0 0.0
      %3083 = vmatprep.subr.mxu0 0.0
      %3084 = vmatpush1.msra.mxu0 0.0
      %3085 = vmatprep.subr.mxu0 0.0
      %3086 = vmatpush1.msra.mxu0 0.0
      %3087 = vmatprep.subr.mxu0 0.0
      %3088 = vmatpush1.msra.mxu0 0.0
      %3089 = vmatprep.subr.mxu0 0.0
      %3090 = vmatpush1.msra.mxu0 0.0
      %3091 = vmatprep.subr.mxu0 0.0
      %3092 = vmatpush1.msra.mxu0 0.0
      %3093 = vmatprep.subr.mxu0 0.0
      %3094 = vmatpush1.msra.mxu0 0.0
      %3095 = vmatprep.subr.mxu0 0.0
      %3096 = vmatpush1.msra.mxu0 0.0
      %3097 = vmatprep.subr.mxu0 0.0
      %3098 = vmatpush1.msra.mxu0 0.0
      %3099 = vmatprep.mubr.f32.mxu0 0.0
      %3100 = vmatmul.mubr.f32.gmra.mrb[0].mxu0 %v3030
      %v3101 = vpop.f32.mrb[0].mxu0
      %v3102 = vadd.f32 0.0, %v3101
      %v3103 = vpop.f32.mrb[0].mxu0
      %3104 = vmatprep.mubr.f32.mxu0 0.0
      %3105 = vmatmul.mubr.f32.gmra.mrb[0].mxu0 %v3033
      %v3106 = vpop.f32.mrb[0].mxu0
      %v3107 = vadd.f32 0.0, %v3106
      %v3108 = vpop.f32.mrb[0].mxu0
      %3109 = vdwg.mxu0
      %v3112 = vcombine.high %v3102, %v3102
      %v3113 = vcombine.high %v3107, %v3107
      %v3116 = vld [vmem:[%s7] sm:$0xff]
      %v3117 = vld [vmem:[%s7 + $0x8] sm:$0xff]
      %v3118 = vld [vmem:[%s7 + $0x10] sm:$0xff]
      %v3119 = vld [vmem:[%s7 + $0x18] sm:$0xff]
      %v3120 = vld [vmem:[%s7 + $0x20] sm:$0xff]
      %v3121 = vld [vmem:[%s7 + $0x28] sm:$0xff]
      %v3122 = vld [vmem:[%s7 + $0x30] sm:$0xff]
      %v3123 = vld [vmem:[%s7 + $0x38] sm:$0xff]
      %v3124 = vld [vmem:[%s7 + $0x40] sm:$0xff]
      %v3125 = vld [vmem:[%s7 + $0x48] sm:$0xff]
      %v3126 = vld [vmem:[%s7 + $0x50] sm:$0xff]
      %v3127 = vld [vmem:[%s7 + $0x58] sm:$0xff]
      %v3128 = vld [vmem:[%s7 + $0x60] sm:$0xff]
      %v3129 = vld [vmem:[%s7 + $0x68] sm:$0xff]
      %v3130 = vld [vmem:[%s7 + $0x70] sm:$0xff]
      %v3131 = vld [vmem:[%s7 + $0x78] sm:$0xff]
      %v3132 = vld [vmem:[%s7 + $0x80] sm:$0xff]
      %v3133 = vld [vmem:[%s7 + $0x88] sm:$0xff]
      %v3134 = vld [vmem:[%s7 + $0x90] sm:$0xff]
      %v3135 = vld [vmem:[%s7 + $0x98] sm:$0xff]
      %v3136 = vld [vmem:[%s7 + $0xa0] sm:$0xff]
      %v3137 = vld [vmem:[%s7 + $0xa8] sm:$0xff]
      %v3138 = vld [vmem:[%s7 + $0xb0] sm:$0xff]
      %v3139 = vld [vmem:[%s7 + $0xb8] sm:$0xff]
      %v3140 = vld [vmem:[%s7 + $0xc0] sm:$0xff]
      %v3141 = vld [vmem:[%s7 + $0xc8] sm:$0xff]
      %v3142 = vld [vmem:[%s7 + $0xd0] sm:$0xff]
      %v3143 = vld [vmem:[%s7 + $0xd8] sm:$0xff]
      %v3144 = vld [vmem:[%s7 + $0xe0] sm:$0xff]
      %v3145 = vld [vmem:[%s7 + $0xe8] sm:$0xff]
      %v3146 = vld [vmem:[%s7 + $0xf0] sm:$0xff]
      %v3147 = vld [vmem:[%s7 + $0xf8] sm:$0xff]
      %v3148 = vld [vmem:[%s7 + $0x100] sm:$0xff]
      %v3149 = vld [vmem:[%s7 + $0x108] sm:$0xff]
      %v3150 = vld [vmem:[%s7 + $0x110] sm:$0xff]
      %v3151 = vld [vmem:[%s7 + $0x118] sm:$0xff]
      %v3152 = vld [vmem:[%s7 + $0x120] sm:$0xff]
      %v3153 = vld [vmem:[%s7 + $0x128] sm:$0xff]
      %v3154 = vld [vmem:[%s7 + $0x130] sm:$0xff]
      %v3155 = vld [vmem:[%s7 + $0x138] sm:$0xff]
      %v3156 = vld [vmem:[%s7 + $0x140] sm:$0xff]
      %v3157 = vld [vmem:[%s7 + $0x148] sm:$0xff]
      %v3158 = vld [vmem:[%s7 + $0x150] sm:$0xff]
      %v3159 = vld [vmem:[%s7 + $0x158] sm:$0xff]
      %v3160 = vld [vmem:[%s7 + $0x160] sm:$0xff]
      %v3161 = vld [vmem:[%s7 + $0x168] sm:$0xff]
      %v3162 = vld [vmem:[%s7 + $0x170] sm:$0xff]
      %v3163 = vld [vmem:[%s7 + $0x178] sm:$0xff]
      %v3164 = vld [vmem:[%s7 + $0x180] sm:$0xff]
      %v3165 = vld [vmem:[%s7 + $0x188] sm:$0xff]
      %v3166 = vld [vmem:[%s7 + $0x190] sm:$0xff]
      %v3167 = vld [vmem:[%s7 + $0x198] sm:$0xff]
      %v3168 = vld [vmem:[%s7 + $0x1a0] sm:$0xff]
      %v3169 = vld [vmem:[%s7 + $0x1a8] sm:$0xff]
      %v3170 = vld [vmem:[%s7 + $0x1b0] sm:$0xff]
      %v3171 = vld [vmem:[%s7 + $0x1b8] sm:$0xff]
      %v3172 = vld [vmem:[%s7 + $0x1c0] sm:$0xff]
      %v3173 = vld [vmem:[%s7 + $0x1c8] sm:$0xff]
      %v3174 = vld [vmem:[%s7 + $0x1d0] sm:$0xff]
      %v3175 = vld [vmem:[%s7 + $0x1d8] sm:$0xff]
      %v3176 = vld [vmem:[%s7 + $0x1e0] sm:$0xff]
      %v3177 = vld [vmem:[%s7 + $0x1e8] sm:$0xff]
      %v3178 = vld [vmem:[%s7 + $0x1f0] sm:$0xff]
      %v3179 = vld [vmem:[%s7 + $0x1f8] sm:$0xff]
      %v3180 = vld [vmem:[%s7 + $0x200] sm:$0xff]
      %v3181 = vld [vmem:[%s7 + $0x208] sm:$0xff]
      %v3182 = vld [vmem:[%s7 + $0x210] sm:$0xff]
      %v3183 = vld [vmem:[%s7 + $0x218] sm:$0xff]
      %v3184 = vld [vmem:[%s7 + $0x220] sm:$0xff]
      %v3185 = vld [vmem:[%s7 + $0x228] sm:$0xff]
      %v3186 = vld [vmem:[%s7 + $0x230] sm:$0xff]
      %v3187 = vld [vmem:[%s7 + $0x238] sm:$0xff]
      %v3188 = vld [vmem:[%s7 + $0x240] sm:$0xff]
      %v3189 = vld [vmem:[%s7 + $0x248] sm:$0xff]
      %v3190 = vld [vmem:[%s7 + $0x250] sm:$0xff]
      %v3191 = vld [vmem:[%s7 + $0x258] sm:$0xff]
      %v3192 = vld [vmem:[%s7 + $0x260] sm:$0xff]
      %v3193 = vld [vmem:[%s7 + $0x268] sm:$0xff]
      %v3194 = vld [vmem:[%s7 + $0x270] sm:$0xff]
      %v3195 = vld [vmem:[%s7 + $0x278] sm:$0xff]
      %v3196 = vld [vmem:[%s7 + $0x280] sm:$0xff]
      %v3197 = vld [vmem:[%s7 + $0x288] sm:$0xff]
      %v3198 = vld [vmem:[%s7 + $0x290] sm:$0xff]
      %v3199 = vld [vmem:[%s7 + $0x298] sm:$0xff]
      %v3200 = vld [vmem:[%s7 + $0x2a0] sm:$0xff]
      %v3201 = vld [vmem:[%s7 + $0x2a8] sm:$0xff]
      %v3202 = vld [vmem:[%s7 + $0x2b0] sm:$0xff]
      %v3203 = vld [vmem:[%s7 + $0x2b8] sm:$0xff]
      %v3204 = vld [vmem:[%s7 + $0x2c0] sm:$0xff]
      %v3205 = vld [vmem:[%s7 + $0x2c8] sm:$0xff]
      %v3206 = vld [vmem:[%s7 + $0x2d0] sm:$0xff]
      %v3207 = vld [vmem:[%s7 + $0x2d8] sm:$0xff]
      %v3208 = vld [vmem:[%s7 + $0x2e0] sm:$0xff]
      %v3209 = vld [vmem:[%s7 + $0x2e8] sm:$0xff]
      %v3210 = vld [vmem:[%s7 + $0x2f0] sm:$0xff]
      %v3211 = vld [vmem:[%s7 + $0x2f8] sm:$0xff]
      %v3212 = vld [vmem:[%s7 + $0x300] sm:$0xff]
      %v3213 = vld [vmem:[%s7 + $0x308] sm:$0xff]
      %v3214 = vld [vmem:[%s7 + $0x310] sm:$0xff]
      %v3215 = vld [vmem:[%s7 + $0x318] sm:$0xff]
      %v3216 = vld [vmem:[%s7 + $0x320] sm:$0xff]
      %v3217 = vld [vmem:[%s7 + $0x328] sm:$0xff]
      %v3218 = vld [vmem:[%s7 + $0x330] sm:$0xff]
      %v3219 = vld [vmem:[%s7 + $0x338] sm:$0xff]
      %v3220 = vld [vmem:[%s7 + $0x340] sm:$0xff]
      %v3221 = vld [vmem:[%s7 + $0x348] sm:$0xff]
      %v3222 = vld [vmem:[%s7 + $0x350] sm:$0xff]
      %v3223 = vld [vmem:[%s7 + $0x358] sm:$0xff]
      %v3224 = vld [vmem:[%s8] sm:$0x1]
      %v3225 = vrot.slane %v3102, 7
      %v3226 = vrot.slane %v3112, 7
      %v3227 = vrot.slane %v3107, 7
      %v3228 = vrot.slane %v3113, 7
      %v3233 = vsel %vm491, 0.0, %v3225
      %v3234 = vsel %vm491, 0.0, %v3226
      %v3235 = vsel %vm491, 0.0, %v3227
      %v3236 = vsel %vm491, 0.0, %v3228
      %vm3237 = vcmask 1044480
      %v3238 = vsel %vm3237, %v3233, 0.0
      %v3239 = vsel %vm3237, %v3234, 0.0
      %v3240 = vsel %vm3237, %v3235, 0.0
      %v3241 = vsel %vm3237, %v3236, 0.0
      %v3245 = vrot.slane %v3238, 1
      %v3246 = vrot.slane %v3239, 1
      %v3247 = vrot.slane %v3240, 1
      %3248 = vrot.lane.b32.xlu0 %v651, 96
      %v3249 = vpop.permute.xlu0 %3248
      %3250 = vrot.lane.b32.xlu0 %v3245, 96
      %v3251 = vpop.permute.xlu0 %3250
      %3252 = vrot.lane.b32.xlu0 %v3246, 96
      %v3253 = vpop.permute.xlu0 %3252
      %3254 = vrot.lane.b32.xlu0 %v3247, 96
      %v3255 = vpop.permute.xlu0 %3254
      %v3260 = vrot.slane %v3238, 2
      %v3261 = vrot.slane %v3239, 2
      %v3262 = vrot.slane %v3240, 2
      %3263 = vrot.lane.b32.xlu0 %v822, 64
      %v3264 = vpop.permute.xlu0 %3263
      %3265 = vrot.lane.b32.xlu0 %v3260, 64
      %v3266 = vpop.permute.xlu0 %3265
      %3267 = vrot.lane.b32.xlu0 %v3261, 64
      %v3268 = vpop.permute.xlu0 %3267
      %3269 = vrot.lane.b32.xlu0 %v3262, 64
      %v3270 = vpop.permute.xlu0 %3269
      %3276 = vrot.lane.b32.xlu0 %v3238, 32
      %v3277 = vpop.permute.xlu0 %3276
      %3278 = vrot.lane.b32.xlu0 %v3239, 32
      %v3279 = vpop.permute.xlu0 %3278
      %3280 = vrot.lane.b32.xlu0 %v3240, 32
      %v3281 = vpop.permute.xlu0 %3280
      %3282 = vrot.lane.b32.xlu0 %v3241, 32
      %v3283 = vpop.permute.xlu0 %3282
      %v3288 = vrot.slane %v3241, 1
      %v3293 = vrot.slane %v3241, 2
      %3294 = vrot.lane.b32.xlu0 %v3260, 96
      %v3295 = vpop.permute.xlu0 %3294
      %3296 = vrot.lane.b32.xlu0 %v3261, 96
      %v3297 = vpop.permute.xlu0 %3296
      %3298 = vrot.lane.b32.xlu0 %v3262, 96
      %v3299 = vpop.permute.xlu0 %3298
      %3300 = vrot.lane.b32.xlu0 %v3293, 96
      %v3301 = vpop.permute.xlu0 %3300
      %3306 = vrot.lane.b32.xlu0 %v3239, 64
      %v3307 = vpop.permute.xlu0 %3306
      %3308 = vrot.lane.b32.xlu0 %v3240, 64
      %v3309 = vpop.permute.xlu0 %3308
      %3310 = vrot.lane.b32.xlu0 %v3241, 64
      %v3311 = vpop.permute.xlu0 %3310
      %3312 = vrot.lane.b32.xlu0 0.0, 64
      %v3313 = vpop.permute.xlu0 %3312
      %3318 = vrot.lane.b32.xlu0 %v3246, 32
      %v3319 = vpop.permute.xlu0 %3318
      %3320 = vrot.lane.b32.xlu0 %v3247, 32
      %v3321 = vpop.permute.xlu0 %3320
      %3322 = vrot.lane.b32.xlu0 %v3288, 32
      %v3323 = vpop.permute.xlu0 %3322
      %3324 = vrot.lane.b32.xlu0 %v651, 32
      %v3325 = vpop.permute.xlu0 %3324
      %v3330 = vsel %vm2718, 0.0, %v3249
      %v3331 = vsel %vm2718, %v3238, %v3251
      %v3332 = vsel %vm2718, %v3239, %v3253
      %v3333 = vsel %vm2718, %v3240, %v3255
      %v3334 = vsel %vm2736, %v3249, %v3264
      %v3335 = vsel %vm2736, %v3251, %v3266
      %v3336 = vsel %vm2736, %v3253, %v3268
      %v3337 = vsel %vm2736, %v3255, %v3270
      %v3338 = vsel %vm2754, %v3264, %v3277
      %v3339 = vsel %vm2754, %v3266, %v3279
      %v3340 = vsel %vm2754, %v3268, %v3281
      %v3341 = vsel %vm2754, %v3270, %v3283
      %v3342 = vsel %vm2718, %v3245, %v3295
      %v3343 = vsel %vm2718, %v3246, %v3297
      %v3344 = vsel %vm2718, %v3247, %v3299
      %v3345 = vsel %vm2718, %v3288, %v3301
      %v3346 = vsel %vm2736, %v3295, %v3307
      %v3347 = vsel %vm2736, %v3297, %v3309
      %v3348 = vsel %vm2736, %v3299, %v3311
      %v3349 = vsel %vm2736, %v3301, %v3313
      %v3350 = vsel %vm2754, %v3307, %v3319
      %v3351 = vsel %vm2754, %v3309, %v3321
      %v3352 = vsel %vm2754, %v3311, %v3323
      %v3353 = vsel %vm2754, %v3313, %v3325
      %v3378 = vcombine.low %v3330, %v3334
      %v3379 = vcombine.low %v3338, %v3342
      %v3380 = vcombine.low %v3346, %v3350
      %v3381 = vcombine.low %v3331, %v3335
      %v3382 = vcombine.low %v3339, %v3343
      %v3383 = vcombine.low %v3347, %v3351
      %v3384 = vcombine.low %v3332, %v3336
      %v3385 = vcombine.low %v3340, %v3344
      %v3386 = vcombine.low %v3348, %v3352
      %v3387 = vcombine.low %v3333, %v3337
      %v3388 = vcombine.low %v3341, %v3345
      %v3389 = vcombine.low %v3349, %v3353
      %v3391 = vlaneseq
      %v3392 = vshrl.u32 %v3391, 7
      %v3393 = vsub.s32 0, %v3392
      %v3394 = vrot.slane %v3224, %v3393
      %v3396 = vcombine.low %v3378, %v3381
      %v3397 = vcombine.high %v3378, %v3381
      %v3398 = vcombine.low %v3379, %v3382
      %v3399 = vcombine.high %v3379, %v3382
      %v3400 = vcombine.low %v3380, %v3383
      %v3401 = vcombine.high %v3380, %v3383
      %v3402 = vcombine.low %v3261, %v3262
      %v3403 = vcombine.low %v3384, %v3387
      %v3404 = vcombine.high %v3384, %v3387
      %v3405 = vcombine.low %v3385, %v3388
      %v3406 = vcombine.high %v3385, %v3388
      %v3407 = vcombine.low %v3386, %v3389
      %v3408 = vcombine.high %v3386, %v3389
      %v3409 = vcombine.low %v3293, %v822
      %v3422 = vsel %vm2718, %v3402, 0
      %v3424 = vsel %vm2718, %v3409, 0
      %3426 = vmatprep.subr.mxu0 0.0
      %3427 = vmatpush1.msra.mxu0 %v3116
      %3428 = vmatprep.subr.mxu0 0.0
      %3429 = vmatpush1.msra.mxu0 %v3117
      %3430 = vmatprep.subr.mxu0 0.0
      %3431 = vmatpush1.msra.mxu0 %v3118
      %3432 = vmatprep.subr.mxu0 0.0
      %3433 = vmatpush1.msra.mxu0 %v3119
      %3434 = vmatprep.subr.mxu0 0.0
      %3435 = vmatpush1.msra.mxu0 %v3120
      %3436 = vmatprep.subr.mxu0 0.0
      %3437 = vmatpush1.msra.mxu0 %v3121
      %3438 = vmatprep.subr.mxu0 0.0
      %3439 = vmatpush1.msra.mxu0 %v3122
      %3440 = vmatprep.subr.mxu0 0.0
      %3441 = vmatpush1.msra.mxu0 %v3123
      %3442 = vmatprep.subr.mxu0 0.0
      %3443 = vmatpush1.msra.mxu0 %v3124
      %3444 = vmatprep.subr.mxu0 0.0
      %3445 = vmatpush1.msra.mxu0 %v3125
      %3446 = vmatprep.subr.mxu0 0.0
      %3447 = vmatpush1.msra.mxu0 %v3126
      %3448 = vmatprep.subr.mxu0 0.0
      %3449 = vmatpush1.msra.mxu0 %v3127
      %3450 = vmatprep.subr.mxu0 0.0
      %3451 = vmatpush1.msra.mxu0 %v3128
      %3452 = vmatprep.subr.mxu0 0.0
      %3453 = vmatpush1.msra.mxu0 %v3129
      %3454 = vmatprep.subr.mxu0 0.0
      %3455 = vmatpush1.msra.mxu0 %v3130
      %3456 = vmatprep.subr.mxu0 0.0
      %3457 = vmatpush1.msra.mxu0 %v3131
      %3458 = vmatprep.subr.mxu0 0.0
      %3459 = vmatpush1.msra.mxu0 %v3132
      %3460 = vmatprep.subr.mxu0 0.0
      %3461 = vmatpush1.msra.mxu0 %v3133
      %3462 = vmatprep.subr.mxu0 0.0
      %3463 = vmatpush1.msra.mxu0 %v3134
      %3464 = vmatprep.subr.mxu0 0.0
      %3465 = vmatpush1.msra.mxu0 %v3135
      %3466 = vmatprep.subr.mxu0 0.0
      %3467 = vmatpush1.msra.mxu0 %v3136
      %3468 = vmatprep.subr.mxu0 0.0
      %3469 = vmatpush1.msra.mxu0 %v3137
      %3470 = vmatprep.subr.mxu0 0.0
      %3471 = vmatpush1.msra.mxu0 %v3138
      %3472 = vmatprep.subr.mxu0 0.0
      %3473 = vmatpush1.msra.mxu0 %v3139
      %3474 = vmatprep.subr.mxu0 0.0
      %3475 = vmatpush1.msra.mxu0 %v3140
      %3476 = vmatprep.subr.mxu0 0.0
      %3477 = vmatpush1.msra.mxu0 %v3141
      %3478 = vmatprep.subr.mxu0 0.0
      %3479 = vmatpush1.msra.mxu0 %v3142
      %3480 = vmatprep.subr.mxu0 0.0
      %3481 = vmatpush1.msra.mxu0 %v3143
      %3482 = vmatprep.subr.mxu0 0.0
      %3483 = vmatpush1.msra.mxu0 %v3144
      %3484 = vmatprep.subr.mxu0 0.0
      %3485 = vmatpush1.msra.mxu0 %v3145
      %3486 = vmatprep.subr.mxu0 0.0
      %3487 = vmatpush1.msra.mxu0 %v3146
      %3488 = vmatprep.subr.mxu0 0.0
      %3489 = vmatpush1.msra.mxu0 %v3147
      %3490 = vmatprep.mubr.f32.mxu0 %v3397
      %3491 = vmatmul.mubr.f32.gmra.mrb[0].mxu0 %v3396
      %v3492 = vpop.f32.mrb[0].mxu0
      %v3493 = vadd.f32 %v3394, %v3492
      %v3494 = vpop.f32.mrb[0].mxu0
      %3495 = vmatprep.mubr.f32.mxu0 %v3404
      %3496 = vmatmul.mubr.f32.gmra.mrb[0].mxu0 %v3403
      %v3497 = vpop.f32.mrb[0].mxu0
      %v3498 = vadd.f32 %v3394, %v3497
      %v3499 = vpop.f32.mrb[0].mxu0
      %3500 = vdwg.mxu0
      %3501 = vmatprep.subr.mxu0 0.0
      %3502 = vmatpush1.msra.mxu0 %v3148
      %3503 = vmatprep.subr.mxu0 0.0
      %3504 = vmatpush1.msra.mxu0 %v3149
      %3505 = vmatprep.subr.mxu0 0.0
      %3506 = vmatpush1.msra.mxu0 %v3150
      %3507 = vmatprep.subr.mxu0 0.0
      %3508 = vmatpush1.msra.mxu0 %v3151
      %3509 = vmatprep.subr.mxu0 0.0
      %3510 = vmatpush1.msra.mxu0 %v3152
      %3511 = vmatprep.subr.mxu0 0.0
      %3512 = vmatpush1.msra.mxu0 %v3153
      %3513 = vmatprep.subr.mxu0 0.0
      %3514 = vmatpush1.msra.mxu0 %v3154
      %3515 = vmatprep.subr.mxu0 0.0
      %3516 = vmatpush1.msra.mxu0 %v3155
      %3517 = vmatprep.subr.mxu0 0.0
      %3518 = vmatpush1.msra.mxu0 %v3156
      %3519 = vmatprep.subr.mxu0 0.0
      %3520 = vmatpush1.msra.mxu0 %v3157
      %3521 = vmatprep.subr.mxu0 0.0
      %3522 = vmatpush1.msra.mxu0 %v3158
      %3523 = vmatprep.subr.mxu0 0.0
      %3524 = vmatpush1.msra.mxu0 %v3159
      %3525 = vmatprep.subr.mxu0 0.0
      %3526 = vmatpush1.msra.mxu0 %v3160
      %3527 = vmatprep.subr.mxu0 0.0
      %3528 = vmatpush1.msra.mxu0 %v3161
      %3529 = vmatprep.subr.mxu0 0.0
      %3530 = vmatpush1.msra.mxu0 %v3162
      %3531 = vmatprep.subr.mxu0 0.0
      %3532 = vmatpush1.msra.mxu0 %v3163
      %3533 = vmatprep.subr.mxu0 0.0
      %3534 = vmatpush1.msra.mxu0 %v3164
      %3535 = vmatprep.subr.mxu0 0.0
      %3536 = vmatpush1.msra.mxu0 %v3165
      %3537 = vmatprep.subr.mxu0 0.0
      %3538 = vmatpush1.msra.mxu0 %v3166
      %3539 = vmatprep.subr.mxu0 0.0
      %3540 = vmatpush1.msra.mxu0 %v3167
      %3541 = vmatprep.subr.mxu0 0.0
      %3542 = vmatpush1.msra.mxu0 %v3168
      %3543 = vmatprep.subr.mxu0 0.0
      %3544 = vmatpush1.msra.mxu0 %v3169
      %3545 = vmatprep.subr.mxu0 0.0
      %3546 = vmatpush1.msra.mxu0 %v3170
      %3547 = vmatprep.subr.mxu0 0.0
      %3548 = vmatpush1.msra.mxu0 %v3171
      %3549 = vmatprep.subr.mxu0 0.0
      %3550 = vmatpush1.msra.mxu0 %v3172
      %3551 = vmatprep.subr.mxu0 0.0
      %3552 = vmatpush1.msra.mxu0 %v3173
      %3553 = vmatprep.subr.mxu0 0.0
      %3554 = vmatpush1.msra.mxu0 %v3174
      %3555 = vmatprep.subr.mxu0 0.0
      %3556 = vmatpush1.msra.mxu0 %v3175
      %3557 = vmatprep.subr.mxu0 0.0
      %3558 = vmatpush1.msra.mxu0 %v3176
      %3559 = vmatprep.subr.mxu0 0.0
      %3560 = vmatpush1.msra.mxu0 %v3177
      %3561 = vmatprep.subr.mxu0 0.0
      %3562 = vmatpush1.msra.mxu0 %v3178
      %3563 = vmatprep.subr.mxu0 0.0
      %3564 = vmatpush1.msra.mxu0 %v3179
      %3565 = vmatprep.mubr.f32.mxu0 %v3399
      %3566 = vmatmul.mubr.f32.gmra.mrb[0].mxu0 %v3398
      %v3567 = vpop.f32.mrb[0].mxu0
      %v3568 = vadd.f32 %v3493, %v3567
      %v3569 = vpop.f32.mrb[0].mxu0
      %3570 = vmatprep.mubr.f32.mxu0 %v3406
      %3571 = vmatmul.mubr.f32.gmra.mrb[0].mxu0 %v3405
      %v3572 = vpop.f32.mrb[0].mxu0
      %v3573 = vadd.f32 %v3498, %v3572
      %v3574 = vpop.f32.mrb[0].mxu0
      %3575 = vdwg.mxu0
      %3576 = vmatprep.subr.mxu0 0.0
      %3577 = vmatpush1.msra.mxu0 %v3180
      %3578 = vmatprep.subr.mxu0 0.0
      %3579 = vmatpush1.msra.mxu0 %v3181
      %3580 = vmatprep.subr.mxu0 0.0
      %3581 = vmatpush1.msra.mxu0 %v3182
      %3582 = vmatprep.subr.mxu0 0.0
      %3583 = vmatpush1.msra.mxu0 %v3183
      %3584 = vmatprep.subr.mxu0 0.0
      %3585 = vmatpush1.msra.mxu0 %v3184
      %3586 = vmatprep.subr.mxu0 0.0
      %3587 = vmatpush1.msra.mxu0 %v3185
      %3588 = vmatprep.subr.mxu0 0.0
      %3589 = vmatpush1.msra.mxu0 %v3186
      %3590 = vmatprep.subr.mxu0 0.0
      %3591 = vmatpush1.msra.mxu0 %v3187
      %3592 = vmatprep.subr.mxu0 0.0
      %3593 = vmatpush1.msra.mxu0 %v3188
      %3594 = vmatprep.subr.mxu0 0.0
      %3595 = vmatpush1.msra.mxu0 %v3189
      %3596 = vmatprep.subr.mxu0 0.0
      %3597 = vmatpush1.msra.mxu0 %v3190
      %3598 = vmatprep.subr.mxu0 0.0
      %3599 = vmatpush1.msra.mxu0 %v3191
      %3600 = vmatprep.subr.mxu0 0.0
      %3601 = vmatpush1.msra.mxu0 %v3192
      %3602 = vmatprep.subr.mxu0 0.0
      %3603 = vmatpush1.msra.mxu0 %v3193
      %3604 = vmatprep.subr.mxu0 0.0
      %3605 = vmatpush1.msra.mxu0 %v3194
      %3606 = vmatprep.subr.mxu0 0.0
      %3607 = vmatpush1.msra.mxu0 %v3195
      %3608 = vmatprep.subr.mxu0 0.0
      %3609 = vmatpush1.msra.mxu0 %v3196
      %3610 = vmatprep.subr.mxu0 0.0
      %3611 = vmatpush1.msra.mxu0 %v3197
      %3612 = vmatprep.subr.mxu0 0.0
      %3613 = vmatpush1.msra.mxu0 %v3198
      %3614 = vmatprep.subr.mxu0 0.0
      %3615 = vmatpush1.msra.mxu0 %v3199
      %3616 = vmatprep.subr.mxu0 0.0
      %3617 = vmatpush1.msra.mxu0 %v3200
      %3618 = vmatprep.subr.mxu0 0.0
      %3619 = vmatpush1.msra.mxu0 %v3201
      %3620 = vmatprep.subr.mxu0 0.0
      %3621 = vmatpush1.msra.mxu0 %v3202
      %3622 = vmatprep.subr.mxu0 0.0
      %3623 = vmatpush1.msra.mxu0 %v3203
      %3624 = vmatprep.subr.mxu0 0.0
      %3625 = vmatpush1.msra.mxu0 %v3204
      %3626 = vmatprep.subr.mxu0 0.0
      %3627 = vmatpush1.msra.mxu0 %v3205
      %3628 = vmatprep.subr.mxu0 0.0
      %3629 = vmatpush1.msra.mxu0 %v3206
      %3630 = vmatprep.subr.mxu0 0.0
      %3631 = vmatpush1.msra.mxu0 %v3207
      %3632 = vmatprep.subr.mxu0 0.0
      %3633 = vmatpush1.msra.mxu0 %v3208
      %3634 = vmatprep.subr.mxu0 0.0
      %3635 = vmatpush1.msra.mxu0 %v3209
      %3636 = vmatprep.subr.mxu0 0.0
      %3637 = vmatpush1.msra.mxu0 %v3210
      %3638 = vmatprep.subr.mxu0 0.0
      %3639 = vmatpush1.msra.mxu0 %v3211
      %3640 = vmatprep.mubr.f32.mxu0 %v3401
      %3641 = vmatmul.mubr.f32.gmra.mrb[0].mxu0 %v3400
      %v3642 = vpop.f32.mrb[0].mxu0
      %v3643 = vadd.f32 %v3568, %v3642
      %v3644 = vpop.f32.mrb[0].mxu0
      %3645 = vmatprep.mubr.f32.mxu0 %v3408
      %3646 = vmatmul.mubr.f32.gmra.mrb[0].mxu0 %v3407
      %v3647 = vpop.f32.mrb[0].mxu0
      %v3648 = vadd.f32 %v3573, %v3647
      %v3649 = vpop.f32.mrb[0].mxu0
      %3650 = vdwg.mxu0
      %3651 = vmatprep.subr.mxu0 0.0
      %3652 = vmatpush1.msra.mxu0 %v3212
      %3653 = vmatprep.subr.mxu0 0.0
      %3654 = vmatpush1.msra.mxu0 %v3213
      %3655 = vmatprep.subr.mxu0 0.0
      %3656 = vmatpush1.msra.mxu0 %v3214
      %3657 = vmatprep.subr.mxu0 0.0
      %3658 = vmatpush1.msra.mxu0 %v3215
      %3659 = vmatprep.subr.mxu0 0.0
      %3660 = vmatpush1.msra.mxu0 %v3216
      %3661 = vmatprep.subr.mxu0 0.0
      %3662 = vmatpush1.msra.mxu0 %v3217
      %3663 = vmatprep.subr.mxu0 0.0
      %3664 = vmatpush1.msra.mxu0 %v3218
      %3665 = vmatprep.subr.mxu0 0.0
      %3666 = vmatpush1.msra.mxu0 %v3219
      %3667 = vmatprep.subr.mxu0 0.0
      %3668 = vmatpush1.msra.mxu0 %v3220
      %3669 = vmatprep.subr.mxu0 0.0
      %3670 = vmatpush1.msra.mxu0 %v3221
      %3671 = vmatprep.subr.mxu0 0.0
      %3672 = vmatpush1.msra.mxu0 %v3222
      %3673 = vmatprep.subr.mxu0 0.0
      %3674 = vmatpush1.msra.mxu0 %v3223
      %3675 = vmatprep.subr.mxu0 0.0
      %3676 = vmatpush1.msra.mxu0 0.0
      %3677 = vmatprep.subr.mxu0 0.0
      %3678 = vmatpush1.msra.mxu0 0.0
      %3679 = vmatprep.subr.mxu0 0.0
      %3680 = vmatpush1.msra.mxu0 0.0
      %3681 = vmatprep.subr.mxu0 0.0
      %3682 = vmatpush1.msra.mxu0 0.0
      %3683 = vmatprep.subr.mxu0 0.0
      %3684 = vmatpush1.msra.mxu0 0.0
      %3685 = vmatprep.subr.mxu0 0.0
      %3686 = vmatpush1.msra.mxu0 0.0
      %3687 = vmatprep.subr.mxu0 0.0
      %3688 = vmatpush1.msra.mxu0 0.0
      %3689 = vmatprep.subr.mxu0 0.0
      %3690 = vmatpush1.msra.mxu0 0.0
      %3691 = vmatprep.subr.mxu0 0.0
      %3692 = vmatpush1.msra.mxu0 0.0
      %3693 = vmatprep.subr.mxu0 0.0
      %3694 = vmatpush1.msra.mxu0 0.0
      %3695 = vmatprep.subr.mxu0 0.0
      %3696 = vmatpush1.msra.mxu0 0.0
      %3697 = vmatprep.subr.mxu0 0.0
      %3698 = vmatpush1.msra.mxu0 0.0
      %3699 = vmatprep.subr.mxu0 0.0
      %3700 = vmatpush1.msra.mxu0 0.0
      %3701 = vmatprep.subr.mxu0 0.0
      %3702 = vmatpush1.msra.mxu0 0.0
      %3703 = vmatprep.subr.mxu0 0.0
      %3704 = vmatpush1.msra.mxu0 0.0
      %3705 = vmatprep.subr.mxu0 0.0
      %3706 = vmatpush1.msra.mxu0 0.0
      %3707 = vmatprep.subr.mxu0 0.0
      %3708 = vmatpush1.msra.mxu0 0.0
      %3709 = vmatprep.subr.mxu0 0.0
      %3710 = vmatpush1.msra.mxu0 0.0
      %3711 = vmatprep.subr.mxu0 0.0
      %3712 = vmatpush1.msra.mxu0 0.0
      %3713 = vmatprep.subr.mxu0 0.0
      %3714 = vmatpush1.msra.mxu0 0.0
      %3715 = vmatprep.mubr.f32.mxu0 0.0
      %3716 = vmatmul.mubr.f32.gmra.mrb[0].mxu0 %v3422
      %v3717 = vpop.f32.mrb[0].mxu0
      %v3718 = vadd.f32 %v3643, %v3717
      %v3719 = vpop.f32.mrb[0].mxu0
      %3720 = vmatprep.mubr.f32.mxu0 0.0
      %3721 = vmatmul.mubr.f32.gmra.mrb[0].mxu0 %v3424
      %v3722 = vpop.f32.mrb[0].mxu0
      %v3723 = vadd.f32 %v3648, %v3722
      %v3724 = vpop.f32.mrb[0].mxu0
      %3725 = vdwg.mxu0
      %vm3726 = vcmp.ge.f32.partialorder %v3718, 0.0
      %vm3727 = vcmp.ge.f32.partialorder %v3723, 0.0
      %v3728 = vmul.f32 %v3718, 0.1
      %v3729 = vmul.f32 %v3723, 0.1
      %v3730 = vsel %vm3726, %v3718, %v3728
      %v3731 = vsel %vm3727, %v3723, %v3729
      %v3734 = vcombine.high %v3730, %v3730
      %v3735 = vcombine.high %v3731, %v3731
      %s3736 = scalar_lea.vmem %s7, 864
      %v3737 = vld [vmem:[%s3736] sm:$0xff]
      %v3738 = vld [vmem:[%s3736 + $0x8] sm:$0xff]
      %v3739 = vld [vmem:[%s3736 + $0x10] sm:$0xff]
      %v3740 = vld [vmem:[%s3736 + $0x18] sm:$0xff]
      %v3741 = vld [vmem:[%s3736 + $0x20] sm:$0xff]
      %v3742 = vld [vmem:[%s3736 + $0x28] sm:$0xff]
      %v3743 = vld [vmem:[%s3736 + $0x30] sm:$0xff]
      %v3744 = vld [vmem:[%s3736 + $0x38] sm:$0xff]
      %v3745 = vld [vmem:[%s3736 + $0x40] sm:$0xff]
      %v3746 = vld [vmem:[%s3736 + $0x48] sm:$0xff]
      %v3747 = vld [vmem:[%s3736 + $0x50] sm:$0xff]
      %v3748 = vld [vmem:[%s3736 + $0x58] sm:$0xff]
      %v3749 = vld [vmem:[%s3736 + $0x60] sm:$0xff]
      %v3750 = vld [vmem:[%s3736 + $0x68] sm:$0xff]
      %v3751 = vld [vmem:[%s3736 + $0x70] sm:$0xff]
      %v3752 = vld [vmem:[%s3736 + $0x78] sm:$0xff]
      %v3753 = vld [vmem:[%s3736 + $0x80] sm:$0xff]
      %v3754 = vld [vmem:[%s3736 + $0x88] sm:$0xff]
      %v3755 = vld [vmem:[%s3736 + $0x90] sm:$0xff]
      %v3756 = vld [vmem:[%s3736 + $0x98] sm:$0xff]
      %v3757 = vld [vmem:[%s3736 + $0xa0] sm:$0xff]
      %v3758 = vld [vmem:[%s3736 + $0xa8] sm:$0xff]
      %v3759 = vld [vmem:[%s3736 + $0xb0] sm:$0xff]
      %v3760 = vld [vmem:[%s3736 + $0xb8] sm:$0xff]
      %v3761 = vld [vmem:[%s3736 + $0xc0] sm:$0xff]
      %v3762 = vld [vmem:[%s3736 + $0xc8] sm:$0xff]
      %v3763 = vld [vmem:[%s3736 + $0xd0] sm:$0xff]
      %v3764 = vld [vmem:[%s3736 + $0xd8] sm:$0xff]
      %v3765 = vld [vmem:[%s3736 + $0xe0] sm:$0xff]
      %v3766 = vld [vmem:[%s3736 + $0xe8] sm:$0xff]
      %v3767 = vld [vmem:[%s3736 + $0xf0] sm:$0xff]
      %v3768 = vld [vmem:[%s3736 + $0xf8] sm:$0xff]
      %v3769 = vld [vmem:[%s3736 + $0x100] sm:$0xff]
      %v3770 = vld [vmem:[%s3736 + $0x108] sm:$0xff]
      %v3771 = vld [vmem:[%s3736 + $0x110] sm:$0xff]
      %v3772 = vld [vmem:[%s3736 + $0x118] sm:$0xff]
      %v3773 = vld [vmem:[%s3736 + $0x120] sm:$0xff]
      %v3774 = vld [vmem:[%s3736 + $0x128] sm:$0xff]
      %v3775 = vld [vmem:[%s3736 + $0x130] sm:$0xff]
      %v3776 = vld [vmem:[%s3736 + $0x138] sm:$0xff]
      %v3777 = vld [vmem:[%s3736 + $0x140] sm:$0xff]
      %v3778 = vld [vmem:[%s3736 + $0x148] sm:$0xff]
      %v3779 = vld [vmem:[%s3736 + $0x150] sm:$0xff]
      %v3780 = vld [vmem:[%s3736 + $0x158] sm:$0xff]
      %v3781 = vld [vmem:[%s3736 + $0x160] sm:$0xff]
      %v3782 = vld [vmem:[%s3736 + $0x168] sm:$0xff]
      %v3783 = vld [vmem:[%s3736 + $0x170] sm:$0xff]
      %v3784 = vld [vmem:[%s3736 + $0x178] sm:$0xff]
      %v3785 = vld [vmem:[%s3736 + $0x180] sm:$0xff]
      %v3786 = vld [vmem:[%s3736 + $0x188] sm:$0xff]
      %v3787 = vld [vmem:[%s3736 + $0x190] sm:$0xff]
      %v3788 = vld [vmem:[%s3736 + $0x198] sm:$0xff]
      %v3789 = vld [vmem:[%s3736 + $0x1a0] sm:$0xff]
      %v3790 = vld [vmem:[%s3736 + $0x1a8] sm:$0xff]
      %v3791 = vld [vmem:[%s3736 + $0x1b0] sm:$0xff]
      %v3792 = vld [vmem:[%s3736 + $0x1b8] sm:$0xff]
      %v3793 = vld [vmem:[%s3736 + $0x1c0] sm:$0xff]
      %v3794 = vld [vmem:[%s3736 + $0x1c8] sm:$0xff]
      %v3795 = vld [vmem:[%s3736 + $0x1d0] sm:$0xff]
      %v3796 = vld [vmem:[%s3736 + $0x1d8] sm:$0xff]
      %v3797 = vld [vmem:[%s3736 + $0x1e0] sm:$0xff]
      %v3798 = vld [vmem:[%s3736 + $0x1e8] sm:$0xff]
      %v3799 = vld [vmem:[%s3736 + $0x1f0] sm:$0xff]
      %v3800 = vld [vmem:[%s3736 + $0x1f8] sm:$0xff]
      %v3801 = vld [vmem:[%s3736 + $0x200] sm:$0xff]
      %v3802 = vld [vmem:[%s3736 + $0x208] sm:$0xff]
      %v3803 = vld [vmem:[%s3736 + $0x210] sm:$0xff]
      %v3804 = vld [vmem:[%s3736 + $0x218] sm:$0xff]
      %v3805 = vld [vmem:[%s3736 + $0x220] sm:$0xff]
      %v3806 = vld [vmem:[%s3736 + $0x228] sm:$0xff]
      %v3807 = vld [vmem:[%s3736 + $0x230] sm:$0xff]
      %v3808 = vld [vmem:[%s3736 + $0x238] sm:$0xff]
      %v3809 = vld [vmem:[%s3736 + $0x240] sm:$0xff]
      %v3810 = vld [vmem:[%s3736 + $0x248] sm:$0xff]
      %v3811 = vld [vmem:[%s3736 + $0x250] sm:$0xff]
      %v3812 = vld [vmem:[%s3736 + $0x258] sm:$0xff]
      %v3813 = vld [vmem:[%s3736 + $0x260] sm:$0xff]
      %v3814 = vld [vmem:[%s3736 + $0x268] sm:$0xff]
      %v3815 = vld [vmem:[%s3736 + $0x270] sm:$0xff]
      %v3816 = vld [vmem:[%s3736 + $0x278] sm:$0xff]
      %v3817 = vld [vmem:[%s3736 + $0x280] sm:$0xff]
      %v3818 = vld [vmem:[%s3736 + $0x288] sm:$0xff]
      %v3819 = vld [vmem:[%s3736 + $0x290] sm:$0xff]
      %v3820 = vld [vmem:[%s3736 + $0x298] sm:$0xff]
      %v3821 = vld [vmem:[%s3736 + $0x2a0] sm:$0xff]
      %v3822 = vld [vmem:[%s3736 + $0x2a8] sm:$0xff]
      %v3823 = vld [vmem:[%s3736 + $0x2b0] sm:$0xff]
      %v3824 = vld [vmem:[%s3736 + $0x2b8] sm:$0xff]
      %v3825 = vld [vmem:[%s3736 + $0x2c0] sm:$0xff]
      %v3826 = vld [vmem:[%s3736 + $0x2c8] sm:$0xff]
      %v3827 = vld [vmem:[%s3736 + $0x2d0] sm:$0xff]
      %v3828 = vld [vmem:[%s3736 + $0x2d8] sm:$0xff]
      %v3829 = vld [vmem:[%s3736 + $0x2e0] sm:$0xff]
      %v3830 = vld [vmem:[%s3736 + $0x2e8] sm:$0xff]
      %v3831 = vld [vmem:[%s3736 + $0x2f0] sm:$0xff]
      %v3832 = vld [vmem:[%s3736 + $0x2f8] sm:$0xff]
      %v3833 = vld [vmem:[%s3736 + $0x300] sm:$0xff]
      %v3834 = vld [vmem:[%s3736 + $0x308] sm:$0xff]
      %v3835 = vld [vmem:[%s3736 + $0x310] sm:$0xff]
      %v3836 = vld [vmem:[%s3736 + $0x318] sm:$0xff]
      %v3837 = vld [vmem:[%s3736 + $0x320] sm:$0xff]
      %v3838 = vld [vmem:[%s3736 + $0x328] sm:$0xff]
      %v3839 = vld [vmem:[%s3736 + $0x330] sm:$0xff]
      %v3840 = vld [vmem:[%s3736 + $0x338] sm:$0xff]
      %v3841 = vld [vmem:[%s3736 + $0x340] sm:$0xff]
      %v3842 = vld [vmem:[%s3736 + $0x348] sm:$0xff]
      %v3843 = vld [vmem:[%s3736 + $0x350] sm:$0xff]
      %v3844 = vld [vmem:[%s3736 + $0x358] sm:$0xff]
      %s3845 = scalar_lea.vmem %s8, 1
      %v3846 = vld [vmem:[%s3845] sm:$0x1]
      %v3847 = vrot.slane %v3730, 7
      %v3848 = vrot.slane %v3734, 7
      %v3849 = vrot.slane %v3731, 7
      %v3850 = vrot.slane %v3735, 7
      %v3855 = vsel %vm491, 0.0, %v3847
      %v3856 = vsel %vm491, 0.0, %v3848
      %v3857 = vsel %vm491, 0.0, %v3849
      %v3858 = vsel %vm491, 0.0, %v3850
      %v3859 = vsel %vm3237, %v3855, 0.0
      %v3860 = vsel %vm3237, %v3856, 0.0
      %v3861 = vsel %vm3237, %v3857, 0.0
      %v3862 = vsel %vm3237, %v3858, 0.0
      %v3866 = vrot.slane %v3859, 1
      %v3867 = vrot.slane %v3860, 1
      %v3868 = vrot.slane %v3861, 1
      %3869 = vrot.lane.b32.xlu0 %v3866, 96
      %v3870 = vpop.permute.xlu0 %3869
      %3871 = vrot.lane.b32.xlu0 %v3867, 96
      %v3872 = vpop.permute.xlu0 %3871
      %3873 = vrot.lane.b32.xlu0 %v3868, 96
      %v3874 = vpop.permute.xlu0 %3873
      %v3878 = vrot.slane %v3859, 2
      %v3879 = vrot.slane %v3860, 2
      %v3880 = vrot.slane %v3861, 2
      %3881 = vrot.lane.b32.xlu0 %v3878, 64
      %v3882 = vpop.permute.xlu0 %3881
      %3883 = vrot.lane.b32.xlu0 %v3879, 64
      %v3884 = vpop.permute.xlu0 %3883
      %3885 = vrot.lane.b32.xlu0 %v3880, 64
      %v3886 = vpop.permute.xlu0 %3885
      %3891 = vrot.lane.b32.xlu0 %v3859, 32
      %v3892 = vpop.permute.xlu0 %3891
      %3893 = vrot.lane.b32.xlu0 %v3860, 32
      %v3894 = vpop.permute.xlu0 %3893
      %3895 = vrot.lane.b32.xlu0 %v3861, 32
      %v3896 = vpop.permute.xlu0 %3895
      %3897 = vrot.lane.b32.xlu0 %v3862, 32
      %v3898 = vpop.permute.xlu0 %3897
      %v3903 = vrot.slane %v3862, 1
      %v3908 = vrot.slane %v3862, 2
      %3909 = vrot.lane.b32.xlu0 %v3878, 96
      %v3910 = vpop.permute.xlu0 %3909
      %3911 = vrot.lane.b32.xlu0 %v3879, 96
      %v3912 = vpop.permute.xlu0 %3911
      %3913 = vrot.lane.b32.xlu0 %v3880, 96
      %v3914 = vpop.permute.xlu0 %3913
      %3915 = vrot.lane.b32.xlu0 %v3908, 96
      %v3916 = vpop.permute.xlu0 %3915
      %3921 = vrot.lane.b32.xlu0 %v3860, 64
      %v3922 = vpop.permute.xlu0 %3921
      %3923 = vrot.lane.b32.xlu0 %v3861, 64
      %v3924 = vpop.permute.xlu0 %3923
      %3925 = vrot.lane.b32.xlu0 %v3862, 64
      %v3926 = vpop.permute.xlu0 %3925
      %3930 = vrot.lane.b32.xlu0 %v3867, 32
      %v3931 = vpop.permute.xlu0 %3930
      %3932 = vrot.lane.b32.xlu0 %v3868, 32
      %v3933 = vpop.permute.xlu0 %3932
      %3934 = vrot.lane.b32.xlu0 %v3903, 32
      %v3935 = vpop.permute.xlu0 %3934
      %v3939 = vsel %vm2718, %v3859, %v3870
      %v3940 = vsel %vm2718, %v3860, %v3872
      %v3941 = vsel %vm2718, %v3861, %v3874
      %v3942 = vsel %vm2736, %v3870, %v3882
      %v3943 = vsel %vm2736, %v3872, %v3884
      %v3944 = vsel %vm2736, %v3874, %v3886
      %v3945 = vsel %vm2754, %v3264, %v3892
      %v3946 = vsel %vm2754, %v3882, %v3894
      %v3947 = vsel %vm2754, %v3884, %v3896
      %v3948 = vsel %vm2754, %v3886, %v3898
      %v3949 = vsel %vm2718, %v3866, %v3910
      %v3950 = vsel %vm2718, %v3867, %v3912
      %v3951 = vsel %vm2718, %v3868, %v3914
      %v3952 = vsel %vm2718, %v3903, %v3916
      %v3953 = vsel %vm2736, %v3910, %v3922
      %v3954 = vsel %vm2736, %v3912, %v3924
      %v3955 = vsel %vm2736, %v3914, %v3926
      %v3956 = vsel %vm2736, %v3916, %v3313
      %v3957 = vsel %vm2754, %v3922, %v3931
      %v3958 = vsel %vm2754, %v3924, %v3933
      %v3959 = vsel %vm2754, %v3926, %v3935
      %v3981 = vcombine.low %v3945, %v3949
      %v3982 = vcombine.low %v3953, %v3957
      %v3983 = vcombine.low %v3939, %v3942
      %v3984 = vcombine.low %v3946, %v3950
      %v3985 = vcombine.low %v3954, %v3958
      %v3986 = vcombine.low %v3940, %v3943
      %v3987 = vcombine.low %v3947, %v3951
      %v3988 = vcombine.low %v3955, %v3959
      %v3989 = vcombine.low %v3941, %v3944
      %v3990 = vcombine.low %v3948, %v3952
      %v3991 = vcombine.low %v3956, %v3353
      %v3993 = vlaneseq
      %v3994 = vshrl.u32 %v3993, 7
      %v3995 = vsub.s32 0, %v3994
      %v3996 = vrot.slane %v3846, %v3995
      %v3998 = vcombine.low %v3378, %v3983
      %v3999 = vcombine.high %v3378, %v3983
      %v4000 = vcombine.low %v3981, %v3984
      %v4001 = vcombine.high %v3981, %v3984
      %v4002 = vcombine.low %v3982, %v3985
      %v4003 = vcombine.high %v3982, %v3985
      %v4004 = vcombine.low %v3879, %v3880
      %v4005 = vcombine.low %v3986, %v3989
      %v4006 = vcombine.high %v3986, %v3989
      %v4007 = vcombine.low %v3987, %v3990
      %v4008 = vcombine.high %v3987, %v3990
      %v4009 = vcombine.low %v3988, %v3991
      %v4010 = vcombine.high %v3988, %v3991
      %v4011 = vcombine.low %v3908, %v822
      %v4024 = vsel %vm2718, %v4004, 0
      %v4026 = vsel %vm2718, %v4011, 0
      %4028 = vmatprep.subr.mxu0 0.0
      %4029 = vmatpush1.msra.mxu0 %v3737
      %4030 = vmatprep.subr.mxu0 0.0
      %4031 = vmatpush1.msra.mxu0 %v3738
      %4032 = vmatprep.subr.mxu0 0.0
      %4033 = vmatpush1.msra.mxu0 %v3739
      %4034 = vmatprep.subr.mxu0 0.0
      %4035 = vmatpush1.msra.mxu0 %v3740
      %4036 = vmatprep.subr.mxu0 0.0
      %4037 = vmatpush1.msra.mxu0 %v3741
      %4038 = vmatprep.subr.mxu0 0.0
      %4039 = vmatpush1.msra.mxu0 %v3742
      %4040 = vmatprep.subr.mxu0 0.0
      %4041 = vmatpush1.msra.mxu0 %v3743
      %4042 = vmatprep.subr.mxu0 0.0
      %4043 = vmatpush1.msra.mxu0 %v3744
      %4044 = vmatprep.subr.mxu0 0.0
      %4045 = vmatpush1.msra.mxu0 %v3745
      %4046 = vmatprep.subr.mxu0 0.0
      %4047 = vmatpush1.msra.mxu0 %v3746
      %4048 = vmatprep.subr.mxu0 0.0
      %4049 = vmatpush1.msra.mxu0 %v3747
      %4050 = vmatprep.subr.mxu0 0.0
      %4051 = vmatpush1.msra.mxu0 %v3748
      %4052 = vmatprep.subr.mxu0 0.0
      %4053 = vmatpush1.msra.mxu0 %v3749
      %4054 = vmatprep.subr.mxu0 0.0
      %4055 = vmatpush1.msra.mxu0 %v3750
      %4056 = vmatprep.subr.mxu0 0.0
      %4057 = vmatpush1.msra.mxu0 %v3751
      %4058 = vmatprep.subr.mxu0 0.0
      %4059 = vmatpush1.msra.mxu0 %v3752
      %4060 = vmatprep.subr.mxu0 0.0
      %4061 = vmatpush1.msra.mxu0 %v3753
      %4062 = vmatprep.subr.mxu0 0.0
      %4063 = vmatpush1.msra.mxu0 %v3754
      %4064 = vmatprep.subr.mxu0 0.0
      %4065 = vmatpush1.msra.mxu0 %v3755
      %4066 = vmatprep.subr.mxu0 0.0
      %4067 = vmatpush1.msra.mxu0 %v3756
      %4068 = vmatprep.subr.mxu0 0.0
      %4069 = vmatpush1.msra.mxu0 %v3757
      %4070 = vmatprep.subr.mxu0 0.0
      %4071 = vmatpush1.msra.mxu0 %v3758
      %4072 = vmatprep.subr.mxu0 0.0
      %4073 = vmatpush1.msra.mxu0 %v3759
      %4074 = vmatprep.subr.mxu0 0.0
      %4075 = vmatpush1.msra.mxu0 %v3760
      %4076 = vmatprep.subr.mxu0 0.0
      %4077 = vmatpush1.msra.mxu0 %v3761
      %4078 = vmatprep.subr.mxu0 0.0
      %4079 = vmatpush1.msra.mxu0 %v3762
      %4080 = vmatprep.subr.mxu0 0.0
      %4081 = vmatpush1.msra.mxu0 %v3763
      %4082 = vmatprep.subr.mxu0 0.0
      %4083 = vmatpush1.msra.mxu0 %v3764
      %4084 = vmatprep.subr.mxu0 0.0
      %4085 = vmatpush1.msra.mxu0 %v3765
      %4086 = vmatprep.subr.mxu0 0.0
      %4087 = vmatpush1.msra.mxu0 %v3766
      %4088 = vmatprep.subr.mxu0 0.0
      %4089 = vmatpush1.msra.mxu0 %v3767
      %4090 = vmatprep.subr.mxu0 0.0
      %4091 = vmatpush1.msra.mxu0 %v3768
      %4092 = vmatprep.mubr.f32.mxu0 %v3999
      %4093 = vmatmul.mubr.f32.gmra.mrb[0].mxu0 %v3998
      %v4094 = vpop.f32.mrb[0].mxu0
      %v4095 = vadd.f32 %v3996, %v4094
      %v4096 = vpop.f32.mrb[0].mxu0
      %4097 = vmatprep.mubr.f32.mxu0 %v4006
      %4098 = vmatmul.mubr.f32.gmra.mrb[0].mxu0 %v4005
      %v4099 = vpop.f32.mrb[0].mxu0
      %v4100 = vadd.f32 %v3996, %v4099
      %v4101 = vpop.f32.mrb[0].mxu0
      %4102 = vdwg.mxu0
      %4103 = vmatprep.subr.mxu0 0.0
      %4104 = vmatpush1.msra.mxu0 %v3769
      %4105 = vmatprep.subr.mxu0 0.0
      %4106 = vmatpush1.msra.mxu0 %v3770
      %4107 = vmatprep.subr.mxu0 0.0
      %4108 = vmatpush1.msra.mxu0 %v3771
      %4109 = vmatprep.subr.mxu0 0.0
      %4110 = vmatpush1.msra.mxu0 %v3772
      %4111 = vmatprep.subr.mxu0 0.0
      %4112 = vmatpush1.msra.mxu0 %v3773
      %4113 = vmatprep.subr.mxu0 0.0
      %4114 = vmatpush1.msra.mxu0 %v3774
      %4115 = vmatprep.subr.mxu0 0.0
      %4116 = vmatpush1.msra.mxu0 %v3775
      %4117 = vmatprep.subr.mxu0 0.0
      %4118 = vmatpush1.msra.mxu0 %v3776
      %4119 = vmatprep.subr.mxu0 0.0
      %4120 = vmatpush1.msra.mxu0 %v3777
      %4121 = vmatprep.subr.mxu0 0.0
      %4122 = vmatpush1.msra.mxu0 %v3778
      %4123 = vmatprep.subr.mxu0 0.0
      %4124 = vmatpush1.msra.mxu0 %v3779
      %4125 = vmatprep.subr.mxu0 0.0
      %4126 = vmatpush1.msra.mxu0 %v3780
      %4127 = vmatprep.subr.mxu0 0.0
      %4128 = vmatpush1.msra.mxu0 %v3781
      %4129 = vmatprep.subr.mxu0 0.0
      %4130 = vmatpush1.msra.mxu0 %v3782
      %4131 = vmatprep.subr.mxu0 0.0
      %4132 = vmatpush1.msra.mxu0 %v3783
      %4133 = vmatprep.subr.mxu0 0.0
      %4134 = vmatpush1.msra.mxu0 %v3784
      %4135 = vmatprep.subr.mxu0 0.0
      %4136 = vmatpush1.msra.mxu0 %v3785
      %4137 = vmatprep.subr.mxu0 0.0
      %4138 = vmatpush1.msra.mxu0 %v3786
      %4139 = vmatprep.subr.mxu0 0.0
      %4140 = vmatpush1.msra.mxu0 %v3787
      %4141 = vmatprep.subr.mxu0 0.0
      %4142 = vmatpush1.msra.mxu0 %v3788
      %4143 = vmatprep.subr.mxu0 0.0
      %4144 = vmatpush1.msra.mxu0 %v3789
      %4145 = vmatprep.subr.mxu0 0.0
      %4146 = vmatpush1.msra.mxu0 %v3790
      %4147 = vmatprep.subr.mxu0 0.0
      %4148 = vmatpush1.msra.mxu0 %v3791
      %4149 = vmatprep.subr.mxu0 0.0
      %4150 = vmatpush1.msra.mxu0 %v3792
      %4151 = vmatprep.subr.mxu0 0.0
      %4152 = vmatpush1.msra.mxu0 %v3793
      %4153 = vmatprep.subr.mxu0 0.0
      %4154 = vmatpush1.msra.mxu0 %v3794
      %4155 = vmatprep.subr.mxu0 0.0
      %4156 = vmatpush1.msra.mxu0 %v3795
      %4157 = vmatprep.subr.mxu0 0.0
      %4158 = vmatpush1.msra.mxu0 %v3796
      %4159 = vmatprep.subr.mxu0 0.0
      %4160 = vmatpush1.msra.mxu0 %v3797
      %4161 = vmatprep.subr.mxu0 0.0
      %4162 = vmatpush1.msra.mxu0 %v3798
      %4163 = vmatprep.subr.mxu0 0.0
      %4164 = vmatpush1.msra.mxu0 %v3799
      %4165 = vmatprep.subr.mxu0 0.0
      %4166 = vmatpush1.msra.mxu0 %v3800
      %4167 = vmatprep.mubr.f32.mxu0 %v4001
      %4168 = vmatmul.mubr.f32.gmra.mrb[0].mxu0 %v4000
      %v4169 = vpop.f32.mrb[0].mxu0
      %v4170 = vadd.f32 %v4095, %v4169
      %v4171 = vpop.f32.mrb[0].mxu0
      %4172 = vmatprep.mubr.f32.mxu0 %v4008
      %4173 = vmatmul.mubr.f32.gmra.mrb[0].mxu0 %v4007
      %v4174 = vpop.f32.mrb[0].mxu0
      %v4175 = vadd.f32 %v4100, %v4174
      %v4176 = vpop.f32.mrb[0].mxu0
      %4177 = vdwg.mxu0
      %4178 = vmatprep.subr.mxu0 0.0
      %4179 = vmatpush1.msra.mxu0 %v3801
      %4180 = vmatprep.subr.mxu0 0.0
      %4181 = vmatpush1.msra.mxu0 %v3802
      %4182 = vmatprep.subr.mxu0 0.0
      %4183 = vmatpush1.msra.mxu0 %v3803
      %4184 = vmatprep.subr.mxu0 0.0
      %4185 = vmatpush1.msra.mxu0 %v3804
      %4186 = vmatprep.subr.mxu0 0.0
      %4187 = vmatpush1.msra.mxu0 %v3805
      %4188 = vmatprep.subr.mxu0 0.0
      %4189 = vmatpush1.msra.mxu0 %v3806
      %4190 = vmatprep.subr.mxu0 0.0
      %4191 = vmatpush1.msra.mxu0 %v3807
      %4192 = vmatprep.subr.mxu0 0.0
      %4193 = vmatpush1.msra.mxu0 %v3808
      %4194 = vmatprep.subr.mxu0 0.0
      %4195 = vmatpush1.msra.mxu0 %v3809
      %4196 = vmatprep.subr.mxu0 0.0
      %4197 = vmatpush1.msra.mxu0 %v3810
      %4198 = vmatprep.subr.mxu0 0.0
      %4199 = vmatpush1.msra.mxu0 %v3811
      %4200 = vmatprep.subr.mxu0 0.0
      %4201 = vmatpush1.msra.mxu0 %v3812
      %4202 = vmatprep.subr.mxu0 0.0
      %4203 = vmatpush1.msra.mxu0 %v3813
      %4204 = vmatprep.subr.mxu0 0.0
      %4205 = vmatpush1.msra.mxu0 %v3814
      %4206 = vmatprep.subr.mxu0 0.0
      %4207 = vmatpush1.msra.mxu0 %v3815
      %4208 = vmatprep.subr.mxu0 0.0
      %4209 = vmatpush1.msra.mxu0 %v3816
      %4210 = vmatprep.subr.mxu0 0.0
      %4211 = vmatpush1.msra.mxu0 %v3817
      %4212 = vmatprep.subr.mxu0 0.0
      %4213 = vmatpush1.msra.mxu0 %v3818
      %4214 = vmatprep.subr.mxu0 0.0
      %4215 = vmatpush1.msra.mxu0 %v3819
      %4216 = vmatprep.subr.mxu0 0.0
      %4217 = vmatpush1.msra.mxu0 %v3820
      %4218 = vmatprep.subr.mxu0 0.0
      %4219 = vmatpush1.msra.mxu0 %v3821
      %4220 = vmatprep.subr.mxu0 0.0
      %4221 = vmatpush1.msra.mxu0 %v3822
      %4222 = vmatprep.subr.mxu0 0.0
      %4223 = vmatpush1.msra.mxu0 %v3823
      %4224 = vmatprep.subr.mxu0 0.0
      %4225 = vmatpush1.msra.mxu0 %v3824
      %4226 = vmatprep.subr.mxu0 0.0
      %4227 = vmatpush1.msra.mxu0 %v3825
      %4228 = vmatprep.subr.mxu0 0.0
      %4229 = vmatpush1.msra.mxu0 %v3826
      %4230 = vmatprep.subr.mxu0 0.0
      %4231 = vmatpush1.msra.mxu0 %v3827
      %4232 = vmatprep.subr.mxu0 0.0
      %4233 = vmatpush1.msra.mxu0 %v3828
      %4234 = vmatprep.subr.mxu0 0.0
      %4235 = vmatpush1.msra.mxu0 %v3829
      %4236 = vmatprep.subr.mxu0 0.0
      %4237 = vmatpush1.msra.mxu0 %v3830
      %4238 = vmatprep.subr.mxu0 0.0
      %4239 = vmatpush1.msra.mxu0 %v3831
      %4240 = vmatprep.subr.mxu0 0.0
      %4241 = vmatpush1.msra.mxu0 %v3832
      %4242 = vmatprep.mubr.f32.mxu0 %v4003
      %4243 = vmatmul.mubr.f32.gmra.mrb[0].mxu0 %v4002
      %v4244 = vpop.f32.mrb[0].mxu0
      %v4245 = vadd.f32 %v4170, %v4244
      %v4246 = vpop.f32.mrb[0].mxu0
      %4247 = vmatprep.mubr.f32.mxu0 %v4010
      %4248 = vmatmul.mubr.f32.gmra.mrb[0].mxu0 %v4009
      %v4249 = vpop.f32.mrb[0].mxu0
      %v4250 = vadd.f32 %v4175, %v4249
      %v4251 = vpop.f32.mrb[0].mxu0
      %4252 = vdwg.mxu0
      %4253 = vmatprep.subr.mxu0 0.0
      %4254 = vmatpush1.msra.mxu0 %v3833
      %4255 = vmatprep.subr.mxu0 0.0
      %4256 = vmatpush1.msra.mxu0 %v3834
      %4257 = vmatprep.subr.mxu0 0.0
      %4258 = vmatpush1.msra.mxu0 %v3835
      %4259 = vmatprep.subr.mxu0 0.0
      %4260 = vmatpush1.msra.mxu0 %v3836
      %4261 = vmatprep.subr.mxu0 0.0
      %4262 = vmatpush1.msra.mxu0 %v3837
      %4263 = vmatprep.subr.mxu0 0.0
      %4264 = vmatpush1.msra.mxu0 %v3838
      %4265 = vmatprep.subr.mxu0 0.0
      %4266 = vmatpush1.msra.mxu0 %v3839
      %4267 = vmatprep.subr.mxu0 0.0
      %4268 = vmatpush1.msra.mxu0 %v3840
      %4269 = vmatprep.subr.mxu0 0.0
      %4270 = vmatpush1.msra.mxu0 %v3841
      %4271 = vmatprep.subr.mxu0 0.0
      %4272 = vmatpush1.msra.mxu0 %v3842
      %4273 = vmatprep.subr.mxu0 0.0
      %4274 = vmatpush1.msra.mxu0 %v3843
      %4275 = vmatprep.subr.mxu0 0.0
      %4276 = vmatpush1.msra.mxu0 %v3844
      %4277 = vmatprep.subr.mxu0 0.0
      %4278 = vmatpush1.msra.mxu0 0.0
      %4279 = vmatprep.subr.mxu0 0.0
      %4280 = vmatpush1.msra.mxu0 0.0
      %4281 = vmatprep.subr.mxu0 0.0
      %4282 = vmatpush1.msra.mxu0 0.0
      %4283 = vmatprep.subr.mxu0 0.0
      %4284 = vmatpush1.msra.mxu0 0.0
      %4285 = vmatprep.subr.mxu0 0.0
      %4286 = vmatpush1.msra.mxu0 0.0
      %4287 = vmatprep.subr.mxu0 0.0
      %4288 = vmatpush1.msra.mxu0 0.0
      %4289 = vmatprep.subr.mxu0 0.0
      %4290 = vmatpush1.msra.mxu0 0.0
      %4291 = vmatprep.subr.mxu0 0.0
      %4292 = vmatpush1.msra.mxu0 0.0
      %4293 = vmatprep.subr.mxu0 0.0
      %4294 = vmatpush1.msra.mxu0 0.0
      %4295 = vmatprep.subr.mxu0 0.0
      %4296 = vmatpush1.msra.mxu0 0.0
      %4297 = vmatprep.subr.mxu0 0.0
      %4298 = vmatpush1.msra.mxu0 0.0
      %4299 = vmatprep.subr.mxu0 0.0
      %4300 = vmatpush1.msra.mxu0 0.0
      %4301 = vmatprep.subr.mxu0 0.0
      %4302 = vmatpush1.msra.mxu0 0.0
      %4303 = vmatprep.subr.mxu0 0.0
      %4304 = vmatpush1.msra.mxu0 0.0
      %4305 = vmatprep.subr.mxu0 0.0
      %4306 = vmatpush1.msra.mxu0 0.0
      %4307 = vmatprep.subr.mxu0 0.0
      %4308 = vmatpush1.msra.mxu0 0.0
      %4309 = vmatprep.subr.mxu0 0.0
      %4310 = vmatpush1.msra.mxu0 0.0
      %4311 = vmatprep.subr.mxu0 0.0
      %4312 = vmatpush1.msra.mxu0 0.0
      %4313 = vmatprep.subr.mxu0 0.0
      %4314 = vmatpush1.msra.mxu0 0.0
      %4315 = vmatprep.subr.mxu0 0.0
      %4316 = vmatpush1.msra.mxu0 0.0
      %4317 = vmatprep.mubr.f32.mxu0 0.0
      %4318 = vmatmul.mubr.f32.gmra.mrb[0].mxu0 %v4024
      %v4319 = vpop.f32.mrb[0].mxu0
      %v4320 = vadd.f32 %v4245, %v4319
      %v4321 = vpop.f32.mrb[0].mxu0
      %4322 = vmatprep.mubr.f32.mxu0 0.0
      %4323 = vmatmul.mubr.f32.gmra.mrb[0].mxu0 %v4026
      %v4324 = vpop.f32.mrb[0].mxu0
      %v4325 = vadd.f32 %v4250, %v4324
      %v4326 = vpop.f32.mrb[0].mxu0
      %4327 = vdwg.mxu0
      %vm4328 = vcmp.ge.f32.partialorder %v4320, 0.0
      %vm4329 = vcmp.ge.f32.partialorder %v4325, 0.0
      %v4330 = vmul.f32 %v4320, 0.1
      %v4331 = vmul.f32 %v4325, 0.1
      %v4332 = vsel %vm4328, %v4320, %v4330
      %v4333 = vsel %vm4329, %v4325, %v4331
      %v4336 = vcombine.high %v4332, %v4332
      %v4337 = vcombine.high %v4333, %v4333
      %s4338 = scalar_lea.vmem %s7, 1728
      %v4339 = vld [vmem:[%s4338] sm:$0xff]
      %v4340 = vld [vmem:[%s4338 + $0x8] sm:$0xff]
      %v4341 = vld [vmem:[%s4338 + $0x10] sm:$0xff]
      %v4342 = vld [vmem:[%s4338 + $0x18] sm:$0xff]
      %v4343 = vld [vmem:[%s4338 + $0x20] sm:$0xff]
      %v4344 = vld [vmem:[%s4338 + $0x28] sm:$0xff]
      %v4345 = vld [vmem:[%s4338 + $0x30] sm:$0xff]
      %v4346 = vld [vmem:[%s4338 + $0x38] sm:$0xff]
      %v4347 = vld [vmem:[%s4338 + $0x40] sm:$0xff]
      %v4348 = vld [vmem:[%s4338 + $0x48] sm:$0xff]
      %v4349 = vld [vmem:[%s4338 + $0x50] sm:$0xff]
      %v4350 = vld [vmem:[%s4338 + $0x58] sm:$0xff]
      %v4351 = vld [vmem:[%s4338 + $0x60] sm:$0xff]
      %v4352 = vld [vmem:[%s4338 + $0x68] sm:$0xff]
      %v4353 = vld [vmem:[%s4338 + $0x70] sm:$0xff]
      %v4354 = vld [vmem:[%s4338 + $0x78] sm:$0xff]
      %v4355 = vld [vmem:[%s4338 + $0x80] sm:$0xff]
      %v4356 = vld [vmem:[%s4338 + $0x88] sm:$0xff]
      %v4357 = vld [vmem:[%s4338 + $0x90] sm:$0xff]
      %v4358 = vld [vmem:[%s4338 + $0x98] sm:$0xff]
      %v4359 = vld [vmem:[%s4338 + $0xa0] sm:$0xff]
      %v4360 = vld [vmem:[%s4338 + $0xa8] sm:$0xff]
      %v4361 = vld [vmem:[%s4338 + $0xb0] sm:$0xff]
      %v4362 = vld [vmem:[%s4338 + $0xb8] sm:$0xff]
      %v4363 = vld [vmem:[%s4338 + $0xc0] sm:$0xff]
      %v4364 = vld [vmem:[%s4338 + $0xc8] sm:$0xff]
      %v4365 = vld [vmem:[%s4338 + $0xd0] sm:$0xff]
      %v4366 = vld [vmem:[%s4338 + $0xd8] sm:$0xff]
      %v4367 = vld [vmem:[%s4338 + $0xe0] sm:$0xff]
      %v4368 = vld [vmem:[%s4338 + $0xe8] sm:$0xff]
      %v4369 = vld [vmem:[%s4338 + $0xf0] sm:$0xff]
      %v4370 = vld [vmem:[%s4338 + $0xf8] sm:$0xff]
      %v4371 = vld [vmem:[%s4338 + $0x100] sm:$0xff]
      %v4372 = vld [vmem:[%s4338 + $0x108] sm:$0xff]
      %v4373 = vld [vmem:[%s4338 + $0x110] sm:$0xff]
      %v4374 = vld [vmem:[%s4338 + $0x118] sm:$0xff]
      %v4375 = vld [vmem:[%s4338 + $0x120] sm:$0xff]
      %v4376 = vld [vmem:[%s4338 + $0x128] sm:$0xff]
      %v4377 = vld [vmem:[%s4338 + $0x130] sm:$0xff]
      %v4378 = vld [vmem:[%s4338 + $0x138] sm:$0xff]
      %v4379 = vld [vmem:[%s4338 + $0x140] sm:$0xff]
      %v4380 = vld [vmem:[%s4338 + $0x148] sm:$0xff]
      %v4381 = vld [vmem:[%s4338 + $0x150] sm:$0xff]
      %v4382 = vld [vmem:[%s4338 + $0x158] sm:$0xff]
      %v4383 = vld [vmem:[%s4338 + $0x160] sm:$0xff]
      %v4384 = vld [vmem:[%s4338 + $0x168] sm:$0xff]
      %v4385 = vld [vmem:[%s4338 + $0x170] sm:$0xff]
      %v4386 = vld [vmem:[%s4338 + $0x178] sm:$0xff]
      %v4387 = vld [vmem:[%s4338 + $0x180] sm:$0xff]
      %v4388 = vld [vmem:[%s4338 + $0x188] sm:$0xff]
      %v4389 = vld [vmem:[%s4338 + $0x190] sm:$0xff]
      %v4390 = vld [vmem:[%s4338 + $0x198] sm:$0xff]
      %v4391 = vld [vmem:[%s4338 + $0x1a0] sm:$0xff]
      %v4392 = vld [vmem:[%s4338 + $0x1a8] sm:$0xff]
      %v4393 = vld [vmem:[%s4338 + $0x1b0] sm:$0xff]
      %v4394 = vld [vmem:[%s4338 + $0x1b8] sm:$0xff]
      %v4395 = vld [vmem:[%s4338 + $0x1c0] sm:$0xff]
      %v4396 = vld [vmem:[%s4338 + $0x1c8] sm:$0xff]
      %v4397 = vld [vmem:[%s4338 + $0x1d0] sm:$0xff]
      %v4398 = vld [vmem:[%s4338 + $0x1d8] sm:$0xff]
      %v4399 = vld [vmem:[%s4338 + $0x1e0] sm:$0xff]
      %v4400 = vld [vmem:[%s4338 + $0x1e8] sm:$0xff]
      %v4401 = vld [vmem:[%s4338 + $0x1f0] sm:$0xff]
      %v4402 = vld [vmem:[%s4338 + $0x1f8] sm:$0xff]
      %v4403 = vld [vmem:[%s4338 + $0x200] sm:$0xff]
      %v4404 = vld [vmem:[%s4338 + $0x208] sm:$0xff]
      %v4405 = vld [vmem:[%s4338 + $0x210] sm:$0xff]
      %v4406 = vld [vmem:[%s4338 + $0x218] sm:$0xff]
      %v4407 = vld [vmem:[%s4338 + $0x220] sm:$0xff]
      %v4408 = vld [vmem:[%s4338 + $0x228] sm:$0xff]
      %v4409 = vld [vmem:[%s4338 + $0x230] sm:$0xff]
      %v4410 = vld [vmem:[%s4338 + $0x238] sm:$0xff]
      %v4411 = vld [vmem:[%s4338 + $0x240] sm:$0xff]
      %v4412 = vld [vmem:[%s4338 + $0x248] sm:$0xff]
      %v4413 = vld [vmem:[%s4338 + $0x250] sm:$0xff]
      %v4414 = vld [vmem:[%s4338 + $0x258] sm:$0xff]
      %v4415 = vld [vmem:[%s4338 + $0x260] sm:$0xff]
      %v4416 = vld [vmem:[%s4338 + $0x268] sm:$0xff]
      %v4417 = vld [vmem:[%s4338 + $0x270] sm:$0xff]
      %v4418 = vld [vmem:[%s4338 + $0x278] sm:$0xff]
      %v4419 = vld [vmem:[%s4338 + $0x280] sm:$0xff]
      %v4420 = vld [vmem:[%s4338 + $0x288] sm:$0xff]
      %v4421 = vld [vmem:[%s4338 + $0x290] sm:$0xff]
      %v4422 = vld [vmem:[%s4338 + $0x298] sm:$0xff]
      %v4423 = vld [vmem:[%s4338 + $0x2a0] sm:$0xff]
      %v4424 = vld [vmem:[%s4338 + $0x2a8] sm:$0xff]
      %v4425 = vld [vmem:[%s4338 + $0x2b0] sm:$0xff]
      %v4426 = vld [vmem:[%s4338 + $0x2b8] sm:$0xff]
      %v4427 = vld [vmem:[%s4338 + $0x2c0] sm:$0xff]
      %v4428 = vld [vmem:[%s4338 + $0x2c8] sm:$0xff]
      %v4429 = vld [vmem:[%s4338 + $0x2d0] sm:$0xff]
      %v4430 = vld [vmem:[%s4338 + $0x2d8] sm:$0xff]
      %v4431 = vld [vmem:[%s4338 + $0x2e0] sm:$0xff]
      %v4432 = vld [vmem:[%s4338 + $0x2e8] sm:$0xff]
      %v4433 = vld [vmem:[%s4338 + $0x2f0] sm:$0xff]
      %v4434 = vld [vmem:[%s4338 + $0x2f8] sm:$0xff]
      %v4435 = vld [vmem:[%s4338 + $0x300] sm:$0xff]
      %v4436 = vld [vmem:[%s4338 + $0x308] sm:$0xff]
      %v4437 = vld [vmem:[%s4338 + $0x310] sm:$0xff]
      %v4438 = vld [vmem:[%s4338 + $0x318] sm:$0xff]
      %v4439 = vld [vmem:[%s4338 + $0x320] sm:$0xff]
      %v4440 = vld [vmem:[%s4338 + $0x328] sm:$0xff]
      %v4441 = vld [vmem:[%s4338 + $0x330] sm:$0xff]
      %v4442 = vld [vmem:[%s4338 + $0x338] sm:$0xff]
      %v4443 = vld [vmem:[%s4338 + $0x340] sm:$0xff]
      %v4444 = vld [vmem:[%s4338 + $0x348] sm:$0xff]
      %v4445 = vld [vmem:[%s4338 + $0x350] sm:$0xff]
      %v4446 = vld [vmem:[%s4338 + $0x358] sm:$0xff]
      %s4447 = scalar_lea.vmem %s8, 2
      %v4448 = vld [vmem:[%s4447] sm:$0x1]
      %v4449 = vrot.slane %v4332, 7
      %v4450 = vrot.slane %v4336, 7
      %v4451 = vrot.slane %v4333, 7
      %v4452 = vrot.slane %v4337, 7
      %v4457 = vsel %vm491, 0.0, %v4449
      %v4458 = vsel %vm491, 0.0, %v4450
      %v4459 = vsel %vm491, 0.0, %v4451
      %v4460 = vsel %vm491, 0.0, %v4452
      %v4461 = vsel %vm3237, %v4457, 0.0
      %v4462 = vsel %vm3237, %v4458, 0.0
      %v4463 = vsel %vm3237, %v4459, 0.0
      %v4464 = vsel %vm3237, %v4460, 0.0
      %v4468 = vrot.slane %v4461, 1
      %v4469 = vrot.slane %v4462, 1
      %v4470 = vrot.slane %v4463, 1
      %4471 = vrot.lane.b32.xlu0 %v4468, 96
      %v4472 = vpop.permute.xlu0 %4471
      %4473 = vrot.lane.b32.xlu0 %v4469, 96
      %v4474 = vpop.permute.xlu0 %4473
      %4475 = vrot.lane.b32.xlu0 %v4470, 96
      %v4476 = vpop.permute.xlu0 %4475
      %v4480 = vrot.slane %v4461, 2
      %v4481 = vrot.slane %v4462, 2
      %v4482 = vrot.slane %v4463, 2
      %4483 = vrot.lane.b32.xlu0 %v4480, 64
      %v4484 = vpop.permute.xlu0 %4483
      %4485 = vrot.lane.b32.xlu0 %v4481, 64
      %v4486 = vpop.permute.xlu0 %4485
      %4487 = vrot.lane.b32.xlu0 %v4482, 64
      %v4488 = vpop.permute.xlu0 %4487
      %4493 = vrot.lane.b32.xlu0 %v4461, 32
      %v4494 = vpop.permute.xlu0 %4493
      %4495 = vrot.lane.b32.xlu0 %v4462, 32
      %v4496 = vpop.permute.xlu0 %4495
      %4497 = vrot.lane.b32.xlu0 %v4463, 32
      %v4498 = vpop.permute.xlu0 %4497
      %4499 = vrot.lane.b32.xlu0 %v4464, 32
      %v4500 = vpop.permute.xlu0 %4499
      %v4505 = vrot.slane %v4464, 1
      %v4510 = vrot.slane %v4464, 2
      %4511 = vrot.lane.b32.xlu0 %v4480, 96
      %v4512 = vpop.permute.xlu0 %4511
      %4513 = vrot.lane.b32.xlu0 %v4481, 96
      %v4514 = vpop.permute.xlu0 %4513
      %4515 = vrot.lane.b32.xlu0 %v4482, 96
      %v4516 = vpop.permute.xlu0 %4515
      %4517 = vrot.lane.b32.xlu0 %v4510, 96
      %v4518 = vpop.permute.xlu0 %4517
      %4523 = vrot.lane.b32.xlu0 %v4462, 64
      %v4524 = vpop.permute.xlu0 %4523
      %4525 = vrot.lane.b32.xlu0 %v4463, 64
      %v4526 = vpop.permute.xlu0 %4525
      %4527 = vrot.lane.b32.xlu0 %v4464, 64
      %v4528 = vpop.permute.xlu0 %4527
      %4532 = vrot.lane.b32.xlu0 %v4469, 32
      %v4533 = vpop.permute.xlu0 %4532
      %4534 = vrot.lane.b32.xlu0 %v4470, 32
      %v4535 = vpop.permute.xlu0 %4534
      %4536 = vrot.lane.b32.xlu0 %v4505, 32
      %v4537 = vpop.permute.xlu0 %4536
      %v4541 = vsel %vm2718, %v4461, %v4472
      %v4542 = vsel %vm2718, %v4462, %v4474
      %v4543 = vsel %vm2718, %v4463, %v4476
      %v4544 = vsel %vm2736, %v4472, %v4484
      %v4545 = vsel %vm2736, %v4474, %v4486
      %v4546 = vsel %vm2736, %v4476, %v4488
      %v4547 = vsel %vm2754, %v3264, %v4494
      %v4548 = vsel %vm2754, %v4484, %v4496
      %v4549 = vsel %vm2754, %v4486, %v4498
      %v4550 = vsel %vm2754, %v4488, %v4500
      %v4551 = vsel %vm2718, %v4468, %v4512
      %v4552 = vsel %vm2718, %v4469, %v4514
      %v4553 = vsel %vm2718, %v4470, %v4516
      %v4554 = vsel %vm2718, %v4505, %v4518
      %v4555 = vsel %vm2736, %v4512, %v4524
      %v4556 = vsel %vm2736, %v4514, %v4526
      %v4557 = vsel %vm2736, %v4516, %v4528
      %v4558 = vsel %vm2736, %v4518, %v3313
      %v4559 = vsel %vm2754, %v4524, %v4533
      %v4560 = vsel %vm2754, %v4526, %v4535
      %v4561 = vsel %vm2754, %v4528, %v4537
      %v4583 = vcombine.low %v4547, %v4551
      %v4584 = vcombine.low %v4555, %v4559
      %v4585 = vcombine.low %v4541, %v4544
      %v4586 = vcombine.low %v4548, %v4552
      %v4587 = vcombine.low %v4556, %v4560
      %v4588 = vcombine.low %v4542, %v4545
      %v4589 = vcombine.low %v4549, %v4553
      %v4590 = vcombine.low %v4557, %v4561
      %v4591 = vcombine.low %v4543, %v4546
      %v4592 = vcombine.low %v4550, %v4554
      %v4593 = vcombine.low %v4558, %v3353
      %v4595 = vlaneseq
      %v4596 = vshrl.u32 %v4595, 7
      %v4597 = vsub.s32 0, %v4596
      %v4598 = vrot.slane %v4448, %v4597
      %v4600 = vcombine.low %v3378, %v4585
      %v4601 = vcombine.high %v3378, %v4585
      %v4602 = vcombine.low %v4583, %v4586
      %v4603 = vcombine.high %v4583, %v4586
      %v4604 = vcombine.low %v4584, %v4587
      %v4605 = vcombine.high %v4584, %v4587
      %v4606 = vcombine.low %v4481, %v4482
      %v4607 = vcombine.low %v4588, %v4591
      %v4608 = vcombine.high %v4588, %v4591
      %v4609 = vcombine.low %v4589, %v4592
      %v4610 = vcombine.high %v4589, %v4592
      %v4611 = vcombine.low %v4590, %v4593
      %v4612 = vcombine.high %v4590, %v4593
      %v4613 = vcombine.low %v4510, %v822
      %v4626 = vsel %vm2718, %v4606, 0
      %v4628 = vsel %vm2718, %v4613, 0
      %4630 = vmatprep.subr.mxu0 0.0
      %4631 = vmatpush1.msra.mxu0 %v4339
      %4632 = vmatprep.subr.mxu0 0.0
      %4633 = vmatpush1.msra.mxu0 %v4340
      %4634 = vmatprep.subr.mxu0 0.0
      %4635 = vmatpush1.msra.mxu0 %v4341
      %4636 = vmatprep.subr.mxu0 0.0
      %4637 = vmatpush1.msra.mxu0 %v4342
      %4638 = vmatprep.subr.mxu0 0.0
      %4639 = vmatpush1.msra.mxu0 %v4343
      %4640 = vmatprep.subr.mxu0 0.0
      %4641 = vmatpush1.msra.mxu0 %v4344
      %4642 = vmatprep.subr.mxu0 0.0
      %4643 = vmatpush1.msra.mxu0 %v4345
      %4644 = vmatprep.subr.mxu0 0.0
      %4645 = vmatpush1.msra.mxu0 %v4346
      %4646 = vmatprep.subr.mxu0 0.0
      %4647 = vmatpush1.msra.mxu0 %v4347
      %4648 = vmatprep.subr.mxu0 0.0
      %4649 = vmatpush1.msra.mxu0 %v4348
      %4650 = vmatprep.subr.mxu0 0.0
      %4651 = vmatpush1.msra.mxu0 %v4349
      %4652 = vmatprep.subr.mxu0 0.0
      %4653 = vmatpush1.msra.mxu0 %v4350
      %4654 = vmatprep.subr.mxu0 0.0
      %4655 = vmatpush1.msra.mxu0 %v4351
      %4656 = vmatprep.subr.mxu0 0.0
      %4657 = vmatpush1.msra.mxu0 %v4352
      %4658 = vmatprep.subr.mxu0 0.0
      %4659 = vmatpush1.msra.mxu0 %v4353
      %4660 = vmatprep.subr.mxu0 0.0
      %4661 = vmatpush1.msra.mxu0 %v4354
      %4662 = vmatprep.subr.mxu0 0.0
      %4663 = vmatpush1.msra.mxu0 %v4355
      %4664 = vmatprep.subr.mxu0 0.0
      %4665 = vmatpush1.msra.mxu0 %v4356
      %4666 = vmatprep.subr.mxu0 0.0
      %4667 = vmatpush1.msra.mxu0 %v4357
      %4668 = vmatprep.subr.mxu0 0.0
      %4669 = vmatpush1.msra.mxu0 %v4358
      %4670 = vmatprep.subr.mxu0 0.0
      %4671 = vmatpush1.msra.mxu0 %v4359
      %4672 = vmatprep.subr.mxu0 0.0
      %4673 = vmatpush1.msra.mxu0 %v4360
      %4674 = vmatprep.subr.mxu0 0.0
      %4675 = vmatpush1.msra.mxu0 %v4361
      %4676 = vmatprep.subr.mxu0 0.0
      %4677 = vmatpush1.msra.mxu0 %v4362
      %4678 = vmatprep.subr.mxu0 0.0
      %4679 = vmatpush1.msra.mxu0 %v4363
      %4680 = vmatprep.subr.mxu0 0.0
      %4681 = vmatpush1.msra.mxu0 %v4364
      %4682 = vmatprep.subr.mxu0 0.0
      %4683 = vmatpush1.msra.mxu0 %v4365
      %4684 = vmatprep.subr.mxu0 0.0
      %4685 = vmatpush1.msra.mxu0 %v4366
      %4686 = vmatprep.subr.mxu0 0.0
      %4687 = vmatpush1.msra.mxu0 %v4367
      %4688 = vmatprep.subr.mxu0 0.0
      %4689 = vmatpush1.msra.mxu0 %v4368
      %4690 = vmatprep.subr.mxu0 0.0
      %4691 = vmatpush1.msra.mxu0 %v4369
      %4692 = vmatprep.subr.mxu0 0.0
      %4693 = vmatpush1.msra.mxu0 %v4370
      %4694 = vmatprep.mubr.f32.mxu0 %v4601
      %4695 = vmatmul.mubr.f32.gmra.mrb[0].mxu0 %v4600
      %v4696 = vpop.f32.mrb[0].mxu0
      %v4697 = vadd.f32 %v4598, %v4696
      %v4698 = vpop.f32.mrb[0].mxu0
      %4699 = vmatprep.mubr.f32.mxu0 %v4608
      %4700 = vmatmul.mubr.f32.gmra.mrb[0].mxu0 %v4607
      %v4701 = vpop.f32.mrb[0].mxu0
      %v4702 = vadd.f32 %v4598, %v4701
      %v4703 = vpop.f32.mrb[0].mxu0
      %4704 = vdwg.mxu0
      %4705 = vmatprep.subr.mxu0 0.0
      %4706 = vmatpush1.msra.mxu0 %v4371
      %4707 = vmatprep.subr.mxu0 0.0
      %4708 = vmatpush1.msra.mxu0 %v4372
      %4709 = vmatprep.subr.mxu0 0.0
      %4710 = vmatpush1.msra.mxu0 %v4373
      %4711 = vmatprep.subr.mxu0 0.0
      %4712 = vmatpush1.msra.mxu0 %v4374
      %4713 = vmatprep.subr.mxu0 0.0
      %4714 = vmatpush1.msra.mxu0 %v4375
      %4715 = vmatprep.subr.mxu0 0.0
      %4716 = vmatpush1.msra.mxu0 %v4376
      %4717 = vmatprep.subr.mxu0 0.0
      %4718 = vmatpush1.msra.mxu0 %v4377
      %4719 = vmatprep.subr.mxu0 0.0
      %4720 = vmatpush1.msra.mxu0 %v4378
      %4721 = vmatprep.subr.mxu0 0.0
      %4722 = vmatpush1.msra.mxu0 %v4379
      %4723 = vmatprep.subr.mxu0 0.0
      %4724 = vmatpush1.msra.mxu0 %v4380
      %4725 = vmatprep.subr.mxu0 0.0
      %4726 = vmatpush1.msra.mxu0 %v4381
      %4727 = vmatprep.subr.mxu0 0.0
      %4728 = vmatpush1.msra.mxu0 %v4382
      %4729 = vmatprep.subr.mxu0 0.0
      %4730 = vmatpush1.msra.mxu0 %v4383
      %4731 = vmatprep.subr.mxu0 0.0
      %4732 = vmatpush1.msra.mxu0 %v4384
      %4733 = vmatprep.subr.mxu0 0.0
      %4734 = vmatpush1.msra.mxu0 %v4385
      %4735 = vmatprep.subr.mxu0 0.0
      %4736 = vmatpush1.msra.mxu0 %v4386
      %4737 = vmatprep.subr.mxu0 0.0
      %4738 = vmatpush1.msra.mxu0 %v4387
      %4739 = vmatprep.subr.mxu0 0.0
      %4740 = vmatpush1.msra.mxu0 %v4388
      %4741 = vmatprep.subr.mxu0 0.0
      %4742 = vmatpush1.msra.mxu0 %v4389
      %4743 = vmatprep.subr.mxu0 0.0
      %4744 = vmatpush1.msra.mxu0 %v4390
      %4745 = vmatprep.subr.mxu0 0.0
      %4746 = vmatpush1.msra.mxu0 %v4391
      %4747 = vmatprep.subr.mxu0 0.0
      %4748 = vmatpush1.msra.mxu0 %v4392
      %4749 = vmatprep.subr.mxu0 0.0
      %4750 = vmatpush1.msra.mxu0 %v4393
      %4751 = vmatprep.subr.mxu0 0.0
      %4752 = vmatpush1.msra.mxu0 %v4394
      %4753 = vmatprep.subr.mxu0 0.0
      %4754 = vmatpush1.msra.mxu0 %v4395
      %4755 = vmatprep.subr.mxu0 0.0
      %4756 = vmatpush1.msra.mxu0 %v4396
      %4757 = vmatprep.subr.mxu0 0.0
      %4758 = vmatpush1.msra.mxu0 %v4397
      %4759 = vmatprep.subr.mxu0 0.0
      %4760 = vmatpush1.msra.mxu0 %v4398
      %4761 = vmatprep.subr.mxu0 0.0
      %4762 = vmatpush1.msra.mxu0 %v4399
      %4763 = vmatprep.subr.mxu0 0.0
      %4764 = vmatpush1.msra.mxu0 %v4400
      %4765 = vmatprep.subr.mxu0 0.0
      %4766 = vmatpush1.msra.mxu0 %v4401
      %4767 = vmatprep.subr.mxu0 0.0
      %4768 = vmatpush1.msra.mxu0 %v4402
      %4769 = vmatprep.mubr.f32.mxu0 %v4603
      %4770 = vmatmul.mubr.f32.gmra.mrb[0].mxu0 %v4602
      %v4771 = vpop.f32.mrb[0].mxu0
      %v4772 = vadd.f32 %v4697, %v4771
      %v4773 = vpop.f32.mrb[0].mxu0
      %4774 = vmatprep.mubr.f32.mxu0 %v4610
      %4775 = vmatmul.mubr.f32.gmra.mrb[0].mxu0 %v4609
      %v4776 = vpop.f32.mrb[0].mxu0
      %v4777 = vadd.f32 %v4702, %v4776
      %v4778 = vpop.f32.mrb[0].mxu0
      %4779 = vdwg.mxu0
      %4780 = vmatprep.subr.mxu0 0.0
      %4781 = vmatpush1.msra.mxu0 %v4403
      %4782 = vmatprep.subr.mxu0 0.0
      %4783 = vmatpush1.msra.mxu0 %v4404
      %4784 = vmatprep.subr.mxu0 0.0
      %4785 = vmatpush1.msra.mxu0 %v4405
      %4786 = vmatprep.subr.mxu0 0.0
      %4787 = vmatpush1.msra.mxu0 %v4406
      %4788 = vmatprep.subr.mxu0 0.0
      %4789 = vmatpush1.msra.mxu0 %v4407
      %4790 = vmatprep.subr.mxu0 0.0
      %4791 = vmatpush1.msra.mxu0 %v4408
      %4792 = vmatprep.subr.mxu0 0.0
      %4793 = vmatpush1.msra.mxu0 %v4409
      %4794 = vmatprep.subr.mxu0 0.0
      %4795 = vmatpush1.msra.mxu0 %v4410
      %4796 = vmatprep.subr.mxu0 0.0
      %4797 = vmatpush1.msra.mxu0 %v4411
      %4798 = vmatprep.subr.mxu0 0.0
      %4799 = vmatpush1.msra.mxu0 %v4412
      %4800 = vmatprep.subr.mxu0 0.0
      %4801 = vmatpush1.msra.mxu0 %v4413
      %4802 = vmatprep.subr.mxu0 0.0
      %4803 = vmatpush1.msra.mxu0 %v4414
      %4804 = vmatprep.subr.mxu0 0.0
      %4805 = vmatpush1.msra.mxu0 %v4415
      %4806 = vmatprep.subr.mxu0 0.0
      %4807 = vmatpush1.msra.mxu0 %v4416
      %4808 = vmatprep.subr.mxu0 0.0
      %4809 = vmatpush1.msra.mxu0 %v4417
      %4810 = vmatprep.subr.mxu0 0.0
      %4811 = vmatpush1.msra.mxu0 %v4418
      %4812 = vmatprep.subr.mxu0 0.0
      %4813 = vmatpush1.msra.mxu0 %v4419
      %4814 = vmatprep.subr.mxu0 0.0
      %4815 = vmatpush1.msra.mxu0 %v4420
      %4816 = vmatprep.subr.mxu0 0.0
      %4817 = vmatpush1.msra.mxu0 %v4421
      %4818 = vmatprep.subr.mxu0 0.0
      %4819 = vmatpush1.msra.mxu0 %v4422
      %4820 = vmatprep.subr.mxu0 0.0
      %4821 = vmatpush1.msra.mxu0 %v4423
      %4822 = vmatprep.subr.mxu0 0.0
      %4823 = vmatpush1.msra.mxu0 %v4424
      %4824 = vmatprep.subr.mxu0 0.0
      %4825 = vmatpush1.msra.mxu0 %v4425
      %4826 = vmatprep.subr.mxu0 0.0
      %4827 = vmatpush1.msra.mxu0 %v4426
      %4828 = vmatprep.subr.mxu0 0.0
      %4829 = vmatpush1.msra.mxu0 %v4427
      %4830 = vmatprep.subr.mxu0 0.0
      %4831 = vmatpush1.msra.mxu0 %v4428
      %4832 = vmatprep.subr.mxu0 0.0
      %4833 = vmatpush1.msra.mxu0 %v4429
      %4834 = vmatprep.subr.mxu0 0.0
      %4835 = vmatpush1.msra.mxu0 %v4430
      %4836 = vmatprep.subr.mxu0 0.0
      %4837 = vmatpush1.msra.mxu0 %v4431
      %4838 = vmatprep.subr.mxu0 0.0
      %4839 = vmatpush1.msra.mxu0 %v4432
      %4840 = vmatprep.subr.mxu0 0.0
      %4841 = vmatpush1.msra.mxu0 %v4433
      %4842 = vmatprep.subr.mxu0 0.0
      %4843 = vmatpush1.msra.mxu0 %v4434
      %4844 = vmatprep.mubr.f32.mxu0 %v4605
      %4845 = vmatmul.mubr.f32.gmra.mrb[0].mxu0 %v4604
      %v4846 = vpop.f32.mrb[0].mxu0
      %v4847 = vadd.f32 %v4772, %v4846
      %v4848 = vpop.f32.mrb[0].mxu0
      %4849 = vmatprep.mubr.f32.mxu0 %v4612
      %4850 = vmatmul.mubr.f32.gmra.mrb[0].mxu0 %v4611
      %v4851 = vpop.f32.mrb[0].mxu0
      %v4852 = vadd.f32 %v4777, %v4851
      %v4853 = vpop.f32.mrb[0].mxu0
      %4854 = vdwg.mxu0
      %4855 = vmatprep.subr.mxu0 0.0
      %4856 = vmatpush1.msra.mxu0 %v4435
      %4857 = vmatprep.subr.mxu0 0.0
      %4858 = vmatpush1.msra.mxu0 %v4436
      %4859 = vmatprep.subr.mxu0 0.0
      %4860 = vmatpush1.msra.mxu0 %v4437
      %4861 = vmatprep.subr.mxu0 0.0
      %4862 = vmatpush1.msra.mxu0 %v4438
      %4863 = vmatprep.subr.mxu0 0.0
      %4864 = vmatpush1.msra.mxu0 %v4439
      %4865 = vmatprep.subr.mxu0 0.0
      %4866 = vmatpush1.msra.mxu0 %v4440
      %4867 = vmatprep.subr.mxu0 0.0
      %4868 = vmatpush1.msra.mxu0 %v4441
      %4869 = vmatprep.subr.mxu0 0.0
      %4870 = vmatpush1.msra.mxu0 %v4442
      %4871 = vmatprep.subr.mxu0 0.0
      %4872 = vmatpush1.msra.mxu0 %v4443
      %4873 = vmatprep.subr.mxu0 0.0
      %4874 = vmatpush1.msra.mxu0 %v4444
      %4875 = vmatprep.subr.mxu0 0.0
      %4876 = vmatpush1.msra.mxu0 %v4445
      %4877 = vmatprep.subr.mxu0 0.0
      %4878 = vmatpush1.msra.mxu0 %v4446
      %4879 = vmatprep.subr.mxu0 0.0
      %4880 = vmatpush1.msra.mxu0 0.0
      %4881 = vmatprep.subr.mxu0 0.0
      %4882 = vmatpush1.msra.mxu0 0.0
      %4883 = vmatprep.subr.mxu0 0.0
      %4884 = vmatpush1.msra.mxu0 0.0
      %4885 = vmatprep.subr.mxu0 0.0
      %4886 = vmatpush1.msra.mxu0 0.0
      %4887 = vmatprep.subr.mxu0 0.0
      %4888 = vmatpush1.msra.mxu0 0.0
      %4889 = vmatprep.subr.mxu0 0.0
      %4890 = vmatpush1.msra.mxu0 0.0
      %4891 = vmatprep.subr.mxu0 0.0
      %4892 = vmatpush1.msra.mxu0 0.0
      %4893 = vmatprep.subr.mxu0 0.0
      %4894 = vmatpush1.msra.mxu0 0.0
      %4895 = vmatprep.subr.mxu0 0.0
      %4896 = vmatpush1.msra.mxu0 0.0
      %4897 = vmatprep.subr.mxu0 0.0
      %4898 = vmatpush1.msra.mxu0 0.0
      %4899 = vmatprep.subr.mxu0 0.0
      %4900 = vmatpush1.msra.mxu0 0.0
      %4901 = vmatprep.subr.mxu0 0.0
      %4902 = vmatpush1.msra.mxu0 0.0
      %4903 = vmatprep.subr.mxu0 0.0
      %4904 = vmatpush1.msra.mxu0 0.0
      %4905 = vmatprep.subr.mxu0 0.0
      %4906 = vmatpush1.msra.mxu0 0.0
      %4907 = vmatprep.subr.mxu0 0.0
      %4908 = vmatpush1.msra.mxu0 0.0
      %4909 = vmatprep.subr.mxu0 0.0
      %4910 = vmatpush1.msra.mxu0 0.0
      %4911 = vmatprep.subr.mxu0 0.0
      %4912 = vmatpush1.msra.mxu0 0.0
      %4913 = vmatprep.subr.mxu0 0.0
      %4914 = vmatpush1.msra.mxu0 0.0
      %4915 = vmatprep.subr.mxu0 0.0
      %4916 = vmatpush1.msra.mxu0 0.0
      %4917 = vmatprep.subr.mxu0 0.0
      %4918 = vmatpush1.msra.mxu0 0.0
      %4919 = vmatprep.mubr.f32.mxu0 0.0
      %4920 = vmatmul.mubr.f32.gmra.mrb[0].mxu0 %v4626
      %v4921 = vpop.f32.mrb[0].mxu0
      %v4922 = vadd.f32 %v4847, %v4921
      %v4923 = vpop.f32.mrb[0].mxu0
      %4924 = vmatprep.mubr.f32.mxu0 0.0
      %4925 = vmatmul.mubr.f32.gmra.mrb[0].mxu0 %v4628
      %v4926 = vpop.f32.mrb[0].mxu0
      %v4927 = vadd.f32 %v4852, %v4926
      %v4928 = vpop.f32.mrb[0].mxu0
      %4929 = vdwg.mxu0
      %vm4930 = vcmp.ge.f32.partialorder %v4922, 0.0
      %vm4931 = vcmp.ge.f32.partialorder %v4927, 0.0
      %v4932 = vmul.f32 %v4922, 0.1
      %v4933 = vmul.f32 %v4927, 0.1
      %v4934 = vsel %vm4930, %v4922, %v4932
      %v4935 = vsel %vm4931, %v4927, %v4933
      %v4938 = vcombine.high %v4934, %v4934
      %v4939 = vcombine.high %v4935, %v4935
      %s4940 = scalar_lea.vmem %s7, 2592
      %v4941 = vld [vmem:[%s4940] sm:$0xff]
      %v4942 = vld [vmem:[%s4940 + $0x8] sm:$0xff]
      %v4943 = vld [vmem:[%s4940 + $0x10] sm:$0xff]
      %v4944 = vld [vmem:[%s4940 + $0x18] sm:$0xff]
      %v4945 = vld [vmem:[%s4940 + $0x20] sm:$0xff]
      %v4946 = vld [vmem:[%s4940 + $0x28] sm:$0xff]
      %v4947 = vld [vmem:[%s4940 + $0x30] sm:$0xff]
      %v4948 = vld [vmem:[%s4940 + $0x38] sm:$0xff]
      %v4949 = vld [vmem:[%s4940 + $0x40] sm:$0xff]
      %v4950 = vld [vmem:[%s4940 + $0x48] sm:$0xff]
      %v4951 = vld [vmem:[%s4940 + $0x50] sm:$0xff]
      %v4952 = vld [vmem:[%s4940 + $0x58] sm:$0xff]
      %v4953 = vld [vmem:[%s4940 + $0x60] sm:$0xff]
      %v4954 = vld [vmem:[%s4940 + $0x68] sm:$0xff]
      %v4955 = vld [vmem:[%s4940 + $0x70] sm:$0xff]
      %v4956 = vld [vmem:[%s4940 + $0x78] sm:$0xff]
      %v4957 = vld [vmem:[%s4940 + $0x80] sm:$0xff]
      %v4958 = vld [vmem:[%s4940 + $0x88] sm:$0xff]
      %v4959 = vld [vmem:[%s4940 + $0x90] sm:$0xff]
      %v4960 = vld [vmem:[%s4940 + $0x98] sm:$0xff]
      %v4961 = vld [vmem:[%s4940 + $0xa0] sm:$0xff]
      %v4962 = vld [vmem:[%s4940 + $0xa8] sm:$0xff]
      %v4963 = vld [vmem:[%s4940 + $0xb0] sm:$0xff]
      %v4964 = vld [vmem:[%s4940 + $0xb8] sm:$0xff]
      %v4965 = vld [vmem:[%s4940 + $0xc0] sm:$0xff]
      %v4966 = vld [vmem:[%s4940 + $0xc8] sm:$0xff]
      %v4967 = vld [vmem:[%s4940 + $0xd0] sm:$0xff]
      %v4968 = vld [vmem:[%s4940 + $0xd8] sm:$0xff]
      %v4969 = vld [vmem:[%s4940 + $0xe0] sm:$0xff]
      %v4970 = vld [vmem:[%s4940 + $0xe8] sm:$0xff]
      %v4971 = vld [vmem:[%s4940 + $0xf0] sm:$0xff]
      %v4972 = vld [vmem:[%s4940 + $0xf8] sm:$0xff]
      %v4973 = vld [vmem:[%s4940 + $0x100] sm:$0xff]
      %v4974 = vld [vmem:[%s4940 + $0x108] sm:$0xff]
      %v4975 = vld [vmem:[%s4940 + $0x110] sm:$0xff]
      %v4976 = vld [vmem:[%s4940 + $0x118] sm:$0xff]
      %v4977 = vld [vmem:[%s4940 + $0x120] sm:$0xff]
      %v4978 = vld [vmem:[%s4940 + $0x128] sm:$0xff]
      %v4979 = vld [vmem:[%s4940 + $0x130] sm:$0xff]
      %v4980 = vld [vmem:[%s4940 + $0x138] sm:$0xff]
      %v4981 = vld [vmem:[%s4940 + $0x140] sm:$0xff]
      %v4982 = vld [vmem:[%s4940 + $0x148] sm:$0xff]
      %v4983 = vld [vmem:[%s4940 + $0x150] sm:$0xff]
      %v4984 = vld [vmem:[%s4940 + $0x158] sm:$0xff]
      %v4985 = vld [vmem:[%s4940 + $0x160] sm:$0xff]
      %v4986 = vld [vmem:[%s4940 + $0x168] sm:$0xff]
      %v4987 = vld [vmem:[%s4940 + $0x170] sm:$0xff]
      %v4988 = vld [vmem:[%s4940 + $0x178] sm:$0xff]
      %v4989 = vld [vmem:[%s4940 + $0x180] sm:$0xff]
      %v4990 = vld [vmem:[%s4940 + $0x188] sm:$0xff]
      %v4991 = vld [vmem:[%s4940 + $0x190] sm:$0xff]
      %v4992 = vld [vmem:[%s4940 + $0x198] sm:$0xff]
      %v4993 = vld [vmem:[%s4940 + $0x1a0] sm:$0xff]
      %v4994 = vld [vmem:[%s4940 + $0x1a8] sm:$0xff]
      %v4995 = vld [vmem:[%s4940 + $0x1b0] sm:$0xff]
      %v4996 = vld [vmem:[%s4940 + $0x1b8] sm:$0xff]
      %v4997 = vld [vmem:[%s4940 + $0x1c0] sm:$0xff]
      %v4998 = vld [vmem:[%s4940 + $0x1c8] sm:$0xff]
      %v4999 = vld [vmem:[%s4940 + $0x1d0] sm:$0xff]
      %v5000 = vld [vmem:[%s4940 + $0x1d8] sm:$0xff]
      %v5001 = vld [vmem:[%s4940 + $0x1e0] sm:$0xff]
      %v5002 = vld [vmem:[%s4940 + $0x1e8] sm:$0xff]
      %v5003 = vld [vmem:[%s4940 + $0x1f0] sm:$0xff]
      %v5004 = vld [vmem:[%s4940 + $0x1f8] sm:$0xff]
      %v5005 = vld [vmem:[%s4940 + $0x200] sm:$0xff]
      %v5006 = vld [vmem:[%s4940 + $0x208] sm:$0xff]
      %v5007 = vld [vmem:[%s4940 + $0x210] sm:$0xff]
      %v5008 = vld [vmem:[%s4940 + $0x218] sm:$0xff]
      %v5009 = vld [vmem:[%s4940 + $0x220] sm:$0xff]
      %v5010 = vld [vmem:[%s4940 + $0x228] sm:$0xff]
      %v5011 = vld [vmem:[%s4940 + $0x230] sm:$0xff]
      %v5012 = vld [vmem:[%s4940 + $0x238] sm:$0xff]
      %v5013 = vld [vmem:[%s4940 + $0x240] sm:$0xff]
      %v5014 = vld [vmem:[%s4940 + $0x248] sm:$0xff]
      %v5015 = vld [vmem:[%s4940 + $0x250] sm:$0xff]
      %v5016 = vld [vmem:[%s4940 + $0x258] sm:$0xff]
      %v5017 = vld [vmem:[%s4940 + $0x260] sm:$0xff]
      %v5018 = vld [vmem:[%s4940 + $0x268] sm:$0xff]
      %v5019 = vld [vmem:[%s4940 + $0x270] sm:$0xff]
      %v5020 = vld [vmem:[%s4940 + $0x278] sm:$0xff]
      %v5021 = vld [vmem:[%s4940 + $0x280] sm:$0xff]
      %v5022 = vld [vmem:[%s4940 + $0x288] sm:$0xff]
      %v5023 = vld [vmem:[%s4940 + $0x290] sm:$0xff]
      %v5024 = vld [vmem:[%s4940 + $0x298] sm:$0xff]
      %v5025 = vld [vmem:[%s4940 + $0x2a0] sm:$0xff]
      %v5026 = vld [vmem:[%s4940 + $0x2a8] sm:$0xff]
      %v5027 = vld [vmem:[%s4940 + $0x2b0] sm:$0xff]
      %v5028 = vld [vmem:[%s4940 + $0x2b8] sm:$0xff]
      %v5029 = vld [vmem:[%s4940 + $0x2c0] sm:$0xff]
      %v5030 = vld [vmem:[%s4940 + $0x2c8] sm:$0xff]
      %v5031 = vld [vmem:[%s4940 + $0x2d0] sm:$0xff]
      %v5032 = vld [vmem:[%s4940 + $0x2d8] sm:$0xff]
      %v5033 = vld [vmem:[%s4940 + $0x2e0] sm:$0xff]
      %v5034 = vld [vmem:[%s4940 + $0x2e8] sm:$0xff]
      %v5035 = vld [vmem:[%s4940 + $0x2f0] sm:$0xff]
      %v5036 = vld [vmem:[%s4940 + $0x2f8] sm:$0xff]
      %v5037 = vld [vmem:[%s4940 + $0x300] sm:$0xff]
      %v5038 = vld [vmem:[%s4940 + $0x308] sm:$0xff]
      %v5039 = vld [vmem:[%s4940 + $0x310] sm:$0xff]
      %v5040 = vld [vmem:[%s4940 + $0x318] sm:$0xff]
      %v5041 = vld [vmem:[%s4940 + $0x320] sm:$0xff]
      %v5042 = vld [vmem:[%s4940 + $0x328] sm:$0xff]
      %v5043 = vld [vmem:[%s4940 + $0x330] sm:$0xff]
      %v5044 = vld [vmem:[%s4940 + $0x338] sm:$0xff]
      %v5045 = vld [vmem:[%s4940 + $0x340] sm:$0xff]
      %v5046 = vld [vmem:[%s4940 + $0x348] sm:$0xff]
      %v5047 = vld [vmem:[%s4940 + $0x350] sm:$0xff]
      %v5048 = vld [vmem:[%s4940 + $0x358] sm:$0xff]
      %s5049 = scalar_lea.vmem %s8, 3
      %v5050 = vld [vmem:[%s5049] sm:$0x1]
      %v5051 = vrot.slane %v4934, 7
      %v5052 = vrot.slane %v4938, 7
      %v5053 = vrot.slane %v4935, 7
      %v5054 = vrot.slane %v4939, 7
      %v5059 = vsel %vm491, 0.0, %v5051
      %v5060 = vsel %vm491, 0.0, %v5052
      %v5061 = vsel %vm491, 0.0, %v5053
      %v5062 = vsel %vm491, 0.0, %v5054
      %v5063 = vsel %vm3237, %v5059, 0.0
      %v5064 = vsel %vm3237, %v5060, 0.0
      %v5065 = vsel %vm3237, %v5061, 0.0
      %v5066 = vsel %vm3237, %v5062, 0.0
      %v5070 = vrot.slane %v5063, 1
      %v5071 = vrot.slane %v5064, 1
      %v5072 = vrot.slane %v5065, 1
      %5073 = vrot.lane.b32.xlu0 %v5070, 96
      %v5074 = vpop.permute.xlu0 %5073
      %5075 = vrot.lane.b32.xlu0 %v5071, 96
      %v5076 = vpop.permute.xlu0 %5075
      %5077 = vrot.lane.b32.xlu0 %v5072, 96
      %v5078 = vpop.permute.xlu0 %5077
      %v5082 = vrot.slane %v5063, 2
      %v5083 = vrot.slane %v5064, 2
      %v5084 = vrot.slane %v5065, 2
      %5085 = vrot.lane.b32.xlu0 %v5082, 64
      %v5086 = vpop.permute.xlu0 %5085
      %5087 = vrot.lane.b32.xlu0 %v5083, 64
      %v5088 = vpop.permute.xlu0 %5087
      %5089 = vrot.lane.b32.xlu0 %v5084, 64
      %v5090 = vpop.permute.xlu0 %5089
      %5095 = vrot.lane.b32.xlu0 %v5063, 32
      %v5096 = vpop.permute.xlu0 %5095
      %5097 = vrot.lane.b32.xlu0 %v5064, 32
      %v5098 = vpop.permute.xlu0 %5097
      %5099 = vrot.lane.b32.xlu0 %v5065, 32
      %v5100 = vpop.permute.xlu0 %5099
      %5101 = vrot.lane.b32.xlu0 %v5066, 32
      %v5102 = vpop.permute.xlu0 %5101
      %v5107 = vrot.slane %v5066, 1
      %v5112 = vrot.slane %v5066, 2
      %5113 = vrot.lane.b32.xlu0 %v5082, 96
      %v5114 = vpop.permute.xlu0 %5113
      %5115 = vrot.lane.b32.xlu0 %v5083, 96
      %v5116 = vpop.permute.xlu0 %5115
      %5117 = vrot.lane.b32.xlu0 %v5084, 96
      %v5118 = vpop.permute.xlu0 %5117
      %5119 = vrot.lane.b32.xlu0 %v5112, 96
      %v5120 = vpop.permute.xlu0 %5119
      %5125 = vrot.lane.b32.xlu0 %v5064, 64
      %v5126 = vpop.permute.xlu0 %5125
      %5127 = vrot.lane.b32.xlu0 %v5065, 64
      %v5128 = vpop.permute.xlu0 %5127
      %5129 = vrot.lane.b32.xlu0 %v5066, 64
      %v5130 = vpop.permute.xlu0 %5129
      %5134 = vrot.lane.b32.xlu0 %v5071, 32
      %v5135 = vpop.permute.xlu0 %5134
      %5136 = vrot.lane.b32.xlu0 %v5072, 32
      %v5137 = vpop.permute.xlu0 %5136
      %5138 = vrot.lane.b32.xlu0 %v5107, 32
      %v5139 = vpop.permute.xlu0 %5138
      %v5143 = vsel %vm2718, %v5063, %v5074
      %v5144 = vsel %vm2718, %v5064, %v5076
      %v5145 = vsel %vm2718, %v5065, %v5078
      %v5146 = vsel %vm2736, %v5074, %v5086
      %v5147 = vsel %vm2736, %v5076, %v5088
      %v5148 = vsel %vm2736, %v5078, %v5090
      %v5149 = vsel %vm2754, %v3264, %v5096
      %v5150 = vsel %vm2754, %v5086, %v5098
      %v5151 = vsel %vm2754, %v5088, %v5100
      %v5152 = vsel %vm2754, %v5090, %v5102
      %v5153 = vsel %vm2718, %v5070, %v5114
      %v5154 = vsel %vm2718, %v5071, %v5116
      %v5155 = vsel %vm2718, %v5072, %v5118
      %v5156 = vsel %vm2718, %v5107, %v5120
      %v5157 = vsel %vm2736, %v5114, %v5126
      %v5158 = vsel %vm2736, %v5116, %v5128
      %v5159 = vsel %vm2736, %v5118, %v5130
      %v5160 = vsel %vm2736, %v5120, %v3313
      %v5161 = vsel %vm2754, %v5126, %v5135
      %v5162 = vsel %vm2754, %v5128, %v5137
      %v5163 = vsel %vm2754, %v5130, %v5139
      %v5185 = vcombine.low %v5149, %v5153
      %v5186 = vcombine.low %v5157, %v5161
      %v5187 = vcombine.low %v5143, %v5146
      %v5188 = vcombine.low %v5150, %v5154
      %v5189 = vcombine.low %v5158, %v5162
      %v5190 = vcombine.low %v5144, %v5147
      %v5191 = vcombine.low %v5151, %v5155
      %v5192 = vcombine.low %v5159, %v5163
      %v5193 = vcombine.low %v5145, %v5148
      %v5194 = vcombine.low %v5152, %v5156
      %v5195 = vcombine.low %v5160, %v3353
      %v5197 = vlaneseq
      %v5198 = vshrl.u32 %v5197, 7
      %v5199 = vsub.s32 0, %v5198
      %v5200 = vrot.slane %v5050, %v5199
      %v5202 = vcombine.low %v3378, %v5187
      %v5203 = vcombine.high %v3378, %v5187
      %v5204 = vcombine.low %v5185, %v5188
      %v5205 = vcombine.high %v5185, %v5188
      %v5206 = vcombine.low %v5186, %v5189
      %v5207 = vcombine.high %v5186, %v5189
      %v5208 = vcombine.low %v5083, %v5084
      %v5209 = vcombine.low %v5190, %v5193
      %v5210 = vcombine.high %v5190, %v5193
      %v5211 = vcombine.low %v5191, %v5194
      %v5212 = vcombine.high %v5191, %v5194
      %v5213 = vcombine.low %v5192, %v5195
      %v5214 = vcombine.high %v5192, %v5195
      %v5215 = vcombine.low %v5112, %v822
      %v5228 = vsel %vm2718, %v5208, 0
      %v5230 = vsel %vm2718, %v5215, 0
      %5232 = vmatprep.subr.mxu0 0.0
      %5233 = vmatpush1.msra.mxu0 %v4941
      %5234 = vmatprep.subr.mxu0 0.0
      %5235 = vmatpush1.msra.mxu0 %v4942
      %5236 = vmatprep.subr.mxu0 0.0
      %5237 = vmatpush1.msra.mxu0 %v4943
      %5238 = vmatprep.subr.mxu0 0.0
      %5239 = vmatpush1.msra.mxu0 %v4944
      %5240 = vmatprep.subr.mxu0 0.0
      %5241 = vmatpush1.msra.mxu0 %v4945
      %5242 = vmatprep.subr.mxu0 0.0
      %5243 = vmatpush1.msra.mxu0 %v4946
      %5244 = vmatprep.subr.mxu0 0.0
      %5245 = vmatpush1.msra.mxu0 %v4947
      %5246 = vmatprep.subr.mxu0 0.0
      %5247 = vmatpush1.msra.mxu0 %v4948
      %5248 = vmatprep.subr.mxu0 0.0
      %5249 = vmatpush1.msra.mxu0 %v4949
      %5250 = vmatprep.subr.mxu0 0.0
      %5251 = vmatpush1.msra.mxu0 %v4950
      %5252 = vmatprep.subr.mxu0 0.0
      %5253 = vmatpush1.msra.mxu0 %v4951
      %5254 = vmatprep.subr.mxu0 0.0
      %5255 = vmatpush1.msra.mxu0 %v4952
      %5256 = vmatprep.subr.mxu0 0.0
      %5257 = vmatpush1.msra.mxu0 %v4953
      %5258 = vmatprep.subr.mxu0 0.0
      %5259 = vmatpush1.msra.mxu0 %v4954
      %5260 = vmatprep.subr.mxu0 0.0
      %5261 = vmatpush1.msra.mxu0 %v4955
      %5262 = vmatprep.subr.mxu0 0.0
      %5263 = vmatpush1.msra.mxu0 %v4956
      %5264 = vmatprep.subr.mxu0 0.0
      %5265 = vmatpush1.msra.mxu0 %v4957
      %5266 = vmatprep.subr.mxu0 0.0
      %5267 = vmatpush1.msra.mxu0 %v4958
      %5268 = vmatprep.subr.mxu0 0.0
      %5269 = vmatpush1.msra.mxu0 %v4959
      %5270 = vmatprep.subr.mxu0 0.0
      %5271 = vmatpush1.msra.mxu0 %v4960
      %5272 = vmatprep.subr.mxu0 0.0
      %5273 = vmatpush1.msra.mxu0 %v4961
      %5274 = vmatprep.subr.mxu0 0.0
      %5275 = vmatpush1.msra.mxu0 %v4962
      %5276 = vmatprep.subr.mxu0 0.0
      %5277 = vmatpush1.msra.mxu0 %v4963
      %5278 = vmatprep.subr.mxu0 0.0
      %5279 = vmatpush1.msra.mxu0 %v4964
      %5280 = vmatprep.subr.mxu0 0.0
      %5281 = vmatpush1.msra.mxu0 %v4965
      %5282 = vmatprep.subr.mxu0 0.0
      %5283 = vmatpush1.msra.mxu0 %v4966
      %5284 = vmatprep.subr.mxu0 0.0
      %5285 = vmatpush1.msra.mxu0 %v4967
      %5286 = vmatprep.subr.mxu0 0.0
      %5287 = vmatpush1.msra.mxu0 %v4968
      %5288 = vmatprep.subr.mxu0 0.0
      %5289 = vmatpush1.msra.mxu0 %v4969
      %5290 = vmatprep.subr.mxu0 0.0
      %5291 = vmatpush1.msra.mxu0 %v4970
      %5292 = vmatprep.subr.mxu0 0.0
      %5293 = vmatpush1.msra.mxu0 %v4971
      %5294 = vmatprep.subr.mxu0 0.0
      %5295 = vmatpush1.msra.mxu0 %v4972
      %5296 = vmatprep.mubr.f32.mxu0 %v5203
      %5297 = vmatmul.mubr.f32.gmra.mrb[0].mxu0 %v5202
      %v5298 = vpop.f32.mrb[0].mxu0
      %v5299 = vadd.f32 %v5200, %v5298
      %v5300 = vpop.f32.mrb[0].mxu0
      %5301 = vmatprep.mubr.f32.mxu0 %v5210
      %5302 = vmatmul.mubr.f32.gmra.mrb[0].mxu0 %v5209
      %v5303 = vpop.f32.mrb[0].mxu0
      %v5304 = vadd.f32 %v5200, %v5303
      %v5305 = vpop.f32.mrb[0].mxu0
      %5306 = vdwg.mxu0
      %5307 = vmatprep.subr.mxu0 0.0
      %5308 = vmatpush1.msra.mxu0 %v4973
      %5309 = vmatprep.subr.mxu0 0.0
      %5310 = vmatpush1.msra.mxu0 %v4974
      %5311 = vmatprep.subr.mxu0 0.0
      %5312 = vmatpush1.msra.mxu0 %v4975
      %5313 = vmatprep.subr.mxu0 0.0
      %5314 = vmatpush1.msra.mxu0 %v4976
      %5315 = vmatprep.subr.mxu0 0.0
      %5316 = vmatpush1.msra.mxu0 %v4977
      %5317 = vmatprep.subr.mxu0 0.0
      %5318 = vmatpush1.msra.mxu0 %v4978
      %5319 = vmatprep.subr.mxu0 0.0
      %5320 = vmatpush1.msra.mxu0 %v4979
      %5321 = vmatprep.subr.mxu0 0.0
      %5322 = vmatpush1.msra.mxu0 %v4980
      %5323 = vmatprep.subr.mxu0 0.0
      %5324 = vmatpush1.msra.mxu0 %v4981
      %5325 = vmatprep.subr.mxu0 0.0
      %5326 = vmatpush1.msra.mxu0 %v4982
      %5327 = vmatprep.subr.mxu0 0.0
      %5328 = vmatpush1.msra.mxu0 %v4983
      %5329 = vmatprep.subr.mxu0 0.0
      %5330 = vmatpush1.msra.mxu0 %v4984
      %5331 = vmatprep.subr.mxu0 0.0
      %5332 = vmatpush1.msra.mxu0 %v4985
      %5333 = vmatprep.subr.mxu0 0.0
      %5334 = vmatpush1.msra.mxu0 %v4986
      %5335 = vmatprep.subr.mxu0 0.0
      %5336 = vmatpush1.msra.mxu0 %v4987
      %5337 = vmatprep.subr.mxu0 0.0
      %5338 = vmatpush1.msra.mxu0 %v4988
      %5339 = vmatprep.subr.mxu0 0.0
      %5340 = vmatpush1.msra.mxu0 %v4989
      %5341 = vmatprep.subr.mxu0 0.0
      %5342 = vmatpush1.msra.mxu0 %v4990
      %5343 = vmatprep.subr.mxu0 0.0
      %5344 = vmatpush1.msra.mxu0 %v4991
      %5345 = vmatprep.subr.mxu0 0.0
      %5346 = vmatpush1.msra.mxu0 %v4992
      %5347 = vmatprep.subr.mxu0 0.0
      %5348 = vmatpush1.msra.mxu0 %v4993
      %5349 = vmatprep.subr.mxu0 0.0
      %5350 = vmatpush1.msra.mxu0 %v4994
      %5351 = vmatprep.subr.mxu0 0.0
      %5352 = vmatpush1.msra.mxu0 %v4995
      %5353 = vmatprep.subr.mxu0 0.0
      %5354 = vmatpush1.msra.mxu0 %v4996
      %5355 = vmatprep.subr.mxu0 0.0
      %5356 = vmatpush1.msra.mxu0 %v4997
      %5357 = vmatprep.subr.mxu0 0.0
      %5358 = vmatpush1.msra.mxu0 %v4998
      %5359 = vmatprep.subr.mxu0 0.0
      %5360 = vmatpush1.msra.mxu0 %v4999
      %5361 = vmatprep.subr.mxu0 0.0
      %5362 = vmatpush1.msra.mxu0 %v5000
      %5363 = vmatprep.subr.mxu0 0.0
      %5364 = vmatpush1.msra.mxu0 %v5001
      %5365 = vmatprep.subr.mxu0 0.0
      %5366 = vmatpush1.msra.mxu0 %v5002
      %5367 = vmatprep.subr.mxu0 0.0
      %5368 = vmatpush1.msra.mxu0 %v5003
      %5369 = vmatprep.subr.mxu0 0.0
      %5370 = vmatpush1.msra.mxu0 %v5004
      %5371 = vmatprep.mubr.f32.mxu0 %v5205
      %5372 = vmatmul.mubr.f32.gmra.mrb[0].mxu0 %v5204
      %v5373 = vpop.f32.mrb[0].mxu0
      %v5374 = vadd.f32 %v5299, %v5373
      %v5375 = vpop.f32.mrb[0].mxu0
      %5376 = vmatprep.mubr.f32.mxu0 %v5212
      %5377 = vmatmul.mubr.f32.gmra.mrb[0].mxu0 %v5211
      %v5378 = vpop.f32.mrb[0].mxu0
      %v5379 = vadd.f32 %v5304, %v5378
      %v5380 = vpop.f32.mrb[0].mxu0
      %5381 = vdwg.mxu0
      %5382 = vmatprep.subr.mxu0 0.0
      %5383 = vmatpush1.msra.mxu0 %v5005
      %5384 = vmatprep.subr.mxu0 0.0
      %5385 = vmatpush1.msra.mxu0 %v5006
      %5386 = vmatprep.subr.mxu0 0.0
      %5387 = vmatpush1.msra.mxu0 %v5007
      %5388 = vmatprep.subr.mxu0 0.0
      %5389 = vmatpush1.msra.mxu0 %v5008
      %5390 = vmatprep.subr.mxu0 0.0
      %5391 = vmatpush1.msra.mxu0 %v5009
      %5392 = vmatprep.subr.mxu0 0.0
      %5393 = vmatpush1.msra.mxu0 %v5010
      %5394 = vmatprep.subr.mxu0 0.0
      %5395 = vmatpush1.msra.mxu0 %v5011
      %5396 = vmatprep.subr.mxu0 0.0
      %5397 = vmatpush1.msra.mxu0 %v5012
      %5398 = vmatprep.subr.mxu0 0.0
      %5399 = vmatpush1.msra.mxu0 %v5013
      %5400 = vmatprep.subr.mxu0 0.0
      %5401 = vmatpush1.msra.mxu0 %v5014
      %5402 = vmatprep.subr.mxu0 0.0
      %5403 = vmatpush1.msra.mxu0 %v5015
      %5404 = vmatprep.subr.mxu0 0.0
      %5405 = vmatpush1.msra.mxu0 %v5016
      %5406 = vmatprep.subr.mxu0 0.0
      %5407 = vmatpush1.msra.mxu0 %v5017
      %5408 = vmatprep.subr.mxu0 0.0
      %5409 = vmatpush1.msra.mxu0 %v5018
      %5410 = vmatprep.subr.mxu0 0.0
      %5411 = vmatpush1.msra.mxu0 %v5019
      %5412 = vmatprep.subr.mxu0 0.0
      %5413 = vmatpush1.msra.mxu0 %v5020
      %5414 = vmatprep.subr.mxu0 0.0
      %5415 = vmatpush1.msra.mxu0 %v5021
      %5416 = vmatprep.subr.mxu0 0.0
      %5417 = vmatpush1.msra.mxu0 %v5022
      %5418 = vmatprep.subr.mxu0 0.0
      %5419 = vmatpush1.msra.mxu0 %v5023
      %5420 = vmatprep.subr.mxu0 0.0
      %5421 = vmatpush1.msra.mxu0 %v5024
      %5422 = vmatprep.subr.mxu0 0.0
      %5423 = vmatpush1.msra.mxu0 %v5025
      %5424 = vmatprep.subr.mxu0 0.0
      %5425 = vmatpush1.msra.mxu0 %v5026
      %5426 = vmatprep.subr.mxu0 0.0
      %5427 = vmatpush1.msra.mxu0 %v5027
      %5428 = vmatprep.subr.mxu0 0.0
      %5429 = vmatpush1.msra.mxu0 %v5028
      %5430 = vmatprep.subr.mxu0 0.0
      %5431 = vmatpush1.msra.mxu0 %v5029
      %5432 = vmatprep.subr.mxu0 0.0
      %5433 = vmatpush1.msra.mxu0 %v5030
      %5434 = vmatprep.subr.mxu0 0.0
      %5435 = vmatpush1.msra.mxu0 %v5031
      %5436 = vmatprep.subr.mxu0 0.0
      %5437 = vmatpush1.msra.mxu0 %v5032
      %5438 = vmatprep.subr.mxu0 0.0
      %5439 = vmatpush1.msra.mxu0 %v5033
      %5440 = vmatprep.subr.mxu0 0.0
      %5441 = vmatpush1.msra.mxu0 %v5034
      %5442 = vmatprep.subr.mxu0 0.0
      %5443 = vmatpush1.msra.mxu0 %v5035
      %5444 = vmatprep.subr.mxu0 0.0
      %5445 = vmatpush1.msra.mxu0 %v5036
      %5446 = vmatprep.mubr.f32.mxu0 %v5207
      %5447 = vmatmul.mubr.f32.gmra.mrb[0].mxu0 %v5206
      %v5448 = vpop.f32.mrb[0].mxu0
      %v5449 = vadd.f32 %v5374, %v5448
      %v5450 = vpop.f32.mrb[0].mxu0
      %5451 = vmatprep.mubr.f32.mxu0 %v5214
      %5452 = vmatmul.mubr.f32.gmra.mrb[0].mxu0 %v5213
      %v5453 = vpop.f32.mrb[0].mxu0
      %v5454 = vadd.f32 %v5379, %v5453
      %v5455 = vpop.f32.mrb[0].mxu0
      %5456 = vdwg.mxu0
      %5457 = vmatprep.subr.mxu0 0.0
      %5458 = vmatpush1.msra.mxu0 %v5037
      %5459 = vmatprep.subr.mxu0 0.0
      %5460 = vmatpush1.msra.mxu0 %v5038
      %5461 = vmatprep.subr.mxu0 0.0
      %5462 = vmatpush1.msra.mxu0 %v5039
      %5463 = vmatprep.subr.mxu0 0.0
      %5464 = vmatpush1.msra.mxu0 %v5040
      %5465 = vmatprep.subr.mxu0 0.0
      %5466 = vmatpush1.msra.mxu0 %v5041
      %5467 = vmatprep.subr.mxu0 0.0
      %5468 = vmatpush1.msra.mxu0 %v5042
      %5469 = vmatprep.subr.mxu0 0.0
      %5470 = vmatpush1.msra.mxu0 %v5043
      %5471 = vmatprep.subr.mxu0 0.0
      %5472 = vmatpush1.msra.mxu0 %v5044
      %5473 = vmatprep.subr.mxu0 0.0
      %5474 = vmatpush1.msra.mxu0 %v5045
      %5475 = vmatprep.subr.mxu0 0.0
      %5476 = vmatpush1.msra.mxu0 %v5046
      %5477 = vmatprep.subr.mxu0 0.0
      %5478 = vmatpush1.msra.mxu0 %v5047
      %5479 = vmatprep.subr.mxu0 0.0
      %5480 = vmatpush1.msra.mxu0 %v5048
      %5481 = vmatprep.subr.mxu0 0.0
      %5482 = vmatpush1.msra.mxu0 0.0
      %5483 = vmatprep.subr.mxu0 0.0
      %5484 = vmatpush1.msra.mxu0 0.0
      %5485 = vmatprep.subr.mxu0 0.0
      %5486 = vmatpush1.msra.mxu0 0.0
      %5487 = vmatprep.subr.mxu0 0.0
      %5488 = vmatpush1.msra.mxu0 0.0
      %5489 = vmatprep.subr.mxu0 0.0
      %5490 = vmatpush1.msra.mxu0 0.0
      %5491 = vmatprep.subr.mxu0 0.0
      %5492 = vmatpush1.msra.mxu0 0.0
      %5493 = vmatprep.subr.mxu0 0.0
      %5494 = vmatpush1.msra.mxu0 0.0
      %5495 = vmatprep.subr.mxu0 0.0
      %5496 = vmatpush1.msra.mxu0 0.0
      %5497 = vmatprep.subr.mxu0 0.0
      %5498 = vmatpush1.msra.mxu0 0.0
      %5499 = vmatprep.subr.mxu0 0.0
      %5500 = vmatpush1.msra.mxu0 0.0
      %5501 = vmatprep.subr.mxu0 0.0
      %5502 = vmatpush1.msra.mxu0 0.0
      %5503 = vmatprep.subr.mxu0 0.0
      %5504 = vmatpush1.msra.mxu0 0.0
      %5505 = vmatprep.subr.mxu0 0.0
      %5506 = vmatpush1.msra.mxu0 0.0
      %5507 = vmatprep.subr.mxu0 0.0
      %5508 = vmatpush1.msra.mxu0 0.0
      %5509 = vmatprep.subr.mxu0 0.0
      %5510 = vmatpush1.msra.mxu0 0.0
      %5511 = vmatprep.subr.mxu0 0.0
      %5512 = vmatpush1.msra.mxu0 0.0
      %5513 = vmatprep.subr.mxu0 0.0
      %5514 = vmatpush1.msra.mxu0 0.0
      %5515 = vmatprep.subr.mxu0 0.0
      %5516 = vmatpush1.msra.mxu0 0.0
      %5517 = vmatprep.subr.mxu0 0.0
      %5518 = vmatpush1.msra.mxu0 0.0
      %5519 = vmatprep.subr.mxu0 0.0
      %5520 = vmatpush1.msra.mxu0 0.0
      %5521 = vmatprep.mubr.f32.mxu0 0.0
      %5522 = vmatmul.mubr.f32.gmra.mrb[0].mxu0 %v5228
      %v5523 = vpop.f32.mrb[0].mxu0
      %v5524 = vadd.f32 %v5449, %v5523
      %v5525 = vpop.f32.mrb[0].mxu0
      %5526 = vmatprep.mubr.f32.mxu0 0.0
      %5527 = vmatmul.mubr.f32.gmra.mrb[0].mxu0 %v5230
      %v5528 = vpop.f32.mrb[0].mxu0
      %v5529 = vadd.f32 %v5454, %v5528
      %v5530 = vpop.f32.mrb[0].mxu0
      %5531 = vdwg.mxu0
      %vm5532 = vcmp.ge.f32.partialorder %v5524, 0.0
      %vm5533 = vcmp.ge.f32.partialorder %v5529, 0.0
      %v5534 = vmul.f32 %v5524, 0.1
      %v5535 = vmul.f32 %v5529, 0.1
      %v5536 = vsel %vm5532, %v5524, %v5534
      %v5537 = vsel %vm5533, %v5529, %v5535
      %v5540 = vcombine.high %v5536, %v5536
      %v5541 = vcombine.high %v5537, %v5537
      %v5544 = vadd.f32 %v5536, %v3102
      %v5545 = vadd.f32 %v5540, %v3112
      %v5546 = vadd.f32 %v5537, %v3107
      %v5547 = vadd.f32 %v5541, %v3113
      %v5548 = vld [vmem:[%s9] sm:$0xff]
      %v5549 = vld [vmem:[%s9 + $0x8] sm:$0xff]
      %v5550 = vld [vmem:[%s9 + $0x10] sm:$0xff]
      %v5551 = vld [vmem:[%s9 + $0x18] sm:$0xff]
      %v5552 = vld [vmem:[%s9 + $0x20] sm:$0xff]
      %v5553 = vld [vmem:[%s9 + $0x28] sm:$0xff]
      %v5554 = vld [vmem:[%s9 + $0x30] sm:$0xff]
      %v5555 = vld [vmem:[%s9 + $0x38] sm:$0xff]
      %v5556 = vld [vmem:[%s9 + $0x40] sm:$0xff]
      %v5557 = vld [vmem:[%s9 + $0x48] sm:$0xff]
      %v5558 = vld [vmem:[%s9 + $0x50] sm:$0xff]
      %v5559 = vld [vmem:[%s9 + $0x58] sm:$0xff]
      %v5564 = vcombine.low %v5544, %v5545
      %v5565 = vcombine.low %v5546, %v5547
      %v5566 = vsel %vm2718, %v5564, 0
      %v5568 = vsel %vm2718, %v5565, 0
      %5570 = vmatprep.subr.mxu0 0.0
      %5571 = vmatpush1.msra.mxu0 %v5548
      %5572 = vmatprep.subr.mxu0 0.0
      %5573 = vmatpush1.msra.mxu0 %v5549
      %5574 = vmatprep.subr.mxu0 0.0
      %5575 = vmatpush1.msra.mxu0 %v5550
      %5576 = vmatprep.subr.mxu0 0.0
      %5577 = vmatpush1.msra.mxu0 %v5551
      %5578 = vmatprep.subr.mxu0 0.0
      %5579 = vmatpush1.msra.mxu0 %v5552
      %5580 = vmatprep.subr.mxu0 0.0
      %5581 = vmatpush1.msra.mxu0 %v5553
      %5582 = vmatprep.subr.mxu0 0.0
      %5583 = vmatpush1.msra.mxu0 %v5554
      %5584 = vmatprep.subr.mxu0 0.0
      %5585 = vmatpush1.msra.mxu0 %v5555
      %5586 = vmatprep.subr.mxu0 0.0
      %5587 = vmatpush1.msra.mxu0 %v5556
      %5588 = vmatprep.subr.mxu0 0.0
      %5589 = vmatpush1.msra.mxu0 %v5557
      %5590 = vmatprep.subr.mxu0 0.0
      %5591 = vmatpush1.msra.mxu0 %v5558
      %5592 = vmatprep.subr.mxu0 0.0
      %5593 = vmatpush1.msra.mxu0 %v5559
      %5594 = vmatprep.subr.mxu0 0.0
      %5595 = vmatpush1.msra.mxu0 0.0
      %5596 = vmatprep.subr.mxu0 0.0
      %5597 = vmatpush1.msra.mxu0 0.0
      %5598 = vmatprep.subr.mxu0 0.0
      %5599 = vmatpush1.msra.mxu0 0.0
      %5600 = vmatprep.subr.mxu0 0.0
      %5601 = vmatpush1.msra.mxu0 0.0
      %5602 = vmatprep.subr.mxu0 0.0
      %5603 = vmatpush1.msra.mxu0 0.0
      %5604 = vmatprep.subr.mxu0 0.0
      %5605 = vmatpush1.msra.mxu0 0.0
      %5606 = vmatprep.subr.mxu0 0.0
      %5607 = vmatpush1.msra.mxu0 0.0
      %5608 = vmatprep.subr.mxu0 0.0
      %5609 = vmatpush1.msra.mxu0 0.0
      %5610 = vmatprep.subr.mxu0 0.0
      %5611 = vmatpush1.msra.mxu0 0.0
      %5612 = vmatprep.subr.mxu0 0.0
      %5613 = vmatpush1.msra.mxu0 0.0
      %5614 = vmatprep.subr.mxu0 0.0
      %5615 = vmatpush1.msra.mxu0 0.0
      %5616 = vmatprep.subr.mxu0 0.0
      %5617 = vmatpush1.msra.mxu0 0.0
      %5618 = vmatprep.subr.mxu0 0.0
      %5619 = vmatpush1.msra.mxu0 0.0
      %5620 = vmatprep.subr.mxu0 0.0
      %5621 = vmatpush1.msra.mxu0 0.0
      %5622 = vmatprep.subr.mxu0 0.0
      %5623 = vmatpush1.msra.mxu0 0.0
      %5624 = vmatprep.subr.mxu0 0.0
      %5625 = vmatpush1.msra.mxu0 0.0
      %5626 = vmatprep.subr.mxu0 0.0
      %5627 = vmatpush1.msra.mxu0 0.0
      %5628 = vmatprep.subr.mxu0 0.0
      %5629 = vmatpush1.msra.mxu0 0.0
      %5630 = vmatprep.subr.mxu0 0.0
      %5631 = vmatpush1.msra.mxu0 0.0
      %5632 = vmatprep.subr.mxu0 0.0
      %5633 = vmatpush1.msra.mxu0 0.0
      %5634 = vmatprep.mubr.f32.mxu0 0.0
      %5635 = vmatmul.mubr.f32.gmra.mrb[0].mxu0 %v5566
      %v5636 = vpop.f32.mrb[0].mxu0
      %v5637 = vadd.f32 0.0, %v5636
      %v5638 = vpop.f32.mrb[0].mxu0
      %5639 = vmatprep.mubr.f32.mxu0 0.0
      %5640 = vmatmul.mubr.f32.gmra.mrb[0].mxu0 %v5568
      %v5641 = vpop.f32.mrb[0].mxu0
      %v5642 = vadd.f32 0.0, %v5641
      %v5643 = vpop.f32.mrb[0].mxu0
      %5644 = vdwg.mxu0
      %s5645 = scalar_lea.vmem %s9, 96
      %v5646 = vld [vmem:[%s5645] sm:$0xff]
      %v5647 = vld [vmem:[%s5645 + $0x8] sm:$0xff]
      %v5648 = vld [vmem:[%s5645 + $0x10] sm:$0xff]
      %v5649 = vld [vmem:[%s5645 + $0x18] sm:$0xff]
      %v5650 = vld [vmem:[%s5645 + $0x20] sm:$0xff]
      %v5651 = vld [vmem:[%s5645 + $0x28] sm:$0xff]
      %v5652 = vld [vmem:[%s5645 + $0x30] sm:$0xff]
      %v5653 = vld [vmem:[%s5645 + $0x38] sm:$0xff]
      %v5654 = vld [vmem:[%s5645 + $0x40] sm:$0xff]
      %v5655 = vld [vmem:[%s5645 + $0x48] sm:$0xff]
      %v5656 = vld [vmem:[%s5645 + $0x50] sm:$0xff]
      %v5657 = vld [vmem:[%s5645 + $0x58] sm:$0xff]
      %5658 = vmatprep.subr.mxu0 0.0
      %5659 = vmatpush1.msra.mxu0 %v5646
      %5660 = vmatprep.subr.mxu0 0.0
      %5661 = vmatpush1.msra.mxu0 %v5647
      %5662 = vmatprep.subr.mxu0 0.0
      %5663 = vmatpush1.msra.mxu0 %v5648
      %5664 = vmatprep.subr.mxu0 0.0
      %5665 = vmatpush1.msra.mxu0 %v5649
      %5666 = vmatprep.subr.mxu0 0.0
      %5667 = vmatpush1.msra.mxu0 %v5650
      %5668 = vmatprep.subr.mxu0 0.0
      %5669 = vmatpush1.msra.mxu0 %v5651
      %5670 = vmatprep.subr.mxu0 0.0
      %5671 = vmatpush1.msra.mxu0 %v5652
      %5672 = vmatprep.subr.mxu0 0.0
      %5673 = vmatpush1.msra.mxu0 %v5653
      %5674 = vmatprep.subr.mxu0 0.0
      %5675 = vmatpush1.msra.mxu0 %v5654
      %5676 = vmatprep.subr.mxu0 0.0
      %5677 = vmatpush1.msra.mxu0 %v5655
      %5678 = vmatprep.subr.mxu0 0.0
      %5679 = vmatpush1.msra.mxu0 %v5656
      %5680 = vmatprep.subr.mxu0 0.0
      %5681 = vmatpush1.msra.mxu0 %v5657
      %5682 = vmatprep.subr.mxu0 0.0
      %5683 = vmatpush1.msra.mxu0 0.0
      %5684 = vmatprep.subr.mxu0 0.0
      %5685 = vmatpush1.msra.mxu0 0.0
      %5686 = vmatprep.subr.mxu0 0.0
      %5687 = vmatpush1.msra.mxu0 0.0
      %5688 = vmatprep.subr.mxu0 0.0
      %5689 = vmatpush1.msra.mxu0 0.0
      %5690 = vmatprep.subr.mxu0 0.0
      %5691 = vmatpush1.msra.mxu0 0.0
      %5692 = vmatprep.subr.mxu0 0.0
      %5693 = vmatpush1.msra.mxu0 0.0
      %5694 = vmatprep.subr.mxu0 0.0
      %5695 = vmatpush1.msra.mxu0 0.0
      %5696 = vmatprep.subr.mxu0 0.0
      %5697 = vmatpush1.msra.mxu0 0.0
      %5698 = vmatprep.subr.mxu0 0.0
      %5699 = vmatpush1.msra.mxu0 0.0
      %5700 = vmatprep.subr.mxu0 0.0
      %5701 = vmatpush1.msra.mxu0 0.0
      %5702 = vmatprep.subr.mxu0 0.0
      %5703 = vmatpush1.msra.mxu0 0.0
      %5704 = vmatprep.subr.mxu0 0.0
      %5705 = vmatpush1.msra.mxu0 0.0
      %5706 = vmatprep.subr.mxu0 0.0
      %5707 = vmatpush1.msra.mxu0 0.0
      %5708 = vmatprep.subr.mxu0 0.0
      %5709 = vmatpush1.msra.mxu0 0.0
      %5710 = vmatprep.subr.mxu0 0.0
      %5711 = vmatpush1.msra.mxu0 0.0
      %5712 = vmatprep.subr.mxu0 0.0
      %5713 = vmatpush1.msra.mxu0 0.0
      %5714 = vmatprep.subr.mxu0 0.0
      %5715 = vmatpush1.msra.mxu0 0.0
      %5716 = vmatprep.subr.mxu0 0.0
      %5717 = vmatpush1.msra.mxu0 0.0
      %5718 = vmatprep.subr.mxu0 0.0
      %5719 = vmatpush1.msra.mxu0 0.0
      %5720 = vmatprep.subr.mxu0 0.0
      %5721 = vmatpush1.msra.mxu0 0.0
      %5722 = vmatprep.mubr.f32.mxu0 0.0
      %5723 = vmatmul.mubr.f32.gmra.mrb[0].mxu0 %v5566
      %v5724 = vpop.f32.mrb[0].mxu0
      %v5725 = vadd.f32 0.0, %v5724
      %v5726 = vpop.f32.mrb[0].mxu0
      %5727 = vmatprep.mubr.f32.mxu0 0.0
      %5728 = vmatmul.mubr.f32.gmra.mrb[0].mxu0 %v5568
      %v5729 = vpop.f32.mrb[0].mxu0
      %v5730 = vadd.f32 0.0, %v5729
      %v5731 = vpop.f32.mrb[0].mxu0
      %5732 = vdwg.mxu0
      %s5733 = scalar_lea.vmem %s9, 192
      %v5734 = vld [vmem:[%s5733] sm:$0xff]
      %v5735 = vld [vmem:[%s5733 + $0x8] sm:$0xff]
      %v5736 = vld [vmem:[%s5733 + $0x10] sm:$0xff]
      %v5737 = vld [vmem:[%s5733 + $0x18] sm:$0xff]
      %v5738 = vld [vmem:[%s5733 + $0x20] sm:$0xff]
      %v5739 = vld [vmem:[%s5733 + $0x28] sm:$0xff]
      %v5740 = vld [vmem:[%s5733 + $0x30] sm:$0xff]
      %v5741 = vld [vmem:[%s5733 + $0x38] sm:$0xff]
      %v5742 = vld [vmem:[%s5733 + $0x40] sm:$0xff]
      %v5743 = vld [vmem:[%s5733 + $0x48] sm:$0xff]
      %v5744 = vld [vmem:[%s5733 + $0x50] sm:$0xff]
      %v5745 = vld [vmem:[%s5733 + $0x58] sm:$0xff]
      %5746 = vmatprep.subr.mxu0 0.0
      %5747 = vmatpush1.msra.mxu0 %v5734
      %5748 = vmatprep.subr.mxu0 0.0
      %5749 = vmatpush1.msra.mxu0 %v5735
      %5750 = vmatprep.subr.mxu0 0.0
      %5751 = vmatpush1.msra.mxu0 %v5736
      %5752 = vmatprep.subr.mxu0 0.0
      %5753 = vmatpush1.msra.mxu0 %v5737
      %5754 = vmatprep.subr.mxu0 0.0
      %5755 = vmatpush1.msra.mxu0 %v5738
      %5756 = vmatprep.subr.mxu0 0.0
      %5757 = vmatpush1.msra.mxu0 %v5739
      %5758 = vmatprep.subr.mxu0 0.0
      %5759 = vmatpush1.msra.mxu0 %v5740
      %5760 = vmatprep.subr.mxu0 0.0
      %5761 = vmatpush1.msra.mxu0 %v5741
      %5762 = vmatprep.subr.mxu0 0.0
      %5763 = vmatpush1.msra.mxu0 %v5742
      %5764 = vmatprep.subr.mxu0 0.0
      %5765 = vmatpush1.msra.mxu0 %v5743
      %5766 = vmatprep.subr.mxu0 0.0
      %5767 = vmatpush1.msra.mxu0 %v5744
      %5768 = vmatprep.subr.mxu0 0.0
      %5769 = vmatpush1.msra.mxu0 %v5745
      %5770 = vmatprep.subr.mxu0 0.0
      %5771 = vmatpush1.msra.mxu0 0.0
      %5772 = vmatprep.subr.mxu0 0.0
      %5773 = vmatpush1.msra.mxu0 0.0
      %5774 = vmatprep.subr.mxu0 0.0
      %5775 = vmatpush1.msra.mxu0 0.0
      %5776 = vmatprep.subr.mxu0 0.0
      %5777 = vmatpush1.msra.mxu0 0.0
      %5778 = vmatprep.subr.mxu0 0.0
      %5779 = vmatpush1.msra.mxu0 0.0
      %5780 = vmatprep.subr.mxu0 0.0
      %5781 = vmatpush1.msra.mxu0 0.0
      %5782 = vmatprep.subr.mxu0 0.0
      %5783 = vmatpush1.msra.mxu0 0.0
      %5784 = vmatprep.subr.mxu0 0.0
      %5785 = vmatpush1.msra.mxu0 0.0
      %5786 = vmatprep.subr.mxu0 0.0
      %5787 = vmatpush1.msra.mxu0 0.0
      %5788 = vmatprep.subr.mxu0 0.0
      %5789 = vmatpush1.msra.mxu0 0.0
      %5790 = vmatprep.subr.mxu0 0.0
      %5791 = vmatpush1.msra.mxu0 0.0
      %5792 = vmatprep.subr.mxu0 0.0
      %5793 = vmatpush1.msra.mxu0 0.0
      %5794 = vmatprep.subr.mxu0 0.0
      %5795 = vmatpush1.msra.mxu0 0.0
      %5796 = vmatprep.subr.mxu0 0.0
      %5797 = vmatpush1.msra.mxu0 0.0
      %5798 = vmatprep.subr.mxu0 0.0
      %5799 = vmatpush1.msra.mxu0 0.0
      %5800 = vmatprep.subr.mxu0 0.0
      %5801 = vmatpush1.msra.mxu0 0.0
      %5802 = vmatprep.subr.mxu0 0.0
      %5803 = vmatpush1.msra.mxu0 0.0
      %5804 = vmatprep.subr.mxu0 0.0
      %5805 = vmatpush1.msra.mxu0 0.0
      %5806 = vmatprep.subr.mxu0 0.0
      %5807 = vmatpush1.msra.mxu0 0.0
      %5808 = vmatprep.subr.mxu0 0.0
      %5809 = vmatpush1.msra.mxu0 0.0
      %5810 = vmatprep.mubr.f32.mxu0 0.0
      %5811 = vmatmul.mubr.f32.gmra.mrb[0].mxu0 %v5566
      %v5812 = vpop.f32.mrb[0].mxu0
      %v5813 = vadd.f32 0.0, %v5812
      %v5814 = vpop.f32.mrb[0].mxu0
      %5815 = vmatprep.mubr.f32.mxu0 0.0
      %5816 = vmatmul.mubr.f32.gmra.mrb[0].mxu0 %v5568
      %v5817 = vpop.f32.mrb[0].mxu0
      %v5818 = vadd.f32 0.0, %v5817
      %v5819 = vpop.f32.mrb[0].mxu0
      %5820 = vdwg.mxu0
      %s5821 = scalar_lea.vmem %s9, 288
      %v5822 = vld [vmem:[%s5821] sm:$0xff]
      %v5823 = vld [vmem:[%s5821 + $0x8] sm:$0xff]
      %v5824 = vld [vmem:[%s5821 + $0x10] sm:$0xff]
      %v5825 = vld [vmem:[%s5821 + $0x18] sm:$0xff]
      %v5826 = vld [vmem:[%s5821 + $0x20] sm:$0xff]
      %v5827 = vld [vmem:[%s5821 + $0x28] sm:$0xff]
      %v5828 = vld [vmem:[%s5821 + $0x30] sm:$0xff]
      %v5829 = vld [vmem:[%s5821 + $0x38] sm:$0xff]
      %v5830 = vld [vmem:[%s5821 + $0x40] sm:$0xff]
      %v5831 = vld [vmem:[%s5821 + $0x48] sm:$0xff]
      %v5832 = vld [vmem:[%s5821 + $0x50] sm:$0xff]
      %v5833 = vld [vmem:[%s5821 + $0x58] sm:$0xff]
      %5834 = vmatprep.subr.mxu0 0.0
      %5835 = vmatpush1.msra.mxu0 %v5822
      %5836 = vmatprep.subr.mxu0 0.0
      %5837 = vmatpush1.msra.mxu0 %v5823
      %5838 = vmatprep.subr.mxu0 0.0
      %5839 = vmatpush1.msra.mxu0 %v5824
      %5840 = vmatprep.subr.mxu0 0.0
      %5841 = vmatpush1.msra.mxu0 %v5825
      %5842 = vmatprep.subr.mxu0 0.0
      %5843 = vmatpush1.msra.mxu0 %v5826
      %5844 = vmatprep.subr.mxu0 0.0
      %5845 = vmatpush1.msra.mxu0 %v5827
      %5846 = vmatprep.subr.mxu0 0.0
      %5847 = vmatpush1.msra.mxu0 %v5828
      %5848 = vmatprep.subr.mxu0 0.0
      %5849 = vmatpush1.msra.mxu0 %v5829
      %5850 = vmatprep.subr.mxu0 0.0
      %5851 = vmatpush1.msra.mxu0 %v5830
      %5852 = vmatprep.subr.mxu0 0.0
      %5853 = vmatpush1.msra.mxu0 %v5831
      %5854 = vmatprep.subr.mxu0 0.0
      %5855 = vmatpush1.msra.mxu0 %v5832
      %5856 = vmatprep.subr.mxu0 0.0
      %5857 = vmatpush1.msra.mxu0 %v5833
      %5858 = vmatprep.subr.mxu0 0.0
      %5859 = vmatpush1.msra.mxu0 0.0
      %5860 = vmatprep.subr.mxu0 0.0
      %5861 = vmatpush1.msra.mxu0 0.0
      %5862 = vmatprep.subr.mxu0 0.0
      %5863 = vmatpush1.msra.mxu0 0.0
      %5864 = vmatprep.subr.mxu0 0.0
      %5865 = vmatpush1.msra.mxu0 0.0
      %5866 = vmatprep.subr.mxu0 0.0
      %5867 = vmatpush1.msra.mxu0 0.0
      %5868 = vmatprep.subr.mxu0 0.0
      %5869 = vmatpush1.msra.mxu0 0.0
      %5870 = vmatprep.subr.mxu0 0.0
      %5871 = vmatpush1.msra.mxu0 0.0
      %5872 = vmatprep.subr.mxu0 0.0
      %5873 = vmatpush1.msra.mxu0 0.0
      %5874 = vmatprep.subr.mxu0 0.0
      %5875 = vmatpush1.msra.mxu0 0.0
      %5876 = vmatprep.subr.mxu0 0.0
      %5877 = vmatpush1.msra.mxu0 0.0
      %5878 = vmatprep.subr.mxu0 0.0
      %5879 = vmatpush1.msra.mxu0 0.0
      %5880 = vmatprep.subr.mxu0 0.0
      %5881 = vmatpush1.msra.mxu0 0.0
      %5882 = vmatprep.subr.mxu0 0.0
      %5883 = vmatpush1.msra.mxu0 0.0
      %5884 = vmatprep.subr.mxu0 0.0
      %5885 = vmatpush1.msra.mxu0 0.0
      %5886 = vmatprep.subr.mxu0 0.0
      %5887 = vmatpush1.msra.mxu0 0.0
      %5888 = vmatprep.subr.mxu0 0.0
      %5889 = vmatpush1.msra.mxu0 0.0
      %5890 = vmatprep.subr.mxu0 0.0
      %5891 = vmatpush1.msra.mxu0 0.0
      %5892 = vmatprep.subr.mxu0 0.0
      %5893 = vmatpush1.msra.mxu0 0.0
      %5894 = vmatprep.subr.mxu0 0.0
      %5895 = vmatpush1.msra.mxu0 0.0
      %5896 = vmatprep.subr.mxu0 0.0
      %5897 = vmatpush1.msra.mxu0 0.0
      %5898 = vmatprep.mubr.f32.mxu0 0.0
      %5899 = vmatmul.mubr.f32.gmra.mrb[0].mxu0 %v5566
      %v5900 = vpop.f32.mrb[0].mxu0
      %v5901 = vadd.f32 0.0, %v5900
      %v5902 = vpop.f32.mrb[0].mxu0
      %5903 = vmatprep.mubr.f32.mxu0 0.0
      %5904 = vmatmul.mubr.f32.gmra.mrb[0].mxu0 %v5568
      %v5905 = vpop.f32.mrb[0].mxu0
      %v5906 = vadd.f32 0.0, %v5905
      %v5907 = vpop.f32.mrb[0].mxu0
      %5908 = vdwg.mxu0
      %s5909 = scalar_lea.vmem %s9, 384
      %v5910 = vld [vmem:[%s5909] sm:$0xff]
      %v5911 = vld [vmem:[%s5909 + $0x8] sm:$0xff]
      %v5912 = vld [vmem:[%s5909 + $0x10] sm:$0xff]
      %v5913 = vld [vmem:[%s5909 + $0x18] sm:$0xff]
      %v5914 = vld [vmem:[%s5909 + $0x20] sm:$0xff]
      %v5915 = vld [vmem:[%s5909 + $0x28] sm:$0xff]
      %v5916 = vld [vmem:[%s5909 + $0x30] sm:$0xff]
      %v5917 = vld [vmem:[%s5909 + $0x38] sm:$0xff]
      %v5918 = vld [vmem:[%s5909 + $0x40] sm:$0xff]
      %v5919 = vld [vmem:[%s5909 + $0x48] sm:$0xff]
      %v5920 = vld [vmem:[%s5909 + $0x50] sm:$0xff]
      %v5921 = vld [vmem:[%s5909 + $0x58] sm:$0xff]
      %5922 = vmatprep.subr.mxu0 0.0
      %5923 = vmatpush1.msra.mxu0 %v5910
      %5924 = vmatprep.subr.mxu0 0.0
      %5925 = vmatpush1.msra.mxu0 %v5911
      %5926 = vmatprep.subr.mxu0 0.0
      %5927 = vmatpush1.msra.mxu0 %v5912
      %5928 = vmatprep.subr.mxu0 0.0
      %5929 = vmatpush1.msra.mxu0 %v5913
      %5930 = vmatprep.subr.mxu0 0.0
      %5931 = vmatpush1.msra.mxu0 %v5914
      %5932 = vmatprep.subr.mxu0 0.0
      %5933 = vmatpush1.msra.mxu0 %v5915
      %5934 = vmatprep.subr.mxu0 0.0
      %5935 = vmatpush1.msra.mxu0 %v5916
      %5936 = vmatprep.subr.mxu0 0.0
      %5937 = vmatpush1.msra.mxu0 %v5917
      %5938 = vmatprep.subr.mxu0 0.0
      %5939 = vmatpush1.msra.mxu0 %v5918
      %5940 = vmatprep.subr.mxu0 0.0
      %5941 = vmatpush1.msra.mxu0 %v5919
      %5942 = vmatprep.subr.mxu0 0.0
      %5943 = vmatpush1.msra.mxu0 %v5920
      %5944 = vmatprep.subr.mxu0 0.0
      %5945 = vmatpush1.msra.mxu0 %v5921
      %5946 = vmatprep.subr.mxu0 0.0
      %5947 = vmatpush1.msra.mxu0 0.0
      %5948 = vmatprep.subr.mxu0 0.0
      %5949 = vmatpush1.msra.mxu0 0.0
      %5950 = vmatprep.subr.mxu0 0.0
      %5951 = vmatpush1.msra.mxu0 0.0
      %5952 = vmatprep.subr.mxu0 0.0
      %5953 = vmatpush1.msra.mxu0 0.0
      %5954 = vmatprep.subr.mxu0 0.0
      %5955 = vmatpush1.msra.mxu0 0.0
      %5956 = vmatprep.subr.mxu0 0.0
      %5957 = vmatpush1.msra.mxu0 0.0
      %5958 = vmatprep.subr.mxu0 0.0
      %5959 = vmatpush1.msra.mxu0 0.0
      %5960 = vmatprep.subr.mxu0 0.0
      %5961 = vmatpush1.msra.mxu0 0.0
      %5962 = vmatprep.subr.mxu0 0.0
      %5963 = vmatpush1.msra.mxu0 0.0
      %5964 = vmatprep.subr.mxu0 0.0
      %5965 = vmatpush1.msra.mxu0 0.0
      %5966 = vmatprep.subr.mxu0 0.0
      %5967 = vmatpush1.msra.mxu0 0.0
      %5968 = vmatprep.subr.mxu0 0.0
      %5969 = vmatpush1.msra.mxu0 0.0
      %5970 = vmatprep.subr.mxu0 0.0
      %5971 = vmatpush1.msra.mxu0 0.0
      %5972 = vmatprep.subr.mxu0 0.0
      %5973 = vmatpush1.msra.mxu0 0.0
      %5974 = vmatprep.subr.mxu0 0.0
      %5975 = vmatpush1.msra.mxu0 0.0
      %5976 = vmatprep.subr.mxu0 0.0
      %5977 = vmatpush1.msra.mxu0 0.0
      %5978 = vmatprep.subr.mxu0 0.0
      %5979 = vmatpush1.msra.mxu0 0.0
      %5980 = vmatprep.subr.mxu0 0.0
      %5981 = vmatpush1.msra.mxu0 0.0
      %5982 = vmatprep.subr.mxu0 0.0
      %5983 = vmatpush1.msra.mxu0 0.0
      %5984 = vmatprep.subr.mxu0 0.0
      %5985 = vmatpush1.msra.mxu0 0.0
      %5986 = vmatprep.mubr.f32.mxu0 0.0
      %5987 = vmatmul.mubr.f32.gmra.mrb[0].mxu0 %v5566
      %v5988 = vpop.f32.mrb[0].mxu0
      %v5989 = vadd.f32 0.0, %v5988
      %v5990 = vpop.f32.mrb[0].mxu0
      %5991 = vmatprep.mubr.f32.mxu0 0.0
      %5992 = vmatmul.mubr.f32.gmra.mrb[0].mxu0 %v5568
      %v5993 = vpop.f32.mrb[0].mxu0
      %v5994 = vadd.f32 0.0, %v5993
      %v5995 = vpop.f32.mrb[0].mxu0
      %5996 = vdwg.mxu0
      %s5997 = scalar_lea.vmem %s9, 480
      %v5998 = vld [vmem:[%s5997] sm:$0xff]
      %v5999 = vld [vmem:[%s5997 + $0x8] sm:$0xff]
      %v6000 = vld [vmem:[%s5997 + $0x10] sm:$0xff]
      %v6001 = vld [vmem:[%s5997 + $0x18] sm:$0xff]
      %v6002 = vld [vmem:[%s5997 + $0x20] sm:$0xff]
      %v6003 = vld [vmem:[%s5997 + $0x28] sm:$0xff]
      %v6004 = vld [vmem:[%s5997 + $0x30] sm:$0xff]
      %v6005 = vld [vmem:[%s5997 + $0x38] sm:$0xff]
      %v6006 = vld [vmem:[%s5997 + $0x40] sm:$0xff]
      %v6007 = vld [vmem:[%s5997 + $0x48] sm:$0xff]
      %v6008 = vld [vmem:[%s5997 + $0x50] sm:$0xff]
      %v6009 = vld [vmem:[%s5997 + $0x58] sm:$0xff]
      %6010 = vmatprep.subr.mxu0 0.0
      %6011 = vmatpush1.msra.mxu0 %v5998
      %6012 = vmatprep.subr.mxu0 0.0
      %6013 = vmatpush1.msra.mxu0 %v5999
      %6014 = vmatprep.subr.mxu0 0.0
      %6015 = vmatpush1.msra.mxu0 %v6000
      %6016 = vmatprep.subr.mxu0 0.0
      %6017 = vmatpush1.msra.mxu0 %v6001
      %6018 = vmatprep.subr.mxu0 0.0
      %6019 = vmatpush1.msra.mxu0 %v6002
      %6020 = vmatprep.subr.mxu0 0.0
      %6021 = vmatpush1.msra.mxu0 %v6003
      %6022 = vmatprep.subr.mxu0 0.0
      %6023 = vmatpush1.msra.mxu0 %v6004
      %6024 = vmatprep.subr.mxu0 0.0
      %6025 = vmatpush1.msra.mxu0 %v6005
      %6026 = vmatprep.subr.mxu0 0.0
      %6027 = vmatpush1.msra.mxu0 %v6006
      %6028 = vmatprep.subr.mxu0 0.0
      %6029 = vmatpush1.msra.mxu0 %v6007
      %6030 = vmatprep.subr.mxu0 0.0
      %6031 = vmatpush1.msra.mxu0 %v6008
      %6032 = vmatprep.subr.mxu0 0.0
      %6033 = vmatpush1.msra.mxu0 %v6009
      %6034 = vmatprep.subr.mxu0 0.0
      %6035 = vmatpush1.msra.mxu0 0.0
      %6036 = vmatprep.subr.mxu0 0.0
      %6037 = vmatpush1.msra.mxu0 0.0
      %6038 = vmatprep.subr.mxu0 0.0
      %6039 = vmatpush1.msra.mxu0 0.0
      %6040 = vmatprep.subr.mxu0 0.0
      %6041 = vmatpush1.msra.mxu0 0.0
      %6042 = vmatprep.subr.mxu0 0.0
      %6043 = vmatpush1.msra.mxu0 0.0
      %6044 = vmatprep.subr.mxu0 0.0
      %6045 = vmatpush1.msra.mxu0 0.0
      %6046 = vmatprep.subr.mxu0 0.0
      %6047 = vmatpush1.msra.mxu0 0.0
      %6048 = vmatprep.subr.mxu0 0.0
      %6049 = vmatpush1.msra.mxu0 0.0
      %6050 = vmatprep.subr.mxu0 0.0
      %6051 = vmatpush1.msra.mxu0 0.0
      %6052 = vmatprep.subr.mxu0 0.0
      %6053 = vmatpush1.msra.mxu0 0.0
      %6054 = vmatprep.subr.mxu0 0.0
      %6055 = vmatpush1.msra.mxu0 0.0
      %6056 = vmatprep.subr.mxu0 0.0
      %6057 = vmatpush1.msra.mxu0 0.0
      %6058 = vmatprep.subr.mxu0 0.0
      %6059 = vmatpush1.msra.mxu0 0.0
      %6060 = vmatprep.subr.mxu0 0.0
      %6061 = vmatpush1.msra.mxu0 0.0
      %6062 = vmatprep.subr.mxu0 0.0
      %6063 = vmatpush1.msra.mxu0 0.0
      %6064 = vmatprep.subr.mxu0 0.0
      %6065 = vmatpush1.msra.mxu0 0.0
      %6066 = vmatprep.subr.mxu0 0.0
      %6067 = vmatpush1.msra.mxu0 0.0
      %6068 = vmatprep.subr.mxu0 0.0
      %6069 = vmatpush1.msra.mxu0 0.0
      %6070 = vmatprep.subr.mxu0 0.0
      %6071 = vmatpush1.msra.mxu0 0.0
      %6072 = vmatprep.subr.mxu0 0.0
      %6073 = vmatpush1.msra.mxu0 0.0
      %6074 = vmatprep.mubr.f32.mxu0 0.0
      %6075 = vmatmul.mubr.f32.gmra.mrb[0].mxu0 %v5566
      %v6076 = vpop.f32.mrb[0].mxu0
      %v6077 = vadd.f32 0.0, %v6076
      %v6078 = vpop.f32.mrb[0].mxu0
      %6079 = vmatprep.mubr.f32.mxu0 0.0
      %6080 = vmatmul.mubr.f32.gmra.mrb[0].mxu0 %v5568
      %v6081 = vpop.f32.mrb[0].mxu0
      %v6082 = vadd.f32 0.0, %v6081
      %v6083 = vpop.f32.mrb[0].mxu0
      %6084 = vdwg.mxu0
      %s6085 = scalar_lea.vmem %s9, 576
      %v6086 = vld [vmem:[%s6085] sm:$0xff]
      %v6087 = vld [vmem:[%s6085 + $0x8] sm:$0xff]
      %v6088 = vld [vmem:[%s6085 + $0x10] sm:$0xff]
      %v6089 = vld [vmem:[%s6085 + $0x18] sm:$0xff]
      %v6090 = vld [vmem:[%s6085 + $0x20] sm:$0xff]
      %v6091 = vld [vmem:[%s6085 + $0x28] sm:$0xff]
      %v6092 = vld [vmem:[%s6085 + $0x30] sm:$0xff]
      %v6093 = vld [vmem:[%s6085 + $0x38] sm:$0xff]
      %v6094 = vld [vmem:[%s6085 + $0x40] sm:$0xff]
      %v6095 = vld [vmem:[%s6085 + $0x48] sm:$0xff]
      %v6096 = vld [vmem:[%s6085 + $0x50] sm:$0xff]
      %v6097 = vld [vmem:[%s6085 + $0x58] sm:$0xff]
      %6098 = vmatprep.subr.mxu0 0.0
      %6099 = vmatpush1.msra.mxu0 %v6086
      %6100 = vmatprep.subr.mxu0 0.0
      %6101 = vmatpush1.msra.mxu0 %v6087
      %6102 = vmatprep.subr.mxu0 0.0
      %6103 = vmatpush1.msra.mxu0 %v6088
      %6104 = vmatprep.subr.mxu0 0.0
      %6105 = vmatpush1.msra.mxu0 %v6089
      %6106 = vmatprep.subr.mxu0 0.0
      %6107 = vmatpush1.msra.mxu0 %v6090
      %6108 = vmatprep.subr.mxu0 0.0
      %6109 = vmatpush1.msra.mxu0 %v6091
      %6110 = vmatprep.subr.mxu0 0.0
      %6111 = vmatpush1.msra.mxu0 %v6092
      %6112 = vmatprep.subr.mxu0 0.0
      %6113 = vmatpush1.msra.mxu0 %v6093
      %6114 = vmatprep.subr.mxu0 0.0
      %6115 = vmatpush1.msra.mxu0 %v6094
      %6116 = vmatprep.subr.mxu0 0.0
      %6117 = vmatpush1.msra.mxu0 %v6095
      %6118 = vmatprep.subr.mxu0 0.0
      %6119 = vmatpush1.msra.mxu0 %v6096
      %6120 = vmatprep.subr.mxu0 0.0
      %6121 = vmatpush1.msra.mxu0 %v6097
      %6122 = vmatprep.subr.mxu0 0.0
      %6123 = vmatpush1.msra.mxu0 0.0
      %6124 = vmatprep.subr.mxu0 0.0
      %6125 = vmatpush1.msra.mxu0 0.0
      %6126 = vmatprep.subr.mxu0 0.0
      %6127 = vmatpush1.msra.mxu0 0.0
      %6128 = vmatprep.subr.mxu0 0.0
      %6129 = vmatpush1.msra.mxu0 0.0
      %6130 = vmatprep.subr.mxu0 0.0
      %6131 = vmatpush1.msra.mxu0 0.0
      %6132 = vmatprep.subr.mxu0 0.0
      %6133 = vmatpush1.msra.mxu0 0.0
      %6134 = vmatprep.subr.mxu0 0.0
      %6135 = vmatpush1.msra.mxu0 0.0
      %6136 = vmatprep.subr.mxu0 0.0
      %6137 = vmatpush1.msra.mxu0 0.0
      %6138 = vmatprep.subr.mxu0 0.0
      %6139 = vmatpush1.msra.mxu0 0.0
      %6140 = vmatprep.subr.mxu0 0.0
      %6141 = vmatpush1.msra.mxu0 0.0
      %6142 = vmatprep.subr.mxu0 0.0
      %6143 = vmatpush1.msra.mxu0 0.0
      %6144 = vmatprep.subr.mxu0 0.0
      %6145 = vmatpush1.msra.mxu0 0.0
      %6146 = vmatprep.subr.mxu0 0.0
      %6147 = vmatpush1.msra.mxu0 0.0
      %6148 = vmatprep.subr.mxu0 0.0
      %6149 = vmatpush1.msra.mxu0 0.0
      %6150 = vmatprep.subr.mxu0 0.0
      %6151 = vmatpush1.msra.mxu0 0.0
      %6152 = vmatprep.subr.mxu0 0.0
      %6153 = vmatpush1.msra.mxu0 0.0
      %6154 = vmatprep.subr.mxu0 0.0
      %6155 = vmatpush1.msra.mxu0 0.0
      %6156 = vmatprep.subr.mxu0 0.0
      %6157 = vmatpush1.msra.mxu0 0.0
      %6158 = vmatprep.subr.mxu0 0.0
      %6159 = vmatpush1.msra.mxu0 0.0
      %6160 = vmatprep.subr.mxu0 0.0
      %6161 = vmatpush1.msra.mxu0 0.0
      %6162 = vmatprep.mubr.f32.mxu0 0.0
      %6163 = vmatmul.mubr.f32.gmra.mrb[0].mxu0 %v5566
      %v6164 = vpop.f32.mrb[0].mxu0
      %v6165 = vadd.f32 0.0, %v6164
      %v6166 = vpop.f32.mrb[0].mxu0
      %6167 = vmatprep.mubr.f32.mxu0 0.0
      %6168 = vmatmul.mubr.f32.gmra.mrb[0].mxu0 %v5568
      %v6169 = vpop.f32.mrb[0].mxu0
      %v6170 = vadd.f32 0.0, %v6169
      %v6171 = vpop.f32.mrb[0].mxu0
      %6172 = vdwg.mxu0
      %s6173 = scalar_lea.vmem %s9, 672
      %v6174 = vld [vmem:[%s6173] sm:$0xff]
      %v6175 = vld [vmem:[%s6173 + $0x8] sm:$0xff]
      %v6176 = vld [vmem:[%s6173 + $0x10] sm:$0xff]
      %v6177 = vld [vmem:[%s6173 + $0x18] sm:$0xff]
      %v6178 = vld [vmem:[%s6173 + $0x20] sm:$0xff]
      %v6179 = vld [vmem:[%s6173 + $0x28] sm:$0xff]
      %v6180 = vld [vmem:[%s6173 + $0x30] sm:$0xff]
      %v6181 = vld [vmem:[%s6173 + $0x38] sm:$0xff]
      %v6182 = vld [vmem:[%s6173 + $0x40] sm:$0xff]
      %v6183 = vld [vmem:[%s6173 + $0x48] sm:$0xff]
      %v6184 = vld [vmem:[%s6173 + $0x50] sm:$0xff]
      %v6185 = vld [vmem:[%s6173 + $0x58] sm:$0xff]
      %6186 = vmatprep.subr.mxu0 0.0
      %6187 = vmatpush1.msra.mxu0 %v6174
      %6188 = vmatprep.subr.mxu0 0.0
      %6189 = vmatpush1.msra.mxu0 %v6175
      %6190 = vmatprep.subr.mxu0 0.0
      %6191 = vmatpush1.msra.mxu0 %v6176
      %6192 = vmatprep.subr.mxu0 0.0
      %6193 = vmatpush1.msra.mxu0 %v6177
      %6194 = vmatprep.subr.mxu0 0.0
      %6195 = vmatpush1.msra.mxu0 %v6178
      %6196 = vmatprep.subr.mxu0 0.0
      %6197 = vmatpush1.msra.mxu0 %v6179
      %6198 = vmatprep.subr.mxu0 0.0
      %6199 = vmatpush1.msra.mxu0 %v6180
      %6200 = vmatprep.subr.mxu0 0.0
      %6201 = vmatpush1.msra.mxu0 %v6181
      %6202 = vmatprep.subr.mxu0 0.0
      %6203 = vmatpush1.msra.mxu0 %v6182
      %6204 = vmatprep.subr.mxu0 0.0
      %6205 = vmatpush1.msra.mxu0 %v6183
      %6206 = vmatprep.subr.mxu0 0.0
      %6207 = vmatpush1.msra.mxu0 %v6184
      %6208 = vmatprep.subr.mxu0 0.0
      %6209 = vmatpush1.msra.mxu0 %v6185
      %6210 = vmatprep.subr.mxu0 0.0
      %6211 = vmatpush1.msra.mxu0 0.0
      %6212 = vmatprep.subr.mxu0 0.0
      %6213 = vmatpush1.msra.mxu0 0.0
      %6214 = vmatprep.subr.mxu0 0.0
      %6215 = vmatpush1.msra.mxu0 0.0
      %6216 = vmatprep.subr.mxu0 0.0
      %6217 = vmatpush1.msra.mxu0 0.0
      %6218 = vmatprep.subr.mxu0 0.0
      %6219 = vmatpush1.msra.mxu0 0.0
      %6220 = vmatprep.subr.mxu0 0.0
      %6221 = vmatpush1.msra.mxu0 0.0
      %6222 = vmatprep.subr.mxu0 0.0
      %6223 = vmatpush1.msra.mxu0 0.0
      %6224 = vmatprep.subr.mxu0 0.0
      %6225 = vmatpush1.msra.mxu0 0.0
      %6226 = vmatprep.subr.mxu0 0.0
      %6227 = vmatpush1.msra.mxu0 0.0
      %6228 = vmatprep.subr.mxu0 0.0
      %6229 = vmatpush1.msra.mxu0 0.0
      %6230 = vmatprep.subr.mxu0 0.0
      %6231 = vmatpush1.msra.mxu0 0.0
      %6232 = vmatprep.subr.mxu0 0.0
      %6233 = vmatpush1.msra.mxu0 0.0
      %6234 = vmatprep.subr.mxu0 0.0
      %6235 = vmatpush1.msra.mxu0 0.0
      %6236 = vmatprep.subr.mxu0 0.0
      %6237 = vmatpush1.msra.mxu0 0.0
      %6238 = vmatprep.subr.mxu0 0.0
      %6239 = vmatpush1.msra.mxu0 0.0
      %6240 = vmatprep.subr.mxu0 0.0
      %6241 = vmatpush1.msra.mxu0 0.0
      %6242 = vmatprep.subr.mxu0 0.0
      %6243 = vmatpush1.msra.mxu0 0.0
      %6244 = vmatprep.subr.mxu0 0.0
      %6245 = vmatpush1.msra.mxu0 0.0
      %6246 = vmatprep.subr.mxu0 0.0
      %6247 = vmatpush1.msra.mxu0 0.0
      %6248 = vmatprep.subr.mxu0 0.0
      %6249 = vmatpush1.msra.mxu0 0.0
      %6250 = vmatprep.mubr.f32.mxu0 0.0
      %6251 = vmatmul.mubr.f32.gmra.mrb[0].mxu0 %v5566
      %v6252 = vpop.f32.mrb[0].mxu0
      %v6253 = vadd.f32 0.0, %v6252
      %v6254 = vpop.f32.mrb[0].mxu0
      %6255 = vmatprep.mubr.f32.mxu0 0.0
      %6256 = vmatmul.mubr.f32.gmra.mrb[0].mxu0 %v5568
      %v6257 = vpop.f32.mrb[0].mxu0
      %v6258 = vadd.f32 0.0, %v6257
      %v6259 = vpop.f32.mrb[0].mxu0
      %6260 = vdwg.mxu0
      %s6261 = scalar_lea.vmem %s9, 768
      %v6262 = vld [vmem:[%s6261] sm:$0xff]
      %v6263 = vld [vmem:[%s6261 + $0x8] sm:$0xff]
      %v6264 = vld [vmem:[%s6261 + $0x10] sm:$0xff]
      %v6265 = vld [vmem:[%s6261 + $0x18] sm:$0xff]
      %v6266 = vld [vmem:[%s6261 + $0x20] sm:$0xff]
      %v6267 = vld [vmem:[%s6261 + $0x28] sm:$0xff]
      %v6268 = vld [vmem:[%s6261 + $0x30] sm:$0xff]
      %v6269 = vld [vmem:[%s6261 + $0x38] sm:$0xff]
      %v6270 = vld [vmem:[%s6261 + $0x40] sm:$0xff]
      %v6271 = vld [vmem:[%s6261 + $0x48] sm:$0xff]
      %v6272 = vld [vmem:[%s6261 + $0x50] sm:$0xff]
      %v6273 = vld [vmem:[%s6261 + $0x58] sm:$0xff]
      %6274 = vmatprep.subr.mxu0 0.0
      %6275 = vmatpush1.msra.mxu0 %v6262
      %6276 = vmatprep.subr.mxu0 0.0
      %6277 = vmatpush1.msra.mxu0 %v6263
      %6278 = vmatprep.subr.mxu0 0.0
      %6279 = vmatpush1.msra.mxu0 %v6264
      %6280 = vmatprep.subr.mxu0 0.0
      %6281 = vmatpush1.msra.mxu0 %v6265
      %6282 = vmatprep.subr.mxu0 0.0
      %6283 = vmatpush1.msra.mxu0 %v6266
      %6284 = vmatprep.subr.mxu0 0.0
      %6285 = vmatpush1.msra.mxu0 %v6267
      %6286 = vmatprep.subr.mxu0 0.0
      %6287 = vmatpush1.msra.mxu0 %v6268
      %6288 = vmatprep.subr.mxu0 0.0
      %6289 = vmatpush1.msra.mxu0 %v6269
      %6290 = vmatprep.subr.mxu0 0.0
      %6291 = vmatpush1.msra.mxu0 %v6270
      %6292 = vmatprep.subr.mxu0 0.0
      %6293 = vmatpush1.msra.mxu0 %v6271
      %6294 = vmatprep.subr.mxu0 0.0
      %6295 = vmatpush1.msra.mxu0 %v6272
      %6296 = vmatprep.subr.mxu0 0.0
      %6297 = vmatpush1.msra.mxu0 %v6273
      %6298 = vmatprep.subr.mxu0 0.0
      %6299 = vmatpush1.msra.mxu0 0.0
      %6300 = vmatprep.subr.mxu0 0.0
      %6301 = vmatpush1.msra.mxu0 0.0
      %6302 = vmatprep.subr.mxu0 0.0
      %6303 = vmatpush1.msra.mxu0 0.0
      %6304 = vmatprep.subr.mxu0 0.0
      %6305 = vmatpush1.msra.mxu0 0.0
      %6306 = vmatprep.subr.mxu0 0.0
      %6307 = vmatpush1.msra.mxu0 0.0
      %6308 = vmatprep.subr.mxu0 0.0
      %6309 = vmatpush1.msra.mxu0 0.0
      %6310 = vmatprep.subr.mxu0 0.0
      %6311 = vmatpush1.msra.mxu0 0.0
      %6312 = vmatprep.subr.mxu0 0.0
      %6313 = vmatpush1.msra.mxu0 0.0
      %6314 = vmatprep.subr.mxu0 0.0
      %6315 = vmatpush1.msra.mxu0 0.0
      %6316 = vmatprep.subr.mxu0 0.0
      %6317 = vmatpush1.msra.mxu0 0.0
      %6318 = vmatprep.subr.mxu0 0.0
      %6319 = vmatpush1.msra.mxu0 0.0
      %6320 = vmatprep.subr.mxu0 0.0
      %6321 = vmatpush1.msra.mxu0 0.0
      %6322 = vmatprep.subr.mxu0 0.0
      %6323 = vmatpush1.msra.mxu0 0.0
      %6324 = vmatprep.subr.mxu0 0.0
      %6325 = vmatpush1.msra.mxu0 0.0
      %6326 = vmatprep.subr.mxu0 0.0
      %6327 = vmatpush1.msra.mxu0 0.0
      %6328 = vmatprep.subr.mxu0 0.0
      %6329 = vmatpush1.msra.mxu0 0.0
      %6330 = vmatprep.subr.mxu0 0.0
      %6331 = vmatpush1.msra.mxu0 0.0
      %6332 = vmatprep.subr.mxu0 0.0
      %6333 = vmatpush1.msra.mxu0 0.0
      %6334 = vmatprep.subr.mxu0 0.0
      %6335 = vmatpush1.msra.mxu0 0.0
      %6336 = vmatprep.subr.mxu0 0.0
      %6337 = vmatpush1.msra.mxu0 0.0
      %6338 = vmatprep.mubr.f32.mxu0 0.0
      %6339 = vmatmul.mubr.f32.gmra.mrb[0].mxu0 %v5566
      %v6340 = vpop.f32.mrb[0].mxu0
      %v6341 = vadd.f32 0.0, %v6340
      %v6342 = vpop.f32.mrb[0].mxu0
      %6343 = vmatprep.mubr.f32.mxu0 0.0
      %6344 = vmatmul.mubr.f32.gmra.mrb[0].mxu0 %v5568
      %v6345 = vpop.f32.mrb[0].mxu0
      %v6346 = vadd.f32 0.0, %v6345
      %v6347 = vpop.f32.mrb[0].mxu0
      %6348 = vdwg.mxu0
      %s6349 = scalar_lea.vmem %s9, 864
      %v6350 = vld [vmem:[%s6349] sm:$0xff]
      %v6351 = vld [vmem:[%s6349 + $0x8] sm:$0xff]
      %v6352 = vld [vmem:[%s6349 + $0x10] sm:$0xff]
      %v6353 = vld [vmem:[%s6349 + $0x18] sm:$0xff]
      %v6354 = vld [vmem:[%s6349 + $0x20] sm:$0xff]
      %v6355 = vld [vmem:[%s6349 + $0x28] sm:$0xff]
      %v6356 = vld [vmem:[%s6349 + $0x30] sm:$0xff]
      %v6357 = vld [vmem:[%s6349 + $0x38] sm:$0xff]
      %v6358 = vld [vmem:[%s6349 + $0x40] sm:$0xff]
      %v6359 = vld [vmem:[%s6349 + $0x48] sm:$0xff]
      %v6360 = vld [vmem:[%s6349 + $0x50] sm:$0xff]
      %v6361 = vld [vmem:[%s6349 + $0x58] sm:$0xff]
      %6362 = vmatprep.subr.mxu0 0.0
      %6363 = vmatpush1.msra.mxu0 %v6350
      %6364 = vmatprep.subr.mxu0 0.0
      %6365 = vmatpush1.msra.mxu0 %v6351
      %6366 = vmatprep.subr.mxu0 0.0
      %6367 = vmatpush1.msra.mxu0 %v6352
      %6368 = vmatprep.subr.mxu0 0.0
      %6369 = vmatpush1.msra.mxu0 %v6353
      %6370 = vmatprep.subr.mxu0 0.0
      %6371 = vmatpush1.msra.mxu0 %v6354
      %6372 = vmatprep.subr.mxu0 0.0
      %6373 = vmatpush1.msra.mxu0 %v6355
      %6374 = vmatprep.subr.mxu0 0.0
      %6375 = vmatpush1.msra.mxu0 %v6356
      %6376 = vmatprep.subr.mxu0 0.0
      %6377 = vmatpush1.msra.mxu0 %v6357
      %6378 = vmatprep.subr.mxu0 0.0
      %6379 = vmatpush1.msra.mxu0 %v6358
      %6380 = vmatprep.subr.mxu0 0.0
      %6381 = vmatpush1.msra.mxu0 %v6359
      %6382 = vmatprep.subr.mxu0 0.0
      %6383 = vmatpush1.msra.mxu0 %v6360
      %6384 = vmatprep.subr.mxu0 0.0
      %6385 = vmatpush1.msra.mxu0 %v6361
      %6386 = vmatprep.subr.mxu0 0.0
      %6387 = vmatpush1.msra.mxu0 0.0
      %6388 = vmatprep.subr.mxu0 0.0
      %6389 = vmatpush1.msra.mxu0 0.0
      %6390 = vmatprep.subr.mxu0 0.0
      %6391 = vmatpush1.msra.mxu0 0.0
      %6392 = vmatprep.subr.mxu0 0.0
      %6393 = vmatpush1.msra.mxu0 0.0
      %6394 = vmatprep.subr.mxu0 0.0
      %6395 = vmatpush1.msra.mxu0 0.0
      %6396 = vmatprep.subr.mxu0 0.0
      %6397 = vmatpush1.msra.mxu0 0.0
      %6398 = vmatprep.subr.mxu0 0.0
      %6399 = vmatpush1.msra.mxu0 0.0
      %6400 = vmatprep.subr.mxu0 0.0
      %6401 = vmatpush1.msra.mxu0 0.0
      %6402 = vmatprep.subr.mxu0 0.0
      %6403 = vmatpush1.msra.mxu0 0.0
      %6404 = vmatprep.subr.mxu0 0.0
      %6405 = vmatpush1.msra.mxu0 0.0
      %6406 = vmatprep.subr.mxu0 0.0
      %6407 = vmatpush1.msra.mxu0 0.0
      %6408 = vmatprep.subr.mxu0 0.0
      %6409 = vmatpush1.msra.mxu0 0.0
      %6410 = vmatprep.subr.mxu0 0.0
      %6411 = vmatpush1.msra.mxu0 0.0
      %6412 = vmatprep.subr.mxu0 0.0
      %6413 = vmatpush1.msra.mxu0 0.0
      %6414 = vmatprep.subr.mxu0 0.0
      %6415 = vmatpush1.msra.mxu0 0.0
      %6416 = vmatprep.subr.mxu0 0.0
      %6417 = vmatpush1.msra.mxu0 0.0
      %6418 = vmatprep.subr.mxu0 0.0
      %6419 = vmatpush1.msra.mxu0 0.0
      %6420 = vmatprep.subr.mxu0 0.0
      %6421 = vmatpush1.msra.mxu0 0.0
      %6422 = vmatprep.subr.mxu0 0.0
      %6423 = vmatpush1.msra.mxu0 0.0
      %6424 = vmatprep.subr.mxu0 0.0
      %6425 = vmatpush1.msra.mxu0 0.0
      %6426 = vmatprep.mubr.f32.mxu0 0.0
      %6427 = vmatmul.mubr.f32.gmra.mrb[0].mxu0 %v5566
      %v6428 = vpop.f32.mrb[0].mxu0
      %v6429 = vadd.f32 0.0, %v6428
      %v6430 = vpop.f32.mrb[0].mxu0
      %6431 = vmatprep.mubr.f32.mxu0 0.0
      %6432 = vmatmul.mubr.f32.gmra.mrb[0].mxu0 %v5568
      %v6433 = vpop.f32.mrb[0].mxu0
      %v6434 = vadd.f32 0.0, %v6433
      %v6435 = vpop.f32.mrb[0].mxu0
      %6436 = vdwg.mxu0
      %s6437 = scalar_lea.vmem %s9, 960
      %v6438 = vld [vmem:[%s6437] sm:$0xff]
      %v6439 = vld [vmem:[%s6437 + $0x8] sm:$0xff]
      %v6440 = vld [vmem:[%s6437 + $0x10] sm:$0xff]
      %v6441 = vld [vmem:[%s6437 + $0x18] sm:$0xff]
      %v6442 = vld [vmem:[%s6437 + $0x20] sm:$0xff]
      %v6443 = vld [vmem:[%s6437 + $0x28] sm:$0xff]
      %v6444 = vld [vmem:[%s6437 + $0x30] sm:$0xff]
      %v6445 = vld [vmem:[%s6437 + $0x38] sm:$0xff]
      %v6446 = vld [vmem:[%s6437 + $0x40] sm:$0xff]
      %v6447 = vld [vmem:[%s6437 + $0x48] sm:$0xff]
      %v6448 = vld [vmem:[%s6437 + $0x50] sm:$0xff]
      %v6449 = vld [vmem:[%s6437 + $0x58] sm:$0xff]
      %6450 = vmatprep.subr.mxu0 0.0
      %6451 = vmatpush1.msra.mxu0 %v6438
      %6452 = vmatprep.subr.mxu0 0.0
      %6453 = vmatpush1.msra.mxu0 %v6439
      %6454 = vmatprep.subr.mxu0 0.0
      %6455 = vmatpush1.msra.mxu0 %v6440
      %6456 = vmatprep.subr.mxu0 0.0
      %6457 = vmatpush1.msra.mxu0 %v6441
      %6458 = vmatprep.subr.mxu0 0.0
      %6459 = vmatpush1.msra.mxu0 %v6442
      %6460 = vmatprep.subr.mxu0 0.0
      %6461 = vmatpush1.msra.mxu0 %v6443
      %6462 = vmatprep.subr.mxu0 0.0
      %6463 = vmatpush1.msra.mxu0 %v6444
      %6464 = vmatprep.subr.mxu0 0.0
      %6465 = vmatpush1.msra.mxu0 %v6445
      %6466 = vmatprep.subr.mxu0 0.0
      %6467 = vmatpush1.msra.mxu0 %v6446
      %6468 = vmatprep.subr.mxu0 0.0
      %6469 = vmatpush1.msra.mxu0 %v6447
      %6470 = vmatprep.subr.mxu0 0.0
      %6471 = vmatpush1.msra.mxu0 %v6448
      %6472 = vmatprep.subr.mxu0 0.0
      %6473 = vmatpush1.msra.mxu0 %v6449
      %6474 = vmatprep.subr.mxu0 0.0
      %6475 = vmatpush1.msra.mxu0 0.0
      %6476 = vmatprep.subr.mxu0 0.0
      %6477 = vmatpush1.msra.mxu0 0.0
      %6478 = vmatprep.subr.mxu0 0.0
      %6479 = vmatpush1.msra.mxu0 0.0
      %6480 = vmatprep.subr.mxu0 0.0
      %6481 = vmatpush1.msra.mxu0 0.0
      %6482 = vmatprep.subr.mxu0 0.0
      %6483 = vmatpush1.msra.mxu0 0.0
      %6484 = vmatprep.subr.mxu0 0.0
      %6485 = vmatpush1.msra.mxu0 0.0
      %6486 = vmatprep.subr.mxu0 0.0
      %6487 = vmatpush1.msra.mxu0 0.0
      %6488 = vmatprep.subr.mxu0 0.0
      %6489 = vmatpush1.msra.mxu0 0.0
      %6490 = vmatprep.subr.mxu0 0.0
      %6491 = vmatpush1.msra.mxu0 0.0
      %6492 = vmatprep.subr.mxu0 0.0
      %6493 = vmatpush1.msra.mxu0 0.0
      %6494 = vmatprep.subr.mxu0 0.0
      %6495 = vmatpush1.msra.mxu0 0.0
      %6496 = vmatprep.subr.mxu0 0.0
      %6497 = vmatpush1.msra.mxu0 0.0
      %6498 = vmatprep.subr.mxu0 0.0
      %6499 = vmatpush1.msra.mxu0 0.0
      %6500 = vmatprep.subr.mxu0 0.0
      %6501 = vmatpush1.msra.mxu0 0.0
      %6502 = vmatprep.subr.mxu0 0.0
      %6503 = vmatpush1.msra.mxu0 0.0
      %6504 = vmatprep.subr.mxu0 0.0
      %6505 = vmatpush1.msra.mxu0 0.0
      %6506 = vmatprep.subr.mxu0 0.0
      %6507 = vmatpush1.msra.mxu0 0.0
      %6508 = vmatprep.subr.mxu0 0.0
      %6509 = vmatpush1.msra.mxu0 0.0
      %6510 = vmatprep.subr.mxu0 0.0
      %6511 = vmatpush1.msra.mxu0 0.0
      %6512 = vmatprep.subr.mxu0 0.0
      %6513 = vmatpush1.msra.mxu0 0.0
      %6514 = vmatprep.mubr.f32.mxu0 0.0
      %6515 = vmatmul.mubr.f32.gmra.mrb[0].mxu0 %v5566
      %v6516 = vpop.f32.mrb[0].mxu0
      %v6517 = vadd.f32 0.0, %v6516
      %v6518 = vpop.f32.mrb[0].mxu0
      %6519 = vmatprep.mubr.f32.mxu0 0.0
      %6520 = vmatmul.mubr.f32.gmra.mrb[0].mxu0 %v5568
      %v6521 = vpop.f32.mrb[0].mxu0
      %v6522 = vadd.f32 0.0, %v6521
      %v6523 = vpop.f32.mrb[0].mxu0
      %6524 = vdwg.mxu0
      %s6525 = scalar_lea.vmem %s9, 1056
      %v6526 = vld [vmem:[%s6525] sm:$0xff]
      %v6527 = vld [vmem:[%s6525 + $0x8] sm:$0xff]
      %v6528 = vld [vmem:[%s6525 + $0x10] sm:$0xff]
      %v6529 = vld [vmem:[%s6525 + $0x18] sm:$0xff]
      %v6530 = vld [vmem:[%s6525 + $0x20] sm:$0xff]
      %v6531 = vld [vmem:[%s6525 + $0x28] sm:$0xff]
      %v6532 = vld [vmem:[%s6525 + $0x30] sm:$0xff]
      %v6533 = vld [vmem:[%s6525 + $0x38] sm:$0xff]
      %v6534 = vld [vmem:[%s6525 + $0x40] sm:$0xff]
      %v6535 = vld [vmem:[%s6525 + $0x48] sm:$0xff]
      %v6536 = vld [vmem:[%s6525 + $0x50] sm:$0xff]
      %v6537 = vld [vmem:[%s6525 + $0x58] sm:$0xff]
      %6538 = vmatprep.subr.mxu0 0.0
      %6539 = vmatpush1.msra.mxu0 %v6526
      %6540 = vmatprep.subr.mxu0 0.0
      %6541 = vmatpush1.msra.mxu0 %v6527
      %6542 = vmatprep.subr.mxu0 0.0
      %6543 = vmatpush1.msra.mxu0 %v6528
      %6544 = vmatprep.subr.mxu0 0.0
      %6545 = vmatpush1.msra.mxu0 %v6529
      %6546 = vmatprep.subr.mxu0 0.0
      %6547 = vmatpush1.msra.mxu0 %v6530
      %6548 = vmatprep.subr.mxu0 0.0
      %6549 = vmatpush1.msra.mxu0 %v6531
      %6550 = vmatprep.subr.mxu0 0.0
      %6551 = vmatpush1.msra.mxu0 %v6532
      %6552 = vmatprep.subr.mxu0 0.0
      %6553 = vmatpush1.msra.mxu0 %v6533
      %6554 = vmatprep.subr.mxu0 0.0
      %6555 = vmatpush1.msra.mxu0 %v6534
      %6556 = vmatprep.subr.mxu0 0.0
      %6557 = vmatpush1.msra.mxu0 %v6535
      %6558 = vmatprep.subr.mxu0 0.0
      %6559 = vmatpush1.msra.mxu0 %v6536
      %6560 = vmatprep.subr.mxu0 0.0
      %6561 = vmatpush1.msra.mxu0 %v6537
      %6562 = vmatprep.subr.mxu0 0.0
      %6563 = vmatpush1.msra.mxu0 0.0
      %6564 = vmatprep.subr.mxu0 0.0
      %6565 = vmatpush1.msra.mxu0 0.0
      %6566 = vmatprep.subr.mxu0 0.0
      %6567 = vmatpush1.msra.mxu0 0.0
      %6568 = vmatprep.subr.mxu0 0.0
      %6569 = vmatpush1.msra.mxu0 0.0
      %6570 = vmatprep.subr.mxu0 0.0
      %6571 = vmatpush1.msra.mxu0 0.0
      %6572 = vmatprep.subr.mxu0 0.0
      %6573 = vmatpush1.msra.mxu0 0.0
      %6574 = vmatprep.subr.mxu0 0.0
      %6575 = vmatpush1.msra.mxu0 0.0
      %6576 = vmatprep.subr.mxu0 0.0
      %6577 = vmatpush1.msra.mxu0 0.0
      %6578 = vmatprep.subr.mxu0 0.0
      %6579 = vmatpush1.msra.mxu0 0.0
      %6580 = vmatprep.subr.mxu0 0.0
      %6581 = vmatpush1.msra.mxu0 0.0
      %6582 = vmatprep.subr.mxu0 0.0
      %6583 = vmatpush1.msra.mxu0 0.0
      %6584 = vmatprep.subr.mxu0 0.0
      %6585 = vmatpush1.msra.mxu0 0.0
      %6586 = vmatprep.subr.mxu0 0.0
      %6587 = vmatpush1.msra.mxu0 0.0
      %6588 = vmatprep.subr.mxu0 0.0
      %6589 = vmatpush1.msra.mxu0 0.0
      %6590 = vmatprep.subr.mxu0 0.0
      %6591 = vmatpush1.msra.mxu0 0.0
      %6592 = vmatprep.subr.mxu0 0.0
      %6593 = vmatpush1.msra.mxu0 0.0
      %6594 = vmatprep.subr.mxu0 0.0
      %6595 = vmatpush1.msra.mxu0 0.0
      %6596 = vmatprep.subr.mxu0 0.0
      %6597 = vmatpush1.msra.mxu0 0.0
      %6598 = vmatprep.subr.mxu0 0.0
      %6599 = vmatpush1.msra.mxu0 0.0
      %6600 = vmatprep.subr.mxu0 0.0
      %6601 = vmatpush1.msra.mxu0 0.0
      %6602 = vmatprep.mubr.f32.mxu0 0.0
      %6603 = vmatmul.mubr.f32.gmra.mrb[0].mxu0 %v5566
      %v6604 = vpop.f32.mrb[0].mxu0
      %v6605 = vadd.f32 0.0, %v6604
      %v6606 = vpop.f32.mrb[0].mxu0
      %6607 = vmatprep.mubr.f32.mxu0 0.0
      %6608 = vmatmul.mubr.f32.gmra.mrb[0].mxu0 %v5568
      %v6609 = vpop.f32.mrb[0].mxu0
      %v6610 = vadd.f32 0.0, %v6609
      %v6611 = vpop.f32.mrb[0].mxu0
      %6612 = vdwg.mxu0
      %s6613 = scalar_lea.vmem %s9, 1152
      %v6614 = vld [vmem:[%s6613] sm:$0xff]
      %v6615 = vld [vmem:[%s6613 + $0x8] sm:$0xff]
      %v6616 = vld [vmem:[%s6613 + $0x10] sm:$0xff]
      %v6617 = vld [vmem:[%s6613 + $0x18] sm:$0xff]
      %v6618 = vld [vmem:[%s6613 + $0x20] sm:$0xff]
      %v6619 = vld [vmem:[%s6613 + $0x28] sm:$0xff]
      %v6620 = vld [vmem:[%s6613 + $0x30] sm:$0xff]
      %v6621 = vld [vmem:[%s6613 + $0x38] sm:$0xff]
      %v6622 = vld [vmem:[%s6613 + $0x40] sm:$0xff]
      %v6623 = vld [vmem:[%s6613 + $0x48] sm:$0xff]
      %v6624 = vld [vmem:[%s6613 + $0x50] sm:$0xff]
      %v6625 = vld [vmem:[%s6613 + $0x58] sm:$0xff]
      %6626 = vmatprep.subr.mxu0 0.0
      %6627 = vmatpush1.msra.mxu0 %v6614
      %6628 = vmatprep.subr.mxu0 0.0
      %6629 = vmatpush1.msra.mxu0 %v6615
      %6630 = vmatprep.subr.mxu0 0.0
      %6631 = vmatpush1.msra.mxu0 %v6616
      %6632 = vmatprep.subr.mxu0 0.0
      %6633 = vmatpush1.msra.mxu0 %v6617
      %6634 = vmatprep.subr.mxu0 0.0
      %6635 = vmatpush1.msra.mxu0 %v6618
      %6636 = vmatprep.subr.mxu0 0.0
      %6637 = vmatpush1.msra.mxu0 %v6619
      %6638 = vmatprep.subr.mxu0 0.0
      %6639 = vmatpush1.msra.mxu0 %v6620
      %6640 = vmatprep.subr.mxu0 0.0
      %6641 = vmatpush1.msra.mxu0 %v6621
      %6642 = vmatprep.subr.mxu0 0.0
      %6643 = vmatpush1.msra.mxu0 %v6622
      %6644 = vmatprep.subr.mxu0 0.0
      %6645 = vmatpush1.msra.mxu0 %v6623
      %6646 = vmatprep.subr.mxu0 0.0
      %6647 = vmatpush1.msra.mxu0 %v6624
      %6648 = vmatprep.subr.mxu0 0.0
      %6649 = vmatpush1.msra.mxu0 %v6625
      %6650 = vmatprep.subr.mxu0 0.0
      %6651 = vmatpush1.msra.mxu0 0.0
      %6652 = vmatprep.subr.mxu0 0.0
      %6653 = vmatpush1.msra.mxu0 0.0
      %6654 = vmatprep.subr.mxu0 0.0
      %6655 = vmatpush1.msra.mxu0 0.0
      %6656 = vmatprep.subr.mxu0 0.0
      %6657 = vmatpush1.msra.mxu0 0.0
      %6658 = vmatprep.subr.mxu0 0.0
      %6659 = vmatpush1.msra.mxu0 0.0
      %6660 = vmatprep.subr.mxu0 0.0
      %6661 = vmatpush1.msra.mxu0 0.0
      %6662 = vmatprep.subr.mxu0 0.0
      %6663 = vmatpush1.msra.mxu0 0.0
      %6664 = vmatprep.subr.mxu0 0.0
      %6665 = vmatpush1.msra.mxu0 0.0
      %6666 = vmatprep.subr.mxu0 0.0
      %6667 = vmatpush1.msra.mxu0 0.0
      %6668 = vmatprep.subr.mxu0 0.0
      %6669 = vmatpush1.msra.mxu0 0.0
      %6670 = vmatprep.subr.mxu0 0.0
      %6671 = vmatpush1.msra.mxu0 0.0
      %6672 = vmatprep.subr.mxu0 0.0
      %6673 = vmatpush1.msra.mxu0 0.0
      %6674 = vmatprep.subr.mxu0 0.0
      %6675 = vmatpush1.msra.mxu0 0.0
      %6676 = vmatprep.subr.mxu0 0.0
      %6677 = vmatpush1.msra.mxu0 0.0
      %6678 = vmatprep.subr.mxu0 0.0
      %6679 = vmatpush1.msra.mxu0 0.0
      %6680 = vmatprep.subr.mxu0 0.0
      %6681 = vmatpush1.msra.mxu0 0.0
      %6682 = vmatprep.subr.mxu0 0.0
      %6683 = vmatpush1.msra.mxu0 0.0
      %6684 = vmatprep.subr.mxu0 0.0
      %6685 = vmatpush1.msra.mxu0 0.0
      %6686 = vmatprep.subr.mxu0 0.0
      %6687 = vmatpush1.msra.mxu0 0.0
      %6688 = vmatprep.subr.mxu0 0.0
      %6689 = vmatpush1.msra.mxu0 0.0
      %6690 = vmatprep.mubr.f32.mxu0 0.0
      %6691 = vmatmul.mubr.f32.gmra.mrb[0].mxu0 %v5566
      %v6692 = vpop.f32.mrb[0].mxu0
      %v6693 = vadd.f32 0.0, %v6692
      %v6694 = vpop.f32.mrb[0].mxu0
      %6695 = vmatprep.mubr.f32.mxu0 0.0
      %6696 = vmatmul.mubr.f32.gmra.mrb[0].mxu0 %v5568
      %v6697 = vpop.f32.mrb[0].mxu0
      %v6698 = vadd.f32 0.0, %v6697
      %v6699 = vpop.f32.mrb[0].mxu0
      %6700 = vdwg.mxu0
      %s6701 = scalar_lea.vmem %s9, 1248
      %v6702 = vld [vmem:[%s6701] sm:$0xff]
      %v6703 = vld [vmem:[%s6701 + $0x8] sm:$0xff]
      %v6704 = vld [vmem:[%s6701 + $0x10] sm:$0xff]
      %v6705 = vld [vmem:[%s6701 + $0x18] sm:$0xff]
      %v6706 = vld [vmem:[%s6701 + $0x20] sm:$0xff]
      %v6707 = vld [vmem:[%s6701 + $0x28] sm:$0xff]
      %v6708 = vld [vmem:[%s6701 + $0x30] sm:$0xff]
      %v6709 = vld [vmem:[%s6701 + $0x38] sm:$0xff]
      %v6710 = vld [vmem:[%s6701 + $0x40] sm:$0xff]
      %v6711 = vld [vmem:[%s6701 + $0x48] sm:$0xff]
      %v6712 = vld [vmem:[%s6701 + $0x50] sm:$0xff]
      %v6713 = vld [vmem:[%s6701 + $0x58] sm:$0xff]
      %6714 = vmatprep.subr.mxu0 0.0
      %6715 = vmatpush1.msra.mxu0 %v6702
      %6716 = vmatprep.subr.mxu0 0.0
      %6717 = vmatpush1.msra.mxu0 %v6703
      %6718 = vmatprep.subr.mxu0 0.0
      %6719 = vmatpush1.msra.mxu0 %v6704
      %6720 = vmatprep.subr.mxu0 0.0
      %6721 = vmatpush1.msra.mxu0 %v6705
      %6722 = vmatprep.subr.mxu0 0.0
      %6723 = vmatpush1.msra.mxu0 %v6706
      %6724 = vmatprep.subr.mxu0 0.0
      %6725 = vmatpush1.msra.mxu0 %v6707
      %6726 = vmatprep.subr.mxu0 0.0
      %6727 = vmatpush1.msra.mxu0 %v6708
      %6728 = vmatprep.subr.mxu0 0.0
      %6729 = vmatpush1.msra.mxu0 %v6709
      %6730 = vmatprep.subr.mxu0 0.0
      %6731 = vmatpush1.msra.mxu0 %v6710
      %6732 = vmatprep.subr.mxu0 0.0
      %6733 = vmatpush1.msra.mxu0 %v6711
      %6734 = vmatprep.subr.mxu0 0.0
      %6735 = vmatpush1.msra.mxu0 %v6712
      %6736 = vmatprep.subr.mxu0 0.0
      %6737 = vmatpush1.msra.mxu0 %v6713
      %6738 = vmatprep.subr.mxu0 0.0
      %6739 = vmatpush1.msra.mxu0 0.0
      %6740 = vmatprep.subr.mxu0 0.0
      %6741 = vmatpush1.msra.mxu0 0.0
      %6742 = vmatprep.subr.mxu0 0.0
      %6743 = vmatpush1.msra.mxu0 0.0
      %6744 = vmatprep.subr.mxu0 0.0
      %6745 = vmatpush1.msra.mxu0 0.0
      %6746 = vmatprep.subr.mxu0 0.0
      %6747 = vmatpush1.msra.mxu0 0.0
      %6748 = vmatprep.subr.mxu0 0.0
      %6749 = vmatpush1.msra.mxu0 0.0
      %6750 = vmatprep.subr.mxu0 0.0
      %6751 = vmatpush1.msra.mxu0 0.0
      %6752 = vmatprep.subr.mxu0 0.0
      %6753 = vmatpush1.msra.mxu0 0.0
      %6754 = vmatprep.subr.mxu0 0.0
      %6755 = vmatpush1.msra.mxu0 0.0
      %6756 = vmatprep.subr.mxu0 0.0
      %6757 = vmatpush1.msra.mxu0 0.0
      %6758 = vmatprep.subr.mxu0 0.0
      %6759 = vmatpush1.msra.mxu0 0.0
      %6760 = vmatprep.subr.mxu0 0.0
      %6761 = vmatpush1.msra.mxu0 0.0
      %6762 = vmatprep.subr.mxu0 0.0
      %6763 = vmatpush1.msra.mxu0 0.0
      %6764 = vmatprep.subr.mxu0 0.0
      %6765 = vmatpush1.msra.mxu0 0.0
      %6766 = vmatprep.subr.mxu0 0.0
      %6767 = vmatpush1.msra.mxu0 0.0
      %6768 = vmatprep.subr.mxu0 0.0
      %6769 = vmatpush1.msra.mxu0 0.0
      %6770 = vmatprep.subr.mxu0 0.0
      %6771 = vmatpush1.msra.mxu0 0.0
      %6772 = vmatprep.subr.mxu0 0.0
      %6773 = vmatpush1.msra.mxu0 0.0
      %6774 = vmatprep.subr.mxu0 0.0
      %6775 = vmatpush1.msra.mxu0 0.0
      %6776 = vmatprep.subr.mxu0 0.0
      %6777 = vmatpush1.msra.mxu0 0.0
      %6778 = vmatprep.mubr.f32.mxu0 0.0
      %6779 = vmatmul.mubr.f32.gmra.mrb[0].mxu0 %v5566
      %v6780 = vpop.f32.mrb[0].mxu0
      %v6781 = vadd.f32 0.0, %v6780
      %v6782 = vpop.f32.mrb[0].mxu0
      %6783 = vmatprep.mubr.f32.mxu0 0.0
      %6784 = vmatmul.mubr.f32.gmra.mrb[0].mxu0 %v5568
      %v6785 = vpop.f32.mrb[0].mxu0
      %v6786 = vadd.f32 0.0, %v6785
      %v6787 = vpop.f32.mrb[0].mxu0
      %6788 = vdwg.mxu0
      %s6789 = scalar_lea.vmem %s9, 1344
      %v6790 = vld [vmem:[%s6789] sm:$0xff]
      %v6791 = vld [vmem:[%s6789 + $0x8] sm:$0xff]
      %v6792 = vld [vmem:[%s6789 + $0x10] sm:$0xff]
      %v6793 = vld [vmem:[%s6789 + $0x18] sm:$0xff]
      %v6794 = vld [vmem:[%s6789 + $0x20] sm:$0xff]
      %v6795 = vld [vmem:[%s6789 + $0x28] sm:$0xff]
      %v6796 = vld [vmem:[%s6789 + $0x30] sm:$0xff]
      %v6797 = vld [vmem:[%s6789 + $0x38] sm:$0xff]
      %v6798 = vld [vmem:[%s6789 + $0x40] sm:$0xff]
      %v6799 = vld [vmem:[%s6789 + $0x48] sm:$0xff]
      %v6800 = vld [vmem:[%s6789 + $0x50] sm:$0xff]
      %v6801 = vld [vmem:[%s6789 + $0x58] sm:$0xff]
      %6802 = vmatprep.subr.mxu0 0.0
      %6803 = vmatpush1.msra.mxu0 %v6790
      %6804 = vmatprep.subr.mxu0 0.0
      %6805 = vmatpush1.msra.mxu0 %v6791
      %6806 = vmatprep.subr.mxu0 0.0
      %6807 = vmatpush1.msra.mxu0 %v6792
      %6808 = vmatprep.subr.mxu0 0.0
      %6809 = vmatpush1.msra.mxu0 %v6793
      %6810 = vmatprep.subr.mxu0 0.0
      %6811 = vmatpush1.msra.mxu0 %v6794
      %6812 = vmatprep.subr.mxu0 0.0
      %6813 = vmatpush1.msra.mxu0 %v6795
      %6814 = vmatprep.subr.mxu0 0.0
      %6815 = vmatpush1.msra.mxu0 %v6796
      %6816 = vmatprep.subr.mxu0 0.0
      %6817 = vmatpush1.msra.mxu0 %v6797
      %6818 = vmatprep.subr.mxu0 0.0
      %6819 = vmatpush1.msra.mxu0 %v6798
      %6820 = vmatprep.subr.mxu0 0.0
      %6821 = vmatpush1.msra.mxu0 %v6799
      %6822 = vmatprep.subr.mxu0 0.0
      %6823 = vmatpush1.msra.mxu0 %v6800
      %6824 = vmatprep.subr.mxu0 0.0
      %6825 = vmatpush1.msra.mxu0 %v6801
      %6826 = vmatprep.subr.mxu0 0.0
      %6827 = vmatpush1.msra.mxu0 0.0
      %6828 = vmatprep.subr.mxu0 0.0
      %6829 = vmatpush1.msra.mxu0 0.0
      %6830 = vmatprep.subr.mxu0 0.0
      %6831 = vmatpush1.msra.mxu0 0.0
      %6832 = vmatprep.subr.mxu0 0.0
      %6833 = vmatpush1.msra.mxu0 0.0
      %6834 = vmatprep.subr.mxu0 0.0
      %6835 = vmatpush1.msra.mxu0 0.0
      %6836 = vmatprep.subr.mxu0 0.0
      %6837 = vmatpush1.msra.mxu0 0.0
      %6838 = vmatprep.subr.mxu0 0.0
      %6839 = vmatpush1.msra.mxu0 0.0
      %6840 = vmatprep.subr.mxu0 0.0
      %6841 = vmatpush1.msra.mxu0 0.0
      %6842 = vmatprep.subr.mxu0 0.0
      %6843 = vmatpush1.msra.mxu0 0.0
      %6844 = vmatprep.subr.mxu0 0.0
      %6845 = vmatpush1.msra.mxu0 0.0
      %6846 = vmatprep.subr.mxu0 0.0
      %6847 = vmatpush1.msra.mxu0 0.0
      %6848 = vmatprep.subr.mxu0 0.0
      %6849 = vmatpush1.msra.mxu0 0.0
      %6850 = vmatprep.subr.mxu0 0.0
      %6851 = vmatpush1.msra.mxu0 0.0
      %6852 = vmatprep.subr.mxu0 0.0
      %6853 = vmatpush1.msra.mxu0 0.0
      %6854 = vmatprep.subr.mxu0 0.0
      %6855 = vmatpush1.msra.mxu0 0.0
      %6856 = vmatprep.subr.mxu0 0.0
      %6857 = vmatpush1.msra.mxu0 0.0
      %6858 = vmatprep.subr.mxu0 0.0
      %6859 = vmatpush1.msra.mxu0 0.0
      %6860 = vmatprep.subr.mxu0 0.0
      %6861 = vmatpush1.msra.mxu0 0.0
      %6862 = vmatprep.subr.mxu0 0.0
      %6863 = vmatpush1.msra.mxu0 0.0
      %6864 = vmatprep.subr.mxu0 0.0
      %6865 = vmatpush1.msra.mxu0 0.0
      %6866 = vmatprep.mubr.f32.mxu0 0.0
      %6867 = vmatmul.mubr.f32.gmra.mrb[0].mxu0 %v5566
      %v6868 = vpop.f32.mrb[0].mxu0
      %v6869 = vadd.f32 0.0, %v6868
      %v6870 = vpop.f32.mrb[0].mxu0
      %6871 = vmatprep.mubr.f32.mxu0 0.0
      %6872 = vmatmul.mubr.f32.gmra.mrb[0].mxu0 %v5568
      %v6873 = vpop.f32.mrb[0].mxu0
      %v6874 = vadd.f32 0.0, %v6873
      %v6875 = vpop.f32.mrb[0].mxu0
      %6876 = vdwg.mxu0
      %s6877 = scalar_lea.vmem %s9, 1440
      %v6878 = vld [vmem:[%s6877] sm:$0xff]
      %v6879 = vld [vmem:[%s6877 + $0x8] sm:$0xff]
      %v6880 = vld [vmem:[%s6877 + $0x10] sm:$0xff]
      %v6881 = vld [vmem:[%s6877 + $0x18] sm:$0xff]
      %v6882 = vld [vmem:[%s6877 + $0x20] sm:$0xff]
      %v6883 = vld [vmem:[%s6877 + $0x28] sm:$0xff]
      %v6884 = vld [vmem:[%s6877 + $0x30] sm:$0xff]
      %v6885 = vld [vmem:[%s6877 + $0x38] sm:$0xff]
      %v6886 = vld [vmem:[%s6877 + $0x40] sm:$0xff]
      %v6887 = vld [vmem:[%s6877 + $0x48] sm:$0xff]
      %v6888 = vld [vmem:[%s6877 + $0x50] sm:$0xff]
      %v6889 = vld [vmem:[%s6877 + $0x58] sm:$0xff]
      %6890 = vmatprep.subr.mxu0 0.0
      %6891 = vmatpush1.msra.mxu0 %v6878
      %6892 = vmatprep.subr.mxu0 0.0
      %6893 = vmatpush1.msra.mxu0 %v6879
      %6894 = vmatprep.subr.mxu0 0.0
      %6895 = vmatpush1.msra.mxu0 %v6880
      %6896 = vmatprep.subr.mxu0 0.0
      %6897 = vmatpush1.msra.mxu0 %v6881
      %6898 = vmatprep.subr.mxu0 0.0
      %6899 = vmatpush1.msra.mxu0 %v6882
      %6900 = vmatprep.subr.mxu0 0.0
      %6901 = vmatpush1.msra.mxu0 %v6883
      %6902 = vmatprep.subr.mxu0 0.0
      %6903 = vmatpush1.msra.mxu0 %v6884
      %6904 = vmatprep.subr.mxu0 0.0
      %6905 = vmatpush1.msra.mxu0 %v6885
      %6906 = vmatprep.subr.mxu0 0.0
      %6907 = vmatpush1.msra.mxu0 %v6886
      %6908 = vmatprep.subr.mxu0 0.0
      %6909 = vmatpush1.msra.mxu0 %v6887
      %6910 = vmatprep.subr.mxu0 0.0
      %6911 = vmatpush1.msra.mxu0 %v6888
      %6912 = vmatprep.subr.mxu0 0.0
      %6913 = vmatpush1.msra.mxu0 %v6889
      %6914 = vmatprep.subr.mxu0 0.0
      %6915 = vmatpush1.msra.mxu0 0.0
      %6916 = vmatprep.subr.mxu0 0.0
      %6917 = vmatpush1.msra.mxu0 0.0
      %6918 = vmatprep.subr.mxu0 0.0
      %6919 = vmatpush1.msra.mxu0 0.0
      %6920 = vmatprep.subr.mxu0 0.0
      %6921 = vmatpush1.msra.mxu0 0.0
      %6922 = vmatprep.subr.mxu0 0.0
      %6923 = vmatpush1.msra.mxu0 0.0
      %6924 = vmatprep.subr.mxu0 0.0
      %6925 = vmatpush1.msra.mxu0 0.0
      %6926 = vmatprep.subr.mxu0 0.0
      %6927 = vmatpush1.msra.mxu0 0.0
      %6928 = vmatprep.subr.mxu0 0.0
      %6929 = vmatpush1.msra.mxu0 0.0
      %6930 = vmatprep.subr.mxu0 0.0
      %6931 = vmatpush1.msra.mxu0 0.0
      %6932 = vmatprep.subr.mxu0 0.0
      %6933 = vmatpush1.msra.mxu0 0.0
      %6934 = vmatprep.subr.mxu0 0.0
      %6935 = vmatpush1.msra.mxu0 0.0
      %6936 = vmatprep.subr.mxu0 0.0
      %6937 = vmatpush1.msra.mxu0 0.0
      %6938 = vmatprep.subr.mxu0 0.0
      %6939 = vmatpush1.msra.mxu0 0.0
      %6940 = vmatprep.subr.mxu0 0.0
      %6941 = vmatpush1.msra.mxu0 0.0
      %6942 = vmatprep.subr.mxu0 0.0
      %6943 = vmatpush1.msra.mxu0 0.0
      %6944 = vmatprep.subr.mxu0 0.0
      %6945 = vmatpush1.msra.mxu0 0.0
      %6946 = vmatprep.subr.mxu0 0.0
      %6947 = vmatpush1.msra.mxu0 0.0
      %6948 = vmatprep.subr.mxu0 0.0
      %6949 = vmatpush1.msra.mxu0 0.0
      %6950 = vmatprep.subr.mxu0 0.0
      %6951 = vmatpush1.msra.mxu0 0.0
      %6952 = vmatprep.subr.mxu0 0.0
      %6953 = vmatpush1.msra.mxu0 0.0
      %6954 = vmatprep.mubr.f32.mxu0 0.0
      %6955 = vmatmul.mubr.f32.gmra.mrb[0].mxu0 %v5566
      %v6956 = vpop.f32.mrb[0].mxu0
      %v6957 = vadd.f32 0.0, %v6956
      %v6958 = vpop.f32.mrb[0].mxu0
      %6959 = vmatprep.mubr.f32.mxu0 0.0
      %6960 = vmatmul.mubr.f32.gmra.mrb[0].mxu0 %v5568
      %v6961 = vpop.f32.mrb[0].mxu0
      %v6962 = vadd.f32 0.0, %v6961
      %v6963 = vpop.f32.mrb[0].mxu0
      %6964 = vdwg.mxu0
      %v6965 = vld [vmem:[%s11] sm:$0xff]
      %v6966 = vld [vmem:[%s11 + $0x8] sm:$0xff]
      %v6967 = vld [vmem:[%s11 + $0x10] sm:$0xff]
      %v6968 = vld [vmem:[%s11 + $0x18] sm:$0xff]
      %v6969 = vld [vmem:[%s11 + $0x20] sm:$0xff]
      %v6970 = vld [vmem:[%s11 + $0x28] sm:$0xff]
      %v6971 = vld [vmem:[%s11 + $0x30] sm:$0xff]
      %v6972 = vld [vmem:[%s11 + $0x38] sm:$0xff]
      %v6973 = vld [vmem:[%s11 + $0x40] sm:$0xff]
      %v6974 = vld [vmem:[%s11 + $0x48] sm:$0xff]
      %v6975 = vld [vmem:[%s11 + $0x50] sm:$0xff]
      %v6976 = vld [vmem:[%s11 + $0x58] sm:$0xff]
      %v6977 = vld [vmem:[%s11 + $0x60] sm:$0xff]
      %v6978 = vld [vmem:[%s11 + $0x68] sm:$0xff]
      %v6979 = vld [vmem:[%s11 + $0x70] sm:$0xff]
      %v6980 = vld [vmem:[%s11 + $0x78] sm:$0xff]
      %v6981 = vld [vmem:[%s11 + $0x80] sm:$0xff]
      %v6982 = vld [vmem:[%s11 + $0x88] sm:$0xff]
      %v6983 = vld [vmem:[%s11 + $0x90] sm:$0xff]
      %v6984 = vld [vmem:[%s11 + $0x98] sm:$0xff]
      %v6985 = vld [vmem:[%s11 + $0xa0] sm:$0xff]
      %v6986 = vld [vmem:[%s11 + $0xa8] sm:$0xff]
      %v6987 = vld [vmem:[%s11 + $0xb0] sm:$0xff]
      %v6988 = vld [vmem:[%s11 + $0xb8] sm:$0xff]
      %v6989 = vld [vmem:[%s11 + $0xc0] sm:$0xff]
      %v6990 = vld [vmem:[%s11 + $0xc8] sm:$0xff]
      %v6991 = vld [vmem:[%s11 + $0xd0] sm:$0xff]
      %v6992 = vld [vmem:[%s11 + $0xd8] sm:$0xff]
      %v6993 = vld [vmem:[%s11 + $0xe0] sm:$0xff]
      %v6994 = vld [vmem:[%s11 + $0xe8] sm:$0xff]
      %v6995 = vld [vmem:[%s11 + $0xf0] sm:$0xff]
      %v6996 = vld [vmem:[%s11 + $0xf8] sm:$0xff]
      %v6997 = vld [vmem:[%s11 + $0x100] sm:$0xff]
      %v6998 = vld [vmem:[%s11 + $0x108] sm:$0xff]
      %v6999 = vld [vmem:[%s11 + $0x110] sm:$0xff]
      %v7000 = vld [vmem:[%s11 + $0x118] sm:$0xff]
      %v7001 = vld [vmem:[%s11 + $0x120] sm:$0xff]
      %v7002 = vld [vmem:[%s11 + $0x128] sm:$0xff]
      %v7003 = vld [vmem:[%s11 + $0x130] sm:$0xff]
      %v7004 = vld [vmem:[%s11 + $0x138] sm:$0xff]
      %v7005 = vld [vmem:[%s11 + $0x140] sm:$0xff]
      %v7006 = vld [vmem:[%s11 + $0x148] sm:$0xff]
      %v7007 = vld [vmem:[%s11 + $0x150] sm:$0xff]
      %v7008 = vld [vmem:[%s11 + $0x158] sm:$0xff]
      %v7009 = vld [vmem:[%s11 + $0x160] sm:$0xff]
      %v7010 = vld [vmem:[%s11 + $0x168] sm:$0xff]
      %v7011 = vld [vmem:[%s11 + $0x170] sm:$0xff]
      %v7012 = vld [vmem:[%s11 + $0x178] sm:$0xff]
      %v7013 = vld [vmem:[%s11 + $0x180] sm:$0xff]
      %v7014 = vld [vmem:[%s11 + $0x188] sm:$0xff]
      %v7015 = vld [vmem:[%s11 + $0x190] sm:$0xff]
      %v7016 = vld [vmem:[%s11 + $0x198] sm:$0xff]
      %v7017 = vld [vmem:[%s11 + $0x1a0] sm:$0xff]
      %v7018 = vld [vmem:[%s11 + $0x1a8] sm:$0xff]
      %v7019 = vld [vmem:[%s11 + $0x1b0] sm:$0xff]
      %v7020 = vld [vmem:[%s11 + $0x1b8] sm:$0xff]
      %v7021 = vld [vmem:[%s11 + $0x1c0] sm:$0xff]
      %v7022 = vld [vmem:[%s11 + $0x1c8] sm:$0xff]
      %v7023 = vld [vmem:[%s11 + $0x1d0] sm:$0xff]
      %v7024 = vld [vmem:[%s11 + $0x1d8] sm:$0xff]
      %v7025 = vld [vmem:[%s11 + $0x1e0] sm:$0xff]
      %v7026 = vld [vmem:[%s11 + $0x1e8] sm:$0xff]
      %v7027 = vld [vmem:[%s11 + $0x1f0] sm:$0xff]
      %v7028 = vld [vmem:[%s11 + $0x1f8] sm:$0xff]
      %v7029 = vld [vmem:[%s10] sm:$0x1]
      %v7031 = vlaneseq
      %v7032 = vshrl.u32 %v7031, 7
      %v7033 = vsub.s32 0, %v7032
      %v7034 = vrot.slane %v7029, %v7033
      %7036 = vmatprep.subr.mxu0 0.0
      %7037 = vmatpush1.msra.mxu0 %v5637
      %7038 = vmatprep.subr.mxu0 0.0
      %7039 = vmatpush1.msra.mxu0 %v5642
      %7040 = vmatprep.subr.mxu0 0.0
      %7041 = vmatpush1.msra.mxu0 %v5725
      %7042 = vmatprep.subr.mxu0 0.0
      %7043 = vmatpush1.msra.mxu0 %v5730
      %7044 = vmatprep.subr.mxu0 0.0
      %7045 = vmatpush1.msra.mxu0 %v5813
      %7046 = vmatprep.subr.mxu0 0.0
      %7047 = vmatpush1.msra.mxu0 %v5818
      %7048 = vmatprep.subr.mxu0 0.0
      %7049 = vmatpush1.msra.mxu0 %v5901
      %7050 = vmatprep.subr.mxu0 0.0
      %7051 = vmatpush1.msra.mxu0 %v5906
      %7052 = vmatprep.subr.mxu0 0.0
      %7053 = vmatpush1.msra.mxu0 %v5989
      %7054 = vmatprep.subr.mxu0 0.0
      %7055 = vmatpush1.msra.mxu0 %v5994
      %7056 = vmatprep.subr.mxu0 0.0
      %7057 = vmatpush1.msra.mxu0 %v6077
      %7058 = vmatprep.subr.mxu0 0.0
      %7059 = vmatpush1.msra.mxu0 %v6082
      %7060 = vmatprep.subr.mxu0 0.0
      %7061 = vmatpush1.msra.mxu0 %v6165
      %7062 = vmatprep.subr.mxu0 0.0
      %7063 = vmatpush1.msra.mxu0 %v6170
      %7064 = vmatprep.subr.mxu0 0.0
      %7065 = vmatpush1.msra.mxu0 %v6253
      %7066 = vmatprep.subr.mxu0 0.0
      %7067 = vmatpush1.msra.mxu0 %v6258
      %7068 = vmatprep.subr.mxu0 0.0
      %7069 = vmatpush1.msra.mxu0 %v6341
      %7070 = vmatprep.subr.mxu0 0.0
      %7071 = vmatpush1.msra.mxu0 %v6346
      %7072 = vmatprep.subr.mxu0 0.0
      %7073 = vmatpush1.msra.mxu0 %v6429
      %7074 = vmatprep.subr.mxu0 0.0
      %7075 = vmatpush1.msra.mxu0 %v6434
      %7076 = vmatprep.subr.mxu0 0.0
      %7077 = vmatpush1.msra.mxu0 %v6517
      %7078 = vmatprep.subr.mxu0 0.0
      %7079 = vmatpush1.msra.mxu0 %v6522
      %7080 = vmatprep.subr.mxu0 0.0
      %7081 = vmatpush1.msra.mxu0 %v6605
      %7082 = vmatprep.subr.mxu0 0.0
      %7083 = vmatpush1.msra.mxu0 %v6610
      %7084 = vmatprep.subr.mxu0 0.0
      %7085 = vmatpush1.msra.mxu0 %v6693
      %7086 = vmatprep.subr.mxu0 0.0
      %7087 = vmatpush1.msra.mxu0 %v6698
      %7088 = vmatprep.subr.mxu0 0.0
      %7089 = vmatpush1.msra.mxu0 %v6781
      %7090 = vmatprep.subr.mxu0 0.0
      %7091 = vmatpush1.msra.mxu0 %v6786
      %7092 = vmatprep.subr.mxu0 0.0
      %7093 = vmatpush1.msra.mxu0 %v6869
      %7094 = vmatprep.subr.mxu0 0.0
      %7095 = vmatpush1.msra.mxu0 %v6874
      %7096 = vmatprep.subr.mxu0 0.0
      %7097 = vmatpush1.msra.mxu0 %v6957
      %7098 = vmatprep.subr.mxu0 0.0
      %7099 = vmatpush1.msra.mxu0 %v6962
      %7100 = vmatprep.mubr.f32.mxu0 %v6966
      %7101 = vmatmul.mubr.f32.gmra.mrb[0].mxu0 %v6965
      %v7102 = vpop.f32.mrb[0].mxu0
      %v7103 = vadd.f32 %v7034, %v7102
      %v7104 = vpop.f32.mrb[0].mxu0
      %7105 = vmatprep.mubr.f32.mxu0 %v6968
      %7106 = vmatmul.mubr.f32.gmra.mrb[0].mxu0 %v6967
      %v7107 = vpop.f32.mrb[0].mxu0
      %v7108 = vadd.f32 %v7034, %v7107
      %v7109 = vpop.f32.mrb[0].mxu0
      %7110 = vmatprep.mubr.f32.mxu0 %v6970
      %7111 = vmatmul.mubr.f32.gmra.mrb[0].mxu0 %v6969
      %v7112 = vpop.f32.mrb[0].mxu0
      %v7113 = vadd.f32 %v7034, %v7112
      %v7114 = vpop.f32.mrb[0].mxu0
      %7115 = vmatprep.mubr.f32.mxu0 %v6972
      %7116 = vmatmul.mubr.f32.gmra.mrb[0].mxu0 %v6971
      %v7117 = vpop.f32.mrb[0].mxu0
      %v7118 = vadd.f32 %v7034, %v7117
      %v7119 = vpop.f32.mrb[0].mxu0
      %7120 = vmatprep.mubr.f32.mxu0 %v6974
      %7121 = vmatmul.mubr.f32.gmra.mrb[0].mxu0 %v6973
      %v7122 = vpop.f32.mrb[0].mxu0
      %v7123 = vadd.f32 %v7034, %v7122
      %v7124 = vpop.f32.mrb[0].mxu0
      %7125 = vmatprep.mubr.f32.mxu0 %v6976
      %7126 = vmatmul.mubr.f32.gmra.mrb[0].mxu0 %v6975
      %v7127 = vpop.f32.mrb[0].mxu0
      %v7128 = vadd.f32 %v7034, %v7127
      %v7129 = vpop.f32.mrb[0].mxu0
      %7130 = vmatprep.mubr.f32.mxu0 %v6978
      %7131 = vmatmul.mubr.f32.gmra.mrb[0].mxu0 %v6977
      %v7132 = vpop.f32.mrb[0].mxu0
      %v7133 = vadd.f32 %v7034, %v7132
      %v7134 = vpop.f32.mrb[0].mxu0
      %7135 = vmatprep.mubr.f32.mxu0 %v6980
      %7136 = vmatmul.mubr.f32.gmra.mrb[0].mxu0 %v6979
      %v7137 = vpop.f32.mrb[0].mxu0
      %v7138 = vadd.f32 %v7034, %v7137
      %v7139 = vpop.f32.mrb[0].mxu0
      %7140 = vmatprep.mubr.f32.mxu0 %v6982
      %7141 = vmatmul.mubr.f32.gmra.mrb[0].mxu0 %v6981
      %v7142 = vpop.f32.mrb[0].mxu0
      %v7143 = vadd.f32 %v7034, %v7142
      %v7144 = vpop.f32.mrb[0].mxu0
      %7145 = vmatprep.mubr.f32.mxu0 %v6984
      %7146 = vmatmul.mubr.f32.gmra.mrb[0].mxu0 %v6983
      %v7147 = vpop.f32.mrb[0].mxu0
      %v7148 = vadd.f32 %v7034, %v7147
      %v7149 = vpop.f32.mrb[0].mxu0
      %7150 = vmatprep.mubr.f32.mxu0 %v6986
      %7151 = vmatmul.mubr.f32.gmra.mrb[0].mxu0 %v6985
      %v7152 = vpop.f32.mrb[0].mxu0
      %v7153 = vadd.f32 %v7034, %v7152
      %v7154 = vpop.f32.mrb[0].mxu0
      %7155 = vmatprep.mubr.f32.mxu0 %v6988
      %7156 = vmatmul.mubr.f32.gmra.mrb[0].mxu0 %v6987
      %v7157 = vpop.f32.mrb[0].mxu0
      %v7158 = vadd.f32 %v7034, %v7157
      %v7159 = vpop.f32.mrb[0].mxu0
      %7160 = vmatprep.mubr.f32.mxu0 %v6990
      %7161 = vmatmul.mubr.f32.gmra.mrb[0].mxu0 %v6989
      %v7162 = vpop.f32.mrb[0].mxu0
      %v7163 = vadd.f32 %v7034, %v7162
      %v7164 = vpop.f32.mrb[0].mxu0
      %7165 = vmatprep.mubr.f32.mxu0 %v6992
      %7166 = vmatmul.mubr.f32.gmra.mrb[0].mxu0 %v6991
      %v7167 = vpop.f32.mrb[0].mxu0
      %v7168 = vadd.f32 %v7034, %v7167
      %v7169 = vpop.f32.mrb[0].mxu0
      %7170 = vmatprep.mubr.f32.mxu0 %v6994
      %7171 = vmatmul.mubr.f32.gmra.mrb[0].mxu0 %v6993
      %v7172 = vpop.f32.mrb[0].mxu0
      %v7173 = vadd.f32 %v7034, %v7172
      %v7174 = vpop.f32.mrb[0].mxu0
      %7175 = vmatprep.mubr.f32.mxu0 %v6996
      %7176 = vmatmul.mubr.f32.gmra.mrb[0].mxu0 %v6995
      %v7177 = vpop.f32.mrb[0].mxu0
      %v7178 = vadd.f32 %v7034, %v7177
      %v7179 = vpop.f32.mrb[0].mxu0
      %7180 = vmatprep.mubr.f32.mxu0 %v6998
      %7181 = vmatmul.mubr.f32.gmra.mrb[0].mxu0 %v6997
      %v7182 = vpop.f32.mrb[0].mxu0
      %v7183 = vadd.f32 %v7034, %v7182
      %v7184 = vpop.f32.mrb[0].mxu0
      %7185 = vmatprep.mubr.f32.mxu0 %v7000
      %7186 = vmatmul.mubr.f32.gmra.mrb[0].mxu0 %v6999
      %v7187 = vpop.f32.mrb[0].mxu0
      %v7188 = vadd.f32 %v7034, %v7187
      %v7189 = vpop.f32.mrb[0].mxu0
      %7190 = vmatprep.mubr.f32.mxu0 %v7002
      %7191 = vmatmul.mubr.f32.gmra.mrb[0].mxu0 %v7001
      %v7192 = vpop.f32.mrb[0].mxu0
      %v7193 = vadd.f32 %v7034, %v7192
      %v7194 = vpop.f32.mrb[0].mxu0
      %7195 = vmatprep.mubr.f32.mxu0 %v7004
      %7196 = vmatmul.mubr.f32.gmra.mrb[0].mxu0 %v7003
      %v7197 = vpop.f32.mrb[0].mxu0
      %v7198 = vadd.f32 %v7034, %v7197
      %v7199 = vpop.f32.mrb[0].mxu0
      %7200 = vmatprep.mubr.f32.mxu0 %v7006
      %7201 = vmatmul.mubr.f32.gmra.mrb[0].mxu0 %v7005
      %v7202 = vpop.f32.mrb[0].mxu0
      %v7203 = vadd.f32 %v7034, %v7202
      %v7204 = vpop.f32.mrb[0].mxu0
      %7205 = vmatprep.mubr.f32.mxu0 %v7008
      %7206 = vmatmul.mubr.f32.gmra.mrb[0].mxu0 %v7007
      %v7207 = vpop.f32.mrb[0].mxu0
      %v7208 = vadd.f32 %v7034, %v7207
      %v7209 = vpop.f32.mrb[0].mxu0
      %7210 = vmatprep.mubr.f32.mxu0 %v7010
      %7211 = vmatmul.mubr.f32.gmra.mrb[0].mxu0 %v7009
      %v7212 = vpop.f32.mrb[0].mxu0
      %v7213 = vadd.f32 %v7034, %v7212
      %v7214 = vpop.f32.mrb[0].mxu0
      %7215 = vmatprep.mubr.f32.mxu0 %v7012
      %7216 = vmatmul.mubr.f32.gmra.mrb[0].mxu0 %v7011
      %v7217 = vpop.f32.mrb[0].mxu0
      %v7218 = vadd.f32 %v7034, %v7217
      %v7219 = vpop.f32.mrb[0].mxu0
      %7220 = vmatprep.mubr.f32.mxu0 %v7014
      %7221 = vmatmul.mubr.f32.gmra.mrb[0].mxu0 %v7013
      %v7222 = vpop.f32.mrb[0].mxu0
      %v7223 = vadd.f32 %v7034, %v7222
      %v7224 = vpop.f32.mrb[0].mxu0
      %7225 = vmatprep.mubr.f32.mxu0 %v7016
      %7226 = vmatmul.mubr.f32.gmra.mrb[0].mxu0 %v7015
      %v7227 = vpop.f32.mrb[0].mxu0
      %v7228 = vadd.f32 %v7034, %v7227
      %v7229 = vpop.f32.mrb[0].mxu0
      %7230 = vmatprep.mubr.f32.mxu0 %v7018
      %7231 = vmatmul.mubr.f32.gmra.mrb[0].mxu0 %v7017
      %v7232 = vpop.f32.mrb[0].mxu0
      %v7233 = vadd.f32 %v7034, %v7232
      %v7234 = vpop.f32.mrb[0].mxu0
      %7235 = vmatprep.mubr.f32.mxu0 %v7020
      %7236 = vmatmul.mubr.f32.gmra.mrb[0].mxu0 %v7019
      %v7237 = vpop.f32.mrb[0].mxu0
      %v7238 = vadd.f32 %v7034, %v7237
      %v7239 = vpop.f32.mrb[0].mxu0
      %7240 = vmatprep.mubr.f32.mxu0 %v7022
      %7241 = vmatmul.mubr.f32.gmra.mrb[0].mxu0 %v7021
      %v7242 = vpop.f32.mrb[0].mxu0
      %v7243 = vadd.f32 %v7034, %v7242
      %v7244 = vpop.f32.mrb[0].mxu0
      %7245 = vmatprep.mubr.f32.mxu0 %v7024
      %7246 = vmatmul.mubr.f32.gmra.mrb[0].mxu0 %v7023
      %v7247 = vpop.f32.mrb[0].mxu0
      %v7248 = vadd.f32 %v7034, %v7247
      %v7249 = vpop.f32.mrb[0].mxu0
      %7250 = vmatprep.mubr.f32.mxu0 %v7026
      %7251 = vmatmul.mubr.f32.gmra.mrb[0].mxu0 %v7025
      %v7252 = vpop.f32.mrb[0].mxu0
      %v7253 = vadd.f32 %v7034, %v7252
      %v7254 = vpop.f32.mrb[0].mxu0
      %7255 = vmatprep.mubr.f32.mxu0 %v7028
      %7256 = vmatmul.mubr.f32.gmra.mrb[0].mxu0 %v7027
      %v7257 = vpop.f32.mrb[0].mxu0
      %v7258 = vadd.f32 %v7034, %v7257
      %v7259 = vpop.f32.mrb[0].mxu0
      %7260 = vdwg.mxu0
      %vm7261 = vcmask 39936
      %7262 = vst.msk [vmem:[%s413] sm:$0xff] %vm7261, %v7103
      %7263 = vst.msk [vmem:[%s413 + $0x8] sm:$0xff] %vm7261, %v7108
      %7264 = vst.msk [vmem:[%s413 + $0x10] sm:$0xff] %vm7261, %v7113
      %7265 = vst.msk [vmem:[%s413 + $0x18] sm:$0xff] %vm7261, %v7118
      %7266 = vst.msk [vmem:[%s413 + $0x20] sm:$0xff] %vm7261, %v7123
      %7267 = vst.msk [vmem:[%s413 + $0x28] sm:$0xff] %vm7261, %v7128
      %7268 = vst.msk [vmem:[%s413 + $0x30] sm:$0xff] %vm7261, %v7133
      %7269 = vst.msk [vmem:[%s413 + $0x38] sm:$0xff] %vm7261, %v7138
      %7270 = vst.msk [vmem:[%s413 + $0x40] sm:$0xff] %vm7261, %v7143
      %7271 = vst.msk [vmem:[%s413 + $0x48] sm:$0xff] %vm7261, %v7148
      %7272 = vst.msk [vmem:[%s413 + $0x50] sm:$0xff] %vm7261, %v7153
      %7273 = vst.msk [vmem:[%s413 + $0x58] sm:$0xff] %vm7261, %v7158
      %7274 = vst.msk [vmem:[%s413 + $0x60] sm:$0xff] %vm7261, %v7163
      %7275 = vst.msk [vmem:[%s413 + $0x68] sm:$0xff] %vm7261, %v7168
      %7276 = vst.msk [vmem:[%s413 + $0x70] sm:$0xff] %vm7261, %v7173
      %7277 = vst.msk [vmem:[%s413 + $0x78] sm:$0xff] %vm7261, %v7178
      %7278 = vst.msk [vmem:[%s413 + $0x80] sm:$0xff] %vm7261, %v7183
      %7279 = vst.msk [vmem:[%s413 + $0x88] sm:$0xff] %vm7261, %v7188
      %7280 = vst.msk [vmem:[%s413 + $0x90] sm:$0xff] %vm7261, %v7193
      %7281 = vst.msk [vmem:[%s413 + $0x98] sm:$0xff] %vm7261, %v7198
      %7282 = vst.msk [vmem:[%s413 + $0xa0] sm:$0xff] %vm7261, %v7203
      %7283 = vst.msk [vmem:[%s413 + $0xa8] sm:$0xff] %vm7261, %v7208
      %7284 = vst.msk [vmem:[%s413 + $0xb0] sm:$0xff] %vm7261, %v7213
      %7285 = vst.msk [vmem:[%s413 + $0xb8] sm:$0xff] %vm7261, %v7218
      %7286 = vst.msk [vmem:[%s413 + $0xc0] sm:$0xff] %vm7261, %v7223
      %7287 = vst.msk [vmem:[%s413 + $0xc8] sm:$0xff] %vm7261, %v7228
      %7288 = vst.msk [vmem:[%s413 + $0xd0] sm:$0xff] %vm7261, %v7233
      %7289 = vst.msk [vmem:[%s413 + $0xd8] sm:$0xff] %vm7261, %v7238
      %7290 = vst.msk [vmem:[%s413 + $0xe0] sm:$0xff] %vm7261, %v7243
      %7291 = vst.msk [vmem:[%s413 + $0xe8] sm:$0xff] %vm7261, %v7248
      %7292 = vst.msk [vmem:[%s413 + $0xf0] sm:$0xff] %vm7261, %v7253
      %7293 = vst.msk [vmem:[%s413 + $0xf8] sm:$0xff] %vm7261, %v7258
      %p7294 = scmp.lt.s32.totalorder %s23, 1
      %s7295 = scalar_select %p7294, %s23, 1
      %s7296 = smul.addr %s7295, 32
      %s7297 = smul.addr %s7296, 8
      %s7298 = scalar_lea.vmem %s12, %s7297
      // Predicated region
      $region69: #{_lambda_.1} parent=67 // pred_check
        %p7299 = pneg %p298
      $region70: #{_lambda_.1} parent=67 // pred_check_branch
        %7301 = sbr.rel (%p7299) target = $region72
      $region71: #{_lambda_.1} parent=67 // pred_region
        _
      $region72: #{_lambda_.1} parent=67 // pred_fallthru
        _
    $region68: #{_lambda_.1} parent=5 // pred_fallthru
      _
    %p7302 = scmp.le.s32.totalorder 2, %s18
    // Predicated region
    $region73: #{_lambda_.1} parent=5 // pred_check
      %p7303 = pneg %p7302
    $region74: #{_lambda_.1} parent=5 // pred_check_branch
      %7305 = sbr.rel (%p7303) target = $region76
    $region75: #{_lambda_.1} parent=5 // pred_region
      %s7306 = ssub.s32 %s18, 2
      // Predicated region
      $region77: #{_lambda_.1} parent=75 // pred_check
        %p7307 = pneg %p304
      $region78: #{_lambda_.1} parent=75 // pred_check_branch
        %7309 = sbr.rel (%p7307) target = $region80
      $region79: #{_lambda_.1} parent=75 // pred_region
        %p7310 = scmp.lt.s32.totalorder %s24, 1
        %s7311 = scalar_select %p7310, %s24, 1
        %s7312 = smul.addr %s7311, 32
        %s7313 = smul.addr %s7312, 8
        %s7314 = scalar_lea.vmem %s12, %s7313
      $region80: #{_lambda_.1} parent=75 // pred_fallthru
        _
    $region76: #{_lambda_.1} parent=5 // pred_fallthru
      _
  $region6: #{_lambda_.1} parent=0 // loop_footer
    %s22 = sadd.s32 1, %s18
  $region7: #{_lambda_.1} parent=0 // loop_footer_branch
    %17 = sbr.rel target = $region3
  $region8: #{_lambda_.1} parent=0 // loop_exit
    _

</llo_original>
